<compile_context>
chip_gen: v7x
topology: tpu7x:2x2x1
jax: 0.10.0
libtpu: 0.0.40
codegen_flags: <defaults>
</compile_context>

<pallas_src>
import jax
import jax.numpy as jnp
from jax import lax
from jax.experimental import pallas as pl
from jax.experimental.pallas import tpu as pltpu

BN_EPS = 1e-5
LEAKY_SLOPE = 0.2
LANE = 128
VMEM_LIMIT = 32 * 1024 * 1024


def _round_up(n, m):
    return (n + m - 1) // m * m


# --------------------------------------------------------------------------
# Pallas kernels
# --------------------------------------------------------------------------
def _conv_row_acc(x0_ref, x1_ref, x2_ref, w_ref, W, Cop):
    """Accumulate one conv-output row (W, Cop) in f32 from 9 bf16 MXU matmuls."""
    acc = jnp.zeros((W, Cop), jnp.float32)
    rows = (x0_ref[0, 0], x1_ref[0, 0], x2_ref[0, 0])   # each (W+2, Cip) bf16
    for ky in range(3):
        row = rows[ky]
        for kx in range(3):
            full = jnp.dot(row, w_ref[ky * 3 + kx],
                           preferred_element_type=jnp.float32)  # (W+2, Cop) f32
            acc = acc + full[kx:kx + W, :]
    return acc


def _conv_bn_stats_kernel(x0_ref, x1_ref, x2_ref, w_ref, y_ref, st_ref):
    """Conv row + per-row channel sum / sum-of-squares (for BatchNorm)."""
    W, Cop = y_ref.shape[2], y_ref.shape[3]
    acc = _conv_row_acc(x0_ref, x1_ref, x2_ref, w_ref, W, Cop)
    y_ref[0, 0] = acc
    st_ref[0, 0, 0:1] = jnp.sum(acc, axis=0, keepdims=True)
    st_ref[0, 0, 1:2] = jnp.sum(acc * acc, axis=0, keepdims=True)


def _conv_bias_kernel(x0_ref, x1_ref, x2_ref, w_ref, b_ref, y_ref):
    """Conv row + bias (final 1-channel conv, no BN)."""
    W, Cop = y_ref.shape[2], y_ref.shape[3]
    acc = _conv_row_acc(x0_ref, x1_ref, x2_ref, w_ref, W, Cop)
    y_ref[0, 0] = acc + b_ref[...]


def _bn_leaky_pool_kernel(y_ref, scale_ref, shift_ref, o_ref):
    """Folded BN (scale/shift) + LeakyReLU(0.2) + 2x2 max-pool.

    y_ref block: (1, 2, Pw, 2*Cop) -- two conv rows, W-pairs folded into lanes.
    o_ref block: (1, Pw, Cop).
    """
    Cop = o_ref.shape[2]
    z = y_ref[0] * scale_ref[...] + shift_ref[...]        # (2, Pw, 2*Cop)
    z = jnp.where(z > 0, z, LEAKY_SLOPE * z)              # LeakyReLU(0.2)
    m = jnp.maximum(z[0], z[1])                           # pool over H pair
    o_ref[0] = jnp.maximum(m[:, :Cop], m[:, Cop:])        # pool over W pair


# --------------------------------------------------------------------------
# pallas_call wrappers
# --------------------------------------------------------------------------
def _conv3x3(xp, w9, bias=None):
    """3x3 / stride-1 / pad-1 conv in NHWC.

    xp  : (N, H+2, W+2, Cip) bf16  spatially pre-padded, channel-padded input
    w9  : (9, Cip, Cop) bf16       tap-major (ky*3+kx) reshaped weights
    bias: optional (1, Cop) f32    (only for the final conv, which has no BN)
    Returns y (N, H, W, Cop) f32 and, when bias is None, per-row BN stats
    (N, H, 2, Cop) f32 (row 0 = sum, row 1 = sum of squares).
    """
    N, Hp, Wp, Cip = xp.shape
    H, W = Hp - 2, Wp - 2
    Cop = w9.shape[-1]

    def xspec(ky):
        return pl.BlockSpec((1, 1, Wp, Cip),
                            lambda n, h, ky=ky: (n, h + ky, 0, 0))

    wspec = pl.BlockSpec((9, Cip, Cop), lambda n, h: (0, 0, 0))
    yspec = pl.BlockSpec((1, 1, W, Cop), lambda n, h: (n, h, 0, 0))
    cparams = pltpu.CompilerParams(
        dimension_semantics=("parallel", "parallel"),
        vmem_limit_bytes=VMEM_LIMIT)

    if bias is None:
        y, st = pl.pallas_call(
            _conv_bn_stats_kernel,
            out_shape=(jax.ShapeDtypeStruct((N, H, W, Cop), jnp.float32),
                       jax.ShapeDtypeStruct((N, H, 2, Cop), jnp.float32)),
            grid=(N, H),
            in_specs=[xspec(0), xspec(1), xspec(2), wspec],
            out_specs=(yspec,
                       pl.BlockSpec((1, 1, 2, Cop), lambda n, h: (n, h, 0, 0))),
            compiler_params=cparams,
        )(xp, xp, xp, w9)
        return y, st

    y = pl.pallas_call(
        _conv_bias_kernel,
        out_shape=jax.ShapeDtypeStruct((N, H, W, Cop), jnp.float32),
        grid=(N, H),
        in_specs=[xspec(0), xspec(1), xspec(2), wspec,
                  pl.BlockSpec((1, Cop), lambda n, h: (0, 0))],
        out_specs=yspec,
        compiler_params=cparams,
    )(xp, xp, xp, w9, bias)
    return y, None


def _bn_leaky_pool(y, scale, shift):
    """y: (N, H, W, Cop) f32 conv output; scale/shift: (Cop,) folded BN params."""
    N, H, W, Cop = y.shape
    Ph, Pw = H // 2, W // 2
    # Pure-metadata reshape: H -> (Ph, 2) pairs, (W, Cop) -> (Pw, 2*Cop) lanes.
    y4 = y.reshape(N * Ph, 2, Pw, 2 * Cop)
    scale2 = jnp.concatenate([scale, scale]).reshape(1, 2 * Cop).astype(jnp.float32)
    shift2 = jnp.concatenate([shift, shift]).reshape(1, 2 * Cop).astype(jnp.float32)

    pooled = pl.pallas_call(
        _bn_leaky_pool_kernel,
        out_shape=jax.ShapeDtypeStruct((N * Ph, Pw, Cop), jnp.float32),
        grid=(N * Ph,),
        in_specs=[pl.BlockSpec((1, 2, Pw, 2 * Cop), lambda i: (i, 0, 0, 0)),
                  pl.BlockSpec((1, 2 * Cop), lambda i: (0, 0)),
                  pl.BlockSpec((1, 2 * Cop), lambda i: (0, 0))],
        out_specs=pl.BlockSpec((1, Pw, Cop), lambda i: (i, 0, 0)),
        compiler_params=pltpu.CompilerParams(
            dimension_semantics=("parallel",),
            vmem_limit_bytes=VMEM_LIMIT),
    )(y4, scale2, shift2)
    return pooled.reshape(N, Ph, Pw, Cop)


def _prep_w9(w, cin_pad, cout_pad):
    """(Cout, Cin, 3, 3) f32 -> (9, cin_pad, cout_pad) bf16, tap index ky*3+kx."""
    cout, cin = w.shape[0], w.shape[1]
    w9 = jnp.transpose(w.astype(jnp.float32), (2, 3, 1, 0)).reshape(9, cin, cout)
    w9 = jnp.pad(w9, ((0, 0), (0, cin_pad - cin), (0, cout_pad - cout)))
    return w9.astype(jnp.bfloat16)


def _cnn_block(h, w, gamma, beta):
    """Conv(3,1,1) -> BN(train) -> LeakyReLU(0.2) -> MaxPool(2,2) on padded NHWC.

    The conv bias is intentionally omitted: it is exactly cancelled by the BN
    mean subtraction, so the forward output is unchanged.
    """
    N, H, W, _ = h.shape
    cout = w.shape[0]
    Cop = _round_up(cout, LANE)
    w9 = _prep_w9(w, h.shape[-1], Cop)

    xp = jnp.pad(h, ((0, 0), (1, 1), (1, 1), (0, 0))).astype(jnp.bfloat16)
    y, st = _conv3x3(xp, w9)                       # pass 1: conv + stats

    s = st.sum(axis=(0, 1))                        # (2, Cop) -- O(C) XLA reduce
    cnt = float(N * H * W)
    mean = s[0] / cnt
    var = jnp.maximum(s[1] / cnt - mean * mean, 0.0)   # biased batch variance
    gamma_p = jnp.pad(gamma.astype(jnp.float32), (0, Cop - cout))
    beta_p = jnp.pad(beta.astype(jnp.float32), (0, Cop - cout))
    scale = gamma_p * lax.rsqrt(var + BN_EPS)
    shift = beta_p - mean * scale

    return _bn_leaky_pool(y, scale, shift)         # pass 2: BN/act/pool


@jax.jit
def discriminator_forward(x, y, params):
    """Pix2Pix Discriminator forward.  x, y: (N, Cin, H, W) NCHW f32."""
    h = jnp.concatenate([x, y], axis=1)            # (N, 2*Cin, H, W)
    h = jnp.transpose(h, (0, 2, 3, 1))             # NHWC
    cin = h.shape[-1]
    h = jnp.pad(h, ((0, 0), (0, 0), (0, 0), (0, _round_up(cin, LANE) - cin)))
    h = h.astype(jnp.float32)

    # `initial` + CNNBlocks: identical structure, all stride-1 convs.
    for (w, _b_cancelled_by_bn, gamma, beta) in params["blocks"]:
        h = _cnn_block(h, w, gamma, beta)

    # Final Conv2d(features[-1], 1, 3, 1, 1) with bias, no BN/act/pool.
    wf, bf = params["final"]
    cout = wf.shape[0]
    Cop = _round_up(cout, LANE)
    w9 = _prep_w9(wf, h.shape[-1], Cop)
    bias = jnp.pad(bf.astype(jnp.float32), (0, Cop - cout)).reshape(1, Cop)
    xp = jnp.pad(h, ((0, 0), (1, 1), (1, 1), (0, 0))).astype(jnp.bfloat16)
    yout, _ = _conv3x3(xp, w9, bias=bias)          # (N, Hf, Wf, Cop)
    out = yout[..., :cout]                         # drop channel padding
    return jnp.transpose(out, (0, 3, 1, 2))        # back to NCHW


# --------------------------------------------------------------------------
# Pure-JAX (f32) reference matching the PyTorch module (training-mode BN)
# --------------------------------------------------------------------------
def _ref_cnn_block(x, w, b, gamma, beta):
    cout = w.shape[0]
    y = lax.conv_general_dilated(
        x, w, window_strides=(1, 1), padding=((1, 1), (1, 1)),
        dimension_numbers=("NCHW", "OIHW", "NCHW"))
    y = y + b.reshape(1, cout, 1, 1)
    mean = y.mean(axis=(0, 2, 3), keepdims=True)
    var = ((y - mean) ** 2).mean(axis=(0, 2, 3), keepdims=True)
    yn = (y - mean) / jnp.sqrt(var + BN_EPS)
    yn = yn * gamma.reshape(1, cout, 1, 1) + beta.reshape(1, cout, 1, 1)
    act = jnp.where(yn > 0, yn, LEAKY_SLOPE * yn)
    N, C, H, W = act.shape
    return act.reshape(N, C, H // 2, 2, W // 2, 2).max(axis=(3, 5))


def discriminator_reference(x, y, params):
    h = jnp.concatenate([x, y], axis=1)
    for (w, b, gamma, beta) in params["blocks"]:
        h = _ref_cnn_block(h, w, b, gamma, beta)
    wf, bf = params["final"]
    out = lax.conv_general_dilated(
        h, wf, window_strides=(1, 1), padding=((1, 1), (1, 1)),
        dimension_numbers=("NCHW", "OIHW", "NCHW"))
    return out + bf.reshape(1, -1, 1, 1)


# --------------------------------------------------------------------------
if __name__ == "__main__":
    N, in_channels, H, W = 2, 1, 16, 16
    features = [32, 64, 128]

    keys = jax.random.split(jax.random.PRNGKey(0), 16)
    x = jax.random.normal(keys[0], (N, in_channels, H, W), jnp.float32)
    y = jax.random.normal(keys[1], (N, in_channels, H, W), jnp.float32)

    blocks = []
    cin = in_channels * 2
    kidx = 2
    for feat in features:
        kw, kb, kg, kbt = keys[kidx:kidx + 4]
        kidx += 4
        w = 0.1 * jax.random.normal(kw, (feat, cin, 3, 3), jnp.float32)
        b = 0.1 * jax.random.normal(kb, (feat,), jnp.float32)
        gamma = 1.0 + 0.1 * jax.random.normal(kg, (feat,), jnp.float32)
        beta = 0.1 * jax.random.normal(kbt, (feat,), jnp.float32)
        blocks.append((w, b, gamma, beta))
        cin = feat
    wf = 0.1 * jax.random.normal(keys[kidx], (1, cin, 3, 3), jnp.float32)
    bf = 0.1 * jax.random.normal(keys[kidx + 1], (1,), jnp.float32)
    params = {"blocks": blocks, "final": (wf, bf)}

    out = discriminator_forward(x, y, params)
    out = jax.block_until_ready(out)

    ref = discriminator_reference(x, y, params)
    assert out.shape == ref.shape == (N, 1, H // 8, W // 8), out.shape
    err = float(jnp.max(jnp.abs(out - ref)))
    # Kernel runs the conv matmuls with bf16 operands (f32 accumulation) through
    # four stacked conv layers, so allow a few 1e-2 of slack vs the f32 reference.
    assert jnp.allclose(out, ref, atol=5e-2, rtol=5e-2), f"max abs err {err}"
    print("KERNEL_OK")
</pallas_src>

<mosaic_0001>
module attributes {stable_mosaic.version = 11 : i64} {
  func.func @_conv_bn_stats_kernel(%arg0: i32, %arg1: i32, %arg2: memref<1x1x18x128xbf16, #tpu.memory_space<vmem>>, %arg3: memref<1x1x18x128xbf16, #tpu.memory_space<vmem>>, %arg4: memref<1x1x18x128xbf16, #tpu.memory_space<vmem>>, %arg5: memref<9x128x128xbf16, #tpu.memory_space<vmem>>, %arg6: memref<1x1x16x128xf32, #tpu.memory_space<vmem>>, %arg7: memref<1x1x2x128xf32, #tpu.memory_space<vmem>>) attributes {dimension_semantics = [#tpu.dimension_semantics<parallel>, #tpu.dimension_semantics<parallel>], iteration_bounds = array<i64: 2, 16>, scalar_prefetch = 0 : i64, scratch_operands = 0 : i64, tpu.core_type = #tpu.core_type<tc>, window_params = [{transform_indices = @transform_0, window_bounds = array<i64: 1, 1, 18, 128>}, {transform_indices = @transform_1, window_bounds = array<i64: 1, 1, 18, 128>}, {transform_indices = @transform_2, window_bounds = array<i64: 1, 1, 18, 128>}, {pipeline_mode = #tpu.pipeline_mode<synchronous>, transform_indices = @transform_3, window_bounds = array<i64: 9, 128, 128>}, {transform_indices = @transform_4, window_bounds = array<i64: 1, 1, 16, 128>}, {transform_indices = @transform_5, window_bounds = array<i64: 1, 1, 2, 128>}]} {
    %cst = arith.constant 0.000000e+00 : f32
    %0 = vector.broadcast %cst : f32 to vector<16x128xf32>
    %c0 = arith.constant 0 : index
    %c0_0 = arith.constant 0 : index
    %c0_1 = arith.constant 0 : index
    %c0_2 = arith.constant 0 : index
    %1 = vector.load %arg2[%c0, %c0_0, %c0_1, %c0_2] : memref<1x1x18x128xbf16, #tpu.memory_space<vmem>>, vector<1x1x18x128xbf16>
    %2 = vector.shape_cast %1 : vector<1x1x18x128xbf16> to vector<18x128xbf16>
    %c0_3 = arith.constant 0 : index
    %c0_4 = arith.constant 0 : index
    %c0_5 = arith.constant 0 : index
    %c0_6 = arith.constant 0 : index
    %3 = vector.load %arg3[%c0_3, %c0_4, %c0_5, %c0_6] : memref<1x1x18x128xbf16, #tpu.memory_space<vmem>>, vector<1x1x18x128xbf16>
    %4 = vector.shape_cast %3 : vector<1x1x18x128xbf16> to vector<18x128xbf16>
    %c0_7 = arith.constant 0 : index
    %c0_8 = arith.constant 0 : index
    %c0_9 = arith.constant 0 : index
    %c0_10 = arith.constant 0 : index
    %5 = vector.load %arg4[%c0_7, %c0_8, %c0_9, %c0_10] : memref<1x1x18x128xbf16, #tpu.memory_space<vmem>>, vector<1x1x18x128xbf16>
    %6 = vector.shape_cast %5 : vector<1x1x18x128xbf16> to vector<18x128xbf16>
    %c0_11 = arith.constant 0 : index
    %c0_12 = arith.constant 0 : index
    %c0_13 = arith.constant 0 : index
    %7 = vector.load %arg5[%c0_11, %c0_12, %c0_13] : memref<9x128x128xbf16, #tpu.memory_space<vmem>>, vector<1x128x128xbf16>
    %8 = vector.shape_cast %7 : vector<1x128x128xbf16> to vector<128x128xbf16>
    %cst_14 = arith.constant dense<0.000000e+00> : vector<18x128xf32>
    %9 = tpu.matmul %2, %8, %cst_14 {dimension_numbers = #tpu.dot_dimension_numbers<[1], [0], [0], [1], [0, 0, 1, 1], [], []>} : vector<18x128xbf16>, vector<128x128xbf16>, vector<18x128xf32> -> vector<18x128xf32>
    %10 = vector.extract_strided_slice %9 {offsets = [0, 0], sizes = [16, 128], strides = [1, 1]} : vector<18x128xf32> to vector<16x128xf32>
    %11 = arith.addf %0, %10 : vector<16x128xf32>
    %c1 = arith.constant 1 : index
    %c0_15 = arith.constant 0 : index
    %c0_16 = arith.constant 0 : index
    %12 = vector.load %arg5[%c1, %c0_15, %c0_16] : memref<9x128x128xbf16, #tpu.memory_space<vmem>>, vector<1x128x128xbf16>
    %13 = vector.shape_cast %12 : vector<1x128x128xbf16> to vector<128x128xbf16>
    %cst_17 = arith.constant dense<0.000000e+00> : vector<18x128xf32>
    %14 = tpu.matmul %2, %13, %cst_17 {dimension_numbers = #tpu.dot_dimension_numbers<[1], [0], [0], [1], [0, 0, 1, 1], [], []>} : vector<18x128xbf16>, vector<128x128xbf16>, vector<18x128xf32> -> vector<18x128xf32>
    %15 = vector.extract_strided_slice %14 {offsets = [1, 0], sizes = [16, 128], strides = [1, 1]} : vector<18x128xf32> to vector<16x128xf32>
    %16 = arith.addf %11, %15 : vector<16x128xf32>
    %c2 = arith.constant 2 : index
    %c0_18 = arith.constant 0 : index
    %c0_19 = arith.constant 0 : index
    %17 = vector.load %arg5[%c2, %c0_18, %c0_19] : memref<9x128x128xbf16, #tpu.memory_space<vmem>>, vector<1x128x128xbf16>
    %18 = vector.shape_cast %17 : vector<1x128x128xbf16> to vector<128x128xbf16>
    %cst_20 = arith.constant dense<0.000000e+00> : vector<18x128xf32>
    %19 = tpu.matmul %2, %18, %cst_20 {dimension_numbers = #tpu.dot_dimension_numbers<[1], [0], [0], [1], [0, 0, 1, 1], [], []>} : vector<18x128xbf16>, vector<128x128xbf16>, vector<18x128xf32> -> vector<18x128xf32>
    %20 = vector.extract_strided_slice %19 {offsets = [2, 0], sizes = [16, 128], strides = [1, 1]} : vector<18x128xf32> to vector<16x128xf32>
    %21 = arith.addf %16, %20 : vector<16x128xf32>
    %c3 = arith.constant 3 : index
    %c0_21 = arith.constant 0 : index
    %c0_22 = arith.constant 0 : index
    %22 = vector.load %arg5[%c3, %c0_21, %c0_22] : memref<9x128x128xbf16, #tpu.memory_space<vmem>>, vector<1x128x128xbf16>
    %23 = vector.shape_cast %22 : vector<1x128x128xbf16> to vector<128x128xbf16>
    %cst_23 = arith.constant dense<0.000000e+00> : vector<18x128xf32>
    %24 = tpu.matmul %4, %23, %cst_23 {dimension_numbers = #tpu.dot_dimension_numbers<[1], [0], [0], [1], [0, 0, 1, 1], [], []>} : vector<18x128xbf16>, vector<128x128xbf16>, vector<18x128xf32> -> vector<18x128xf32>
    %25 = vector.extract_strided_slice %24 {offsets = [0, 0], sizes = [16, 128], strides = [1, 1]} : vector<18x128xf32> to vector<16x128xf32>
    %26 = arith.addf %21, %25 : vector<16x128xf32>
    %c4 = arith.constant 4 : index
    %c0_24 = arith.constant 0 : index
    %c0_25 = arith.constant 0 : index
    %27 = vector.load %arg5[%c4, %c0_24, %c0_25] : memref<9x128x128xbf16, #tpu.memory_space<vmem>>, vector<1x128x128xbf16>
    %28 = vector.shape_cast %27 : vector<1x128x128xbf16> to vector<128x128xbf16>
    %cst_26 = arith.constant dense<0.000000e+00> : vector<18x128xf32>
    %29 = tpu.matmul %4, %28, %cst_26 {dimension_numbers = #tpu.dot_dimension_numbers<[1], [0], [0], [1], [0, 0, 1, 1], [], []>} : vector<18x128xbf16>, vector<128x128xbf16>, vector<18x128xf32> -> vector<18x128xf32>
    %30 = vector.extract_strided_slice %29 {offsets = [1, 0], sizes = [16, 128], strides = [1, 1]} : vector<18x128xf32> to vector<16x128xf32>
    %31 = arith.addf %26, %30 : vector<16x128xf32>
    %c5 = arith.constant 5 : index
    %c0_27 = arith.constant 0 : index
    %c0_28 = arith.constant 0 : index
    %32 = vector.load %arg5[%c5, %c0_27, %c0_28] : memref<9x128x128xbf16, #tpu.memory_space<vmem>>, vector<1x128x128xbf16>
    %33 = vector.shape_cast %32 : vector<1x128x128xbf16> to vector<128x128xbf16>
    %cst_29 = arith.constant dense<0.000000e+00> : vector<18x128xf32>
    %34 = tpu.matmul %4, %33, %cst_29 {dimension_numbers = #tpu.dot_dimension_numbers<[1], [0], [0], [1], [0, 0, 1, 1], [], []>} : vector<18x128xbf16>, vector<128x128xbf16>, vector<18x128xf32> -> vector<18x128xf32>
    %35 = vector.extract_strided_slice %34 {offsets = [2, 0], sizes = [16, 128], strides = [1, 1]} : vector<18x128xf32> to vector<16x128xf32>
    %36 = arith.addf %31, %35 : vector<16x128xf32>
    %c6 = arith.constant 6 : index
    %c0_30 = arith.constant 0 : index
    %c0_31 = arith.constant 0 : index
    %37 = vector.load %arg5[%c6, %c0_30, %c0_31] : memref<9x128x128xbf16, #tpu.memory_space<vmem>>, vector<1x128x128xbf16>
    %38 = vector.shape_cast %37 : vector<1x128x128xbf16> to vector<128x128xbf16>
    %cst_32 = arith.constant dense<0.000000e+00> : vector<18x128xf32>
    %39 = tpu.matmul %6, %38, %cst_32 {dimension_numbers = #tpu.dot_dimension_numbers<[1], [0], [0], [1], [0, 0, 1, 1], [], []>} : vector<18x128xbf16>, vector<128x128xbf16>, vector<18x128xf32> -> vector<18x128xf32>
    %40 = vector.extract_strided_slice %39 {offsets = [0, 0], sizes = [16, 128], strides = [1, 1]} : vector<18x128xf32> to vector<16x128xf32>
    %41 = arith.addf %36, %40 : vector<16x128xf32>
    %c7 = arith.constant 7 : index
    %c0_33 = arith.constant 0 : index
    %c0_34 = arith.constant 0 : index
    %42 = vector.load %arg5[%c7, %c0_33, %c0_34] : memref<9x128x128xbf16, #tpu.memory_space<vmem>>, vector<1x128x128xbf16>
    %43 = vector.shape_cast %42 : vector<1x128x128xbf16> to vector<128x128xbf16>
    %cst_35 = arith.constant dense<0.000000e+00> : vector<18x128xf32>
    %44 = tpu.matmul %6, %43, %cst_35 {dimension_numbers = #tpu.dot_dimension_numbers<[1], [0], [0], [1], [0, 0, 1, 1], [], []>} : vector<18x128xbf16>, vector<128x128xbf16>, vector<18x128xf32> -> vector<18x128xf32>
    %45 = vector.extract_strided_slice %44 {offsets = [1, 0], sizes = [16, 128], strides = [1, 1]} : vector<18x128xf32> to vector<16x128xf32>
    %46 = arith.addf %41, %45 : vector<16x128xf32>
    %c8 = arith.constant 8 : index
    %c0_36 = arith.constant 0 : index
    %c0_37 = arith.constant 0 : index
    %47 = vector.load %arg5[%c8, %c0_36, %c0_37] : memref<9x128x128xbf16, #tpu.memory_space<vmem>>, vector<1x128x128xbf16>
    %48 = vector.shape_cast %47 : vector<1x128x128xbf16> to vector<128x128xbf16>
    %cst_38 = arith.constant dense<0.000000e+00> : vector<18x128xf32>
    %49 = tpu.matmul %6, %48, %cst_38 {dimension_numbers = #tpu.dot_dimension_numbers<[1], [0], [0], [1], [0, 0, 1, 1], [], []>} : vector<18x128xbf16>, vector<128x128xbf16>, vector<18x128xf32> -> vector<18x128xf32>
    %50 = vector.extract_strided_slice %49 {offsets = [2, 0], sizes = [16, 128], strides = [1, 1]} : vector<18x128xf32> to vector<16x128xf32>
    %51 = arith.addf %46, %50 : vector<16x128xf32>
    %c0_39 = arith.constant 0 : index
    %c0_40 = arith.constant 0 : index
    %c0_41 = arith.constant 0 : index
    %c0_42 = arith.constant 0 : index
    %52 = vector.load %arg6[%c0_39, %c0_40, %c0_41, %c0_42] : memref<1x1x16x128xf32, #tpu.memory_space<vmem>>, vector<1x1x16x128xf32>
    %53 = vector.shape_cast %52 : vector<1x1x16x128xf32> to vector<16x128xf32>
    %54 = vector.shape_cast %51 : vector<16x128xf32> to vector<1x1x16x128xf32>
    tpu.vector_store %arg6[%c0_39, %c0_40, %c0_41, %c0_42], %54 {strides = array<i32>} : memref<1x1x16x128xf32, #tpu.memory_space<vmem>>, vector<1x1x16x128xf32>,
    %cst_43 = arith.constant dense<0.000000e+00> : vector<128xf32>
    %55 = vector.multi_reduction <add>, %51, %cst_43 [0] : vector<16x128xf32> to vector<128xf32>
    %56 = vector.shape_cast %55 : vector<128xf32> to vector<1x128xf32>
    %c0_44 = arith.constant 0 : index
    %c0_45 = arith.constant 0 : index
    %c0_46 = arith.constant 0 : index
    %c0_47 = arith.constant 0 : index
    %57 = vector.load %arg7[%c0_44, %c0_45, %c0_46, %c0_47] : memref<1x1x2x128xf32, #tpu.memory_space<vmem>>, vector<1x1x1x128xf32>
    %58 = vector.shape_cast %57 : vector<1x1x1x128xf32> to vector<1x128xf32>
    %59 = vector.shape_cast %56 : vector<1x128xf32> to vector<1x1x1x128xf32>
    tpu.vector_store %arg7[%c0_44, %c0_45, %c0_46, %c0_47], %59 {strides = array<i32>} : memref<1x1x2x128xf32, #tpu.memory_space<vmem>>, vector<1x1x1x128xf32>,
    %60 = arith.mulf %51, %51 : vector<16x128xf32>
    %cst_48 = arith.constant dense<0.000000e+00> : vector<128xf32>
    %61 = vector.multi_reduction <add>, %60, %cst_48 [0] : vector<16x128xf32> to vector<128xf32>
    %62 = vector.shape_cast %61 : vector<128xf32> to vector<1x128xf32>
    %c0_49 = arith.constant 0 : index
    %c0_50 = arith.constant 0 : index
    %c1_51 = arith.constant 1 : index
    %c0_52 = arith.constant 0 : index
    %63 = vector.load %arg7[%c0_49, %c0_50, %c1_51, %c0_52] : memref<1x1x2x128xf32, #tpu.memory_space<vmem>>, vector<1x1x1x128xf32>
    %64 = vector.shape_cast %63 : vector<1x1x1x128xf32> to vector<1x128xf32>
    %65 = vector.shape_cast %62 : vector<1x128xf32> to vector<1x1x1x128xf32>
    tpu.vector_store %arg7[%c0_49, %c0_50, %c1_51, %c0_52], %65 {strides = array<i32>} : memref<1x1x2x128xf32, #tpu.memory_space<vmem>>, vector<1x1x1x128xf32>,
    return
  }
  func.func @transform_0(%arg0: i32, %arg1: i32) -> (i32, i32, i32, i32) {
    %c0_i32 = arith.constant 0 : i32
    %0 = arith.addi %arg1, %c0_i32 : i32
    %c0_i32_0 = arith.constant 0 : i32
    %c0_i32_1 = arith.constant 0 : i32
    %c0_i32_2 = arith.constant 0 : i32
    return %arg0, %0, %c0_i32_0, %c0_i32_1 : i32, i32, i32, i32
  }
  func.func @transform_1(%arg0: i32, %arg1: i32) -> (i32, i32, i32, i32) {
    %c1_i32 = arith.constant 1 : i32
    %0 = arith.addi %arg1, %c1_i32 : i32
    %c0_i32 = arith.constant 0 : i32
    %c0_i32_0 = arith.constant 0 : i32
    %c0_i32_1 = arith.constant 0 : i32
    return %arg0, %0, %c0_i32, %c0_i32_0 : i32, i32, i32, i32
  }
  func.func @transform_2(%arg0: i32, %arg1: i32) -> (i32, i32, i32, i32) {
    %c2_i32 = arith.constant 2 : i32
    %0 = arith.addi %arg1, %c2_i32 : i32
    %c0_i32 = arith.constant 0 : i32
    %c0_i32_0 = arith.constant 0 : i32
    %c0_i32_1 = arith.constant 0 : i32
    return %arg0, %0, %c0_i32, %c0_i32_0 : i32, i32, i32, i32
  }
  func.func @transform_3(%arg0: i32, %arg1: i32) -> (i32, i32, i32) {
    %c0_i32 = arith.constant 0 : i32
    %c0_i32_0 = arith.constant 0 : i32
    %c0_i32_1 = arith.constant 0 : i32
    %c0_i32_2 = arith.constant 0 : i32
    return %c0_i32, %c0_i32_0, %c0_i32_1 : i32, i32, i32
  }
  func.func @transform_4(%arg0: i32, %arg1: i32) -> (i32, i32, i32, i32) {
    %c0_i32 = arith.constant 0 : i32
    %c0_i32_0 = arith.constant 0 : i32
    %c0_i32_1 = arith.constant 0 : i32
    return %arg0, %arg1, %c0_i32, %c0_i32_0 : i32, i32, i32, i32
  }
  func.func @transform_5(%arg0: i32, %arg1: i32) -> (i32, i32, i32, i32) {
    %c0_i32 = arith.constant 0 : i32
    %c0_i32_0 = arith.constant 0 : i32
    %c0_i32_1 = arith.constant 0 : i32
    return %arg0, %arg1, %c0_i32, %c0_i32_0 : i32, i32, i32, i32
  }
}

module attributes {stable_mosaic.version = 11 : i64} {
  func.func @_bn_leaky_pool_kernel(%arg0: i32, %arg1: memref<1x2x8x256xf32, #tpu.memory_space<vmem>>, %arg2: memref<1x256xf32, #tpu.memory_space<vmem>>, %arg3: memref<1x256xf32, #tpu.memory_space<vmem>>, %arg4: memref<1x8x128xf32, #tpu.memory_space<vmem>>) attributes {dimension_semantics = [#tpu.dimension_semantics<parallel>], iteration_bounds = array<i64: 16>, scalar_prefetch = 0 : i64, scratch_operands = 0 : i64, tpu.core_type = #tpu.core_type<tc>, window_params = [{transform_indices = @transform_0, window_bounds = array<i64: 1, 2, 8, 256>}, {pipeline_mode = #tpu.pipeline_mode<synchronous>, transform_indices = @transform_1, window_bounds = array<i64: 1, 256>}, {pipeline_mode = #tpu.pipeline_mode<synchronous>, transform_indices = @transform_2, window_bounds = array<i64: 1, 256>}, {transform_indices = @transform_3, window_bounds = array<i64: 1, 8, 128>}]} {
    %c0 = arith.constant 0 : index
    %c0_0 = arith.constant 0 : index
    %c0_1 = arith.constant 0 : index
    %c0_2 = arith.constant 0 : index
    %0 = vector.load %arg1[%c0, %c0_0, %c0_1, %c0_2] : memref<1x2x8x256xf32, #tpu.memory_space<vmem>>, vector<1x2x8x256xf32>
    %1 = vector.shape_cast %0 : vector<1x2x8x256xf32> to vector<2x8x256xf32>
    %c0_3 = arith.constant 0 : index
    %c0_4 = arith.constant 0 : index
    %2 = vector.load %arg2[%c0_3, %c0_4] : memref<1x256xf32, #tpu.memory_space<vmem>>, vector<1x256xf32>
    %3 = vector.shape_cast %2 : vector<1x256xf32> to vector<1x1x256xf32>
    %4 = vector.broadcast %3 : vector<1x1x256xf32> to vector<2x8x256xf32>
    %5 = arith.mulf %1, %4 : vector<2x8x256xf32>
    %c0_5 = arith.constant 0 : index
    %c0_6 = arith.constant 0 : index
    %6 = vector.load %arg3[%c0_5, %c0_6] : memref<1x256xf32, #tpu.memory_space<vmem>>, vector<1x256xf32>
    %7 = vector.shape_cast %6 : vector<1x256xf32> to vector<1x1x256xf32>
    %8 = vector.broadcast %7 : vector<1x1x256xf32> to vector<2x8x256xf32>
    %9 = arith.addf %5, %8 : vector<2x8x256xf32>
    %cst = arith.constant 0.000000e+00 : f32
    %10 = vector.broadcast %cst : f32 to vector<2x8x256xf32>
    %11 = arith.cmpf ogt, %9, %10 : vector<2x8x256xf32>
    %cst_7 = arith.constant 2.000000e-01 : f32
    %12 = vector.broadcast %cst_7 : f32 to vector<2x8x256xf32>
    %13 = arith.mulf %12, %9 : vector<2x8x256xf32>
    %14 = arith.select %11, %9, %13 : vector<2x8x256xi1>, vector<2x8x256xf32>
    %15 = vector.extract_strided_slice %14 {offsets = [0, 0, 0], sizes = [1, 8, 256], strides = [1, 1, 1]} : vector<2x8x256xf32> to vector<1x8x256xf32>
    %16 = vector.shape_cast %15 : vector<1x8x256xf32> to vector<8x256xf32>
    %17 = vector.extract_strided_slice %14 {offsets = [1, 0, 0], sizes = [1, 8, 256], strides = [1, 1, 1]} : vector<2x8x256xf32> to vector<1x8x256xf32>
    %18 = vector.shape_cast %17 : vector<1x8x256xf32> to vector<8x256xf32>
    %19 = arith.maximumf %16, %18 : vector<8x256xf32>
    %20 = vector.extract_strided_slice %19 {offsets = [0, 0], sizes = [8, 128], strides = [1, 1]} : vector<8x256xf32> to vector<8x128xf32>
    %21 = vector.extract_strided_slice %19 {offsets = [0, 128], sizes = [8, 128], strides = [1, 1]} : vector<8x256xf32> to vector<8x128xf32>
    %22 = arith.maximumf %20, %21 : vector<8x128xf32>
    %c0_8 = arith.constant 0 : index
    %c0_9 = arith.constant 0 : index
    %c0_10 = arith.constant 0 : index
    %23 = vector.load %arg4[%c0_8, %c0_9, %c0_10] : memref<1x8x128xf32, #tpu.memory_space<vmem>>, vector<1x8x128xf32>
    %24 = vector.shape_cast %23 : vector<1x8x128xf32> to vector<8x128xf32>
    %25 = vector.shape_cast %22 : vector<8x128xf32> to vector<1x8x128xf32>
    tpu.vector_store %arg4[%c0_8, %c0_9, %c0_10], %25 {strides = array<i32>} : memref<1x8x128xf32, #tpu.memory_space<vmem>>, vector<1x8x128xf32>,
    return
  }
  func.func @transform_0(%arg0: i32) -> (i32, i32, i32, i32) {
    %c0_i32 = arith.constant 0 : i32
    %c0_i32_0 = arith.constant 0 : i32
    %c0_i32_1 = arith.constant 0 : i32
    %c0_i32_2 = arith.constant 0 : i32
    return %arg0, %c0_i32, %c0_i32_0, %c0_i32_1 : i32, i32, i32, i32
  }
  func.func @transform_1(%arg0: i32) -> (i32, i32) {
    %c0_i32 = arith.constant 0 : i32
    %c0_i32_0 = arith.constant 0 : i32
    %c0_i32_1 = arith.constant 0 : i32
    return %c0_i32, %c0_i32_0 : i32, i32
  }
  func.func @transform_2(%arg0: i32) -> (i32, i32) {
    %c0_i32 = arith.constant 0 : i32
    %c0_i32_0 = arith.constant 0 : i32
    %c0_i32_1 = arith.constant 0 : i32
    return %c0_i32, %c0_i32_0 : i32, i32
  }
  func.func @transform_3(%arg0: i32) -> (i32, i32, i32) {
    %c0_i32 = arith.constant 0 : i32
    %c0_i32_0 = arith.constant 0 : i32
    %c0_i32_1 = arith.constant 0 : i32
    return %arg0, %c0_i32, %c0_i32_0 : i32, i32, i32
  }
}

module attributes {stable_mosaic.version = 11 : i64} {
  func.func @_conv_bn_stats_kernel(%arg0: i32, %arg1: i32, %arg2: memref<1x1x10x128xbf16, #tpu.memory_space<vmem>>, %arg3: memref<1x1x10x128xbf16, #tpu.memory_space<vmem>>, %arg4: memref<1x1x10x128xbf16, #tpu.memory_space<vmem>>, %arg5: memref<9x128x128xbf16, #tpu.memory_space<vmem>>, %arg6: memref<1x1x8x128xf32, #tpu.memory_space<vmem>>, %arg7: memref<1x1x2x128xf32, #tpu.memory_space<vmem>>) attributes {dimension_semantics = [#tpu.dimension_semantics<parallel>, #tpu.dimension_semantics<parallel>], iteration_bounds = array<i64: 2, 8>, scalar_prefetch = 0 : i64, scratch_operands = 0 : i64, tpu.core_type = #tpu.core_type<tc>, window_params = [{transform_indices = @transform_0, window_bounds = array<i64: 1, 1, 10, 128>}, {transform_indices = @transform_1, window_bounds = array<i64: 1, 1, 10, 128>}, {transform_indices = @transform_2, window_bounds = array<i64: 1, 1, 10, 128>}, {pipeline_mode = #tpu.pipeline_mode<synchronous>, transform_indices = @transform_3, window_bounds = array<i64: 9, 128, 128>}, {transform_indices = @transform_4, window_bounds = array<i64: 1, 1, 8, 128>}, {transform_indices = @transform_5, window_bounds = array<i64: 1, 1, 2, 128>}]} {
    %cst = arith.constant 0.000000e+00 : f32
    %0 = vector.broadcast %cst : f32 to vector<8x128xf32>
    %c0 = arith.constant 0 : index
    %c0_0 = arith.constant 0 : index
    %c0_1 = arith.constant 0 : index
    %c0_2 = arith.constant 0 : index
    %1 = vector.load %arg2[%c0, %c0_0, %c0_1, %c0_2] : memref<1x1x10x128xbf16, #tpu.memory_space<vmem>>, vector<1x1x10x128xbf16>
    %2 = vector.shape_cast %1 : vector<1x1x10x128xbf16> to vector<10x128xbf16>
    %c0_3 = arith.constant 0 : index
    %c0_4 = arith.constant 0 : index
    %c0_5 = arith.constant 0 : index
    %c0_6 = arith.constant 0 : index
    %3 = vector.load %arg3[%c0_3, %c0_4, %c0_5, %c0_6] : memref<1x1x10x128xbf16, #tpu.memory_space<vmem>>, vector<1x1x10x128xbf16>
    %4 = vector.shape_cast %3 : vector<1x1x10x128xbf16> to vector<10x128xbf16>
    %c0_7 = arith.constant 0 : index
    %c0_8 = arith.constant 0 : index
    %c0_9 = arith.constant 0 : index
    %c0_10 = arith.constant 0 : index
    %5 = vector.load %arg4[%c0_7, %c0_8, %c0_9, %c0_10] : memref<1x1x10x128xbf16, #tpu.memory_space<vmem>>, vector<1x1x10x128xbf16>
    %6 = vector.shape_cast %5 : vector<1x1x10x128xbf16> to vector<10x128xbf16>
    %c0_11 = arith.constant 0 : index
    %c0_12 = arith.constant 0 : index
    %c0_13 = arith.constant 0 : index
    %7 = vector.load %arg5[%c0_11, %c0_12, %c0_13] : memref<9x128x128xbf16, #tpu.memory_space<vmem>>, vector<1x128x128xbf16>
    %8 = vector.shape_cast %7 : vector<1x128x128xbf16> to vector<128x128xbf16>
    %cst_14 = arith.constant dense<0.000000e+00> : vector<10x128xf32>
    %9 = tpu.matmul %2, %8, %cst_14 {dimension_numbers = #tpu.dot_dimension_numbers<[1], [0], [0], [1], [0, 0, 1, 1], [], []>} : vector<10x128xbf16>, vector<128x128xbf16>, vector<10x128xf32> -> vector<10x128xf32>
    %10 = vector.extract_strided_slice %9 {offsets = [0, 0], sizes = [8, 128], strides = [1, 1]} : vector<10x128xf32> to vector<8x128xf32>
    %11 = arith.addf %0, %10 : vector<8x128xf32>
    %c1 = arith.constant 1 : index
    %c0_15 = arith.constant 0 : index
    %c0_16 = arith.constant 0 : index
    %12 = vector.load %arg5[%c1, %c0_15, %c0_16] : memref<9x128x128xbf16, #tpu.memory_space<vmem>>, vector<1x128x128xbf16>
    %13 = vector.shape_cast %12 : vector<1x128x128xbf16> to vector<128x128xbf16>
    %cst_17 = arith.constant dense<0.000000e+00> : vector<10x128xf32>
    %14 = tpu.matmul %2, %13, %cst_17 {dimension_numbers = #tpu.dot_dimension_numbers<[1], [0], [0], [1], [0, 0, 1, 1], [], []>} : vector<10x128xbf16>, vector<128x128xbf16>, vector<10x128xf32> -> vector<10x128xf32>
    %15 = vector.extract_strided_slice %14 {offsets = [1, 0], sizes = [8, 128], strides = [1, 1]} : vector<10x128xf32> to vector<8x128xf32>
    %16 = arith.addf %11, %15 : vector<8x128xf32>
    %c2 = arith.constant 2 : index
    %c0_18 = arith.constant 0 : index
    %c0_19 = arith.constant 0 : index
    %17 = vector.load %arg5[%c2, %c0_18, %c0_19] : memref<9x128x128xbf16, #tpu.memory_space<vmem>>, vector<1x128x128xbf16>
    %18 = vector.shape_cast %17 : vector<1x128x128xbf16> to vector<128x128xbf16>
    %cst_20 = arith.constant dense<0.000000e+00> : vector<10x128xf32>
    %19 = tpu.matmul %2, %18, %cst_20 {dimension_numbers = #tpu.dot_dimension_numbers<[1], [0], [0], [1], [0, 0, 1, 1], [], []>} : vector<10x128xbf16>, vector<128x128xbf16>, vector<10x128xf32> -> vector<10x128xf32>
    %20 = vector.extract_strided_slice %19 {offsets = [2, 0], sizes = [8, 128], strides = [1, 1]} : vector<10x128xf32> to vector<8x128xf32>
    %21 = arith.addf %16, %20 : vector<8x128xf32>
    %c3 = arith.constant 3 : index
    %c0_21 = arith.constant 0 : index
    %c0_22 = arith.constant 0 : index
    %22 = vector.load %arg5[%c3, %c0_21, %c0_22] : memref<9x128x128xbf16, #tpu.memory_space<vmem>>, vector<1x128x128xbf16>
    %23 = vector.shape_cast %22 : vector<1x128x128xbf16> to vector<128x128xbf16>
    %cst_23 = arith.constant dense<0.000000e+00> : vector<10x128xf32>
    %24 = tpu.matmul %4, %23, %cst_23 {dimension_numbers = #tpu.dot_dimension_numbers<[1], [0], [0], [1], [0, 0, 1, 1], [], []>} : vector<10x128xbf16>, vector<128x128xbf16>, vector<10x128xf32> -> vector<10x128xf32>
    %25 = vector.extract_strided_slice %24 {offsets = [0, 0], sizes = [8, 128], strides = [1, 1]} : vector<10x128xf32> to vector<8x128xf32>
    %26 = arith.addf %21, %25 : vector<8x128xf32>
    %c4 = arith.constant 4 : index
    %c0_24 = arith.constant 0 : index
    %c0_25 = arith.constant 0 : index
    %27 = vector.load %arg5[%c4, %c0_24, %c0_25] : memref<9x128x128xbf16, #tpu.memory_space<vmem>>, vector<1x128x128xbf16>
    %28 = vector.shape_cast %27 : vector<1x128x128xbf16> to vector<128x128xbf16>
    %cst_26 = arith.constant dense<0.000000e+00> : vector<10x128xf32>
    %29 = tpu.matmul %4, %28, %cst_26 {dimension_numbers = #tpu.dot_dimension_numbers<[1], [0], [0], [1], [0, 0, 1, 1], [], []>} : vector<10x128xbf16>, vector<128x128xbf16>, vector<10x128xf32> -> vector<10x128xf32>
    %30 = vector.extract_strided_slice %29 {offsets = [1, 0], sizes = [8, 128], strides = [1, 1]} : vector<10x128xf32> to vector<8x128xf32>
    %31 = arith.addf %26, %30 : vector<8x128xf32>
    %c5 = arith.constant 5 : index
    %c0_27 = arith.constant 0 : index
    %c0_28 = arith.constant 0 : index
    %32 = vector.load %arg5[%c5, %c0_27, %c0_28] : memref<9x128x128xbf16, #tpu.memory_space<vmem>>, vector<1x128x128xbf16>
    %33 = vector.shape_cast %32 : vector<1x128x128xbf16> to vector<128x128xbf16>
    %cst_29 = arith.constant dense<0.000000e+00> : vector<10x128xf32>
    %34 = tpu.matmul %4, %33, %cst_29 {dimension_numbers = #tpu.dot_dimension_numbers<[1], [0], [0], [1], [0, 0, 1, 1], [], []>} : vector<10x128xbf16>, vector<128x128xbf16>, vector<10x128xf32> -> vector<10x128xf32>
    %35 = vector.extract_strided_slice %34 {offsets = [2, 0], sizes = [8, 128], strides = [1, 1]} : vector<10x128xf32> to vector<8x128xf32>
    %36 = arith.addf %31, %35 : vector<8x128xf32>
    %c6 = arith.constant 6 : index
    %c0_30 = arith.constant 0 : index
    %c0_31 = arith.constant 0 : index
    %37 = vector.load %arg5[%c6, %c0_30, %c0_31] : memref<9x128x128xbf16, #tpu.memory_space<vmem>>, vector<1x128x128xbf16>
    %38 = vector.shape_cast %37 : vector<1x128x128xbf16> to vector<128x128xbf16>
    %cst_32 = arith.constant dense<0.000000e+00> : vector<10x128xf32>
    %39 = tpu.matmul %6, %38, %cst_32 {dimension_numbers = #tpu.dot_dimension_numbers<[1], [0], [0], [1], [0, 0, 1, 1], [], []>} : vector<10x128xbf16>, vector<128x128xbf16>, vector<10x128xf32> -> vector<10x128xf32>
    %40 = vector.extract_strided_slice %39 {offsets = [0, 0], sizes = [8, 128], strides = [1, 1]} : vector<10x128xf32> to vector<8x128xf32>
    %41 = arith.addf %36, %40 : vector<8x128xf32>
    %c7 = arith.constant 7 : index
    %c0_33 = arith.constant 0 : index
    %c0_34 = arith.constant 0 : index
    %42 = vector.load %arg5[%c7, %c0_33, %c0_34] : memref<9x128x128xbf16, #tpu.memory_space<vmem>>, vector<1x128x128xbf16>
    %43 = vector.shape_cast %42 : vector<1x128x128xbf16> to vector<128x128xbf16>
    %cst_35 = arith.constant dense<0.000000e+00> : vector<10x128xf32>
    %44 = tpu.matmul %6, %43, %cst_35 {dimension_numbers = #tpu.dot_dimension_numbers<[1], [0], [0], [1], [0, 0, 1, 1], [], []>} : vector<10x128xbf16>, vector<128x128xbf16>, vector<10x128xf32> -> vector<10x128xf32>
    %45 = vector.extract_strided_slice %44 {offsets = [1, 0], sizes = [8, 128], strides = [1, 1]} : vector<10x128xf32> to vector<8x128xf32>
    %46 = arith.addf %41, %45 : vector<8x128xf32>
    %c8 = arith.constant 8 : index
    %c0_36 = arith.constant 0 : index
    %c0_37 = arith.constant 0 : index
    %47 = vector.load %arg5[%c8, %c0_36, %c0_37] : memref<9x128x128xbf16, #tpu.memory_space<vmem>>, vector<1x128x128xbf16>
    %48 = vector.shape_cast %47 : vector<1x128x128xbf16> to vector<128x128xbf16>
    %cst_38 = arith.constant dense<0.000000e+00> : vector<10x128xf32>
    %49 = tpu.matmul %6, %48, %cst_38 {dimension_numbers = #tpu.dot_dimension_numbers<[1], [0], [0], [1], [0, 0, 1, 1], [], []>} : vector<10x128xbf16>, vector<128x128xbf16>, vector<10x128xf32> -> vector<10x128xf32>
    %50 = vector.extract_strided_slice %49 {offsets = [2, 0], sizes = [8, 128], strides = [1, 1]} : vector<10x128xf32> to vector<8x128xf32>
    %51 = arith.addf %46, %50 : vector<8x128xf32>
    %c0_39 = arith.constant 0 : index
    %c0_40 = arith.constant 0 : index
    %c0_41 = arith.constant 0 : index
    %c0_42 = arith.constant 0 : index
    %52 = vector.load %arg6[%c0_39, %c0_40, %c0_41, %c0_42] : memref<1x1x8x128xf32, #tpu.memory_space<vmem>>, vector<1x1x8x128xf32>
    %53 = vector.shape_cast %52 : vector<1x1x8x128xf32> to vector<8x128xf32>
    %54 = vector.shape_cast %51 : vector<8x128xf32> to vector<1x1x8x128xf32>
    tpu.vector_store %arg6[%c0_39, %c0_40, %c0_41, %c0_42], %54 {strides = array<i32>} : memref<1x1x8x128xf32, #tpu.memory_space<vmem>>, vector<1x1x8x128xf32>,
    %cst_43 = arith.constant dense<0.000000e+00> : vector<128xf32>
    %55 = vector.multi_reduction <add>, %51, %cst_43 [0] : vector<8x128xf32> to vector<128xf32>
    %56 = vector.shape_cast %55 : vector<128xf32> to vector<1x128xf32>
    %c0_44 = arith.constant 0 : index
    %c0_45 = arith.constant 0 : index
    %c0_46 = arith.constant 0 : index
    %c0_47 = arith.constant 0 : index
    %57 = vector.load %arg7[%c0_44, %c0_45, %c0_46, %c0_47] : memref<1x1x2x128xf32, #tpu.memory_space<vmem>>, vector<1x1x1x128xf32>
    %58 = vector.shape_cast %57 : vector<1x1x1x128xf32> to vector<1x128xf32>
    %59 = vector.shape_cast %56 : vector<1x128xf32> to vector<1x1x1x128xf32>
    tpu.vector_store %arg7[%c0_44, %c0_45, %c0_46, %c0_47], %59 {strides = array<i32>} : memref<1x1x2x128xf32, #tpu.memory_space<vmem>>, vector<1x1x1x128xf32>,
    %60 = arith.mulf %51, %51 : vector<8x128xf32>
    %cst_48 = arith.constant dense<0.000000e+00> : vector<128xf32>
    %61 = vector.multi_reduction <add>, %60, %cst_48 [0] : vector<8x128xf32> to vector<128xf32>
    %62 = vector.shape_cast %61 : vector<128xf32> to vector<1x128xf32>
    %c0_49 = arith.constant 0 : index
    %c0_50 = arith.constant 0 : index
    %c1_51 = arith.constant 1 : index
    %c0_52 = arith.constant 0 : index
    %63 = vector.load %arg7[%c0_49, %c0_50, %c1_51, %c0_52] : memref<1x1x2x128xf32, #tpu.memory_space<vmem>>, vector<1x1x1x128xf32>
    %64 = vector.shape_cast %63 : vector<1x1x1x128xf32> to vector<1x128xf32>
    %65 = vector.shape_cast %62 : vector<1x128xf32> to vector<1x1x1x128xf32>
    tpu.vector_store %arg7[%c0_49, %c0_50, %c1_51, %c0_52], %65 {strides = array<i32>} : memref<1x1x2x128xf32, #tpu.memory_space<vmem>>, vector<1x1x1x128xf32>,
    return
  }
  func.func @transform_0(%arg0: i32, %arg1: i32) -> (i32, i32, i32, i32) {
    %c0_i32 = arith.constant 0 : i32
    %0 = arith.addi %arg1, %c0_i32 : i32
    %c0_i32_0 = arith.constant 0 : i32
    %c0_i32_1 = arith.constant 0 : i32
    %c0_i32_2 = arith.constant 0 : i32
    return %arg0, %0, %c0_i32_0, %c0_i32_1 : i32, i32, i32, i32
  }
  func.func @transform_1(%arg0: i32, %arg1: i32) -> (i32, i32, i32, i32) {
    %c1_i32 = arith.constant 1 : i32
    %0 = arith.addi %arg1, %c1_i32 : i32
    %c0_i32 = arith.constant 0 : i32
    %c0_i32_0 = arith.constant 0 : i32
    %c0_i32_1 = arith.constant 0 : i32
    return %arg0, %0, %c0_i32, %c0_i32_0 : i32, i32, i32, i32
  }
  func.func @transform_2(%arg0: i32, %arg1: i32) -> (i32, i32, i32, i32) {
    %c2_i32 = arith.constant 2 : i32
    %0 = arith.addi %arg1, %c2_i32 : i32
    %c0_i32 = arith.constant 0 : i32
    %c0_i32_0 = arith.constant 0 : i32
    %c0_i32_1 = arith.constant 0 : i32
    return %arg0, %0, %c0_i32, %c0_i32_0 : i32, i32, i32, i32
  }
  func.func @transform_3(%arg0: i32, %arg1: i32) -> (i32, i32, i32) {
    %c0_i32 = arith.constant 0 : i32
    %c0_i32_0 = arith.constant 0 : i32
    %c0_i32_1 = arith.constant 0 : i32
    %c0_i32_2 = arith.constant 0 : i32
    return %c0_i32, %c0_i32_0, %c0_i32_1 : i32, i32, i32
  }
  func.func @transform_4(%arg0: i32, %arg1: i32) -> (i32, i32, i32, i32) {
    %c0_i32 = arith.constant 0 : i32
    %c0_i32_0 = arith.constant 0 : i32
    %c0_i32_1 = arith.constant 0 : i32
    return %arg0, %arg1, %c0_i32, %c0_i32_0 : i32, i32, i32, i32
  }
  func.func @transform_5(%arg0: i32, %arg1: i32) -> (i32, i32, i32, i32) {
    %c0_i32 = arith.constant 0 : i32
    %c0_i32_0 = arith.constant 0 : i32
    %c0_i32_1 = arith.constant 0 : i32
    return %arg0, %arg1, %c0_i32, %c0_i32_0 : i32, i32, i32, i32
  }
}

module attributes {stable_mosaic.version = 11 : i64} {
  func.func @_bn_leaky_pool_kernel(%arg0: i32, %arg1: memref<1x2x4x256xf32, #tpu.memory_space<vmem>>, %arg2: memref<1x256xf32, #tpu.memory_space<vmem>>, %arg3: memref<1x256xf32, #tpu.memory_space<vmem>>, %arg4: memref<1x4x128xf32, #tpu.memory_space<vmem>>) attributes {dimension_semantics = [#tpu.dimension_semantics<parallel>], iteration_bounds = array<i64: 8>, scalar_prefetch = 0 : i64, scratch_operands = 0 : i64, tpu.core_type = #tpu.core_type<tc>, window_params = [{transform_indices = @transform_0, window_bounds = array<i64: 1, 2, 4, 256>}, {pipeline_mode = #tpu.pipeline_mode<synchronous>, transform_indices = @transform_1, window_bounds = array<i64: 1, 256>}, {pipeline_mode = #tpu.pipeline_mode<synchronous>, transform_indices = @transform_2, window_bounds = array<i64: 1, 256>}, {transform_indices = @transform_3, window_bounds = array<i64: 1, 4, 128>}]} {
    %c0 = arith.constant 0 : index
    %c0_0 = arith.constant 0 : index
    %c0_1 = arith.constant 0 : index
    %c0_2 = arith.constant 0 : index
    %0 = vector.load %arg1[%c0, %c0_0, %c0_1, %c0_2] : memref<1x2x4x256xf32, #tpu.memory_space<vmem>>, vector<1x2x4x256xf32>
    %1 = vector.shape_cast %0 : vector<1x2x4x256xf32> to vector<2x4x256xf32>
    %c0_3 = arith.constant 0 : index
    %c0_4 = arith.constant 0 : index
    %2 = vector.load %arg2[%c0_3, %c0_4] : memref<1x256xf32, #tpu.memory_space<vmem>>, vector<1x256xf32>
    %3 = vector.shape_cast %2 : vector<1x256xf32> to vector<1x1x256xf32>
    %4 = vector.broadcast %3 : vector<1x1x256xf32> to vector<2x4x256xf32>
    %5 = arith.mulf %1, %4 : vector<2x4x256xf32>
    %c0_5 = arith.constant 0 : index
    %c0_6 = arith.constant 0 : index
    %6 = vector.load %arg3[%c0_5, %c0_6] : memref<1x256xf32, #tpu.memory_space<vmem>>, vector<1x256xf32>
    %7 = vector.shape_cast %6 : vector<1x256xf32> to vector<1x1x256xf32>
    %8 = vector.broadcast %7 : vector<1x1x256xf32> to vector<2x4x256xf32>
    %9 = arith.addf %5, %8 : vector<2x4x256xf32>
    %cst = arith.constant 0.000000e+00 : f32
    %10 = vector.broadcast %cst : f32 to vector<2x4x256xf32>
    %11 = arith.cmpf ogt, %9, %10 : vector<2x4x256xf32>
    %cst_7 = arith.constant 2.000000e-01 : f32
    %12 = vector.broadcast %cst_7 : f32 to vector<2x4x256xf32>
    %13 = arith.mulf %12, %9 : vector<2x4x256xf32>
    %14 = arith.select %11, %9, %13 : vector<2x4x256xi1>, vector<2x4x256xf32>
    %15 = vector.extract_strided_slice %14 {offsets = [0, 0, 0], sizes = [1, 4, 256], strides = [1, 1, 1]} : vector<2x4x256xf32> to vector<1x4x256xf32>
    %16 = vector.shape_cast %15 : vector<1x4x256xf32> to vector<4x256xf32>
    %17 = vector.extract_strided_slice %14 {offsets = [1, 0, 0], sizes = [1, 4, 256], strides = [1, 1, 1]} : vector<2x4x256xf32> to vector<1x4x256xf32>
    %18 = vector.shape_cast %17 : vector<1x4x256xf32> to vector<4x256xf32>
    %19 = arith.maximumf %16, %18 : vector<4x256xf32>
    %20 = vector.extract_strided_slice %19 {offsets = [0, 0], sizes = [4, 128], strides = [1, 1]} : vector<4x256xf32> to vector<4x128xf32>
    %21 = vector.extract_strided_slice %19 {offsets = [0, 128], sizes = [4, 128], strides = [1, 1]} : vector<4x256xf32> to vector<4x128xf32>
    %22 = arith.maximumf %20, %21 : vector<4x128xf32>
    %c0_8 = arith.constant 0 : index
    %c0_9 = arith.constant 0 : index
    %c0_10 = arith.constant 0 : index
    %23 = vector.load %arg4[%c0_8, %c0_9, %c0_10] : memref<1x4x128xf32, #tpu.memory_space<vmem>>, vector<1x4x128xf32>
    %24 = vector.shape_cast %23 : vector<1x4x128xf32> to vector<4x128xf32>
    %25 = vector.shape_cast %22 : vector<4x128xf32> to vector<1x4x128xf32>
    tpu.vector_store %arg4[%c0_8, %c0_9, %c0_10], %25 {strides = array<i32>} : memref<1x4x128xf32, #tpu.memory_space<vmem>>, vector<1x4x128xf32>,
    return
  }
  func.func @transform_0(%arg0: i32) -> (i32, i32, i32, i32) {
    %c0_i32 = arith.constant 0 : i32
    %c0_i32_0 = arith.constant 0 : i32
    %c0_i32_1 = arith.constant 0 : i32
    %c0_i32_2 = arith.constant 0 : i32
    return %arg0, %c0_i32, %c0_i32_0, %c0_i32_1 : i32, i32, i32, i32
  }
  func.func @transform_1(%arg0: i32) -> (i32, i32) {
    %c0_i32 = arith.constant 0 : i32
    %c0_i32_0 = arith.constant 0 : i32
    %c0_i32_1 = arith.constant 0 : i32
    return %c0_i32, %c0_i32_0 : i32, i32
  }
  func.func @transform_2(%arg0: i32) -> (i32, i32) {
    %c0_i32 = arith.constant 0 : i32
    %c0_i32_0 = arith.constant 0 : i32
    %c0_i32_1 = arith.constant 0 : i32
    return %c0_i32, %c0_i32_0 : i32, i32
  }
  func.func @transform_3(%arg0: i32) -> (i32, i32, i32) {
    %c0_i32 = arith.constant 0 : i32
    %c0_i32_0 = arith.constant 0 : i32
    %c0_i32_1 = arith.constant 0 : i32
    return %arg0, %c0_i32, %c0_i32_0 : i32, i32, i32
  }
}

module attributes {stable_mosaic.version = 11 : i64} {
  func.func @_conv_bn_stats_kernel(%arg0: i32, %arg1: i32, %arg2: memref<1x1x6x128xbf16, #tpu.memory_space<vmem>>, %arg3: memref<1x1x6x128xbf16, #tpu.memory_space<vmem>>, %arg4: memref<1x1x6x128xbf16, #tpu.memory_space<vmem>>, %arg5: memref<9x128x128xbf16, #tpu.memory_space<vmem>>, %arg6: memref<1x1x4x128xf32, #tpu.memory_space<vmem>>, %arg7: memref<1x1x2x128xf32, #tpu.memory_space<vmem>>) attributes {dimension_semantics = [#tpu.dimension_semantics<parallel>, #tpu.dimension_semantics<parallel>], iteration_bounds = array<i64: 2, 4>, scalar_prefetch = 0 : i64, scratch_operands = 0 : i64, tpu.core_type = #tpu.core_type<tc>, window_params = [{transform_indices = @transform_0, window_bounds = array<i64: 1, 1, 6, 128>}, {transform_indices = @transform_1, window_bounds = array<i64: 1, 1, 6, 128>}, {transform_indices = @transform_2, window_bounds = array<i64: 1, 1, 6, 128>}, {pipeline_mode = #tpu.pipeline_mode<synchronous>, transform_indices = @transform_3, window_bounds = array<i64: 9, 128, 128>}, {transform_indices = @transform_4, window_bounds = array<i64: 1, 1, 4, 128>}, {transform_indices = @transform_5, window_bounds = array<i64: 1, 1, 2, 128>}]} {
    %cst = arith.constant 0.000000e+00 : f32
    %0 = vector.broadcast %cst : f32 to vector<4x128xf32>
    %c0 = arith.constant 0 : index
    %c0_0 = arith.constant 0 : index
    %c0_1 = arith.constant 0 : index
    %c0_2 = arith.constant 0 : index
    %1 = vector.load %arg2[%c0, %c0_0, %c0_1, %c0_2] : memref<1x1x6x128xbf16, #tpu.memory_space<vmem>>, vector<1x1x6x128xbf16>
    %2 = vector.shape_cast %1 : vector<1x1x6x128xbf16> to vector<6x128xbf16>
    %c0_3 = arith.constant 0 : index
    %c0_4 = arith.constant 0 : index
    %c0_5 = arith.constant 0 : index
    %c0_6 = arith.constant 0 : index
    %3 = vector.load %arg3[%c0_3, %c0_4, %c0_5, %c0_6] : memref<1x1x6x128xbf16, #tpu.memory_space<vmem>>, vector<1x1x6x128xbf16>
    %4 = vector.shape_cast %3 : vector<1x1x6x128xbf16> to vector<6x128xbf16>
    %c0_7 = arith.constant 0 : index
    %c0_8 = arith.constant 0 : index
    %c0_9 = arith.constant 0 : index
    %c0_10 = arith.constant 0 : index
    %5 = vector.load %arg4[%c0_7, %c0_8, %c0_9, %c0_10] : memref<1x1x6x128xbf16, #tpu.memory_space<vmem>>, vector<1x1x6x128xbf16>
    %6 = vector.shape_cast %5 : vector<1x1x6x128xbf16> to vector<6x128xbf16>
    %c0_11 = arith.constant 0 : index
    %c0_12 = arith.constant 0 : index
    %c0_13 = arith.constant 0 : index
    %7 = vector.load %arg5[%c0_11, %c0_12, %c0_13] : memref<9x128x128xbf16, #tpu.memory_space<vmem>>, vector<1x128x128xbf16>
    %8 = vector.shape_cast %7 : vector<1x128x128xbf16> to vector<128x128xbf16>
    %cst_14 = arith.constant dense<0.000000e+00> : vector<6x128xf32>
    %9 = tpu.matmul %2, %8, %cst_14 {dimension_numbers = #tpu.dot_dimension_numbers<[1], [0], [0], [1], [0, 0, 1, 1], [], []>} : vector<6x128xbf16>, vector<128x128xbf16>, vector<6x128xf32> -> vector<6x128xf32>
    %10 = vector.extract_strided_slice %9 {offsets = [0, 0], sizes = [4, 128], strides = [1, 1]} : vector<6x128xf32> to vector<4x128xf32>
    %11 = arith.addf %0, %10 : vector<4x128xf32>
    %c1 = arith.constant 1 : index
    %c0_15 = arith.constant 0 : index
    %c0_16 = arith.constant 0 : index
    %12 = vector.load %arg5[%c1, %c0_15, %c0_16] : memref<9x128x128xbf16, #tpu.memory_space<vmem>>, vector<1x128x128xbf16>
    %13 = vector.shape_cast %12 : vector<1x128x128xbf16> to vector<128x128xbf16>
    %cst_17 = arith.constant dense<0.000000e+00> : vector<6x128xf32>
    %14 = tpu.matmul %2, %13, %cst_17 {dimension_numbers = #tpu.dot_dimension_numbers<[1], [0], [0], [1], [0, 0, 1, 1], [], []>} : vector<6x128xbf16>, vector<128x128xbf16>, vector<6x128xf32> -> vector<6x128xf32>
    %15 = vector.extract_strided_slice %14 {offsets = [1, 0], sizes = [4, 128], strides = [1, 1]} : vector<6x128xf32> to vector<4x128xf32>
    %16 = arith.addf %11, %15 : vector<4x128xf32>
    %c2 = arith.constant 2 : index
    %c0_18 = arith.constant 0 : index
    %c0_19 = arith.constant 0 : index
    %17 = vector.load %arg5[%c2, %c0_18, %c0_19] : memref<9x128x128xbf16, #tpu.memory_space<vmem>>, vector<1x128x128xbf16>
    %18 = vector.shape_cast %17 : vector<1x128x128xbf16> to vector<128x128xbf16>
    %cst_20 = arith.constant dense<0.000000e+00> : vector<6x128xf32>
    %19 = tpu.matmul %2, %18, %cst_20 {dimension_numbers = #tpu.dot_dimension_numbers<[1], [0], [0], [1], [0, 0, 1, 1], [], []>} : vector<6x128xbf16>, vector<128x128xbf16>, vector<6x128xf32> -> vector<6x128xf32>
    %20 = vector.extract_strided_slice %19 {offsets = [2, 0], sizes = [4, 128], strides = [1, 1]} : vector<6x128xf32> to vector<4x128xf32>
    %21 = arith.addf %16, %20 : vector<4x128xf32>
    %c3 = arith.constant 3 : index
    %c0_21 = arith.constant 0 : index
    %c0_22 = arith.constant 0 : index
    %22 = vector.load %arg5[%c3, %c0_21, %c0_22] : memref<9x128x128xbf16, #tpu.memory_space<vmem>>, vector<1x128x128xbf16>
    %23 = vector.shape_cast %22 : vector<1x128x128xbf16> to vector<128x128xbf16>
    %cst_23 = arith.constant dense<0.000000e+00> : vector<6x128xf32>
    %24 = tpu.matmul %4, %23, %cst_23 {dimension_numbers = #tpu.dot_dimension_numbers<[1], [0], [0], [1], [0, 0, 1, 1], [], []>} : vector<6x128xbf16>, vector<128x128xbf16>, vector<6x128xf32> -> vector<6x128xf32>
    %25 = vector.extract_strided_slice %24 {offsets = [0, 0], sizes = [4, 128], strides = [1, 1]} : vector<6x128xf32> to vector<4x128xf32>
    %26 = arith.addf %21, %25 : vector<4x128xf32>
    %c4 = arith.constant 4 : index
    %c0_24 = arith.constant 0 : index
    %c0_25 = arith.constant 0 : index
    %27 = vector.load %arg5[%c4, %c0_24, %c0_25] : memref<9x128x128xbf16, #tpu.memory_space<vmem>>, vector<1x128x128xbf16>
    %28 = vector.shape_cast %27 : vector<1x128x128xbf16> to vector<128x128xbf16>
    %cst_26 = arith.constant dense<0.000000e+00> : vector<6x128xf32>
    %29 = tpu.matmul %4, %28, %cst_26 {dimension_numbers = #tpu.dot_dimension_numbers<[1], [0], [0], [1], [0, 0, 1, 1], [], []>} : vector<6x128xbf16>, vector<128x128xbf16>, vector<6x128xf32> -> vector<6x128xf32>
    %30 = vector.extract_strided_slice %29 {offsets = [1, 0], sizes = [4, 128], strides = [1, 1]} : vector<6x128xf32> to vector<4x128xf32>
    %31 = arith.addf %26, %30 : vector<4x128xf32>
    %c5 = arith.constant 5 : index
    %c0_27 = arith.constant 0 : index
    %c0_28 = arith.constant 0 : index
    %32 = vector.load %arg5[%c5, %c0_27, %c0_28] : memref<9x128x128xbf16, #tpu.memory_space<vmem>>, vector<1x128x128xbf16>
    %33 = vector.shape_cast %32 : vector<1x128x128xbf16> to vector<128x128xbf16>
    %cst_29 = arith.constant dense<0.000000e+00> : vector<6x128xf32>
    %34 = tpu.matmul %4, %33, %cst_29 {dimension_numbers = #tpu.dot_dimension_numbers<[1], [0], [0], [1], [0, 0, 1, 1], [], []>} : vector<6x128xbf16>, vector<128x128xbf16>, vector<6x128xf32> -> vector<6x128xf32>
    %35 = vector.extract_strided_slice %34 {offsets = [2, 0], sizes = [4, 128], strides = [1, 1]} : vector<6x128xf32> to vector<4x128xf32>
    %36 = arith.addf %31, %35 : vector<4x128xf32>
    %c6 = arith.constant 6 : index
    %c0_30 = arith.constant 0 : index
    %c0_31 = arith.constant 0 : index
    %37 = vector.load %arg5[%c6, %c0_30, %c0_31] : memref<9x128x128xbf16, #tpu.memory_space<vmem>>, vector<1x128x128xbf16>
    %38 = vector.shape_cast %37 : vector<1x128x128xbf16> to vector<128x128xbf16>
    %cst_32 = arith.constant dense<0.000000e+00> : vector<6x128xf32>
    %39 = tpu.matmul %6, %38, %cst_32 {dimension_numbers = #tpu.dot_dimension_numbers<[1], [0], [0], [1], [0, 0, 1, 1], [], []>} : vector<6x128xbf16>, vector<128x128xbf16>, vector<6x128xf32> -> vector<6x128xf32>
    %40 = vector.extract_strided_slice %39 {offsets = [0, 0], sizes = [4, 128], strides = [1, 1]} : vector<6x128xf32> to vector<4x128xf32>
    %41 = arith.addf %36, %40 : vector<4x128xf32>
    %c7 = arith.constant 7 : index
    %c0_33 = arith.constant 0 : index
    %c0_34 = arith.constant 0 : index
    %42 = vector.load %arg5[%c7, %c0_33, %c0_34] : memref<9x128x128xbf16, #tpu.memory_space<vmem>>, vector<1x128x128xbf16>
    %43 = vector.shape_cast %42 : vector<1x128x128xbf16> to vector<128x128xbf16>
    %cst_35 = arith.constant dense<0.000000e+00> : vector<6x128xf32>
    %44 = tpu.matmul %6, %43, %cst_35 {dimension_numbers = #tpu.dot_dimension_numbers<[1], [0], [0], [1], [0, 0, 1, 1], [], []>} : vector<6x128xbf16>, vector<128x128xbf16>, vector<6x128xf32> -> vector<6x128xf32>
    %45 = vector.extract_strided_slice %44 {offsets = [1, 0], sizes = [4, 128], strides = [1, 1]} : vector<6x128xf32> to vector<4x128xf32>
    %46 = arith.addf %41, %45 : vector<4x128xf32>
    %c8 = arith.constant 8 : index
    %c0_36 = arith.constant 0 : index
    %c0_37 = arith.constant 0 : index
    %47 = vector.load %arg5[%c8, %c0_36, %c0_37] : memref<9x128x128xbf16, #tpu.memory_space<vmem>>, vector<1x128x128xbf16>
    %48 = vector.shape_cast %47 : vector<1x128x128xbf16> to vector<128x128xbf16>
    %cst_38 = arith.constant dense<0.000000e+00> : vector<6x128xf32>
    %49 = tpu.matmul %6, %48, %cst_38 {dimension_numbers = #tpu.dot_dimension_numbers<[1], [0], [0], [1], [0, 0, 1, 1], [], []>} : vector<6x128xbf16>, vector<128x128xbf16>, vector<6x128xf32> -> vector<6x128xf32>
    %50 = vector.extract_strided_slice %49 {offsets = [2, 0], sizes = [4, 128], strides = [1, 1]} : vector<6x128xf32> to vector<4x128xf32>
    %51 = arith.addf %46, %50 : vector<4x128xf32>
    %c0_39 = arith.constant 0 : index
    %c0_40 = arith.constant 0 : index
    %c0_41 = arith.constant 0 : index
    %c0_42 = arith.constant 0 : index
    %52 = vector.load %arg6[%c0_39, %c0_40, %c0_41, %c0_42] : memref<1x1x4x128xf32, #tpu.memory_space<vmem>>, vector<1x1x4x128xf32>
    %53 = vector.shape_cast %52 : vector<1x1x4x128xf32> to vector<4x128xf32>
    %54 = vector.shape_cast %51 : vector<4x128xf32> to vector<1x1x4x128xf32>
    tpu.vector_store %arg6[%c0_39, %c0_40, %c0_41, %c0_42], %54 {strides = array<i32>} : memref<1x1x4x128xf32, #tpu.memory_space<vmem>>, vector<1x1x4x128xf32>,
    %cst_43 = arith.constant dense<0.000000e+00> : vector<128xf32>
    %55 = vector.multi_reduction <add>, %51, %cst_43 [0] : vector<4x128xf32> to vector<128xf32>
    %56 = vector.shape_cast %55 : vector<128xf32> to vector<1x128xf32>
    %c0_44 = arith.constant 0 : index
    %c0_45 = arith.constant 0 : index
    %c0_46 = arith.constant 0 : index
    %c0_47 = arith.constant 0 : index
    %57 = vector.load %arg7[%c0_44, %c0_45, %c0_46, %c0_47] : memref<1x1x2x128xf32, #tpu.memory_space<vmem>>, vector<1x1x1x128xf32>
    %58 = vector.shape_cast %57 : vector<1x1x1x128xf32> to vector<1x128xf32>
    %59 = vector.shape_cast %56 : vector<1x128xf32> to vector<1x1x1x128xf32>
    tpu.vector_store %arg7[%c0_44, %c0_45, %c0_46, %c0_47], %59 {strides = array<i32>} : memref<1x1x2x128xf32, #tpu.memory_space<vmem>>, vector<1x1x1x128xf32>,
    %60 = arith.mulf %51, %51 : vector<4x128xf32>
    %cst_48 = arith.constant dense<0.000000e+00> : vector<128xf32>
    %61 = vector.multi_reduction <add>, %60, %cst_48 [0] : vector<4x128xf32> to vector<128xf32>
    %62 = vector.shape_cast %61 : vector<128xf32> to vector<1x128xf32>
    %c0_49 = arith.constant 0 : index
    %c0_50 = arith.constant 0 : index
    %c1_51 = arith.constant 1 : index
    %c0_52 = arith.constant 0 : index
    %63 = vector.load %arg7[%c0_49, %c0_50, %c1_51, %c0_52] : memref<1x1x2x128xf32, #tpu.memory_space<vmem>>, vector<1x1x1x128xf32>
    %64 = vector.shape_cast %63 : vector<1x1x1x128xf32> to vector<1x128xf32>
    %65 = vector.shape_cast %62 : vector<1x128xf32> to vector<1x1x1x128xf32>
    tpu.vector_store %arg7[%c0_49, %c0_50, %c1_51, %c0_52], %65 {strides = array<i32>} : memref<1x1x2x128xf32, #tpu.memory_space<vmem>>, vector<1x1x1x128xf32>,
    return
  }
  func.func @transform_0(%arg0: i32, %arg1: i32) -> (i32, i32, i32, i32) {
    %c0_i32 = arith.constant 0 : i32
    %0 = arith.addi %arg1, %c0_i32 : i32
    %c0_i32_0 = arith.constant 0 : i32
    %c0_i32_1 = arith.constant 0 : i32
    %c0_i32_2 = arith.constant 0 : i32
    return %arg0, %0, %c0_i32_0, %c0_i32_1 : i32, i32, i32, i32
  }
  func.func @transform_1(%arg0: i32, %arg1: i32) -> (i32, i32, i32, i32) {
    %c1_i32 = arith.constant 1 : i32
    %0 = arith.addi %arg1, %c1_i32 : i32
    %c0_i32 = arith.constant 0 : i32
    %c0_i32_0 = arith.constant 0 : i32
    %c0_i32_1 = arith.constant 0 : i32
    return %arg0, %0, %c0_i32, %c0_i32_0 : i32, i32, i32, i32
  }
  func.func @transform_2(%arg0: i32, %arg1: i32) -> (i32, i32, i32, i32) {
    %c2_i32 = arith.constant 2 : i32
    %0 = arith.addi %arg1, %c2_i32 : i32
    %c0_i32 = arith.constant 0 : i32
    %c0_i32_0 = arith.constant 0 : i32
    %c0_i32_1 = arith.constant 0 : i32
    return %arg0, %0, %c0_i32, %c0_i32_0 : i32, i32, i32, i32
  }
  func.func @transform_3(%arg0: i32, %arg1: i32) -> (i32, i32, i32) {
    %c0_i32 = arith.constant 0 : i32
    %c0_i32_0 = arith.constant 0 : i32
    %c0_i32_1 = arith.constant 0 : i32
    %c0_i32_2 = arith.constant 0 : i32
    return %c0_i32, %c0_i32_0, %c0_i32_1 : i32, i32, i32
  }
  func.func @transform_4(%arg0: i32, %arg1: i32) -> (i32, i32, i32, i32) {
    %c0_i32 = arith.constant 0 : i32
    %c0_i32_0 = arith.constant 0 : i32
    %c0_i32_1 = arith.constant 0 : i32
    return %arg0, %arg1, %c0_i32, %c0_i32_0 : i32, i32, i32, i32
  }
  func.func @transform_5(%arg0: i32, %arg1: i32) -> (i32, i32, i32, i32) {
    %c0_i32 = arith.constant 0 : i32
    %c0_i32_0 = arith.constant 0 : i32
    %c0_i32_1 = arith.constant 0 : i32
    return %arg0, %arg1, %c0_i32, %c0_i32_0 : i32, i32, i32, i32
  }
}

module attributes {stable_mosaic.version = 11 : i64} {
  func.func @_bn_leaky_pool_kernel(%arg0: i32, %arg1: memref<1x2x2x256xf32, #tpu.memory_space<vmem>>, %arg2: memref<1x256xf32, #tpu.memory_space<vmem>>, %arg3: memref<1x256xf32, #tpu.memory_space<vmem>>, %arg4: memref<1x2x128xf32, #tpu.memory_space<vmem>>) attributes {dimension_semantics = [#tpu.dimension_semantics<parallel>], iteration_bounds = array<i64: 4>, scalar_prefetch = 0 : i64, scratch_operands = 0 : i64, tpu.core_type = #tpu.core_type<tc>, window_params = [{transform_indices = @transform_0, window_bounds = array<i64: 1, 2, 2, 256>}, {pipeline_mode = #tpu.pipeline_mode<synchronous>, transform_indices = @transform_1, window_bounds = array<i64: 1, 256>}, {pipeline_mode = #tpu.pipeline_mode<synchronous>, transform_indices = @transform_2, window_bounds = array<i64: 1, 256>}, {transform_indices = @transform_3, window_bounds = array<i64: 1, 2, 128>}]} {
    %c0 = arith.constant 0 : index
    %c0_0 = arith.constant 0 : index
    %c0_1 = arith.constant 0 : index
    %c0_2 = arith.constant 0 : index
    %0 = vector.load %arg1[%c0, %c0_0, %c0_1, %c0_2] : memref<1x2x2x256xf32, #tpu.memory_space<vmem>>, vector<1x2x2x256xf32>
    %1 = vector.shape_cast %0 : vector<1x2x2x256xf32> to vector<2x2x256xf32>
    %c0_3 = arith.constant 0 : index
    %c0_4 = arith.constant 0 : index
    %2 = vector.load %arg2[%c0_3, %c0_4] : memref<1x256xf32, #tpu.memory_space<vmem>>, vector<1x256xf32>
    %3 = vector.shape_cast %2 : vector<1x256xf32> to vector<1x1x256xf32>
    %4 = vector.broadcast %3 : vector<1x1x256xf32> to vector<2x2x256xf32>
    %5 = arith.mulf %1, %4 : vector<2x2x256xf32>
    %c0_5 = arith.constant 0 : index
    %c0_6 = arith.constant 0 : index
    %6 = vector.load %arg3[%c0_5, %c0_6] : memref<1x256xf32, #tpu.memory_space<vmem>>, vector<1x256xf32>
    %7 = vector.shape_cast %6 : vector<1x256xf32> to vector<1x1x256xf32>
    %8 = vector.broadcast %7 : vector<1x1x256xf32> to vector<2x2x256xf32>
    %9 = arith.addf %5, %8 : vector<2x2x256xf32>
    %cst = arith.constant 0.000000e+00 : f32
    %10 = vector.broadcast %cst : f32 to vector<2x2x256xf32>
    %11 = arith.cmpf ogt, %9, %10 : vector<2x2x256xf32>
    %cst_7 = arith.constant 2.000000e-01 : f32
    %12 = vector.broadcast %cst_7 : f32 to vector<2x2x256xf32>
    %13 = arith.mulf %12, %9 : vector<2x2x256xf32>
    %14 = arith.select %11, %9, %13 : vector<2x2x256xi1>, vector<2x2x256xf32>
    %15 = vector.extract_strided_slice %14 {offsets = [0, 0, 0], sizes = [1, 2, 256], strides = [1, 1, 1]} : vector<2x2x256xf32> to vector<1x2x256xf32>
    %16 = vector.shape_cast %15 : vector<1x2x256xf32> to vector<2x256xf32>
    %17 = vector.extract_strided_slice %14 {offsets = [1, 0, 0], sizes = [1, 2, 256], strides = [1, 1, 1]} : vector<2x2x256xf32> to vector<1x2x256xf32>
    %18 = vector.shape_cast %17 : vector<1x2x256xf32> to vector<2x256xf32>
    %19 = arith.maximumf %16, %18 : vector<2x256xf32>
    %20 = vector.extract_strided_slice %19 {offsets = [0, 0], sizes = [2, 128], strides = [1, 1]} : vector<2x256xf32> to vector<2x128xf32>
    %21 = vector.extract_strided_slice %19 {offsets = [0, 128], sizes = [2, 128], strides = [1, 1]} : vector<2x256xf32> to vector<2x128xf32>
    %22 = arith.maximumf %20, %21 : vector<2x128xf32>
    %c0_8 = arith.constant 0 : index
    %c0_9 = arith.constant 0 : index
    %c0_10 = arith.constant 0 : index
    %23 = vector.load %arg4[%c0_8, %c0_9, %c0_10] : memref<1x2x128xf32, #tpu.memory_space<vmem>>, vector<1x2x128xf32>
    %24 = vector.shape_cast %23 : vector<1x2x128xf32> to vector<2x128xf32>
    %25 = vector.shape_cast %22 : vector<2x128xf32> to vector<1x2x128xf32>
    tpu.vector_store %arg4[%c0_8, %c0_9, %c0_10], %25 {strides = array<i32>} : memref<1x2x128xf32, #tpu.memory_space<vmem>>, vector<1x2x128xf32>,
    return
  }
  func.func @transform_0(%arg0: i32) -> (i32, i32, i32, i32) {
    %c0_i32 = arith.constant 0 : i32
    %c0_i32_0 = arith.constant 0 : i32
    %c0_i32_1 = arith.constant 0 : i32
    %c0_i32_2 = arith.constant 0 : i32
    return %arg0, %c0_i32, %c0_i32_0, %c0_i32_1 : i32, i32, i32, i32
  }
  func.func @transform_1(%arg0: i32) -> (i32, i32) {
    %c0_i32 = arith.constant 0 : i32
    %c0_i32_0 = arith.constant 0 : i32
    %c0_i32_1 = arith.constant 0 : i32
    return %c0_i32, %c0_i32_0 : i32, i32
  }
  func.func @transform_2(%arg0: i32) -> (i32, i32) {
    %c0_i32 = arith.constant 0 : i32
    %c0_i32_0 = arith.constant 0 : i32
    %c0_i32_1 = arith.constant 0 : i32
    return %c0_i32, %c0_i32_0 : i32, i32
  }
  func.func @transform_3(%arg0: i32) -> (i32, i32, i32) {
    %c0_i32 = arith.constant 0 : i32
    %c0_i32_0 = arith.constant 0 : i32
    %c0_i32_1 = arith.constant 0 : i32
    return %arg0, %c0_i32, %c0_i32_0 : i32, i32, i32
  }
}

module attributes {stable_mosaic.version = 11 : i64} {
  func.func @_conv_bias_kernel(%arg0: i32, %arg1: i32, %arg2: memref<1x1x4x128xbf16, #tpu.memory_space<vmem>>, %arg3: memref<1x1x4x128xbf16, #tpu.memory_space<vmem>>, %arg4: memref<1x1x4x128xbf16, #tpu.memory_space<vmem>>, %arg5: memref<9x128x128xbf16, #tpu.memory_space<vmem>>, %arg6: memref<1x128xf32, #tpu.memory_space<vmem>>, %arg7: memref<1x1x2x128xf32, #tpu.memory_space<vmem>>) attributes {dimension_semantics = [#tpu.dimension_semantics<parallel>, #tpu.dimension_semantics<parallel>], iteration_bounds = array<i64: 2, 2>, scalar_prefetch = 0 : i64, scratch_operands = 0 : i64, tpu.core_type = #tpu.core_type<tc>, window_params = [{transform_indices = @transform_0, window_bounds = array<i64: 1, 1, 4, 128>}, {transform_indices = @transform_1, window_bounds = array<i64: 1, 1, 4, 128>}, {transform_indices = @transform_2, window_bounds = array<i64: 1, 1, 4, 128>}, {pipeline_mode = #tpu.pipeline_mode<synchronous>, transform_indices = @transform_3, window_bounds = array<i64: 9, 128, 128>}, {pipeline_mode = #tpu.pipeline_mode<synchronous>, transform_indices = @transform_4, window_bounds = array<i64: 1, 128>}, {transform_indices = @transform_5, window_bounds = array<i64: 1, 1, 2, 128>}]} {
    %cst = arith.constant 0.000000e+00 : f32
    %0 = vector.broadcast %cst : f32 to vector<2x128xf32>
    %c0 = arith.constant 0 : index
    %c0_0 = arith.constant 0 : index
    %c0_1 = arith.constant 0 : index
    %c0_2 = arith.constant 0 : index
    %1 = vector.load %arg2[%c0, %c0_0, %c0_1, %c0_2] : memref<1x1x4x128xbf16, #tpu.memory_space<vmem>>, vector<1x1x4x128xbf16>
    %2 = vector.shape_cast %1 : vector<1x1x4x128xbf16> to vector<4x128xbf16>
    %c0_3 = arith.constant 0 : index
    %c0_4 = arith.constant 0 : index
    %c0_5 = arith.constant 0 : index
    %c0_6 = arith.constant 0 : index
    %3 = vector.load %arg3[%c0_3, %c0_4, %c0_5, %c0_6] : memref<1x1x4x128xbf16, #tpu.memory_space<vmem>>, vector<1x1x4x128xbf16>
    %4 = vector.shape_cast %3 : vector<1x1x4x128xbf16> to vector<4x128xbf16>
    %c0_7 = arith.constant 0 : index
    %c0_8 = arith.constant 0 : index
    %c0_9 = arith.constant 0 : index
    %c0_10 = arith.constant 0 : index
    %5 = vector.load %arg4[%c0_7, %c0_8, %c0_9, %c0_10] : memref<1x1x4x128xbf16, #tpu.memory_space<vmem>>, vector<1x1x4x128xbf16>
    %6 = vector.shape_cast %5 : vector<1x1x4x128xbf16> to vector<4x128xbf16>
    %c0_11 = arith.constant 0 : index
    %c0_12 = arith.constant 0 : index
    %c0_13 = arith.constant 0 : index
    %7 = vector.load %arg5[%c0_11, %c0_12, %c0_13] : memref<9x128x128xbf16, #tpu.memory_space<vmem>>, vector<1x128x128xbf16>
    %8 = vector.shape_cast %7 : vector<1x128x128xbf16> to vector<128x128xbf16>
    %cst_14 = arith.constant dense<0.000000e+00> : vector<4x128xf32>
    %9 = tpu.matmul %2, %8, %cst_14 {dimension_numbers = #tpu.dot_dimension_numbers<[1], [0], [0], [1], [0, 0, 1, 1], [], []>} : vector<4x128xbf16>, vector<128x128xbf16>, vector<4x128xf32> -> vector<4x128xf32>
    %10 = vector.extract_strided_slice %9 {offsets = [0, 0], sizes = [2, 128], strides = [1, 1]} : vector<4x128xf32> to vector<2x128xf32>
    %11 = arith.addf %0, %10 : vector<2x128xf32>
    %c1 = arith.constant 1 : index
    %c0_15 = arith.constant 0 : index
    %c0_16 = arith.constant 0 : index
    %12 = vector.load %arg5[%c1, %c0_15, %c0_16] : memref<9x128x128xbf16, #tpu.memory_space<vmem>>, vector<1x128x128xbf16>
    %13 = vector.shape_cast %12 : vector<1x128x128xbf16> to vector<128x128xbf16>
    %cst_17 = arith.constant dense<0.000000e+00> : vector<4x128xf32>
    %14 = tpu.matmul %2, %13, %cst_17 {dimension_numbers = #tpu.dot_dimension_numbers<[1], [0], [0], [1], [0, 0, 1, 1], [], []>} : vector<4x128xbf16>, vector<128x128xbf16>, vector<4x128xf32> -> vector<4x128xf32>
    %15 = vector.extract_strided_slice %14 {offsets = [1, 0], sizes = [2, 128], strides = [1, 1]} : vector<4x128xf32> to vector<2x128xf32>
    %16 = arith.addf %11, %15 : vector<2x128xf32>
    %c2 = arith.constant 2 : index
    %c0_18 = arith.constant 0 : index
    %c0_19 = arith.constant 0 : index
    %17 = vector.load %arg5[%c2, %c0_18, %c0_19] : memref<9x128x128xbf16, #tpu.memory_space<vmem>>, vector<1x128x128xbf16>
    %18 = vector.shape_cast %17 : vector<1x128x128xbf16> to vector<128x128xbf16>
    %cst_20 = arith.constant dense<0.000000e+00> : vector<4x128xf32>
    %19 = tpu.matmul %2, %18, %cst_20 {dimension_numbers = #tpu.dot_dimension_numbers<[1], [0], [0], [1], [0, 0, 1, 1], [], []>} : vector<4x128xbf16>, vector<128x128xbf16>, vector<4x128xf32> -> vector<4x128xf32>
    %20 = vector.extract_strided_slice %19 {offsets = [2, 0], sizes = [2, 128], strides = [1, 1]} : vector<4x128xf32> to vector<2x128xf32>
    %21 = arith.addf %16, %20 : vector<2x128xf32>
    %c3 = arith.constant 3 : index
    %c0_21 = arith.constant 0 : index
    %c0_22 = arith.constant 0 : index
    %22 = vector.load %arg5[%c3, %c0_21, %c0_22] : memref<9x128x128xbf16, #tpu.memory_space<vmem>>, vector<1x128x128xbf16>
    %23 = vector.shape_cast %22 : vector<1x128x128xbf16> to vector<128x128xbf16>
    %cst_23 = arith.constant dense<0.000000e+00> : vector<4x128xf32>
    %24 = tpu.matmul %4, %23, %cst_23 {dimension_numbers = #tpu.dot_dimension_numbers<[1], [0], [0], [1], [0, 0, 1, 1], [], []>} : vector<4x128xbf16>, vector<128x128xbf16>, vector<4x128xf32> -> vector<4x128xf32>
    %25 = vector.extract_strided_slice %24 {offsets = [0, 0], sizes = [2, 128], strides = [1, 1]} : vector<4x128xf32> to vector<2x128xf32>
    %26 = arith.addf %21, %25 : vector<2x128xf32>
    %c4 = arith.constant 4 : index
    %c0_24 = arith.constant 0 : index
    %c0_25 = arith.constant 0 : index
    %27 = vector.load %arg5[%c4, %c0_24, %c0_25] : memref<9x128x128xbf16, #tpu.memory_space<vmem>>, vector<1x128x128xbf16>
    %28 = vector.shape_cast %27 : vector<1x128x128xbf16> to vector<128x128xbf16>
    %cst_26 = arith.constant dense<0.000000e+00> : vector<4x128xf32>
    %29 = tpu.matmul %4, %28, %cst_26 {dimension_numbers = #tpu.dot_dimension_numbers<[1], [0], [0], [1], [0, 0, 1, 1], [], []>} : vector<4x128xbf16>, vector<128x128xbf16>, vector<4x128xf32> -> vector<4x128xf32>
    %30 = vector.extract_strided_slice %29 {offsets = [1, 0], sizes = [2, 128], strides = [1, 1]} : vector<4x128xf32> to vector<2x128xf32>
    %31 = arith.addf %26, %30 : vector<2x128xf32>
    %c5 = arith.constant 5 : index
    %c0_27 = arith.constant 0 : index
    %c0_28 = arith.constant 0 : index
    %32 = vector.load %arg5[%c5, %c0_27, %c0_28] : memref<9x128x128xbf16, #tpu.memory_space<vmem>>, vector<1x128x128xbf16>
    %33 = vector.shape_cast %32 : vector<1x128x128xbf16> to vector<128x128xbf16>
    %cst_29 = arith.constant dense<0.000000e+00> : vector<4x128xf32>
    %34 = tpu.matmul %4, %33, %cst_29 {dimension_numbers = #tpu.dot_dimension_numbers<[1], [0], [0], [1], [0, 0, 1, 1], [], []>} : vector<4x128xbf16>, vector<128x128xbf16>, vector<4x128xf32> -> vector<4x128xf32>
    %35 = vector.extract_strided_slice %34 {offsets = [2, 0], sizes = [2, 128], strides = [1, 1]} : vector<4x128xf32> to vector<2x128xf32>
    %36 = arith.addf %31, %35 : vector<2x128xf32>
    %c6 = arith.constant 6 : index
    %c0_30 = arith.constant 0 : index
    %c0_31 = arith.constant 0 : index
    %37 = vector.load %arg5[%c6, %c0_30, %c0_31] : memref<9x128x128xbf16, #tpu.memory_space<vmem>>, vector<1x128x128xbf16>
    %38 = vector.shape_cast %37 : vector<1x128x128xbf16> to vector<128x128xbf16>
    %cst_32 = arith.constant dense<0.000000e+00> : vector<4x128xf32>
    %39 = tpu.matmul %6, %38, %cst_32 {dimension_numbers = #tpu.dot_dimension_numbers<[1], [0], [0], [1], [0, 0, 1, 1], [], []>} : vector<4x128xbf16>, vector<128x128xbf16>, vector<4x128xf32> -> vector<4x128xf32>
    %40 = vector.extract_strided_slice %39 {offsets = [0, 0], sizes = [2, 128], strides = [1, 1]} : vector<4x128xf32> to vector<2x128xf32>
    %41 = arith.addf %36, %40 : vector<2x128xf32>
    %c7 = arith.constant 7 : index
    %c0_33 = arith.constant 0 : index
    %c0_34 = arith.constant 0 : index
    %42 = vector.load %arg5[%c7, %c0_33, %c0_34] : memref<9x128x128xbf16, #tpu.memory_space<vmem>>, vector<1x128x128xbf16>
    %43 = vector.shape_cast %42 : vector<1x128x128xbf16> to vector<128x128xbf16>
    %cst_35 = arith.constant dense<0.000000e+00> : vector<4x128xf32>
    %44 = tpu.matmul %6, %43, %cst_35 {dimension_numbers = #tpu.dot_dimension_numbers<[1], [0], [0], [1], [0, 0, 1, 1], [], []>} : vector<4x128xbf16>, vector<128x128xbf16>, vector<4x128xf32> -> vector<4x128xf32>
    %45 = vector.extract_strided_slice %44 {offsets = [1, 0], sizes = [2, 128], strides = [1, 1]} : vector<4x128xf32> to vector<2x128xf32>
    %46 = arith.addf %41, %45 : vector<2x128xf32>
    %c8 = arith.constant 8 : index
    %c0_36 = arith.constant 0 : index
    %c0_37 = arith.constant 0 : index
    %47 = vector.load %arg5[%c8, %c0_36, %c0_37] : memref<9x128x128xbf16, #tpu.memory_space<vmem>>, vector<1x128x128xbf16>
    %48 = vector.shape_cast %47 : vector<1x128x128xbf16> to vector<128x128xbf16>
    %cst_38 = arith.constant dense<0.000000e+00> : vector<4x128xf32>
    %49 = tpu.matmul %6, %48, %cst_38 {dimension_numbers = #tpu.dot_dimension_numbers<[1], [0], [0], [1], [0, 0, 1, 1], [], []>} : vector<4x128xbf16>, vector<128x128xbf16>, vector<4x128xf32> -> vector<4x128xf32>
    %50 = vector.extract_strided_slice %49 {offsets = [2, 0], sizes = [2, 128], strides = [1, 1]} : vector<4x128xf32> to vector<2x128xf32>
    %51 = arith.addf %46, %50 : vector<2x128xf32>
    %c0_39 = arith.constant 0 : index
    %c0_40 = arith.constant 0 : index
    %52 = vector.load %arg6[%c0_39, %c0_40] : memref<1x128xf32, #tpu.memory_space<vmem>>, vector<1x128xf32>
    %53 = vector.broadcast %52 : vector<1x128xf32> to vector<2x128xf32>
    %54 = arith.addf %51, %53 : vector<2x128xf32>
    %c0_41 = arith.constant 0 : index
    %c0_42 = arith.constant 0 : index
    %c0_43 = arith.constant 0 : index
    %c0_44 = arith.constant 0 : index
    %55 = vector.load %arg7[%c0_41, %c0_42, %c0_43, %c0_44] : memref<1x1x2x128xf32, #tpu.memory_space<vmem>>, vector<1x1x2x128xf32>
    %56 = vector.shape_cast %55 : vector<1x1x2x128xf32> to vector<2x128xf32>
    %57 = vector.shape_cast %54 : vector<2x128xf32> to vector<1x1x2x128xf32>
    tpu.vector_store %arg7[%c0_41, %c0_42, %c0_43, %c0_44], %57 {strides = array<i32>} : memref<1x1x2x128xf32, #tpu.memory_space<vmem>>, vector<1x1x2x128xf32>,
    return
  }
  func.func @transform_0(%arg0: i32, %arg1: i32) -> (i32, i32, i32, i32) {
    %c0_i32 = arith.constant 0 : i32
    %0 = arith.addi %arg1, %c0_i32 : i32
    %c0_i32_0 = arith.constant 0 : i32
    %c0_i32_1 = arith.constant 0 : i32
    %c0_i32_2 = arith.constant 0 : i32
    return %arg0, %0, %c0_i32_0, %c0_i32_1 : i32, i32, i32, i32
  }
  func.func @transform_1(%arg0: i32, %arg1: i32) -> (i32, i32, i32, i32) {
    %c1_i32 = arith.constant 1 : i32
    %0 = arith.addi %arg1, %c1_i32 : i32
    %c0_i32 = arith.constant 0 : i32
    %c0_i32_0 = arith.constant 0 : i32
    %c0_i32_1 = arith.constant 0 : i32
    return %arg0, %0, %c0_i32, %c0_i32_0 : i32, i32, i32, i32
  }
  func.func @transform_2(%arg0: i32, %arg1: i32) -> (i32, i32, i32, i32) {
    %c2_i32 = arith.constant 2 : i32
    %0 = arith.addi %arg1, %c2_i32 : i32
    %c0_i32 = arith.constant 0 : i32
    %c0_i32_0 = arith.constant 0 : i32
    %c0_i32_1 = arith.constant 0 : i32
    return %arg0, %0, %c0_i32, %c0_i32_0 : i32, i32, i32, i32
  }
  func.func @transform_3(%arg0: i32, %arg1: i32) -> (i32, i32, i32) {
    %c0_i32 = arith.constant 0 : i32
    %c0_i32_0 = arith.constant 0 : i32
    %c0_i32_1 = arith.constant 0 : i32
    %c0_i32_2 = arith.constant 0 : i32
    return %c0_i32, %c0_i32_0, %c0_i32_1 : i32, i32, i32
  }
  func.func @transform_4(%arg0: i32, %arg1: i32) -> (i32, i32) {
    %c0_i32 = arith.constant 0 : i32
    %c0_i32_0 = arith.constant 0 : i32
    %c0_i32_1 = arith.constant 0 : i32
    return %c0_i32, %c0_i32_0 : i32, i32
  }
  func.func @transform_5(%arg0: i32, %arg1: i32) -> (i32, i32, i32, i32) {
    %c0_i32 = arith.constant 0 : i32
    %c0_i32_0 = arith.constant 0 : i32
    %c0_i32_1 = arith.constant 0 : i32
    return %arg0, %arg1, %c0_i32, %c0_i32_0 : i32, i32, i32, i32
  }
}

</mosaic_0001>

<llo_original>
// kernel: discriminator_forward.8
$region0: #{discriminator_forward.8}
  #allocation0 [shape = 'u32[]', space=smem, size = 0x4, offset = 0x4, fixed_abs, tag = 'smem constant byte address 0x4 - core index']
  #allocation1 [shape = 'u32[144,128]{1,0:T(1,128)}', space=vmem, size = 0x12000, scoped, tag = 'internal scratch']
  %s0 = inlined_call_operand.vmem [shape: f32[16,2,8,256], index: 0, kind: input, shape index: {}]
  %s1 = inlined_call_operand.vmem [shape: f32[1,256], index: 1, kind: input, shape index: {}]
  %s2 = inlined_call_operand.vmem [shape: f32[1,256], index: 2, kind: input, shape index: {}]
  %s3 = inlined_call_operand.vmem [shape: f32[16,8,128], index: 3, kind: output, shape index: {}]
  %s4 = sld [smem:[#allocation0]]
  $region45: #{discriminator_forward.8} parent=0
    _
  %s6 = ssub.s32 1, %s4
  %s7 = scalar_select 0, %s6, %s4
  loop: start=0, step=1, limit=18
  $region2: #{discriminator_forward.8} parent=0 // loop_pre_header
    _
  $region3: #{discriminator_forward.8} parent=0 // loop_header
    %s9 = sphi 0, %s13
    %p10 = scmp.ge.s32.totalorder %s9, 18
    %s19 = sphi 0, %s21
    %s22 = sphi 0, %s19
    %s23 = sphi 0, %s22
    %s39 = sphi 0, %s23
    %s43 = sphi 0, %s43
    %s45 = sphi 0, %s43
    %s46 = sphi 0, %s45
    %s60 = sphi 0, %s46
    %s64 = sphi 0, %s64
    %s66 = sphi 0, %s64
    %s67 = sphi 0, %s66
    %s81 = sphi 0, %s67
    %s87 = sphi 0, %s89
    %s90 = sphi 0, %s87
    %s91 = sphi 0, %s90
    %s107 = sphi 0, %s91
  $region4: #{discriminator_forward.8} parent=0 // loop_header_branch
    %12 = sbr.rel (%p10) target = $region8
  $region5: #{discriminator_forward.8} parent=0 // loop_body
    %s14 = ssub.s32 %s9, 1
    %s15 = ssub.s32 %s9, 2
    %s16 = sadd.s32 %s9, 1
    %s17 = ssub.s32 %s9, %s16
    %p18 = scmp.eq.s32.totalorder %s17, 0
    %s20 = sadd.s32 %s19, 1
    %s21 = scalar_select %p18, %s19, %s20
    %p24 = pneg %p18
    %p25 = scmp.eq.s32.totalorder %s9, 15
    %p26 = por %p24, %p25
    %p27 = scmp.ne.s32.totalorder %s19, %s22
    %p28 = scmp.eq.s32.totalorder %s9, 0
    %p29 = por %p27, %p28
    %p30 = scmp.ne.s32.totalorder %s19, %s22
    %p31 = scmp.eq.s32.totalorder %s14, 15
    %p32 = por %p30, %p31
    %p33 = scmp.ne.s32.totalorder %s22, %s23
    %p34 = scmp.eq.s32.totalorder %s14, 0
    %p35 = por %p33, %p34
    %p36 = scmp.ne.s32.totalorder %s22, %s23
    %p37 = scmp.eq.s32.totalorder %s15, 15
    %p38 = por %p36, %p37
    %p40 = scmp.ne.s32.totalorder %s23, %s39
    %p41 = scmp.eq.s32.totalorder %s15, 0
    %p42 = por %p40, %p41
    %s44 = sadd.s32 %s43, 1
    %p47 = scmp.eq.s32.totalorder %s9, 15
    %p48 = scmp.ne.s32.totalorder %s43, %s45
    %p49 = scmp.eq.s32.totalorder %s9, 0
    %p50 = por %p48, %p49
    %p51 = scmp.ne.s32.totalorder %s43, %s45
    %p52 = scmp.eq.s32.totalorder %s14, 15
    %p53 = por %p51, %p52
    %p54 = scmp.ne.s32.totalorder %s45, %s46
    %p55 = scmp.eq.s32.totalorder %s14, 0
    %p56 = por %p54, %p55
    %p57 = scmp.ne.s32.totalorder %s45, %s46
    %p58 = scmp.eq.s32.totalorder %s15, 15
    %p59 = por %p57, %p58
    %p61 = scmp.ne.s32.totalorder %s46, %s60
    %p62 = scmp.eq.s32.totalorder %s15, 0
    %p63 = por %p61, %p62
    %s65 = sadd.s32 %s64, 1
    %p68 = scmp.eq.s32.totalorder %s9, 15
    %p69 = scmp.ne.s32.totalorder %s64, %s66
    %p70 = scmp.eq.s32.totalorder %s9, 0
    %p71 = por %p69, %p70
    %p72 = scmp.ne.s32.totalorder %s64, %s66
    %p73 = scmp.eq.s32.totalorder %s14, 15
    %p74 = por %p72, %p73
    %p75 = scmp.ne.s32.totalorder %s66, %s67
    %p76 = scmp.eq.s32.totalorder %s14, 0
    %p77 = por %p75, %p76
    %p78 = scmp.ne.s32.totalorder %s66, %s67
    %p79 = scmp.eq.s32.totalorder %s15, 15
    %p80 = por %p78, %p79
    %p82 = scmp.ne.s32.totalorder %s67, %s81
    %p83 = scmp.eq.s32.totalorder %s15, 0
    %p84 = por %p82, %p83
    %s85 = ssub.s32 %s9, %s16
    %p86 = scmp.eq.s32.totalorder %s85, 0
    %s88 = sadd.s32 %s87, 1
    %s89 = scalar_select %p86, %s87, %s88
    %p92 = pneg %p86
    %p93 = scmp.eq.s32.totalorder %s9, 15
    %p94 = por %p92, %p93
    %p95 = scmp.ne.s32.totalorder %s87, %s90
    %p96 = scmp.eq.s32.totalorder %s9, 0
    %p97 = por %p95, %p96
    %p98 = scmp.ne.s32.totalorder %s87, %s90
    %p99 = scmp.eq.s32.totalorder %s14, 15
    %p100 = por %p98, %p99
    %p101 = scmp.ne.s32.totalorder %s90, %s91
    %p102 = scmp.eq.s32.totalorder %s14, 0
    %p103 = por %p101, %p102
    %p104 = scmp.ne.s32.totalorder %s90, %s91
    %p105 = scmp.eq.s32.totalorder %s15, 15
    %p106 = por %p104, %p105
    %p108 = scmp.ne.s32.totalorder %s91, %s107
    %p109 = scmp.eq.s32.totalorder %s15, 0
    %p110 = por %p108, %p109
    %p111 = scmp.le.s32.totalorder 1, %s9
    %p112 = scmp.lt.s32.totalorder %s9, 17
    %p113 = pnand %p111, %p112
    %p114 = pneg %p113
    // Predicated region
    $region9: #{discriminator_forward.8} parent=5 // pred_check
      _
    $region10: #{discriminator_forward.8} parent=5 // pred_check_branch
      %116 = sbr.rel (%p113) target = $region12
    $region11: #{discriminator_forward.8} parent=5 // pred_region
      %s117 = ssub.s32 %s9, 1
      // Predicated region
      $region13: #{discriminator_forward.8} parent=11 // pred_check
        %p118 = pneg %p56
      $region14: #{discriminator_forward.8} parent=11 // pred_check_branch
        %120 = sbr.rel (%p118) target = $region16
      $region15: #{discriminator_forward.8} parent=11 // pred_region
        _
      $region16: #{discriminator_forward.8} parent=11 // pred_fallthru
        _
      // Predicated region
      $region17: #{discriminator_forward.8} parent=11 // pred_check
        %p121 = pneg %p77
      $region18: #{discriminator_forward.8} parent=11 // pred_check_branch
        %123 = sbr.rel (%p121) target = $region20
      $region19: #{discriminator_forward.8} parent=11 // pred_region
        _
      $region20: #{discriminator_forward.8} parent=11 // pred_fallthru
        _
    $region12: #{discriminator_forward.8} parent=5 // pred_fallthru
      _
    %p124 = scmp.lt.s32.totalorder %s9, 16
    // Predicated region
    $region21: #{discriminator_forward.8} parent=5 // pred_check
      %p125 = pneg %p124
    $region22: #{discriminator_forward.8} parent=5 // pred_check_branch
      %127 = sbr.rel (%p125) target = $region24
    $region23: #{discriminator_forward.8} parent=5 // pred_region
      // Predicated region
      $region25: #{discriminator_forward.8} parent=23 // pred_check
        %p128 = pneg %p29
      $region26: #{discriminator_forward.8} parent=23 // pred_check_branch
        %130 = sbr.rel (%p128) target = $region28
      $region27: #{discriminator_forward.8} parent=23 // pred_region
        %p131 = scmp.lt.s32.totalorder %s9, 15
        %s132 = scalar_select %p131, %s9, 15
        %s133 = smul.addr %s132, 4
        %s134 = smul.addr %s133, 8
        %s135 = scalar_lea.vmem %s0, %s134
      $region28: #{discriminator_forward.8} parent=23 // pred_fallthru
        _
    $region24: #{discriminator_forward.8} parent=5 // pred_fallthru
      _
    %p136 = scmp.le.s32.totalorder 1, %s9
    %p137 = scmp.lt.s32.totalorder %s9, 17
    %p138 = pnand %p136, %p137
    %p139 = pneg %p138
    // Predicated region
    $region29: #{discriminator_forward.8} parent=5 // pred_check
      _
    $region30: #{discriminator_forward.8} parent=5 // pred_check_branch
      %141 = sbr.rel (%p138) target = $region32
    $region31: #{discriminator_forward.8} parent=5 // pred_region
      %s142 = ssub.s32 %s9, 1
      %p143 = scmp.lt.s32.totalorder %s14, 15
      %s144 = scalar_select %p143, %s14, 15
      %s145 = smul.addr %s144, 4
      %s146 = smul.addr %s145, 8
      %s147 = scalar_lea.vmem %s0, %s146
      %p148 = pneg %p35
      %p149 = pneg %p32
      %p150 = pneg %p56
      %p151 = pneg %p53
      %p152 = pneg %p77
      %p153 = pneg %p74
      %p154 = pneg %p103
      %p155 = pneg %p100
      %p156 = scmp.lt.s32.totalorder %s14, 15
      %s157 = scalar_select %p156, %s14, 15
      %s158 = smul.addr %s157, 8
      %s159 = scalar_lea.vmem %s3, %s158
      %p160 = scmp.lt.s32.totalorder %s14, 15
      %s161 = scalar_select %p160, %s14, 15
      %s162 = smul.addr %s161, 4
      %s163 = smul.addr %s162, 8
      %s164 = scalar_lea.vmem %s0, %s163
      %p165 = scmp.lt.s32.totalorder %s14, 15
      %s166 = scalar_select %p165, %s14, 15
      %s167 = smul.addr %s166, 8
      %s168 = scalar_lea.vmem %s3, %s167
      %v169 = vld [vmem:[%s164] sm:$0xff]
      %v170 = vld [vmem:[%s164 + $0x8] sm:$0xff]
      %v171 = vld [vmem:[%s164 + $0x10] sm:$0xff]
      %v172 = vld [vmem:[%s164 + $0x18] sm:$0xff]
      %v173 = vld [vmem:[%s1] sm:$0x3]
      %v175 = vlaneseq
      %v176 = vshrl.u32 %v175, 7
      %v177 = vsub.s32 0, %v176
      %v178 = vrot.slane %v173, %v177
      %v179 = vlaneseq
      %v180 = vshrl.u32 %v179, 7
      %v181 = vsub.s32 1, %v180
      %v182 = vrot.slane %v173, %v181
      %v185 = vmul.f32 %v169, %v178
      %v186 = vmul.f32 %v170, %v182
      %v187 = vmul.f32 %v171, %v178
      %v188 = vmul.f32 %v172, %v182
      %v189 = vld [vmem:[%s2] sm:$0x3]
      %v191 = vlaneseq
      %v192 = vshrl.u32 %v191, 7
      %v193 = vsub.s32 0, %v192
      %v194 = vrot.slane %v189, %v193
      %v195 = vlaneseq
      %v196 = vshrl.u32 %v195, 7
      %v197 = vsub.s32 1, %v196
      %v198 = vrot.slane %v189, %v197
      %v201 = vadd.f32 %v185, %v194
      %v202 = vadd.f32 %v186, %v198
      %v203 = vadd.f32 %v187, %v194
      %v204 = vadd.f32 %v188, %v198
      %vm205 = vcmp.gt.f32.partialorder %v201, 0.0
      %vm206 = vcmp.gt.f32.partialorder %v202, 0.0
      %vm207 = vcmp.gt.f32.partialorder %v203, 0.0
      %vm208 = vcmp.gt.f32.partialorder %v204, 0.0
      %v209 = vmul.f32 %v201, 0.2
      %v210 = vmul.f32 %v202, 0.2
      %v211 = vmul.f32 %v203, 0.2
      %v212 = vmul.f32 %v204, 0.2
      %v213 = vsel %vm205, %v201, %v209
      %v214 = vsel %vm206, %v202, %v210
      %v215 = vsel %vm207, %v203, %v211
      %v216 = vsel %vm208, %v204, %v212
      %v217 = vmax.f32 %v213, %v215
      %v218 = vmax.f32 %v214, %v216
      %v219 = vmax.f32 %v217, %v218
      %220 = vst [vmem:[%s168] sm:$0xff] %v219
      %p221 = scmp.lt.s32.totalorder %s14, 15
      %s222 = scalar_select %p221, %s14, 15
      %s223 = smul.addr %s222, 8
      %s224 = scalar_lea.vmem %s3, %s223
      // Predicated region
      $region33: #{discriminator_forward.8} parent=31 // pred_check
        %p225 = pneg %p100
      $region34: #{discriminator_forward.8} parent=31 // pred_check_branch
        %227 = sbr.rel (%p225) target = $region36
      $region35: #{discriminator_forward.8} parent=31 // pred_region
        _
      $region36: #{discriminator_forward.8} parent=31 // pred_fallthru
        _
    $region32: #{discriminator_forward.8} parent=5 // pred_fallthru
      _
    %p228 = scmp.le.s32.totalorder 2, %s9
    // Predicated region
    $region37: #{discriminator_forward.8} parent=5 // pred_check
      %p229 = pneg %p228
    $region38: #{discriminator_forward.8} parent=5 // pred_check_branch
      %231 = sbr.rel (%p229) target = $region40
    $region39: #{discriminator_forward.8} parent=5 // pred_region
      %s232 = ssub.s32 %s9, 2
      // Predicated region
      $region41: #{discriminator_forward.8} parent=39 // pred_check
        %p233 = pneg %p106
      $region42: #{discriminator_forward.8} parent=39 // pred_check_branch
        %235 = sbr.rel (%p233) target = $region44
      $region43: #{discriminator_forward.8} parent=39 // pred_region
        %p236 = scmp.lt.s32.totalorder %s15, 15
        %s237 = scalar_select %p236, %s15, 15
        %s238 = smul.addr %s237, 8
        %s239 = scalar_lea.vmem %s3, %s238
      $region44: #{discriminator_forward.8} parent=39 // pred_fallthru
        _
    $region40: #{discriminator_forward.8} parent=5 // pred_fallthru
      _
  $region6: #{discriminator_forward.8} parent=0 // loop_footer
    %s13 = sadd.s32 1, %s9
  $region7: #{discriminator_forward.8} parent=0 // loop_footer_branch
    %8 = sbr.rel target = $region3
  $region8: #{discriminator_forward.8} parent=0 // loop_exit
    _

// kernel: discriminator_forward.7
$region0: #{discriminator_forward.7}
  #allocation0 [shape = 'u32[]', space=smem, size = 0x4, offset = 0x4, fixed_abs, tag = 'smem constant byte address 0x4 - core index']
  #allocation1 [shape = 'u32[144,128]{1,0:T(1,128)}', space=vmem, size = 0x12000, scoped, tag = 'internal scratch']
  %s0 = inlined_call_operand.vmem [shape: bf16[2,18,18,128], index: 0, kind: input, shape index: {}, may-alias: {0,1,2}]
  %s1 = inlined_call_operand.vmem [shape: bf16[2,18,18,128], index: 1, kind: input, shape index: {}, may-alias: {0,1,2}]
  %s2 = inlined_call_operand.vmem [shape: bf16[2,18,18,128], index: 2, kind: input, shape index: {}, may-alias: {0,1,2}]
  %s3 = inlined_call_operand.vmem [shape: bf16[9,128,128], index: 3, kind: input, shape index: {}]
  %s4 = inlined_call_operand.vmem [shape: f32[2,16,16,128], index: 4, kind: output, shape index: {0}]
  %s5 = inlined_call_operand.vmem [shape: f32[2,16,2,128], index: 5, kind: output, shape index: {1}]
  %6 = xla_tuple %s4, %s5
  %s7 = sld [smem:[#allocation0]]
  $region57: #{discriminator_forward.7} parent=0
    _
  %s9 = ssub.s32 1, %s7
  %s10 = scalar_select 0, %s9, %s7
  loop: start=0, step=1, limit=34
  $region2: #{discriminator_forward.7} parent=0 // loop_pre_header
    _
  $region3: #{discriminator_forward.7} parent=0 // loop_header
    %s12 = sphi 0, %s16
    %p13 = scmp.ge.s32.totalorder %s12, 34
    %s19 = sphi 0, %s31
    %s20 = sphi 0, %s27
    %s21 = sphi 0, %s19
    %s22 = sphi 0, %s20
    %s23 = sphi 0, %s21
    %s24 = sphi 0, %s22
    %s36 = sphi 0, %s38
    %s39 = sphi 0, %s36
    %s40 = sphi 0, %s39
    %s56 = sphi 0, %s40
    %s66 = sphi 0, %s68
    %s69 = sphi 0, %s66
    %s70 = sphi 0, %s69
    %s86 = sphi 0, %s70
    %s96 = sphi 0, %s98
    %s99 = sphi 0, %s96
    %s100 = sphi 0, %s99
    %s116 = sphi 0, %s100
    %s120 = sphi 0, %s120
    %s122 = sphi 0, %s120
    %s123 = sphi 0, %s122
    %s137 = sphi 0, %s123
    %s145 = sphi 0, %s147
    %s148 = sphi 0, %s145
    %s149 = sphi 0, %s148
    %s165 = sphi 0, %s149
    %s173 = sphi 0, %s175
    %s176 = sphi 0, %s173
    %s177 = sphi 0, %s176
    %s193 = sphi 0, %s177
  $region4: #{discriminator_forward.7} parent=0 // loop_header_branch
    %15 = sbr.rel (%p13) target = $region8
  $region5: #{discriminator_forward.7} parent=0 // loop_body
    %s17 = ssub.s32 %s12, 1
    %s18 = ssub.s32 %s12, 2
    %s25 = sadd.s32 1, %s20
    %p26 = scmp.ge.s32.totalorder %s25, 16
    %s27 = scalar_select %p26, 0, %s25
    %s28 = sadd.s32 1, %s19
    %s29 = scalar_select %p26, %s28, %s19
    %p30 = scmp.ge.s32.totalorder %s29, 2
    %s31 = scalar_select %p30, 0, %s29
    %s32 = ssub.s32 %s19, %s31
    %s33 = ssub.s32 %s20, %s27
    %s34 = sor.u32 %s32, %s33
    %p35 = scmp.eq.s32.totalorder %s34, 0
    %s37 = sadd.s32 %s36, 1
    %s38 = scalar_select %p35, %s36, %s37
    %p41 = pneg %p35
    %p42 = scmp.eq.s32.totalorder %s12, 31
    %p43 = por %p41, %p42
    %p44 = scmp.ne.s32.totalorder %s36, %s39
    %p45 = scmp.eq.s32.totalorder %s12, 0
    %p46 = por %p44, %p45
    %p47 = scmp.ne.s32.totalorder %s36, %s39
    %p48 = scmp.eq.s32.totalorder %s17, 31
    %p49 = por %p47, %p48
    %p50 = scmp.ne.s32.totalorder %s39, %s40
    %p51 = scmp.eq.s32.totalorder %s17, 0
    %p52 = por %p50, %p51
    %p53 = scmp.ne.s32.totalorder %s39, %s40
    %p54 = scmp.eq.s32.totalorder %s18, 31
    %p55 = por %p53, %p54
    %p57 = scmp.ne.s32.totalorder %s40, %s56
    %p58 = scmp.eq.s32.totalorder %s18, 0
    %p59 = por %p57, %p58
    %s60 = sadd.s32 %s20, 1
    %s61 = sadd.s32 %s27, 1
    %s62 = ssub.s32 %s19, %s31
    %s63 = ssub.s32 %s60, %s61
    %s64 = sor.u32 %s62, %s63
    %p65 = scmp.eq.s32.totalorder %s64, 0
    %s67 = sadd.s32 %s66, 1
    %s68 = scalar_select %p65, %s66, %s67
    %p71 = pneg %p65
    %p72 = scmp.eq.s32.totalorder %s12, 31
    %p73 = por %p71, %p72
    %p74 = scmp.ne.s32.totalorder %s66, %s69
    %p75 = scmp.eq.s32.totalorder %s12, 0
    %p76 = por %p74, %p75
    %p77 = scmp.ne.s32.totalorder %s66, %s69
    %p78 = scmp.eq.s32.totalorder %s17, 31
    %p79 = por %p77, %p78
    %p80 = scmp.ne.s32.totalorder %s69, %s70
    %p81 = scmp.eq.s32.totalorder %s17, 0
    %p82 = por %p80, %p81
    %p83 = scmp.ne.s32.totalorder %s69, %s70
    %p84 = scmp.eq.s32.totalorder %s18, 31
    %p85 = por %p83, %p84
    %p87 = scmp.ne.s32.totalorder %s70, %s86
    %p88 = scmp.eq.s32.totalorder %s18, 0
    %p89 = por %p87, %p88
    %s90 = sadd.s32 %s20, 2
    %s91 = sadd.s32 %s27, 2
    %s92 = ssub.s32 %s19, %s31
    %s93 = ssub.s32 %s90, %s91
    %s94 = sor.u32 %s92, %s93
    %p95 = scmp.eq.s32.totalorder %s94, 0
    %s97 = sadd.s32 %s96, 1
    %s98 = scalar_select %p95, %s96, %s97
    %p101 = pneg %p95
    %p102 = scmp.eq.s32.totalorder %s12, 31
    %p103 = por %p101, %p102
    %p104 = scmp.ne.s32.totalorder %s96, %s99
    %p105 = scmp.eq.s32.totalorder %s12, 0
    %p106 = por %p104, %p105
    %p107 = scmp.ne.s32.totalorder %s96, %s99
    %p108 = scmp.eq.s32.totalorder %s17, 31
    %p109 = por %p107, %p108
    %p110 = scmp.ne.s32.totalorder %s99, %s100
    %p111 = scmp.eq.s32.totalorder %s17, 0
    %p112 = por %p110, %p111
    %p113 = scmp.ne.s32.totalorder %s99, %s100
    %p114 = scmp.eq.s32.totalorder %s18, 31
    %p115 = por %p113, %p114
    %p117 = scmp.ne.s32.totalorder %s100, %s116
    %p118 = scmp.eq.s32.totalorder %s18, 0
    %p119 = por %p117, %p118
    %s121 = sadd.s32 %s120, 1
    %p124 = scmp.eq.s32.totalorder %s12, 31
    %p125 = scmp.ne.s32.totalorder %s120, %s122
    %p126 = scmp.eq.s32.totalorder %s12, 0
    %p127 = por %p125, %p126
    %p128 = scmp.ne.s32.totalorder %s120, %s122
    %p129 = scmp.eq.s32.totalorder %s17, 31
    %p130 = por %p128, %p129
    %p131 = scmp.ne.s32.totalorder %s122, %s123
    %p132 = scmp.eq.s32.totalorder %s17, 0
    %p133 = por %p131, %p132
    %p134 = scmp.ne.s32.totalorder %s122, %s123
    %p135 = scmp.eq.s32.totalorder %s18, 31
    %p136 = por %p134, %p135
    %p138 = scmp.ne.s32.totalorder %s123, %s137
    %p139 = scmp.eq.s32.totalorder %s18, 0
    %p140 = por %p138, %p139
    %s141 = ssub.s32 %s19, %s31
    %s142 = ssub.s32 %s20, %s27
    %s143 = sor.u32 %s141, %s142
    %p144 = scmp.eq.s32.totalorder %s143, 0
    %s146 = sadd.s32 %s145, 1
    %s147 = scalar_select %p144, %s145, %s146
    %p150 = pneg %p144
    %p151 = scmp.eq.s32.totalorder %s12, 31
    %p152 = por %p150, %p151
    %p153 = scmp.ne.s32.totalorder %s145, %s148
    %p154 = scmp.eq.s32.totalorder %s12, 0
    %p155 = por %p153, %p154
    %p156 = scmp.ne.s32.totalorder %s145, %s148
    %p157 = scmp.eq.s32.totalorder %s17, 31
    %p158 = por %p156, %p157
    %p159 = scmp.ne.s32.totalorder %s148, %s149
    %p160 = scmp.eq.s32.totalorder %s17, 0
    %p161 = por %p159, %p160
    %p162 = scmp.ne.s32.totalorder %s148, %s149
    %p163 = scmp.eq.s32.totalorder %s18, 31
    %p164 = por %p162, %p163
    %p166 = scmp.ne.s32.totalorder %s149, %s165
    %p167 = scmp.eq.s32.totalorder %s18, 0
    %p168 = por %p166, %p167
    %s169 = ssub.s32 %s19, %s31
    %s170 = ssub.s32 %s20, %s27
    %s171 = sor.u32 %s169, %s170
    %p172 = scmp.eq.s32.totalorder %s171, 0
    %s174 = sadd.s32 %s173, 1
    %s175 = scalar_select %p172, %s173, %s174
    %p178 = pneg %p172
    %p179 = scmp.eq.s32.totalorder %s12, 31
    %p180 = por %p178, %p179
    %p181 = scmp.ne.s32.totalorder %s173, %s176
    %p182 = scmp.eq.s32.totalorder %s12, 0
    %p183 = por %p181, %p182
    %p184 = scmp.ne.s32.totalorder %s173, %s176
    %p185 = scmp.eq.s32.totalorder %s17, 31
    %p186 = por %p184, %p185
    %p187 = scmp.ne.s32.totalorder %s176, %s177
    %p188 = scmp.eq.s32.totalorder %s17, 0
    %p189 = por %p187, %p188
    %p190 = scmp.ne.s32.totalorder %s176, %s177
    %p191 = scmp.eq.s32.totalorder %s18, 31
    %p192 = por %p190, %p191
    %p194 = scmp.ne.s32.totalorder %s177, %s193
    %p195 = scmp.eq.s32.totalorder %s18, 0
    %p196 = por %p194, %p195
    %p197 = scmp.le.s32.totalorder 1, %s12
    %p198 = scmp.lt.s32.totalorder %s12, 33
    %p199 = pnand %p197, %p198
    %p200 = pneg %p199
    // Predicated region
    $region9: #{discriminator_forward.7} parent=5 // pred_check
      _
    $region10: #{discriminator_forward.7} parent=5 // pred_check_branch
      %202 = sbr.rel (%p199) target = $region12
    $region11: #{discriminator_forward.7} parent=5 // pred_region
      %s203 = ssub.s32 %s12, 1
      // Predicated region
      $region13: #{discriminator_forward.7} parent=11 // pred_check
        %p204 = pneg %p133
      $region14: #{discriminator_forward.7} parent=11 // pred_check_branch
        %206 = sbr.rel (%p204) target = $region16
      $region15: #{discriminator_forward.7} parent=11 // pred_region
        _
      $region16: #{discriminator_forward.7} parent=11 // pred_fallthru
        _
    $region12: #{discriminator_forward.7} parent=5 // pred_fallthru
      _
    %p207 = scmp.lt.s32.totalorder %s12, 32
    // Predicated region
    $region17: #{discriminator_forward.7} parent=5 // pred_check
      %p208 = pneg %p207
    $region18: #{discriminator_forward.7} parent=5 // pred_check_branch
      %210 = sbr.rel (%p208) target = $region20
    $region19: #{discriminator_forward.7} parent=5 // pred_region
      // Predicated region
      $region21: #{discriminator_forward.7} parent=19 // pred_check
        %p211 = pneg %p46
      $region22: #{discriminator_forward.7} parent=19 // pred_check_branch
        %213 = sbr.rel (%p211) target = $region24
      $region23: #{discriminator_forward.7} parent=19 // pred_region
        %p214 = scmp.lt.s32.totalorder %s19, 1
        %s215 = scalar_select %p214, %s19, 1
        %p216 = scmp.lt.s32.totalorder %s20, 17
        %s217 = scalar_select %p216, %s20, 17
        %s218 = smul.addr %s217, 3
        %s219 = smul.addr %s215, 54
        %s220 = sadd.s32 %s218, %s219
        %s221 = smul.addr %s220, 4
        %s222 = scalar_lea.vmem %s0, %s221
      $region24: #{discriminator_forward.7} parent=19 // pred_fallthru
        _
      // Predicated region
      $region25: #{discriminator_forward.7} parent=19 // pred_check
        %p223 = pneg %p76
      $region26: #{discriminator_forward.7} parent=19 // pred_check_branch
        %225 = sbr.rel (%p223) target = $region28
      $region27: #{discriminator_forward.7} parent=19 // pred_region
        %s226 = sadd.s32 %s20, 1
        %p227 = scmp.lt.s32.totalorder %s19, 1
        %s228 = scalar_select %p227, %s19, 1
        %p229 = scmp.lt.s32.totalorder %s226, 17
        %s230 = scalar_select %p229, %s226, 17
        %s231 = smul.addr %s230, 3
        %s232 = smul.addr %s228, 54
        %s233 = sadd.s32 %s231, %s232
        %s234 = smul.addr %s233, 4
        %s235 = scalar_lea.vmem %s1, %s234
        %s236 = sadd.s32 %s20, 1
      $region28: #{discriminator_forward.7} parent=19 // pred_fallthru
        _
      // Predicated region
      $region29: #{discriminator_forward.7} parent=19 // pred_check
        %p237 = pneg %p106
      $region30: #{discriminator_forward.7} parent=19 // pred_check_branch
        %239 = sbr.rel (%p237) target = $region32
      $region31: #{discriminator_forward.7} parent=19 // pred_region
        %s240 = sadd.s32 %s20, 2
        %p241 = scmp.lt.s32.totalorder %s19, 1
        %s242 = scalar_select %p241, %s19, 1
        %p243 = scmp.lt.s32.totalorder %s240, 17
        %s244 = scalar_select %p243, %s240, 17
        %s245 = smul.addr %s244, 3
        %s246 = smul.addr %s242, 54
        %s247 = sadd.s32 %s245, %s246
        %s248 = smul.addr %s247, 4
        %s249 = scalar_lea.vmem %s2, %s248
        %s250 = sadd.s32 %s20, 2
      $region32: #{discriminator_forward.7} parent=19 // pred_fallthru
        _
    $region20: #{discriminator_forward.7} parent=5 // pred_fallthru
      _
    %p251 = scmp.le.s32.totalorder 1, %s12
    %p252 = scmp.lt.s32.totalorder %s12, 33
    %p253 = pnand %p251, %p252
    %p254 = pneg %p253
    // Predicated region
    $region33: #{discriminator_forward.7} parent=5 // pred_check
      _
    $region34: #{discriminator_forward.7} parent=5 // pred_check_branch
      %256 = sbr.rel (%p253) target = $region36
    $region35: #{discriminator_forward.7} parent=5 // pred_region
      %s257 = ssub.s32 %s12, 1
      %p258 = scmp.lt.s32.totalorder %s21, 1
      %s259 = scalar_select %p258, %s21, 1
      %p260 = scmp.lt.s32.totalorder %s22, 17
      %s261 = scalar_select %p260, %s22, 17
      %s262 = smul.addr %s261, 3
      %s263 = smul.addr %s259, 54
      %s264 = sadd.s32 %s262, %s263
      %s265 = smul.addr %s264, 4
      %s266 = scalar_lea.vmem %s0, %s265
      %p267 = pneg %p52
      %p268 = pneg %p49
      %s269 = sadd.s32 %s22, 1
      %p270 = scmp.lt.s32.totalorder %s21, 1
      %s271 = scalar_select %p270, %s21, 1
      %p272 = scmp.lt.s32.totalorder %s269, 17
      %s273 = scalar_select %p272, %s269, 17
      %s274 = smul.addr %s273, 3
      %s275 = smul.addr %s271, 54
      %s276 = sadd.s32 %s274, %s275
      %s277 = smul.addr %s276, 4
      %s278 = scalar_lea.vmem %s1, %s277
      %p279 = pneg %p82
      %p280 = pneg %p79
      %s281 = sadd.s32 %s22, 2
      %p282 = scmp.lt.s32.totalorder %s21, 1
      %s283 = scalar_select %p282, %s21, 1
      %p284 = scmp.lt.s32.totalorder %s281, 17
      %s285 = scalar_select %p284, %s281, 17
      %s286 = smul.addr %s285, 3
      %s287 = smul.addr %s283, 54
      %s288 = sadd.s32 %s286, %s287
      %s289 = smul.addr %s288, 4
      %s290 = scalar_lea.vmem %s2, %s289
      %p291 = pneg %p112
      %p292 = pneg %p109
      %p293 = pneg %p133
      %p294 = pneg %p130
      %p295 = pneg %p161
      %p296 = pneg %p158
      %p297 = scmp.lt.s32.totalorder %s21, 1
      %s298 = scalar_select %p297, %s21, 1
      %p299 = scmp.lt.s32.totalorder %s22, 15
      %s300 = scalar_select %p299, %s22, 15
      %s301 = smul.addr %s300, 2
      %s302 = smul.addr %s298, 32
      %s303 = sadd.s32 %s301, %s302
      %s304 = smul.addr %s303, 8
      %s305 = scalar_lea.vmem %s4, %s304
      %p306 = pneg %p189
      %p307 = pneg %p186
      %p308 = scmp.lt.s32.totalorder %s21, 1
      %s309 = scalar_select %p308, %s21, 1
      %p310 = scmp.lt.s32.totalorder %s22, 15
      %s311 = scalar_select %p310, %s22, 15
      %s312 = smul.addr %s309, 16
      %s313 = sadd.s32 %s311, %s312
      %s314 = smul.addr %s313, 2
      %s315 = scalar_lea.vmem %s5, %s314
      %p316 = scmp.lt.s32.totalorder %s21, 1
      %s317 = scalar_select %p316, %s21, 1
      %p318 = scmp.lt.s32.totalorder %s22, 17
      %s319 = scalar_select %p318, %s22, 17
      %s320 = smul.addr %s319, 3
      %s321 = smul.addr %s317, 54
      %s322 = sadd.s32 %s320, %s321
      %s323 = smul.addr %s322, 4
      %s324 = scalar_lea.vmem %s0, %s323
      %s325 = sadd.s32 %s22, 1
      %p326 = scmp.lt.s32.totalorder %s21, 1
      %s327 = scalar_select %p326, %s21, 1
      %p328 = scmp.lt.s32.totalorder %s325, 17
      %s329 = scalar_select %p328, %s325, 17
      %s330 = smul.addr %s329, 3
      %s331 = smul.addr %s327, 54
      %s332 = sadd.s32 %s330, %s331
      %s333 = smul.addr %s332, 4
      %s334 = scalar_lea.vmem %s1, %s333
      %s335 = sadd.s32 %s22, 1
      %s336 = sadd.s32 %s22, 2
      %p337 = scmp.lt.s32.totalorder %s21, 1
      %s338 = scalar_select %p337, %s21, 1
      %p339 = scmp.lt.s32.totalorder %s336, 17
      %s340 = scalar_select %p339, %s336, 17
      %s341 = smul.addr %s340, 3
      %s342 = smul.addr %s338, 54
      %s343 = sadd.s32 %s341, %s342
      %s344 = smul.addr %s343, 4
      %s345 = scalar_lea.vmem %s2, %s344
      %s346 = sadd.s32 %s22, 2
      %p347 = scmp.lt.s32.totalorder %s21, 1
      %s348 = scalar_select %p347, %s21, 1
      %p349 = scmp.lt.s32.totalorder %s22, 15
      %s350 = scalar_select %p349, %s22, 15
      %s351 = smul.addr %s350, 2
      %s352 = smul.addr %s348, 32
      %s353 = sadd.s32 %s351, %s352
      %s354 = smul.addr %s353, 8
      %s355 = scalar_lea.vmem %s4, %s354
      %p356 = scmp.lt.s32.totalorder %s21, 1
      %s357 = scalar_select %p356, %s21, 1
      %p358 = scmp.lt.s32.totalorder %s22, 15
      %s359 = scalar_select %p358, %s22, 15
      %s360 = smul.addr %s357, 16
      %s361 = sadd.s32 %s359, %s360
      %s362 = smul.addr %s361, 2
      %s363 = scalar_lea.vmem %s5, %s362
      %v365 = vld [vmem:[%s324] sm:$0xf]
      %v366 = vld [vmem:[%s324 + $0x4] sm:$0xf]
      %v367 = vld [vmem:[%s324 + $0x8] sm:$0x1]
      %v368 = vld [vmem:[%s334] sm:$0xf]
      %v369 = vld [vmem:[%s334 + $0x4] sm:$0xf]
      %v370 = vld [vmem:[%s334 + $0x8] sm:$0x1]
      %v371 = vld [vmem:[%s345] sm:$0xf]
      %v372 = vld [vmem:[%s345 + $0x4] sm:$0xf]
      %v373 = vld [vmem:[%s345 + $0x8] sm:$0x1]
      %v374 = vld [vmem:[%s3] sm:$0xf]
      %v375 = vld [vmem:[%s3 + $0x4] sm:$0xf]
      %v376 = vld [vmem:[%s3 + $0x8] sm:$0xf]
      %v377 = vld [vmem:[%s3 + $0xc] sm:$0xf]
      %v378 = vld [vmem:[%s3 + $0x10] sm:$0xf]
      %v379 = vld [vmem:[%s3 + $0x14] sm:$0xf]
      %v380 = vld [vmem:[%s3 + $0x18] sm:$0xf]
      %v381 = vld [vmem:[%s3 + $0x1c] sm:$0xf]
      %v382 = vld [vmem:[%s3 + $0x20] sm:$0xf]
      %v383 = vld [vmem:[%s3 + $0x24] sm:$0xf]
      %v384 = vld [vmem:[%s3 + $0x28] sm:$0xf]
      %v385 = vld [vmem:[%s3 + $0x2c] sm:$0xf]
      %v386 = vld [vmem:[%s3 + $0x30] sm:$0xf]
      %v387 = vld [vmem:[%s3 + $0x34] sm:$0xf]
      %v388 = vld [vmem:[%s3 + $0x38] sm:$0xf]
      %v389 = vld [vmem:[%s3 + $0x3c] sm:$0xf]
      %v393 = vunpack.c.l.b16 %v365
      %v394 = vunpack.c.l.b16 %v366
      %v395 = vunpack.c.l.b16 %v367
      %v396 = vpack.c.b16 %v394, %v393
      %v397 = vpack.c.b16 %v395, %v395
      %v416 = vunpack.c.l.b16 %v374
      %v417 = vunpack.c.l.b16 %v375
      %v418 = vunpack.c.l.b16 %v376
      %v419 = vunpack.c.l.b16 %v377
      %v420 = vunpack.c.l.b16 %v378
      %v421 = vunpack.c.l.b16 %v379
      %v422 = vunpack.c.l.b16 %v380
      %v423 = vunpack.c.l.b16 %v381
      %v424 = vunpack.c.l.b16 %v382
      %v425 = vunpack.c.l.b16 %v383
      %v426 = vunpack.c.l.b16 %v384
      %v427 = vunpack.c.l.b16 %v385
      %v428 = vunpack.c.l.b16 %v386
      %v429 = vunpack.c.l.b16 %v387
      %v430 = vunpack.c.l.b16 %v388
      %v431 = vunpack.c.l.b16 %v389
      %v432 = vpack.c.b16 %v417, %v416
      %v433 = vpack.c.b16 %v419, %v418
      %v434 = vpack.c.b16 %v421, %v420
      %v435 = vpack.c.b16 %v423, %v422
      %v436 = vpack.c.b16 %v425, %v424
      %v437 = vpack.c.b16 %v427, %v426
      %v438 = vpack.c.b16 %v429, %v428
      %v439 = vpack.c.b16 %v431, %v430
      %448 = vmatprep.subr.bf16.mxu0 0
      %449 = vmatpush1.bf16.msra.mxu0 %v432
      %450 = vmatprep.subr.bf16.mxu0 0
      %451 = vmatpush1.bf16.msra.mxu0 %v433
      %452 = vmatprep.subr.bf16.mxu0 0
      %453 = vmatpush1.bf16.msra.mxu0 %v434
      %454 = vmatprep.subr.bf16.mxu0 0
      %455 = vmatpush1.bf16.msra.mxu0 %v435
      %456 = vmatprep.subr.bf16.mxu0 0
      %457 = vmatpush1.bf16.msra.mxu0 %v436
      %458 = vmatprep.subr.bf16.mxu0 0
      %459 = vmatpush1.bf16.msra.mxu0 %v437
      %460 = vmatprep.subr.bf16.mxu0 0
      %461 = vmatpush1.bf16.msra.mxu0 %v438
      %462 = vmatprep.subr.bf16.mxu0 0
      %463 = vmatpush1.bf16.msra.mxu0 %v439
      %464 = vmatprep.subr.bf16.mxu0 0
      %465 = vmatpush1.bf16.msra.mxu0 0
      %466 = vmatprep.subr.bf16.mxu0 0
      %467 = vmatpush1.bf16.msra.mxu0 0
      %468 = vmatprep.subr.bf16.mxu0 0
      %469 = vmatpush1.bf16.msra.mxu0 0
      %470 = vmatprep.subr.bf16.mxu0 0
      %471 = vmatpush1.bf16.msra.mxu0 0
      %472 = vmatprep.subr.bf16.mxu0 0
      %473 = vmatpush1.bf16.msra.mxu0 0
      %474 = vmatprep.subr.bf16.mxu0 0
      %475 = vmatpush1.bf16.msra.mxu0 0
      %476 = vmatprep.subr.bf16.mxu0 0
      %477 = vmatpush1.bf16.msra.mxu0 0
      %478 = vmatprep.subr.bf16.mxu0 0
      %479 = vmatpush1.bf16.msra.mxu0 0
      %480 = vmatprep.mubr.bf16.mxu0 0
      %481 = vmatmul.mubr.bf16.gmra.mrb[0].mxu0 %v396
      %v482 = vpop.f32.mrb[0].mxu0
      %v483 = vadd.f32 0.0, %v482
      %v484 = vpop.f32.mrb[0].mxu0
      %v485 = vpop.f32.mrb[0].mxu0
      %v486 = vadd.f32 0.0, %v485
      %v487 = vpop.f32.mrb[0].mxu0
      %488 = vmatprep.mubr.bf16.mxu0 0
      %489 = vmatmul.mubr.bf16.gmra.mrb[0].mxu0 %v397
      %v490 = vpop.f32.mrb[0].mxu0
      %v491 = vpop.f32.mrb[0].mxu0
      %v492 = vpop.f32.mrb[0].mxu0
      %v493 = vpop.f32.mrb[0].mxu0
      %494 = vdwg.mxu0
      %v495 = vadd.f32 %v483, 0.0
      %v496 = vadd.f32 %v486, 0.0
      %s497 = scalar_lea.vmem %s3, 64
      %v498 = vld [vmem:[%s497] sm:$0xf]
      %v499 = vld [vmem:[%s497 + $0x4] sm:$0xf]
      %v500 = vld [vmem:[%s497 + $0x8] sm:$0xf]
      %v501 = vld [vmem:[%s497 + $0xc] sm:$0xf]
      %v502 = vld [vmem:[%s497 + $0x10] sm:$0xf]
      %v503 = vld [vmem:[%s497 + $0x14] sm:$0xf]
      %v504 = vld [vmem:[%s497 + $0x18] sm:$0xf]
      %v505 = vld [vmem:[%s497 + $0x1c] sm:$0xf]
      %v506 = vld [vmem:[%s497 + $0x20] sm:$0xf]
      %v507 = vld [vmem:[%s497 + $0x24] sm:$0xf]
      %v508 = vld [vmem:[%s497 + $0x28] sm:$0xf]
      %v509 = vld [vmem:[%s497 + $0x2c] sm:$0xf]
      %v510 = vld [vmem:[%s497 + $0x30] sm:$0xf]
      %v511 = vld [vmem:[%s497 + $0x34] sm:$0xf]
      %v512 = vld [vmem:[%s497 + $0x38] sm:$0xf]
      %v513 = vld [vmem:[%s497 + $0x3c] sm:$0xf]
      %v530 = vunpack.c.l.b16 %v498
      %v531 = vunpack.c.l.b16 %v499
      %v532 = vunpack.c.l.b16 %v500
      %v533 = vunpack.c.l.b16 %v501
      %v534 = vunpack.c.l.b16 %v502
      %v535 = vunpack.c.l.b16 %v503
      %v536 = vunpack.c.l.b16 %v504
      %v537 = vunpack.c.l.b16 %v505
      %v538 = vunpack.c.l.b16 %v506
      %v539 = vunpack.c.l.b16 %v507
      %v540 = vunpack.c.l.b16 %v508
      %v541 = vunpack.c.l.b16 %v509
      %v542 = vunpack.c.l.b16 %v510
      %v543 = vunpack.c.l.b16 %v511
      %v544 = vunpack.c.l.b16 %v512
      %v545 = vunpack.c.l.b16 %v513
      %v546 = vpack.c.b16 %v531, %v530
      %v547 = vpack.c.b16 %v533, %v532
      %v548 = vpack.c.b16 %v535, %v534
      %v549 = vpack.c.b16 %v537, %v536
      %v550 = vpack.c.b16 %v539, %v538
      %v551 = vpack.c.b16 %v541, %v540
      %v552 = vpack.c.b16 %v543, %v542
      %v553 = vpack.c.b16 %v545, %v544
      %562 = vmatprep.subr.bf16.mxu0 0
      %563 = vmatpush1.bf16.msra.mxu0 %v546
      %564 = vmatprep.subr.bf16.mxu0 0
      %565 = vmatpush1.bf16.msra.mxu0 %v547
      %566 = vmatprep.subr.bf16.mxu0 0
      %567 = vmatpush1.bf16.msra.mxu0 %v548
      %568 = vmatprep.subr.bf16.mxu0 0
      %569 = vmatpush1.bf16.msra.mxu0 %v549
      %570 = vmatprep.subr.bf16.mxu0 0
      %571 = vmatpush1.bf16.msra.mxu0 %v550
      %572 = vmatprep.subr.bf16.mxu0 0
      %573 = vmatpush1.bf16.msra.mxu0 %v551
      %574 = vmatprep.subr.bf16.mxu0 0
      %575 = vmatpush1.bf16.msra.mxu0 %v552
      %576 = vmatprep.subr.bf16.mxu0 0
      %577 = vmatpush1.bf16.msra.mxu0 %v553
      %578 = vmatprep.subr.bf16.mxu0 0
      %579 = vmatpush1.bf16.msra.mxu0 0
      %580 = vmatprep.subr.bf16.mxu0 0
      %581 = vmatpush1.bf16.msra.mxu0 0
      %582 = vmatprep.subr.bf16.mxu0 0
      %583 = vmatpush1.bf16.msra.mxu0 0
      %584 = vmatprep.subr.bf16.mxu0 0
      %585 = vmatpush1.bf16.msra.mxu0 0
      %586 = vmatprep.subr.bf16.mxu0 0
      %587 = vmatpush1.bf16.msra.mxu0 0
      %588 = vmatprep.subr.bf16.mxu0 0
      %589 = vmatpush1.bf16.msra.mxu0 0
      %590 = vmatprep.subr.bf16.mxu0 0
      %591 = vmatpush1.bf16.msra.mxu0 0
      %592 = vmatprep.subr.bf16.mxu0 0
      %593 = vmatpush1.bf16.msra.mxu0 0
      %594 = vmatprep.mubr.bf16.mxu0 0
      %595 = vmatmul.mubr.bf16.gmra.mrb[0].mxu0 %v396
      %v596 = vpop.f32.mrb[0].mxu0
      %v597 = vadd.f32 0.0, %v596
      %v598 = vpop.f32.mrb[0].mxu0
      %v599 = vpop.f32.mrb[0].mxu0
      %v600 = vadd.f32 0.0, %v599
      %v601 = vpop.f32.mrb[0].mxu0
      %602 = vmatprep.mubr.bf16.mxu0 0
      %603 = vmatmul.mubr.bf16.gmra.mrb[0].mxu0 %v397
      %v604 = vpop.f32.mrb[0].mxu0
      %v605 = vadd.f32 0.0, %v604
      %v606 = vpop.f32.mrb[0].mxu0
      %v607 = vpop.f32.mrb[0].mxu0
      %v608 = vpop.f32.mrb[0].mxu0
      %609 = vdwg.mxu0
      %vm613 = vcmask 1046528
      %v614 = vrot.slane %v597, 1
      %v615 = vrot.slane %v600, 1
      %v616 = vsel %vm613, %v614, %v615
      %v617 = vrot.slane %v605, 1
      %v618 = vsel %vm613, %v615, %v617
      %v621 = vadd.f32 %v495, %v616
      %v622 = vadd.f32 %v496, %v618
      %s623 = scalar_lea.vmem %s3, 128
      %v624 = vld [vmem:[%s623] sm:$0xf]
      %v625 = vld [vmem:[%s623 + $0x4] sm:$0xf]
      %v626 = vld [vmem:[%s623 + $0x8] sm:$0xf]
      %v627 = vld [vmem:[%s623 + $0xc] sm:$0xf]
      %v628 = vld [vmem:[%s623 + $0x10] sm:$0xf]
      %v629 = vld [vmem:[%s623 + $0x14] sm:$0xf]
      %v630 = vld [vmem:[%s623 + $0x18] sm:$0xf]
      %v631 = vld [vmem:[%s623 + $0x1c] sm:$0xf]
      %v632 = vld [vmem:[%s623 + $0x20] sm:$0xf]
      %v633 = vld [vmem:[%s623 + $0x24] sm:$0xf]
      %v634 = vld [vmem:[%s623 + $0x28] sm:$0xf]
      %v635 = vld [vmem:[%s623 + $0x2c] sm:$0xf]
      %v636 = vld [vmem:[%s623 + $0x30] sm:$0xf]
      %v637 = vld [vmem:[%s623 + $0x34] sm:$0xf]
      %v638 = vld [vmem:[%s623 + $0x38] sm:$0xf]
      %v639 = vld [vmem:[%s623 + $0x3c] sm:$0xf]
      %v656 = vunpack.c.l.b16 %v624
      %v657 = vunpack.c.l.b16 %v625
      %v658 = vunpack.c.l.b16 %v626
      %v659 = vunpack.c.l.b16 %v627
      %v660 = vunpack.c.l.b16 %v628
      %v661 = vunpack.c.l.b16 %v629
      %v662 = vunpack.c.l.b16 %v630
      %v663 = vunpack.c.l.b16 %v631
      %v664 = vunpack.c.l.b16 %v632
      %v665 = vunpack.c.l.b16 %v633
      %v666 = vunpack.c.l.b16 %v634
      %v667 = vunpack.c.l.b16 %v635
      %v668 = vunpack.c.l.b16 %v636
      %v669 = vunpack.c.l.b16 %v637
      %v670 = vunpack.c.l.b16 %v638
      %v671 = vunpack.c.l.b16 %v639
      %v672 = vpack.c.b16 %v657, %v656
      %v673 = vpack.c.b16 %v659, %v658
      %v674 = vpack.c.b16 %v661, %v660
      %v675 = vpack.c.b16 %v663, %v662
      %v676 = vpack.c.b16 %v665, %v664
      %v677 = vpack.c.b16 %v667, %v666
      %v678 = vpack.c.b16 %v669, %v668
      %v679 = vpack.c.b16 %v671, %v670
      %688 = vmatprep.subr.bf16.mxu0 0
      %689 = vmatpush1.bf16.msra.mxu0 %v672
      %690 = vmatprep.subr.bf16.mxu0 0
      %691 = vmatpush1.bf16.msra.mxu0 %v673
      %692 = vmatprep.subr.bf16.mxu0 0
      %693 = vmatpush1.bf16.msra.mxu0 %v674
      %694 = vmatprep.subr.bf16.mxu0 0
      %695 = vmatpush1.bf16.msra.mxu0 %v675
      %696 = vmatprep.subr.bf16.mxu0 0
      %697 = vmatpush1.bf16.msra.mxu0 %v676
      %698 = vmatprep.subr.bf16.mxu0 0
      %699 = vmatpush1.bf16.msra.mxu0 %v677
      %700 = vmatprep.subr.bf16.mxu0 0
      %701 = vmatpush1.bf16.msra.mxu0 %v678
      %702 = vmatprep.subr.bf16.mxu0 0
      %703 = vmatpush1.bf16.msra.mxu0 %v679
      %704 = vmatprep.subr.bf16.mxu0 0
      %705 = vmatpush1.bf16.msra.mxu0 0
      %706 = vmatprep.subr.bf16.mxu0 0
      %707 = vmatpush1.bf16.msra.mxu0 0
      %708 = vmatprep.subr.bf16.mxu0 0
      %709 = vmatpush1.bf16.msra.mxu0 0
      %710 = vmatprep.subr.bf16.mxu0 0
      %711 = vmatpush1.bf16.msra.mxu0 0
      %712 = vmatprep.subr.bf16.mxu0 0
      %713 = vmatpush1.bf16.msra.mxu0 0
      %714 = vmatprep.subr.bf16.mxu0 0
      %715 = vmatpush1.bf16.msra.mxu0 0
      %716 = vmatprep.subr.bf16.mxu0 0
      %717 = vmatpush1.bf16.msra.mxu0 0
      %718 = vmatprep.subr.bf16.mxu0 0
      %719 = vmatpush1.bf16.msra.mxu0 0
      %720 = vmatprep.mubr.bf16.mxu0 0
      %721 = vmatmul.mubr.bf16.gmra.mrb[0].mxu0 %v396
      %v722 = vpop.f32.mrb[0].mxu0
      %v723 = vadd.f32 0.0, %v722
      %v724 = vpop.f32.mrb[0].mxu0
      %v725 = vpop.f32.mrb[0].mxu0
      %v726 = vadd.f32 0.0, %v725
      %v727 = vpop.f32.mrb[0].mxu0
      %728 = vmatprep.mubr.bf16.mxu0 0
      %729 = vmatmul.mubr.bf16.gmra.mrb[0].mxu0 %v397
      %v730 = vpop.f32.mrb[0].mxu0
      %v731 = vadd.f32 0.0, %v730
      %v732 = vpop.f32.mrb[0].mxu0
      %v733 = vpop.f32.mrb[0].mxu0
      %v734 = vpop.f32.mrb[0].mxu0
      %735 = vdwg.mxu0
      %vm739 = vcmask 1045504
      %v740 = vrot.slane %v723, 2
      %v741 = vrot.slane %v726, 2
      %v742 = vsel %vm739, %v740, %v741
      %v743 = vrot.slane %v731, 2
      %v744 = vsel %vm739, %v741, %v743
      %v747 = vadd.f32 %v621, %v742
      %v748 = vadd.f32 %v622, %v744
      %s749 = scalar_lea.vmem %s3, 192
      %v750 = vld [vmem:[%s749] sm:$0xf]
      %v751 = vld [vmem:[%s749 + $0x4] sm:$0xf]
      %v752 = vld [vmem:[%s749 + $0x8] sm:$0xf]
      %v753 = vld [vmem:[%s749 + $0xc] sm:$0xf]
      %v754 = vld [vmem:[%s749 + $0x10] sm:$0xf]
      %v755 = vld [vmem:[%s749 + $0x14] sm:$0xf]
      %v756 = vld [vmem:[%s749 + $0x18] sm:$0xf]
      %v757 = vld [vmem:[%s749 + $0x1c] sm:$0xf]
      %v758 = vld [vmem:[%s749 + $0x20] sm:$0xf]
      %v759 = vld [vmem:[%s749 + $0x24] sm:$0xf]
      %v760 = vld [vmem:[%s749 + $0x28] sm:$0xf]
      %v761 = vld [vmem:[%s749 + $0x2c] sm:$0xf]
      %v762 = vld [vmem:[%s749 + $0x30] sm:$0xf]
      %v763 = vld [vmem:[%s749 + $0x34] sm:$0xf]
      %v764 = vld [vmem:[%s749 + $0x38] sm:$0xf]
      %v765 = vld [vmem:[%s749 + $0x3c] sm:$0xf]
      %v769 = vunpack.c.l.b16 %v368
      %v770 = vunpack.c.l.b16 %v369
      %v771 = vunpack.c.l.b16 %v370
      %v772 = vpack.c.b16 %v770, %v769
      %v773 = vpack.c.b16 %v771, %v771
      %v792 = vunpack.c.l.b16 %v750
      %v793 = vunpack.c.l.b16 %v751
      %v794 = vunpack.c.l.b16 %v752
      %v795 = vunpack.c.l.b16 %v753
      %v796 = vunpack.c.l.b16 %v754
      %v797 = vunpack.c.l.b16 %v755
      %v798 = vunpack.c.l.b16 %v756
      %v799 = vunpack.c.l.b16 %v757
      %v800 = vunpack.c.l.b16 %v758
      %v801 = vunpack.c.l.b16 %v759
      %v802 = vunpack.c.l.b16 %v760
      %v803 = vunpack.c.l.b16 %v761
      %v804 = vunpack.c.l.b16 %v762
      %v805 = vunpack.c.l.b16 %v763
      %v806 = vunpack.c.l.b16 %v764
      %v807 = vunpack.c.l.b16 %v765
      %v808 = vpack.c.b16 %v793, %v792
      %v809 = vpack.c.b16 %v795, %v794
      %v810 = vpack.c.b16 %v797, %v796
      %v811 = vpack.c.b16 %v799, %v798
      %v812 = vpack.c.b16 %v801, %v800
      %v813 = vpack.c.b16 %v803, %v802
      %v814 = vpack.c.b16 %v805, %v804
      %v815 = vpack.c.b16 %v807, %v806
      %824 = vmatprep.subr.bf16.mxu0 0
      %825 = vmatpush1.bf16.msra.mxu0 %v808
      %826 = vmatprep.subr.bf16.mxu0 0
      %827 = vmatpush1.bf16.msra.mxu0 %v809
      %828 = vmatprep.subr.bf16.mxu0 0
      %829 = vmatpush1.bf16.msra.mxu0 %v810
      %830 = vmatprep.subr.bf16.mxu0 0
      %831 = vmatpush1.bf16.msra.mxu0 %v811
      %832 = vmatprep.subr.bf16.mxu0 0
      %833 = vmatpush1.bf16.msra.mxu0 %v812
      %834 = vmatprep.subr.bf16.mxu0 0
      %835 = vmatpush1.bf16.msra.mxu0 %v813
      %836 = vmatprep.subr.bf16.mxu0 0
      %837 = vmatpush1.bf16.msra.mxu0 %v814
      %838 = vmatprep.subr.bf16.mxu0 0
      %839 = vmatpush1.bf16.msra.mxu0 %v815
      %840 = vmatprep.subr.bf16.mxu0 0
      %841 = vmatpush1.bf16.msra.mxu0 0
      %842 = vmatprep.subr.bf16.mxu0 0
      %843 = vmatpush1.bf16.msra.mxu0 0
      %844 = vmatprep.subr.bf16.mxu0 0
      %845 = vmatpush1.bf16.msra.mxu0 0
      %846 = vmatprep.subr.bf16.mxu0 0
      %847 = vmatpush1.bf16.msra.mxu0 0
      %848 = vmatprep.subr.bf16.mxu0 0
      %849 = vmatpush1.bf16.msra.mxu0 0
      %850 = vmatprep.subr.bf16.mxu0 0
      %851 = vmatpush1.bf16.msra.mxu0 0
      %852 = vmatprep.subr.bf16.mxu0 0
      %853 = vmatpush1.bf16.msra.mxu0 0
      %854 = vmatprep.subr.bf16.mxu0 0
      %855 = vmatpush1.bf16.msra.mxu0 0
      %856 = vmatprep.mubr.bf16.mxu0 0
      %857 = vmatmul.mubr.bf16.gmra.mrb[0].mxu0 %v772
      %v858 = vpop.f32.mrb[0].mxu0
      %v859 = vadd.f32 0.0, %v858
      %v860 = vpop.f32.mrb[0].mxu0
      %v861 = vpop.f32.mrb[0].mxu0
      %v862 = vadd.f32 0.0, %v861
      %v863 = vpop.f32.mrb[0].mxu0
      %864 = vmatprep.mubr.bf16.mxu0 0
      %865 = vmatmul.mubr.bf16.gmra.mrb[0].mxu0 %v773
      %v866 = vpop.f32.mrb[0].mxu0
      %v867 = vpop.f32.mrb[0].mxu0
      %v868 = vpop.f32.mrb[0].mxu0
      %v869 = vpop.f32.mrb[0].mxu0
      %870 = vdwg.mxu0
      %v871 = vadd.f32 %v747, %v859
      %v872 = vadd.f32 %v748, %v862
      %s873 = scalar_lea.vmem %s3, 256
      %v874 = vld [vmem:[%s873] sm:$0xf]
      %v875 = vld [vmem:[%s873 + $0x4] sm:$0xf]
      %v876 = vld [vmem:[%s873 + $0x8] sm:$0xf]
      %v877 = vld [vmem:[%s873 + $0xc] sm:$0xf]
      %v878 = vld [vmem:[%s873 + $0x10] sm:$0xf]
      %v879 = vld [vmem:[%s873 + $0x14] sm:$0xf]
      %v880 = vld [vmem:[%s873 + $0x18] sm:$0xf]
      %v881 = vld [vmem:[%s873 + $0x1c] sm:$0xf]
      %v882 = vld [vmem:[%s873 + $0x20] sm:$0xf]
      %v883 = vld [vmem:[%s873 + $0x24] sm:$0xf]
      %v884 = vld [vmem:[%s873 + $0x28] sm:$0xf]
      %v885 = vld [vmem:[%s873 + $0x2c] sm:$0xf]
      %v886 = vld [vmem:[%s873 + $0x30] sm:$0xf]
      %v887 = vld [vmem:[%s873 + $0x34] sm:$0xf]
      %v888 = vld [vmem:[%s873 + $0x38] sm:$0xf]
      %v889 = vld [vmem:[%s873 + $0x3c] sm:$0xf]
      %v906 = vunpack.c.l.b16 %v874
      %v907 = vunpack.c.l.b16 %v875
      %v908 = vunpack.c.l.b16 %v876
      %v909 = vunpack.c.l.b16 %v877
      %v910 = vunpack.c.l.b16 %v878
      %v911 = vunpack.c.l.b16 %v879
      %v912 = vunpack.c.l.b16 %v880
      %v913 = vunpack.c.l.b16 %v881
      %v914 = vunpack.c.l.b16 %v882
      %v915 = vunpack.c.l.b16 %v883
      %v916 = vunpack.c.l.b16 %v884
      %v917 = vunpack.c.l.b16 %v885
      %v918 = vunpack.c.l.b16 %v886
      %v919 = vunpack.c.l.b16 %v887
      %v920 = vunpack.c.l.b16 %v888
      %v921 = vunpack.c.l.b16 %v889
      %v922 = vpack.c.b16 %v907, %v906
      %v923 = vpack.c.b16 %v909, %v908
      %v924 = vpack.c.b16 %v911, %v910
      %v925 = vpack.c.b16 %v913, %v912
      %v926 = vpack.c.b16 %v915, %v914
      %v927 = vpack.c.b16 %v917, %v916
      %v928 = vpack.c.b16 %v919, %v918
      %v929 = vpack.c.b16 %v921, %v920
      %938 = vmatprep.subr.bf16.mxu0 0
      %939 = vmatpush1.bf16.msra.mxu0 %v922
      %940 = vmatprep.subr.bf16.mxu0 0
      %941 = vmatpush1.bf16.msra.mxu0 %v923
      %942 = vmatprep.subr.bf16.mxu0 0
      %943 = vmatpush1.bf16.msra.mxu0 %v924
      %944 = vmatprep.subr.bf16.mxu0 0
      %945 = vmatpush1.bf16.msra.mxu0 %v925
      %946 = vmatprep.subr.bf16.mxu0 0
      %947 = vmatpush1.bf16.msra.mxu0 %v926
      %948 = vmatprep.subr.bf16.mxu0 0
      %949 = vmatpush1.bf16.msra.mxu0 %v927
      %950 = vmatprep.subr.bf16.mxu0 0
      %951 = vmatpush1.bf16.msra.mxu0 %v928
      %952 = vmatprep.subr.bf16.mxu0 0
      %953 = vmatpush1.bf16.msra.mxu0 %v929
      %954 = vmatprep.subr.bf16.mxu0 0
      %955 = vmatpush1.bf16.msra.mxu0 0
      %956 = vmatprep.subr.bf16.mxu0 0
      %957 = vmatpush1.bf16.msra.mxu0 0
      %958 = vmatprep.subr.bf16.mxu0 0
      %959 = vmatpush1.bf16.msra.mxu0 0
      %960 = vmatprep.subr.bf16.mxu0 0
      %961 = vmatpush1.bf16.msra.mxu0 0
      %962 = vmatprep.subr.bf16.mxu0 0
      %963 = vmatpush1.bf16.msra.mxu0 0
      %964 = vmatprep.subr.bf16.mxu0 0
      %965 = vmatpush1.bf16.msra.mxu0 0
      %966 = vmatprep.subr.bf16.mxu0 0
      %967 = vmatpush1.bf16.msra.mxu0 0
      %968 = vmatprep.subr.bf16.mxu0 0
      %969 = vmatpush1.bf16.msra.mxu0 0
      %970 = vmatprep.mubr.bf16.mxu0 0
      %971 = vmatmul.mubr.bf16.gmra.mrb[0].mxu0 %v772
      %v972 = vpop.f32.mrb[0].mxu0
      %v973 = vadd.f32 0.0, %v972
      %v974 = vpop.f32.mrb[0].mxu0
      %v975 = vpop.f32.mrb[0].mxu0
      %v976 = vadd.f32 0.0, %v975
      %v977 = vpop.f32.mrb[0].mxu0
      %978 = vmatprep.mubr.bf16.mxu0 0
      %979 = vmatmul.mubr.bf16.gmra.mrb[0].mxu0 %v773
      %v980 = vpop.f32.mrb[0].mxu0
      %v981 = vadd.f32 0.0, %v980
      %v982 = vpop.f32.mrb[0].mxu0
      %v983 = vpop.f32.mrb[0].mxu0
      %v984 = vpop.f32.mrb[0].mxu0
      %985 = vdwg.mxu0
      %v989 = vrot.slane %v973, 1
      %v990 = vrot.slane %v976, 1
      %v991 = vsel %vm613, %v989, %v990
      %v992 = vrot.slane %v981, 1
      %v993 = vsel %vm613, %v990, %v992
      %v996 = vadd.f32 %v871, %v991
      %v997 = vadd.f32 %v872, %v993
      %s998 = scalar_lea.vmem %s3, 320
      %v999 = vld [vmem:[%s998] sm:$0xf]
      %v1000 = vld [vmem:[%s998 + $0x4] sm:$0xf]
      %v1001 = vld [vmem:[%s998 + $0x8] sm:$0xf]
      %v1002 = vld [vmem:[%s998 + $0xc] sm:$0xf]
      %v1003 = vld [vmem:[%s998 + $0x10] sm:$0xf]
      %v1004 = vld [vmem:[%s998 + $0x14] sm:$0xf]
      %v1005 = vld [vmem:[%s998 + $0x18] sm:$0xf]
      %v1006 = vld [vmem:[%s998 + $0x1c] sm:$0xf]
      %v1007 = vld [vmem:[%s998 + $0x20] sm:$0xf]
      %v1008 = vld [vmem:[%s998 + $0x24] sm:$0xf]
      %v1009 = vld [vmem:[%s998 + $0x28] sm:$0xf]
      %v1010 = vld [vmem:[%s998 + $0x2c] sm:$0xf]
      %v1011 = vld [vmem:[%s998 + $0x30] sm:$0xf]
      %v1012 = vld [vmem:[%s998 + $0x34] sm:$0xf]
      %v1013 = vld [vmem:[%s998 + $0x38] sm:$0xf]
      %v1014 = vld [vmem:[%s998 + $0x3c] sm:$0xf]
      %v1031 = vunpack.c.l.b16 %v999
      %v1032 = vunpack.c.l.b16 %v1000
      %v1033 = vunpack.c.l.b16 %v1001
      %v1034 = vunpack.c.l.b16 %v1002
      %v1035 = vunpack.c.l.b16 %v1003
      %v1036 = vunpack.c.l.b16 %v1004
      %v1037 = vunpack.c.l.b16 %v1005
      %v1038 = vunpack.c.l.b16 %v1006
      %v1039 = vunpack.c.l.b16 %v1007
      %v1040 = vunpack.c.l.b16 %v1008
      %v1041 = vunpack.c.l.b16 %v1009
      %v1042 = vunpack.c.l.b16 %v1010
      %v1043 = vunpack.c.l.b16 %v1011
      %v1044 = vunpack.c.l.b16 %v1012
      %v1045 = vunpack.c.l.b16 %v1013
      %v1046 = vunpack.c.l.b16 %v1014
      %v1047 = vpack.c.b16 %v1032, %v1031
      %v1048 = vpack.c.b16 %v1034, %v1033
      %v1049 = vpack.c.b16 %v1036, %v1035
      %v1050 = vpack.c.b16 %v1038, %v1037
      %v1051 = vpack.c.b16 %v1040, %v1039
      %v1052 = vpack.c.b16 %v1042, %v1041
      %v1053 = vpack.c.b16 %v1044, %v1043
      %v1054 = vpack.c.b16 %v1046, %v1045
      %1063 = vmatprep.subr.bf16.mxu0 0
      %1064 = vmatpush1.bf16.msra.mxu0 %v1047
      %1065 = vmatprep.subr.bf16.mxu0 0
      %1066 = vmatpush1.bf16.msra.mxu0 %v1048
      %1067 = vmatprep.subr.bf16.mxu0 0
      %1068 = vmatpush1.bf16.msra.mxu0 %v1049
      %1069 = vmatprep.subr.bf16.mxu0 0
      %1070 = vmatpush1.bf16.msra.mxu0 %v1050
      %1071 = vmatprep.subr.bf16.mxu0 0
      %1072 = vmatpush1.bf16.msra.mxu0 %v1051
      %1073 = vmatprep.subr.bf16.mxu0 0
      %1074 = vmatpush1.bf16.msra.mxu0 %v1052
      %1075 = vmatprep.subr.bf16.mxu0 0
      %1076 = vmatpush1.bf16.msra.mxu0 %v1053
      %1077 = vmatprep.subr.bf16.mxu0 0
      %1078 = vmatpush1.bf16.msra.mxu0 %v1054
      %1079 = vmatprep.subr.bf16.mxu0 0
      %1080 = vmatpush1.bf16.msra.mxu0 0
      %1081 = vmatprep.subr.bf16.mxu0 0
      %1082 = vmatpush1.bf16.msra.mxu0 0
      %1083 = vmatprep.subr.bf16.mxu0 0
      %1084 = vmatpush1.bf16.msra.mxu0 0
      %1085 = vmatprep.subr.bf16.mxu0 0
      %1086 = vmatpush1.bf16.msra.mxu0 0
      %1087 = vmatprep.subr.bf16.mxu0 0
      %1088 = vmatpush1.bf16.msra.mxu0 0
      %1089 = vmatprep.subr.bf16.mxu0 0
      %1090 = vmatpush1.bf16.msra.mxu0 0
      %1091 = vmatprep.subr.bf16.mxu0 0
      %1092 = vmatpush1.bf16.msra.mxu0 0
      %1093 = vmatprep.subr.bf16.mxu0 0
      %1094 = vmatpush1.bf16.msra.mxu0 0
      %1095 = vmatprep.mubr.bf16.mxu0 0
      %1096 = vmatmul.mubr.bf16.gmra.mrb[0].mxu0 %v772
      %v1097 = vpop.f32.mrb[0].mxu0
      %v1098 = vadd.f32 0.0, %v1097
      %v1099 = vpop.f32.mrb[0].mxu0
      %v1100 = vpop.f32.mrb[0].mxu0
      %v1101 = vadd.f32 0.0, %v1100
      %v1102 = vpop.f32.mrb[0].mxu0
      %1103 = vmatprep.mubr.bf16.mxu0 0
      %1104 = vmatmul.mubr.bf16.gmra.mrb[0].mxu0 %v773
      %v1105 = vpop.f32.mrb[0].mxu0
      %v1106 = vadd.f32 0.0, %v1105
      %v1107 = vpop.f32.mrb[0].mxu0
      %v1108 = vpop.f32.mrb[0].mxu0
      %v1109 = vpop.f32.mrb[0].mxu0
      %1110 = vdwg.mxu0
      %v1114 = vrot.slane %v1098, 2
      %v1115 = vrot.slane %v1101, 2
      %v1116 = vsel %vm739, %v1114, %v1115
      %v1117 = vrot.slane %v1106, 2
      %v1118 = vsel %vm739, %v1115, %v1117
      %v1121 = vadd.f32 %v996, %v1116
      %v1122 = vadd.f32 %v997, %v1118
      %s1123 = scalar_lea.vmem %s3, 384
      %v1124 = vld [vmem:[%s1123] sm:$0xf]
      %v1125 = vld [vmem:[%s1123 + $0x4] sm:$0xf]
      %v1126 = vld [vmem:[%s1123 + $0x8] sm:$0xf]
      %v1127 = vld [vmem:[%s1123 + $0xc] sm:$0xf]
      %v1128 = vld [vmem:[%s1123 + $0x10] sm:$0xf]
      %v1129 = vld [vmem:[%s1123 + $0x14] sm:$0xf]
      %v1130 = vld [vmem:[%s1123 + $0x18] sm:$0xf]
      %v1131 = vld [vmem:[%s1123 + $0x1c] sm:$0xf]
      %v1132 = vld [vmem:[%s1123 + $0x20] sm:$0xf]
      %v1133 = vld [vmem:[%s1123 + $0x24] sm:$0xf]
      %v1134 = vld [vmem:[%s1123 + $0x28] sm:$0xf]
      %v1135 = vld [vmem:[%s1123 + $0x2c] sm:$0xf]
      %v1136 = vld [vmem:[%s1123 + $0x30] sm:$0xf]
      %v1137 = vld [vmem:[%s1123 + $0x34] sm:$0xf]
      %v1138 = vld [vmem:[%s1123 + $0x38] sm:$0xf]
      %v1139 = vld [vmem:[%s1123 + $0x3c] sm:$0xf]
      %v1143 = vunpack.c.l.b16 %v371
      %v1144 = vunpack.c.l.b16 %v372
      %v1145 = vunpack.c.l.b16 %v373
      %v1146 = vpack.c.b16 %v1144, %v1143
      %v1147 = vpack.c.b16 %v1145, %v1145
      %v1166 = vunpack.c.l.b16 %v1124
      %v1167 = vunpack.c.l.b16 %v1125
      %v1168 = vunpack.c.l.b16 %v1126
      %v1169 = vunpack.c.l.b16 %v1127
      %v1170 = vunpack.c.l.b16 %v1128
      %v1171 = vunpack.c.l.b16 %v1129
      %v1172 = vunpack.c.l.b16 %v1130
      %v1173 = vunpack.c.l.b16 %v1131
      %v1174 = vunpack.c.l.b16 %v1132
      %v1175 = vunpack.c.l.b16 %v1133
      %v1176 = vunpack.c.l.b16 %v1134
      %v1177 = vunpack.c.l.b16 %v1135
      %v1178 = vunpack.c.l.b16 %v1136
      %v1179 = vunpack.c.l.b16 %v1137
      %v1180 = vunpack.c.l.b16 %v1138
      %v1181 = vunpack.c.l.b16 %v1139
      %v1182 = vpack.c.b16 %v1167, %v1166
      %v1183 = vpack.c.b16 %v1169, %v1168
      %v1184 = vpack.c.b16 %v1171, %v1170
      %v1185 = vpack.c.b16 %v1173, %v1172
      %v1186 = vpack.c.b16 %v1175, %v1174
      %v1187 = vpack.c.b16 %v1177, %v1176
      %v1188 = vpack.c.b16 %v1179, %v1178
      %v1189 = vpack.c.b16 %v1181, %v1180
      %1198 = vmatprep.subr.bf16.mxu0 0
      %1199 = vmatpush1.bf16.msra.mxu0 %v1182
      %1200 = vmatprep.subr.bf16.mxu0 0
      %1201 = vmatpush1.bf16.msra.mxu0 %v1183
      %1202 = vmatprep.subr.bf16.mxu0 0
      %1203 = vmatpush1.bf16.msra.mxu0 %v1184
      %1204 = vmatprep.subr.bf16.mxu0 0
      %1205 = vmatpush1.bf16.msra.mxu0 %v1185
      %1206 = vmatprep.subr.bf16.mxu0 0
      %1207 = vmatpush1.bf16.msra.mxu0 %v1186
      %1208 = vmatprep.subr.bf16.mxu0 0
      %1209 = vmatpush1.bf16.msra.mxu0 %v1187
      %1210 = vmatprep.subr.bf16.mxu0 0
      %1211 = vmatpush1.bf16.msra.mxu0 %v1188
      %1212 = vmatprep.subr.bf16.mxu0 0
      %1213 = vmatpush1.bf16.msra.mxu0 %v1189
      %1214 = vmatprep.subr.bf16.mxu0 0
      %1215 = vmatpush1.bf16.msra.mxu0 0
      %1216 = vmatprep.subr.bf16.mxu0 0
      %1217 = vmatpush1.bf16.msra.mxu0 0
      %1218 = vmatprep.subr.bf16.mxu0 0
      %1219 = vmatpush1.bf16.msra.mxu0 0
      %1220 = vmatprep.subr.bf16.mxu0 0
      %1221 = vmatpush1.bf16.msra.mxu0 0
      %1222 = vmatprep.subr.bf16.mxu0 0
      %1223 = vmatpush1.bf16.msra.mxu0 0
      %1224 = vmatprep.subr.bf16.mxu0 0
      %1225 = vmatpush1.bf16.msra.mxu0 0
      %1226 = vmatprep.subr.bf16.mxu0 0
      %1227 = vmatpush1.bf16.msra.mxu0 0
      %1228 = vmatprep.subr.bf16.mxu0 0
      %1229 = vmatpush1.bf16.msra.mxu0 0
      %1230 = vmatprep.mubr.bf16.mxu0 0
      %1231 = vmatmul.mubr.bf16.gmra.mrb[0].mxu0 %v1146
      %v1232 = vpop.f32.mrb[0].mxu0
      %v1233 = vadd.f32 0.0, %v1232
      %v1234 = vpop.f32.mrb[0].mxu0
      %v1235 = vpop.f32.mrb[0].mxu0
      %v1236 = vadd.f32 0.0, %v1235
      %v1237 = vpop.f32.mrb[0].mxu0
      %1238 = vmatprep.mubr.bf16.mxu0 0
      %1239 = vmatmul.mubr.bf16.gmra.mrb[0].mxu0 %v1147
      %v1240 = vpop.f32.mrb[0].mxu0
      %v1241 = vpop.f32.mrb[0].mxu0
      %v1242 = vpop.f32.mrb[0].mxu0
      %v1243 = vpop.f32.mrb[0].mxu0
      %1244 = vdwg.mxu0
      %v1245 = vadd.f32 %v1121, %v1233
      %v1246 = vadd.f32 %v1122, %v1236
      %s1247 = scalar_lea.vmem %s3, 448
      %v1248 = vld [vmem:[%s1247] sm:$0xf]
      %v1249 = vld [vmem:[%s1247 + $0x4] sm:$0xf]
      %v1250 = vld [vmem:[%s1247 + $0x8] sm:$0xf]
      %v1251 = vld [vmem:[%s1247 + $0xc] sm:$0xf]
      %v1252 = vld [vmem:[%s1247 + $0x10] sm:$0xf]
      %v1253 = vld [vmem:[%s1247 + $0x14] sm:$0xf]
      %v1254 = vld [vmem:[%s1247 + $0x18] sm:$0xf]
      %v1255 = vld [vmem:[%s1247 + $0x1c] sm:$0xf]
      %v1256 = vld [vmem:[%s1247 + $0x20] sm:$0xf]
      %v1257 = vld [vmem:[%s1247 + $0x24] sm:$0xf]
      %v1258 = vld [vmem:[%s1247 + $0x28] sm:$0xf]
      %v1259 = vld [vmem:[%s1247 + $0x2c] sm:$0xf]
      %v1260 = vld [vmem:[%s1247 + $0x30] sm:$0xf]
      %v1261 = vld [vmem:[%s1247 + $0x34] sm:$0xf]
      %v1262 = vld [vmem:[%s1247 + $0x38] sm:$0xf]
      %v1263 = vld [vmem:[%s1247 + $0x3c] sm:$0xf]
      %v1280 = vunpack.c.l.b16 %v1248
      %v1281 = vunpack.c.l.b16 %v1249
      %v1282 = vunpack.c.l.b16 %v1250
      %v1283 = vunpack.c.l.b16 %v1251
      %v1284 = vunpack.c.l.b16 %v1252
      %v1285 = vunpack.c.l.b16 %v1253
      %v1286 = vunpack.c.l.b16 %v1254
      %v1287 = vunpack.c.l.b16 %v1255
      %v1288 = vunpack.c.l.b16 %v1256
      %v1289 = vunpack.c.l.b16 %v1257
      %v1290 = vunpack.c.l.b16 %v1258
      %v1291 = vunpack.c.l.b16 %v1259
      %v1292 = vunpack.c.l.b16 %v1260
      %v1293 = vunpack.c.l.b16 %v1261
      %v1294 = vunpack.c.l.b16 %v1262
      %v1295 = vunpack.c.l.b16 %v1263
      %v1296 = vpack.c.b16 %v1281, %v1280
      %v1297 = vpack.c.b16 %v1283, %v1282
      %v1298 = vpack.c.b16 %v1285, %v1284
      %v1299 = vpack.c.b16 %v1287, %v1286
      %v1300 = vpack.c.b16 %v1289, %v1288
      %v1301 = vpack.c.b16 %v1291, %v1290
      %v1302 = vpack.c.b16 %v1293, %v1292
      %v1303 = vpack.c.b16 %v1295, %v1294
      %1312 = vmatprep.subr.bf16.mxu0 0
      %1313 = vmatpush1.bf16.msra.mxu0 %v1296
      %1314 = vmatprep.subr.bf16.mxu0 0
      %1315 = vmatpush1.bf16.msra.mxu0 %v1297
      %1316 = vmatprep.subr.bf16.mxu0 0
      %1317 = vmatpush1.bf16.msra.mxu0 %v1298
      %1318 = vmatprep.subr.bf16.mxu0 0
      %1319 = vmatpush1.bf16.msra.mxu0 %v1299
      %1320 = vmatprep.subr.bf16.mxu0 0
      %1321 = vmatpush1.bf16.msra.mxu0 %v1300
      %1322 = vmatprep.subr.bf16.mxu0 0
      %1323 = vmatpush1.bf16.msra.mxu0 %v1301
      %1324 = vmatprep.subr.bf16.mxu0 0
      %1325 = vmatpush1.bf16.msra.mxu0 %v1302
      %1326 = vmatprep.subr.bf16.mxu0 0
      %1327 = vmatpush1.bf16.msra.mxu0 %v1303
      %1328 = vmatprep.subr.bf16.mxu0 0
      %1329 = vmatpush1.bf16.msra.mxu0 0
      %1330 = vmatprep.subr.bf16.mxu0 0
      %1331 = vmatpush1.bf16.msra.mxu0 0
      %1332 = vmatprep.subr.bf16.mxu0 0
      %1333 = vmatpush1.bf16.msra.mxu0 0
      %1334 = vmatprep.subr.bf16.mxu0 0
      %1335 = vmatpush1.bf16.msra.mxu0 0
      %1336 = vmatprep.subr.bf16.mxu0 0
      %1337 = vmatpush1.bf16.msra.mxu0 0
      %1338 = vmatprep.subr.bf16.mxu0 0
      %1339 = vmatpush1.bf16.msra.mxu0 0
      %1340 = vmatprep.subr.bf16.mxu0 0
      %1341 = vmatpush1.bf16.msra.mxu0 0
      %1342 = vmatprep.subr.bf16.mxu0 0
      %1343 = vmatpush1.bf16.msra.mxu0 0
      %1344 = vmatprep.mubr.bf16.mxu0 0
      %1345 = vmatmul.mubr.bf16.gmra.mrb[0].mxu0 %v1146
      %v1346 = vpop.f32.mrb[0].mxu0
      %v1347 = vadd.f32 0.0, %v1346
      %v1348 = vpop.f32.mrb[0].mxu0
      %v1349 = vpop.f32.mrb[0].mxu0
      %v1350 = vadd.f32 0.0, %v1349
      %v1351 = vpop.f32.mrb[0].mxu0
      %1352 = vmatprep.mubr.bf16.mxu0 0
      %1353 = vmatmul.mubr.bf16.gmra.mrb[0].mxu0 %v1147
      %v1354 = vpop.f32.mrb[0].mxu0
      %v1355 = vadd.f32 0.0, %v1354
      %v1356 = vpop.f32.mrb[0].mxu0
      %v1357 = vpop.f32.mrb[0].mxu0
      %v1358 = vpop.f32.mrb[0].mxu0
      %1359 = vdwg.mxu0
      %v1363 = vrot.slane %v1347, 1
      %v1364 = vrot.slane %v1350, 1
      %v1365 = vsel %vm613, %v1363, %v1364
      %v1366 = vrot.slane %v1355, 1
      %v1367 = vsel %vm613, %v1364, %v1366
      %v1370 = vadd.f32 %v1245, %v1365
      %v1371 = vadd.f32 %v1246, %v1367
      %s1372 = scalar_lea.vmem %s3, 512
      %v1373 = vld [vmem:[%s1372] sm:$0xf]
      %v1374 = vld [vmem:[%s1372 + $0x4] sm:$0xf]
      %v1375 = vld [vmem:[%s1372 + $0x8] sm:$0xf]
      %v1376 = vld [vmem:[%s1372 + $0xc] sm:$0xf]
      %v1377 = vld [vmem:[%s1372 + $0x10] sm:$0xf]
      %v1378 = vld [vmem:[%s1372 + $0x14] sm:$0xf]
      %v1379 = vld [vmem:[%s1372 + $0x18] sm:$0xf]
      %v1380 = vld [vmem:[%s1372 + $0x1c] sm:$0xf]
      %v1381 = vld [vmem:[%s1372 + $0x20] sm:$0xf]
      %v1382 = vld [vmem:[%s1372 + $0x24] sm:$0xf]
      %v1383 = vld [vmem:[%s1372 + $0x28] sm:$0xf]
      %v1384 = vld [vmem:[%s1372 + $0x2c] sm:$0xf]
      %v1385 = vld [vmem:[%s1372 + $0x30] sm:$0xf]
      %v1386 = vld [vmem:[%s1372 + $0x34] sm:$0xf]
      %v1387 = vld [vmem:[%s1372 + $0x38] sm:$0xf]
      %v1388 = vld [vmem:[%s1372 + $0x3c] sm:$0xf]
      %v1405 = vunpack.c.l.b16 %v1373
      %v1406 = vunpack.c.l.b16 %v1374
      %v1407 = vunpack.c.l.b16 %v1375
      %v1408 = vunpack.c.l.b16 %v1376
      %v1409 = vunpack.c.l.b16 %v1377
      %v1410 = vunpack.c.l.b16 %v1378
      %v1411 = vunpack.c.l.b16 %v1379
      %v1412 = vunpack.c.l.b16 %v1380
      %v1413 = vunpack.c.l.b16 %v1381
      %v1414 = vunpack.c.l.b16 %v1382
      %v1415 = vunpack.c.l.b16 %v1383
      %v1416 = vunpack.c.l.b16 %v1384
      %v1417 = vunpack.c.l.b16 %v1385
      %v1418 = vunpack.c.l.b16 %v1386
      %v1419 = vunpack.c.l.b16 %v1387
      %v1420 = vunpack.c.l.b16 %v1388
      %v1421 = vpack.c.b16 %v1406, %v1405
      %v1422 = vpack.c.b16 %v1408, %v1407
      %v1423 = vpack.c.b16 %v1410, %v1409
      %v1424 = vpack.c.b16 %v1412, %v1411
      %v1425 = vpack.c.b16 %v1414, %v1413
      %v1426 = vpack.c.b16 %v1416, %v1415
      %v1427 = vpack.c.b16 %v1418, %v1417
      %v1428 = vpack.c.b16 %v1420, %v1419
      %1437 = vmatprep.subr.bf16.mxu0 0
      %1438 = vmatpush1.bf16.msra.mxu0 %v1421
      %1439 = vmatprep.subr.bf16.mxu0 0
      %1440 = vmatpush1.bf16.msra.mxu0 %v1422
      %1441 = vmatprep.subr.bf16.mxu0 0
      %1442 = vmatpush1.bf16.msra.mxu0 %v1423
      %1443 = vmatprep.subr.bf16.mxu0 0
      %1444 = vmatpush1.bf16.msra.mxu0 %v1424
      %1445 = vmatprep.subr.bf16.mxu0 0
      %1446 = vmatpush1.bf16.msra.mxu0 %v1425
      %1447 = vmatprep.subr.bf16.mxu0 0
      %1448 = vmatpush1.bf16.msra.mxu0 %v1426
      %1449 = vmatprep.subr.bf16.mxu0 0
      %1450 = vmatpush1.bf16.msra.mxu0 %v1427
      %1451 = vmatprep.subr.bf16.mxu0 0
      %1452 = vmatpush1.bf16.msra.mxu0 %v1428
      %1453 = vmatprep.subr.bf16.mxu0 0
      %1454 = vmatpush1.bf16.msra.mxu0 0
      %1455 = vmatprep.subr.bf16.mxu0 0
      %1456 = vmatpush1.bf16.msra.mxu0 0
      %1457 = vmatprep.subr.bf16.mxu0 0
      %1458 = vmatpush1.bf16.msra.mxu0 0
      %1459 = vmatprep.subr.bf16.mxu0 0
      %1460 = vmatpush1.bf16.msra.mxu0 0
      %1461 = vmatprep.subr.bf16.mxu0 0
      %1462 = vmatpush1.bf16.msra.mxu0 0
      %1463 = vmatprep.subr.bf16.mxu0 0
      %1464 = vmatpush1.bf16.msra.mxu0 0
      %1465 = vmatprep.subr.bf16.mxu0 0
      %1466 = vmatpush1.bf16.msra.mxu0 0
      %1467 = vmatprep.subr.bf16.mxu0 0
      %1468 = vmatpush1.bf16.msra.mxu0 0
      %1469 = vmatprep.mubr.bf16.mxu0 0
      %1470 = vmatmul.mubr.bf16.gmra.mrb[0].mxu0 %v1146
      %v1471 = vpop.f32.mrb[0].mxu0
      %v1472 = vadd.f32 0.0, %v1471
      %v1473 = vpop.f32.mrb[0].mxu0
      %v1474 = vpop.f32.mrb[0].mxu0
      %v1475 = vadd.f32 0.0, %v1474
      %v1476 = vpop.f32.mrb[0].mxu0
      %1477 = vmatprep.mubr.bf16.mxu0 0
      %1478 = vmatmul.mubr.bf16.gmra.mrb[0].mxu0 %v1147
      %v1479 = vpop.f32.mrb[0].mxu0
      %v1480 = vadd.f32 0.0, %v1479
      %v1481 = vpop.f32.mrb[0].mxu0
      %v1482 = vpop.f32.mrb[0].mxu0
      %v1483 = vpop.f32.mrb[0].mxu0
      %1484 = vdwg.mxu0
      %v1488 = vrot.slane %v1472, 2
      %v1489 = vrot.slane %v1475, 2
      %v1490 = vsel %vm739, %v1488, %v1489
      %v1491 = vrot.slane %v1480, 2
      %v1492 = vsel %vm739, %v1489, %v1491
      %v1495 = vadd.f32 %v1370, %v1490
      %v1496 = vadd.f32 %v1371, %v1492
      %1497 = vst [vmem:[%s355] sm:$0xff] %v1495
      %1498 = vst [vmem:[%s355 + $0x8] sm:$0xff] %v1496
      %v1499 = vadd.f32 %v1495, %v1496
      %v1500 = vrot.slane %v1499, 4
      %v1501 = vadd.f32 %v1499, %v1500
      %v1502 = vrot.slane %v1501, 2
      %v1503 = vadd.f32 %v1501, %v1502
      %v1504 = vrot.slane %v1503, 1
      %v1505 = vadd.f32 %v1503, %v1504
      %1506 = vst [vmem:[%s363] sm:$0x1] %v1505
      %v1507 = vmul.f32 %v1495, %v1495
      %v1508 = vmul.f32 %v1496, %v1496
      %v1509 = vadd.f32 %v1507, %v1508
      %v1510 = vrot.slane %v1509, 4
      %v1511 = vadd.f32 %v1509, %v1510
      %v1512 = vrot.slane %v1511, 2
      %v1513 = vadd.f32 %v1511, %v1512
      %v1514 = vrot.slane %v1513, 1
      %v1515 = vadd.f32 %v1513, %v1514
      %1516 = vst [vmem:[%s363 + $0x1] sm:$0x1] %v1515
      %p1517 = scmp.lt.s32.totalorder %s21, 1
      %s1518 = scalar_select %p1517, %s21, 1
      %p1519 = scmp.lt.s32.totalorder %s22, 15
      %s1520 = scalar_select %p1519, %s22, 15
      %s1521 = smul.addr %s1520, 2
      %s1522 = smul.addr %s1518, 32
      %s1523 = sadd.s32 %s1521, %s1522
      %s1524 = smul.addr %s1523, 8
      %s1525 = scalar_lea.vmem %s4, %s1524
      %p1526 = scmp.lt.s32.totalorder %s21, 1
      %s1527 = scalar_select %p1526, %s21, 1
      %p1528 = scmp.lt.s32.totalorder %s22, 15
      %s1529 = scalar_select %p1528, %s22, 15
      %s1530 = smul.addr %s1527, 16
      %s1531 = sadd.s32 %s1529, %s1530
      %s1532 = smul.addr %s1531, 2
      %s1533 = scalar_lea.vmem %s5, %s1532
      // Predicated region
      $region37: #{discriminator_forward.7} parent=35 // pred_check
        %p1534 = pneg %p158
      $region38: #{discriminator_forward.7} parent=35 // pred_check_branch
        %1536 = sbr.rel (%p1534) target = $region40
      $region39: #{discriminator_forward.7} parent=35 // pred_region
        _
      $region40: #{discriminator_forward.7} parent=35 // pred_fallthru
        _
      // Predicated region
      $region41: #{discriminator_forward.7} parent=35 // pred_check
        %p1537 = pneg %p186
      $region42: #{discriminator_forward.7} parent=35 // pred_check_branch
        %1539 = sbr.rel (%p1537) target = $region44
      $region43: #{discriminator_forward.7} parent=35 // pred_region
        _
      $region44: #{discriminator_forward.7} parent=35 // pred_fallthru
        _
    $region36: #{discriminator_forward.7} parent=5 // pred_fallthru
      _
    %p1540 = scmp.le.s32.totalorder 2, %s12
    // Predicated region
    $region45: #{discriminator_forward.7} parent=5 // pred_check
      %p1541 = pneg %p1540
    $region46: #{discriminator_forward.7} parent=5 // pred_check_branch
      %1543 = sbr.rel (%p1541) target = $region48
    $region47: #{discriminator_forward.7} parent=5 // pred_region
      %s1544 = ssub.s32 %s12, 2
      // Predicated region
      $region49: #{discriminator_forward.7} parent=47 // pred_check
        %p1545 = pneg %p164
      $region50: #{discriminator_forward.7} parent=47 // pred_check_branch
        %1547 = sbr.rel (%p1545) target = $region52
      $region51: #{discriminator_forward.7} parent=47 // pred_region
        %p1548 = scmp.lt.s32.totalorder %s23, 1
        %s1549 = scalar_select %p1548, %s23, 1
        %p1550 = scmp.lt.s32.totalorder %s24, 15
        %s1551 = scalar_select %p1550, %s24, 15
        %s1552 = smul.addr %s1551, 2
        %s1553 = smul.addr %s1549, 32
        %s1554 = sadd.s32 %s1552, %s1553
        %s1555 = smul.addr %s1554, 8
        %s1556 = scalar_lea.vmem %s4, %s1555
      $region52: #{discriminator_forward.7} parent=47 // pred_fallthru
        _
      // Predicated region
      $region53: #{discriminator_forward.7} parent=47 // pred_check
        %p1557 = pneg %p192
      $region54: #{discriminator_forward.7} parent=47 // pred_check_branch
        %1559 = sbr.rel (%p1557) target = $region56
      $region55: #{discriminator_forward.7} parent=47 // pred_region
        %p1560 = scmp.lt.s32.totalorder %s23, 1
        %s1561 = scalar_select %p1560, %s23, 1
        %p1562 = scmp.lt.s32.totalorder %s24, 15
        %s1563 = scalar_select %p1562, %s24, 15
        %s1564 = smul.addr %s1561, 16
        %s1565 = sadd.s32 %s1563, %s1564
        %s1566 = smul.addr %s1565, 2
        %s1567 = scalar_lea.vmem %s5, %s1566
      $region56: #{discriminator_forward.7} parent=47 // pred_fallthru
        _
    $region48: #{discriminator_forward.7} parent=5 // pred_fallthru
      _
  $region6: #{discriminator_forward.7} parent=0 // loop_footer
    %s16 = sadd.s32 1, %s12
  $region7: #{discriminator_forward.7} parent=0 // loop_footer_branch
    %11 = sbr.rel target = $region3
  $region8: #{discriminator_forward.7} parent=0 // loop_exit
    _

// kernel: discriminator_forward.10
$region0: #{discriminator_forward.10}
  #allocation0 [shape = 'u32[]', space=smem, size = 0x4, offset = 0x4, fixed_abs, tag = 'smem constant byte address 0x4 - core index']
  #allocation1 [shape = 'u32[144,128]{1,0:T(1,128)}', space=vmem, size = 0x12000, scoped, tag = 'internal scratch']
  %s0 = inlined_call_operand.vmem [shape: f32[8,2,4,256], index: 0, kind: input, shape index: {}]
  %s1 = inlined_call_operand.vmem [shape: f32[1,256], index: 1, kind: input, shape index: {}]
  %s2 = inlined_call_operand.vmem [shape: f32[1,256], index: 2, kind: input, shape index: {}]
  %s3 = inlined_call_operand.vmem [shape: f32[8,4,128], index: 3, kind: output, shape index: {}]
  %s4 = sld [smem:[#allocation0]]
  $region45: #{discriminator_forward.10} parent=0
    _
  %s6 = ssub.s32 1, %s4
  %s7 = scalar_select 0, %s6, %s4
  loop: start=0, step=1, limit=10
  $region2: #{discriminator_forward.10} parent=0 // loop_pre_header
    _
  $region3: #{discriminator_forward.10} parent=0 // loop_header
    %s9 = sphi 0, %s13
    %p10 = scmp.ge.s32.totalorder %s9, 10
    %s19 = sphi 0, %s21
    %s22 = sphi 0, %s19
    %s23 = sphi 0, %s22
    %s39 = sphi 0, %s23
    %s43 = sphi 0, %s43
    %s45 = sphi 0, %s43
    %s46 = sphi 0, %s45
    %s60 = sphi 0, %s46
    %s64 = sphi 0, %s64
    %s66 = sphi 0, %s64
    %s67 = sphi 0, %s66
    %s81 = sphi 0, %s67
    %s87 = sphi 0, %s89
    %s90 = sphi 0, %s87
    %s91 = sphi 0, %s90
    %s107 = sphi 0, %s91
  $region4: #{discriminator_forward.10} parent=0 // loop_header_branch
    %12 = sbr.rel (%p10) target = $region8
  $region5: #{discriminator_forward.10} parent=0 // loop_body
    %s14 = ssub.s32 %s9, 1
    %s15 = ssub.s32 %s9, 2
    %s16 = sadd.s32 %s9, 1
    %s17 = ssub.s32 %s9, %s16
    %p18 = scmp.eq.s32.totalorder %s17, 0
    %s20 = sadd.s32 %s19, 1
    %s21 = scalar_select %p18, %s19, %s20
    %p24 = pneg %p18
    %p25 = scmp.eq.s32.totalorder %s9, 7
    %p26 = por %p24, %p25
    %p27 = scmp.ne.s32.totalorder %s19, %s22
    %p28 = scmp.eq.s32.totalorder %s9, 0
    %p29 = por %p27, %p28
    %p30 = scmp.ne.s32.totalorder %s19, %s22
    %p31 = scmp.eq.s32.totalorder %s14, 7
    %p32 = por %p30, %p31
    %p33 = scmp.ne.s32.totalorder %s22, %s23
    %p34 = scmp.eq.s32.totalorder %s14, 0
    %p35 = por %p33, %p34
    %p36 = scmp.ne.s32.totalorder %s22, %s23
    %p37 = scmp.eq.s32.totalorder %s15, 7
    %p38 = por %p36, %p37
    %p40 = scmp.ne.s32.totalorder %s23, %s39
    %p41 = scmp.eq.s32.totalorder %s15, 0
    %p42 = por %p40, %p41
    %s44 = sadd.s32 %s43, 1
    %p47 = scmp.eq.s32.totalorder %s9, 7
    %p48 = scmp.ne.s32.totalorder %s43, %s45
    %p49 = scmp.eq.s32.totalorder %s9, 0
    %p50 = por %p48, %p49
    %p51 = scmp.ne.s32.totalorder %s43, %s45
    %p52 = scmp.eq.s32.totalorder %s14, 7
    %p53 = por %p51, %p52
    %p54 = scmp.ne.s32.totalorder %s45, %s46
    %p55 = scmp.eq.s32.totalorder %s14, 0
    %p56 = por %p54, %p55
    %p57 = scmp.ne.s32.totalorder %s45, %s46
    %p58 = scmp.eq.s32.totalorder %s15, 7
    %p59 = por %p57, %p58
    %p61 = scmp.ne.s32.totalorder %s46, %s60
    %p62 = scmp.eq.s32.totalorder %s15, 0
    %p63 = por %p61, %p62
    %s65 = sadd.s32 %s64, 1
    %p68 = scmp.eq.s32.totalorder %s9, 7
    %p69 = scmp.ne.s32.totalorder %s64, %s66
    %p70 = scmp.eq.s32.totalorder %s9, 0
    %p71 = por %p69, %p70
    %p72 = scmp.ne.s32.totalorder %s64, %s66
    %p73 = scmp.eq.s32.totalorder %s14, 7
    %p74 = por %p72, %p73
    %p75 = scmp.ne.s32.totalorder %s66, %s67
    %p76 = scmp.eq.s32.totalorder %s14, 0
    %p77 = por %p75, %p76
    %p78 = scmp.ne.s32.totalorder %s66, %s67
    %p79 = scmp.eq.s32.totalorder %s15, 7
    %p80 = por %p78, %p79
    %p82 = scmp.ne.s32.totalorder %s67, %s81
    %p83 = scmp.eq.s32.totalorder %s15, 0
    %p84 = por %p82, %p83
    %s85 = ssub.s32 %s9, %s16
    %p86 = scmp.eq.s32.totalorder %s85, 0
    %s88 = sadd.s32 %s87, 1
    %s89 = scalar_select %p86, %s87, %s88
    %p92 = pneg %p86
    %p93 = scmp.eq.s32.totalorder %s9, 7
    %p94 = por %p92, %p93
    %p95 = scmp.ne.s32.totalorder %s87, %s90
    %p96 = scmp.eq.s32.totalorder %s9, 0
    %p97 = por %p95, %p96
    %p98 = scmp.ne.s32.totalorder %s87, %s90
    %p99 = scmp.eq.s32.totalorder %s14, 7
    %p100 = por %p98, %p99
    %p101 = scmp.ne.s32.totalorder %s90, %s91
    %p102 = scmp.eq.s32.totalorder %s14, 0
    %p103 = por %p101, %p102
    %p104 = scmp.ne.s32.totalorder %s90, %s91
    %p105 = scmp.eq.s32.totalorder %s15, 7
    %p106 = por %p104, %p105
    %p108 = scmp.ne.s32.totalorder %s91, %s107
    %p109 = scmp.eq.s32.totalorder %s15, 0
    %p110 = por %p108, %p109
    %p111 = scmp.le.s32.totalorder 1, %s9
    %p112 = scmp.lt.s32.totalorder %s9, 9
    %p113 = pnand %p111, %p112
    %p114 = pneg %p113
    // Predicated region
    $region9: #{discriminator_forward.10} parent=5 // pred_check
      _
    $region10: #{discriminator_forward.10} parent=5 // pred_check_branch
      %116 = sbr.rel (%p113) target = $region12
    $region11: #{discriminator_forward.10} parent=5 // pred_region
      %s117 = ssub.s32 %s9, 1
      // Predicated region
      $region13: #{discriminator_forward.10} parent=11 // pred_check
        %p118 = pneg %p56
      $region14: #{discriminator_forward.10} parent=11 // pred_check_branch
        %120 = sbr.rel (%p118) target = $region16
      $region15: #{discriminator_forward.10} parent=11 // pred_region
        _
      $region16: #{discriminator_forward.10} parent=11 // pred_fallthru
        _
      // Predicated region
      $region17: #{discriminator_forward.10} parent=11 // pred_check
        %p121 = pneg %p77
      $region18: #{discriminator_forward.10} parent=11 // pred_check_branch
        %123 = sbr.rel (%p121) target = $region20
      $region19: #{discriminator_forward.10} parent=11 // pred_region
        _
      $region20: #{discriminator_forward.10} parent=11 // pred_fallthru
        _
    $region12: #{discriminator_forward.10} parent=5 // pred_fallthru
      _
    %p124 = scmp.lt.s32.totalorder %s9, 8
    // Predicated region
    $region21: #{discriminator_forward.10} parent=5 // pred_check
      %p125 = pneg %p124
    $region22: #{discriminator_forward.10} parent=5 // pred_check_branch
      %127 = sbr.rel (%p125) target = $region24
    $region23: #{discriminator_forward.10} parent=5 // pred_region
      // Predicated region
      $region25: #{discriminator_forward.10} parent=23 // pred_check
        %p128 = pneg %p29
      $region26: #{discriminator_forward.10} parent=23 // pred_check_branch
        %130 = sbr.rel (%p128) target = $region28
      $region27: #{discriminator_forward.10} parent=23 // pred_region
        %p131 = scmp.lt.s32.totalorder %s9, 7
        %s132 = scalar_select %p131, %s9, 7
        %s133 = smul.addr %s132, 4
        %s134 = smul.addr %s133, 4
        %s135 = scalar_lea.vmem %s0, %s134
      $region28: #{discriminator_forward.10} parent=23 // pred_fallthru
        _
    $region24: #{discriminator_forward.10} parent=5 // pred_fallthru
      _
    %p136 = scmp.le.s32.totalorder 1, %s9
    %p137 = scmp.lt.s32.totalorder %s9, 9
    %p138 = pnand %p136, %p137
    %p139 = pneg %p138
    // Predicated region
    $region29: #{discriminator_forward.10} parent=5 // pred_check
      _
    $region30: #{discriminator_forward.10} parent=5 // pred_check_branch
      %141 = sbr.rel (%p138) target = $region32
    $region31: #{discriminator_forward.10} parent=5 // pred_region
      %s142 = ssub.s32 %s9, 1
      %p143 = scmp.lt.s32.totalorder %s14, 7
      %s144 = scalar_select %p143, %s14, 7
      %s145 = smul.addr %s144, 4
      %s146 = smul.addr %s145, 4
      %s147 = scalar_lea.vmem %s0, %s146
      %p148 = pneg %p35
      %p149 = pneg %p32
      %p150 = pneg %p56
      %p151 = pneg %p53
      %p152 = pneg %p77
      %p153 = pneg %p74
      %p154 = pneg %p103
      %p155 = pneg %p100
      %p156 = scmp.lt.s32.totalorder %s14, 7
      %s157 = scalar_select %p156, %s14, 7
      %s158 = smul.addr %s157, 4
      %s159 = scalar_lea.vmem %s3, %s158
      %p160 = scmp.lt.s32.totalorder %s14, 7
      %s161 = scalar_select %p160, %s14, 7
      %s162 = smul.addr %s161, 4
      %s163 = smul.addr %s162, 4
      %s164 = scalar_lea.vmem %s0, %s163
      %p165 = scmp.lt.s32.totalorder %s14, 7
      %s166 = scalar_select %p165, %s14, 7
      %s167 = smul.addr %s166, 4
      %s168 = scalar_lea.vmem %s3, %s167
      %v169 = vld [vmem:[%s164] sm:$0xff]
      %v170 = vld [vmem:[%s164 + $0x8] sm:$0xff]
      %v171 = vld [vmem:[%s1] sm:$0x3]
      %v173 = vlaneseq
      %v174 = vshrl.u32 %v173, 7
      %v175 = vsub.s32 0, %v174
      %v176 = vrot.slane %v171, %v175
      %v177 = vlaneseq
      %v178 = vshrl.u32 %v177, 7
      %v179 = vsub.s32 1, %v178
      %v180 = vrot.slane %v171, %v179
      %v181 = vcombine.low %v176, %v180
      %v183 = vmul.f32 %v169, %v181
      %v184 = vmul.f32 %v170, %v181
      %v185 = vld [vmem:[%s2] sm:$0x3]
      %v187 = vlaneseq
      %v188 = vshrl.u32 %v187, 7
      %v189 = vsub.s32 0, %v188
      %v190 = vrot.slane %v185, %v189
      %v191 = vlaneseq
      %v192 = vshrl.u32 %v191, 7
      %v193 = vsub.s32 1, %v192
      %v194 = vrot.slane %v185, %v193
      %v195 = vcombine.low %v190, %v194
      %v197 = vadd.f32 %v183, %v195
      %v198 = vadd.f32 %v184, %v195
      %vm199 = vcmp.gt.f32.partialorder %v197, 0.0
      %vm200 = vcmp.gt.f32.partialorder %v198, 0.0
      %v201 = vmul.f32 %v197, 0.2
      %v202 = vmul.f32 %v198, 0.2
      %v203 = vsel %vm199, %v197, %v201
      %v204 = vsel %vm200, %v198, %v202
      %v205 = vmax.f32 %v203, %v204
      %v207 = vrot.slane %v205, 4
      %v209 = vmax.f32 %v205, %v207
      %210 = vst [vmem:[%s168] sm:$0xf] %v209
      %p211 = scmp.lt.s32.totalorder %s14, 7
      %s212 = scalar_select %p211, %s14, 7
      %s213 = smul.addr %s212, 4
      %s214 = scalar_lea.vmem %s3, %s213
      // Predicated region
      $region33: #{discriminator_forward.10} parent=31 // pred_check
        %p215 = pneg %p100
      $region34: #{discriminator_forward.10} parent=31 // pred_check_branch
        %217 = sbr.rel (%p215) target = $region36
      $region35: #{discriminator_forward.10} parent=31 // pred_region
        _
      $region36: #{discriminator_forward.10} parent=31 // pred_fallthru
        _
    $region32: #{discriminator_forward.10} parent=5 // pred_fallthru
      _
    %p218 = scmp.le.s32.totalorder 2, %s9
    // Predicated region
    $region37: #{discriminator_forward.10} parent=5 // pred_check
      %p219 = pneg %p218
    $region38: #{discriminator_forward.10} parent=5 // pred_check_branch
      %221 = sbr.rel (%p219) target = $region40
    $region39: #{discriminator_forward.10} parent=5 // pred_region
      %s222 = ssub.s32 %s9, 2
      // Predicated region
      $region41: #{discriminator_forward.10} parent=39 // pred_check
        %p223 = pneg %p106
      $region42: #{discriminator_forward.10} parent=39 // pred_check_branch
        %225 = sbr.rel (%p223) target = $region44
      $region43: #{discriminator_forward.10} parent=39 // pred_region
        %p226 = scmp.lt.s32.totalorder %s15, 7
        %s227 = scalar_select %p226, %s15, 7
        %s228 = smul.addr %s227, 4
        %s229 = scalar_lea.vmem %s3, %s228
      $region44: #{discriminator_forward.10} parent=39 // pred_fallthru
        _
    $region40: #{discriminator_forward.10} parent=5 // pred_fallthru
      _
  $region6: #{discriminator_forward.10} parent=0 // loop_footer
    %s13 = sadd.s32 1, %s9
  $region7: #{discriminator_forward.10} parent=0 // loop_footer_branch
    %8 = sbr.rel target = $region3
  $region8: #{discriminator_forward.10} parent=0 // loop_exit
    _

// kernel: discriminator_forward.9
$region0: #{discriminator_forward.9}
  #allocation0 [shape = 'u32[]', space=smem, size = 0x4, offset = 0x4, fixed_abs, tag = 'smem constant byte address 0x4 - core index']
  #allocation1 [shape = 'u32[144,128]{1,0:T(1,128)}', space=vmem, size = 0x12000, scoped, tag = 'internal scratch']
  %s0 = inlined_call_operand.vmem [shape: bf16[2,10,10,128], index: 0, kind: input, shape index: {}, may-alias: {0,1,2}]
  %s1 = inlined_call_operand.vmem [shape: bf16[2,10,10,128], index: 1, kind: input, shape index: {}, may-alias: {0,1,2}]
  %s2 = inlined_call_operand.vmem [shape: bf16[2,10,10,128], index: 2, kind: input, shape index: {}, may-alias: {0,1,2}]
  %s3 = inlined_call_operand.vmem [shape: bf16[9,128,128], index: 3, kind: input, shape index: {}]
  %s4 = inlined_call_operand.vmem [shape: f32[2,8,8,128], index: 4, kind: output, shape index: {0}]
  %s5 = inlined_call_operand.vmem [shape: f32[2,8,2,128], index: 5, kind: output, shape index: {1}]
  %6 = xla_tuple %s4, %s5
  %s7 = sld [smem:[#allocation0]]
  $region57: #{discriminator_forward.9} parent=0
    _
  %s9 = ssub.s32 1, %s7
  %s10 = scalar_select 0, %s9, %s7
  loop: start=0, step=1, limit=18
  $region2: #{discriminator_forward.9} parent=0 // loop_pre_header
    _
  $region3: #{discriminator_forward.9} parent=0 // loop_header
    %s12 = sphi 0, %s16
    %p13 = scmp.ge.s32.totalorder %s12, 18
    %s19 = sphi 0, %s31
    %s20 = sphi 0, %s27
    %s21 = sphi 0, %s19
    %s22 = sphi 0, %s20
    %s23 = sphi 0, %s21
    %s24 = sphi 0, %s22
    %s36 = sphi 0, %s38
    %s39 = sphi 0, %s36
    %s40 = sphi 0, %s39
    %s56 = sphi 0, %s40
    %s66 = sphi 0, %s68
    %s69 = sphi 0, %s66
    %s70 = sphi 0, %s69
    %s86 = sphi 0, %s70
    %s96 = sphi 0, %s98
    %s99 = sphi 0, %s96
    %s100 = sphi 0, %s99
    %s116 = sphi 0, %s100
    %s120 = sphi 0, %s120
    %s122 = sphi 0, %s120
    %s123 = sphi 0, %s122
    %s137 = sphi 0, %s123
    %s145 = sphi 0, %s147
    %s148 = sphi 0, %s145
    %s149 = sphi 0, %s148
    %s165 = sphi 0, %s149
    %s173 = sphi 0, %s175
    %s176 = sphi 0, %s173
    %s177 = sphi 0, %s176
    %s193 = sphi 0, %s177
  $region4: #{discriminator_forward.9} parent=0 // loop_header_branch
    %15 = sbr.rel (%p13) target = $region8
  $region5: #{discriminator_forward.9} parent=0 // loop_body
    %s17 = ssub.s32 %s12, 1
    %s18 = ssub.s32 %s12, 2
    %s25 = sadd.s32 1, %s20
    %p26 = scmp.ge.s32.totalorder %s25, 8
    %s27 = scalar_select %p26, 0, %s25
    %s28 = sadd.s32 1, %s19
    %s29 = scalar_select %p26, %s28, %s19
    %p30 = scmp.ge.s32.totalorder %s29, 2
    %s31 = scalar_select %p30, 0, %s29
    %s32 = ssub.s32 %s19, %s31
    %s33 = ssub.s32 %s20, %s27
    %s34 = sor.u32 %s32, %s33
    %p35 = scmp.eq.s32.totalorder %s34, 0
    %s37 = sadd.s32 %s36, 1
    %s38 = scalar_select %p35, %s36, %s37
    %p41 = pneg %p35
    %p42 = scmp.eq.s32.totalorder %s12, 15
    %p43 = por %p41, %p42
    %p44 = scmp.ne.s32.totalorder %s36, %s39
    %p45 = scmp.eq.s32.totalorder %s12, 0
    %p46 = por %p44, %p45
    %p47 = scmp.ne.s32.totalorder %s36, %s39
    %p48 = scmp.eq.s32.totalorder %s17, 15
    %p49 = por %p47, %p48
    %p50 = scmp.ne.s32.totalorder %s39, %s40
    %p51 = scmp.eq.s32.totalorder %s17, 0
    %p52 = por %p50, %p51
    %p53 = scmp.ne.s32.totalorder %s39, %s40
    %p54 = scmp.eq.s32.totalorder %s18, 15
    %p55 = por %p53, %p54
    %p57 = scmp.ne.s32.totalorder %s40, %s56
    %p58 = scmp.eq.s32.totalorder %s18, 0
    %p59 = por %p57, %p58
    %s60 = sadd.s32 %s20, 1
    %s61 = sadd.s32 %s27, 1
    %s62 = ssub.s32 %s19, %s31
    %s63 = ssub.s32 %s60, %s61
    %s64 = sor.u32 %s62, %s63
    %p65 = scmp.eq.s32.totalorder %s64, 0
    %s67 = sadd.s32 %s66, 1
    %s68 = scalar_select %p65, %s66, %s67
    %p71 = pneg %p65
    %p72 = scmp.eq.s32.totalorder %s12, 15
    %p73 = por %p71, %p72
    %p74 = scmp.ne.s32.totalorder %s66, %s69
    %p75 = scmp.eq.s32.totalorder %s12, 0
    %p76 = por %p74, %p75
    %p77 = scmp.ne.s32.totalorder %s66, %s69
    %p78 = scmp.eq.s32.totalorder %s17, 15
    %p79 = por %p77, %p78
    %p80 = scmp.ne.s32.totalorder %s69, %s70
    %p81 = scmp.eq.s32.totalorder %s17, 0
    %p82 = por %p80, %p81
    %p83 = scmp.ne.s32.totalorder %s69, %s70
    %p84 = scmp.eq.s32.totalorder %s18, 15
    %p85 = por %p83, %p84
    %p87 = scmp.ne.s32.totalorder %s70, %s86
    %p88 = scmp.eq.s32.totalorder %s18, 0
    %p89 = por %p87, %p88
    %s90 = sadd.s32 %s20, 2
    %s91 = sadd.s32 %s27, 2
    %s92 = ssub.s32 %s19, %s31
    %s93 = ssub.s32 %s90, %s91
    %s94 = sor.u32 %s92, %s93
    %p95 = scmp.eq.s32.totalorder %s94, 0
    %s97 = sadd.s32 %s96, 1
    %s98 = scalar_select %p95, %s96, %s97
    %p101 = pneg %p95
    %p102 = scmp.eq.s32.totalorder %s12, 15
    %p103 = por %p101, %p102
    %p104 = scmp.ne.s32.totalorder %s96, %s99
    %p105 = scmp.eq.s32.totalorder %s12, 0
    %p106 = por %p104, %p105
    %p107 = scmp.ne.s32.totalorder %s96, %s99
    %p108 = scmp.eq.s32.totalorder %s17, 15
    %p109 = por %p107, %p108
    %p110 = scmp.ne.s32.totalorder %s99, %s100
    %p111 = scmp.eq.s32.totalorder %s17, 0
    %p112 = por %p110, %p111
    %p113 = scmp.ne.s32.totalorder %s99, %s100
    %p114 = scmp.eq.s32.totalorder %s18, 15
    %p115 = por %p113, %p114
    %p117 = scmp.ne.s32.totalorder %s100, %s116
    %p118 = scmp.eq.s32.totalorder %s18, 0
    %p119 = por %p117, %p118
    %s121 = sadd.s32 %s120, 1
    %p124 = scmp.eq.s32.totalorder %s12, 15
    %p125 = scmp.ne.s32.totalorder %s120, %s122
    %p126 = scmp.eq.s32.totalorder %s12, 0
    %p127 = por %p125, %p126
    %p128 = scmp.ne.s32.totalorder %s120, %s122
    %p129 = scmp.eq.s32.totalorder %s17, 15
    %p130 = por %p128, %p129
    %p131 = scmp.ne.s32.totalorder %s122, %s123
    %p132 = scmp.eq.s32.totalorder %s17, 0
    %p133 = por %p131, %p132
    %p134 = scmp.ne.s32.totalorder %s122, %s123
    %p135 = scmp.eq.s32.totalorder %s18, 15
    %p136 = por %p134, %p135
    %p138 = scmp.ne.s32.totalorder %s123, %s137
    %p139 = scmp.eq.s32.totalorder %s18, 0
    %p140 = por %p138, %p139
    %s141 = ssub.s32 %s19, %s31
    %s142 = ssub.s32 %s20, %s27
    %s143 = sor.u32 %s141, %s142
    %p144 = scmp.eq.s32.totalorder %s143, 0
    %s146 = sadd.s32 %s145, 1
    %s147 = scalar_select %p144, %s145, %s146
    %p150 = pneg %p144
    %p151 = scmp.eq.s32.totalorder %s12, 15
    %p152 = por %p150, %p151
    %p153 = scmp.ne.s32.totalorder %s145, %s148
    %p154 = scmp.eq.s32.totalorder %s12, 0
    %p155 = por %p153, %p154
    %p156 = scmp.ne.s32.totalorder %s145, %s148
    %p157 = scmp.eq.s32.totalorder %s17, 15
    %p158 = por %p156, %p157
    %p159 = scmp.ne.s32.totalorder %s148, %s149
    %p160 = scmp.eq.s32.totalorder %s17, 0
    %p161 = por %p159, %p160
    %p162 = scmp.ne.s32.totalorder %s148, %s149
    %p163 = scmp.eq.s32.totalorder %s18, 15
    %p164 = por %p162, %p163
    %p166 = scmp.ne.s32.totalorder %s149, %s165
    %p167 = scmp.eq.s32.totalorder %s18, 0
    %p168 = por %p166, %p167
    %s169 = ssub.s32 %s19, %s31
    %s170 = ssub.s32 %s20, %s27
    %s171 = sor.u32 %s169, %s170
    %p172 = scmp.eq.s32.totalorder %s171, 0
    %s174 = sadd.s32 %s173, 1
    %s175 = scalar_select %p172, %s173, %s174
    %p178 = pneg %p172
    %p179 = scmp.eq.s32.totalorder %s12, 15
    %p180 = por %p178, %p179
    %p181 = scmp.ne.s32.totalorder %s173, %s176
    %p182 = scmp.eq.s32.totalorder %s12, 0
    %p183 = por %p181, %p182
    %p184 = scmp.ne.s32.totalorder %s173, %s176
    %p185 = scmp.eq.s32.totalorder %s17, 15
    %p186 = por %p184, %p185
    %p187 = scmp.ne.s32.totalorder %s176, %s177
    %p188 = scmp.eq.s32.totalorder %s17, 0
    %p189 = por %p187, %p188
    %p190 = scmp.ne.s32.totalorder %s176, %s177
    %p191 = scmp.eq.s32.totalorder %s18, 15
    %p192 = por %p190, %p191
    %p194 = scmp.ne.s32.totalorder %s177, %s193
    %p195 = scmp.eq.s32.totalorder %s18, 0
    %p196 = por %p194, %p195
    %p197 = scmp.le.s32.totalorder 1, %s12
    %p198 = scmp.lt.s32.totalorder %s12, 17
    %p199 = pnand %p197, %p198
    %p200 = pneg %p199
    // Predicated region
    $region9: #{discriminator_forward.9} parent=5 // pred_check
      _
    $region10: #{discriminator_forward.9} parent=5 // pred_check_branch
      %202 = sbr.rel (%p199) target = $region12
    $region11: #{discriminator_forward.9} parent=5 // pred_region
      %s203 = ssub.s32 %s12, 1
      // Predicated region
      $region13: #{discriminator_forward.9} parent=11 // pred_check
        %p204 = pneg %p133
      $region14: #{discriminator_forward.9} parent=11 // pred_check_branch
        %206 = sbr.rel (%p204) target = $region16
      $region15: #{discriminator_forward.9} parent=11 // pred_region
        _
      $region16: #{discriminator_forward.9} parent=11 // pred_fallthru
        _
    $region12: #{discriminator_forward.9} parent=5 // pred_fallthru
      _
    %p207 = scmp.lt.s32.totalorder %s12, 16
    // Predicated region
    $region17: #{discriminator_forward.9} parent=5 // pred_check
      %p208 = pneg %p207
    $region18: #{discriminator_forward.9} parent=5 // pred_check_branch
      %210 = sbr.rel (%p208) target = $region20
    $region19: #{discriminator_forward.9} parent=5 // pred_region
      // Predicated region
      $region21: #{discriminator_forward.9} parent=19 // pred_check
        %p211 = pneg %p46
      $region22: #{discriminator_forward.9} parent=19 // pred_check_branch
        %213 = sbr.rel (%p211) target = $region24
      $region23: #{discriminator_forward.9} parent=19 // pred_region
        %p214 = scmp.lt.s32.totalorder %s19, 1
        %s215 = scalar_select %p214, %s19, 1
        %p216 = scmp.lt.s32.totalorder %s20, 9
        %s217 = scalar_select %p216, %s20, 9
        %s218 = smul.addr %s217, 2
        %s219 = smul.addr %s215, 20
        %s220 = sadd.s32 %s218, %s219
        %s221 = smul.addr %s220, 4
        %s222 = scalar_lea.vmem %s0, %s221
      $region24: #{discriminator_forward.9} parent=19 // pred_fallthru
        _
      // Predicated region
      $region25: #{discriminator_forward.9} parent=19 // pred_check
        %p223 = pneg %p76
      $region26: #{discriminator_forward.9} parent=19 // pred_check_branch
        %225 = sbr.rel (%p223) target = $region28
      $region27: #{discriminator_forward.9} parent=19 // pred_region
        %s226 = sadd.s32 %s20, 1
        %p227 = scmp.lt.s32.totalorder %s19, 1
        %s228 = scalar_select %p227, %s19, 1
        %p229 = scmp.lt.s32.totalorder %s226, 9
        %s230 = scalar_select %p229, %s226, 9
        %s231 = smul.addr %s230, 2
        %s232 = smul.addr %s228, 20
        %s233 = sadd.s32 %s231, %s232
        %s234 = smul.addr %s233, 4
        %s235 = scalar_lea.vmem %s1, %s234
        %s236 = sadd.s32 %s20, 1
      $region28: #{discriminator_forward.9} parent=19 // pred_fallthru
        _
      // Predicated region
      $region29: #{discriminator_forward.9} parent=19 // pred_check
        %p237 = pneg %p106
      $region30: #{discriminator_forward.9} parent=19 // pred_check_branch
        %239 = sbr.rel (%p237) target = $region32
      $region31: #{discriminator_forward.9} parent=19 // pred_region
        %s240 = sadd.s32 %s20, 2
        %p241 = scmp.lt.s32.totalorder %s19, 1
        %s242 = scalar_select %p241, %s19, 1
        %p243 = scmp.lt.s32.totalorder %s240, 9
        %s244 = scalar_select %p243, %s240, 9
        %s245 = smul.addr %s244, 2
        %s246 = smul.addr %s242, 20
        %s247 = sadd.s32 %s245, %s246
        %s248 = smul.addr %s247, 4
        %s249 = scalar_lea.vmem %s2, %s248
        %s250 = sadd.s32 %s20, 2
      $region32: #{discriminator_forward.9} parent=19 // pred_fallthru
        _
    $region20: #{discriminator_forward.9} parent=5 // pred_fallthru
      _
    %p251 = scmp.le.s32.totalorder 1, %s12
    %p252 = scmp.lt.s32.totalorder %s12, 17
    %p253 = pnand %p251, %p252
    %p254 = pneg %p253
    // Predicated region
    $region33: #{discriminator_forward.9} parent=5 // pred_check
      _
    $region34: #{discriminator_forward.9} parent=5 // pred_check_branch
      %256 = sbr.rel (%p253) target = $region36
    $region35: #{discriminator_forward.9} parent=5 // pred_region
      %s257 = ssub.s32 %s12, 1
      %p258 = scmp.lt.s32.totalorder %s21, 1
      %s259 = scalar_select %p258, %s21, 1
      %p260 = scmp.lt.s32.totalorder %s22, 9
      %s261 = scalar_select %p260, %s22, 9
      %s262 = smul.addr %s261, 2
      %s263 = smul.addr %s259, 20
      %s264 = sadd.s32 %s262, %s263
      %s265 = smul.addr %s264, 4
      %s266 = scalar_lea.vmem %s0, %s265
      %p267 = pneg %p52
      %p268 = pneg %p49
      %s269 = sadd.s32 %s22, 1
      %p270 = scmp.lt.s32.totalorder %s21, 1
      %s271 = scalar_select %p270, %s21, 1
      %p272 = scmp.lt.s32.totalorder %s269, 9
      %s273 = scalar_select %p272, %s269, 9
      %s274 = smul.addr %s273, 2
      %s275 = smul.addr %s271, 20
      %s276 = sadd.s32 %s274, %s275
      %s277 = smul.addr %s276, 4
      %s278 = scalar_lea.vmem %s1, %s277
      %p279 = pneg %p82
      %p280 = pneg %p79
      %s281 = sadd.s32 %s22, 2
      %p282 = scmp.lt.s32.totalorder %s21, 1
      %s283 = scalar_select %p282, %s21, 1
      %p284 = scmp.lt.s32.totalorder %s281, 9
      %s285 = scalar_select %p284, %s281, 9
      %s286 = smul.addr %s285, 2
      %s287 = smul.addr %s283, 20
      %s288 = sadd.s32 %s286, %s287
      %s289 = smul.addr %s288, 4
      %s290 = scalar_lea.vmem %s2, %s289
      %p291 = pneg %p112
      %p292 = pneg %p109
      %p293 = pneg %p133
      %p294 = pneg %p130
      %p295 = pneg %p161
      %p296 = pneg %p158
      %p297 = scmp.lt.s32.totalorder %s21, 1
      %s298 = scalar_select %p297, %s21, 1
      %p299 = scmp.lt.s32.totalorder %s22, 7
      %s300 = scalar_select %p299, %s22, 7
      %s301 = smul.addr %s298, 8
      %s302 = sadd.s32 %s300, %s301
      %s303 = smul.addr %s302, 8
      %s304 = scalar_lea.vmem %s4, %s303
      %p305 = pneg %p189
      %p306 = pneg %p186
      %p307 = scmp.lt.s32.totalorder %s21, 1
      %s308 = scalar_select %p307, %s21, 1
      %p309 = scmp.lt.s32.totalorder %s22, 7
      %s310 = scalar_select %p309, %s22, 7
      %s311 = smul.addr %s308, 8
      %s312 = sadd.s32 %s310, %s311
      %s313 = smul.addr %s312, 2
      %s314 = scalar_lea.vmem %s5, %s313
      %p315 = scmp.lt.s32.totalorder %s21, 1
      %s316 = scalar_select %p315, %s21, 1
      %p317 = scmp.lt.s32.totalorder %s22, 9
      %s318 = scalar_select %p317, %s22, 9
      %s319 = smul.addr %s318, 2
      %s320 = smul.addr %s316, 20
      %s321 = sadd.s32 %s319, %s320
      %s322 = smul.addr %s321, 4
      %s323 = scalar_lea.vmem %s0, %s322
      %s324 = sadd.s32 %s22, 1
      %p325 = scmp.lt.s32.totalorder %s21, 1
      %s326 = scalar_select %p325, %s21, 1
      %p327 = scmp.lt.s32.totalorder %s324, 9
      %s328 = scalar_select %p327, %s324, 9
      %s329 = smul.addr %s328, 2
      %s330 = smul.addr %s326, 20
      %s331 = sadd.s32 %s329, %s330
      %s332 = smul.addr %s331, 4
      %s333 = scalar_lea.vmem %s1, %s332
      %s334 = sadd.s32 %s22, 1
      %s335 = sadd.s32 %s22, 2
      %p336 = scmp.lt.s32.totalorder %s21, 1
      %s337 = scalar_select %p336, %s21, 1
      %p338 = scmp.lt.s32.totalorder %s335, 9
      %s339 = scalar_select %p338, %s335, 9
      %s340 = smul.addr %s339, 2
      %s341 = smul.addr %s337, 20
      %s342 = sadd.s32 %s340, %s341
      %s343 = smul.addr %s342, 4
      %s344 = scalar_lea.vmem %s2, %s343
      %s345 = sadd.s32 %s22, 2
      %p346 = scmp.lt.s32.totalorder %s21, 1
      %s347 = scalar_select %p346, %s21, 1
      %p348 = scmp.lt.s32.totalorder %s22, 7
      %s349 = scalar_select %p348, %s22, 7
      %s350 = smul.addr %s347, 8
      %s351 = sadd.s32 %s349, %s350
      %s352 = smul.addr %s351, 8
      %s353 = scalar_lea.vmem %s4, %s352
      %p354 = scmp.lt.s32.totalorder %s21, 1
      %s355 = scalar_select %p354, %s21, 1
      %p356 = scmp.lt.s32.totalorder %s22, 7
      %s357 = scalar_select %p356, %s22, 7
      %s358 = smul.addr %s355, 8
      %s359 = sadd.s32 %s357, %s358
      %s360 = smul.addr %s359, 2
      %s361 = scalar_lea.vmem %s5, %s360
      %v363 = vld [vmem:[%s323] sm:$0xf]
      %v364 = vld [vmem:[%s323 + $0x4] sm:$0x1]
      %v365 = vld [vmem:[%s333] sm:$0xf]
      %v366 = vld [vmem:[%s333 + $0x4] sm:$0x1]
      %v367 = vld [vmem:[%s344] sm:$0xf]
      %v368 = vld [vmem:[%s344 + $0x4] sm:$0x1]
      %v369 = vld [vmem:[%s3] sm:$0xf]
      %v370 = vld [vmem:[%s3 + $0x4] sm:$0xf]
      %v371 = vld [vmem:[%s3 + $0x8] sm:$0xf]
      %v372 = vld [vmem:[%s3 + $0xc] sm:$0xf]
      %v373 = vld [vmem:[%s3 + $0x10] sm:$0xf]
      %v374 = vld [vmem:[%s3 + $0x14] sm:$0xf]
      %v375 = vld [vmem:[%s3 + $0x18] sm:$0xf]
      %v376 = vld [vmem:[%s3 + $0x1c] sm:$0xf]
      %v377 = vld [vmem:[%s3 + $0x20] sm:$0xf]
      %v378 = vld [vmem:[%s3 + $0x24] sm:$0xf]
      %v379 = vld [vmem:[%s3 + $0x28] sm:$0xf]
      %v380 = vld [vmem:[%s3 + $0x2c] sm:$0xf]
      %v381 = vld [vmem:[%s3 + $0x30] sm:$0xf]
      %v382 = vld [vmem:[%s3 + $0x34] sm:$0xf]
      %v383 = vld [vmem:[%s3 + $0x38] sm:$0xf]
      %v384 = vld [vmem:[%s3 + $0x3c] sm:$0xf]
      %v387 = vunpack.c.l.b16 %v363
      %v388 = vunpack.c.l.b16 %v364
      %v389 = vpack.c.b16 %v388, %v387
      %v407 = vunpack.c.l.b16 %v369
      %v408 = vunpack.c.l.b16 %v370
      %v409 = vunpack.c.l.b16 %v371
      %v410 = vunpack.c.l.b16 %v372
      %v411 = vunpack.c.l.b16 %v373
      %v412 = vunpack.c.l.b16 %v374
      %v413 = vunpack.c.l.b16 %v375
      %v414 = vunpack.c.l.b16 %v376
      %v415 = vunpack.c.l.b16 %v377
      %v416 = vunpack.c.l.b16 %v378
      %v417 = vunpack.c.l.b16 %v379
      %v418 = vunpack.c.l.b16 %v380
      %v419 = vunpack.c.l.b16 %v381
      %v420 = vunpack.c.l.b16 %v382
      %v421 = vunpack.c.l.b16 %v383
      %v422 = vunpack.c.l.b16 %v384
      %v423 = vpack.c.b16 %v408, %v407
      %v424 = vpack.c.b16 %v410, %v409
      %v425 = vpack.c.b16 %v412, %v411
      %v426 = vpack.c.b16 %v414, %v413
      %v427 = vpack.c.b16 %v416, %v415
      %v428 = vpack.c.b16 %v418, %v417
      %v429 = vpack.c.b16 %v420, %v419
      %v430 = vpack.c.b16 %v422, %v421
      %439 = vmatprep.subr.bf16.mxu0 0
      %440 = vmatpush1.bf16.msra.mxu0 %v423
      %441 = vmatprep.subr.bf16.mxu0 0
      %442 = vmatpush1.bf16.msra.mxu0 %v424
      %443 = vmatprep.subr.bf16.mxu0 0
      %444 = vmatpush1.bf16.msra.mxu0 %v425
      %445 = vmatprep.subr.bf16.mxu0 0
      %446 = vmatpush1.bf16.msra.mxu0 %v426
      %447 = vmatprep.subr.bf16.mxu0 0
      %448 = vmatpush1.bf16.msra.mxu0 %v427
      %449 = vmatprep.subr.bf16.mxu0 0
      %450 = vmatpush1.bf16.msra.mxu0 %v428
      %451 = vmatprep.subr.bf16.mxu0 0
      %452 = vmatpush1.bf16.msra.mxu0 %v429
      %453 = vmatprep.subr.bf16.mxu0 0
      %454 = vmatpush1.bf16.msra.mxu0 %v430
      %455 = vmatprep.subr.bf16.mxu0 0
      %456 = vmatpush1.bf16.msra.mxu0 0
      %457 = vmatprep.subr.bf16.mxu0 0
      %458 = vmatpush1.bf16.msra.mxu0 0
      %459 = vmatprep.subr.bf16.mxu0 0
      %460 = vmatpush1.bf16.msra.mxu0 0
      %461 = vmatprep.subr.bf16.mxu0 0
      %462 = vmatpush1.bf16.msra.mxu0 0
      %463 = vmatprep.subr.bf16.mxu0 0
      %464 = vmatpush1.bf16.msra.mxu0 0
      %465 = vmatprep.subr.bf16.mxu0 0
      %466 = vmatpush1.bf16.msra.mxu0 0
      %467 = vmatprep.subr.bf16.mxu0 0
      %468 = vmatpush1.bf16.msra.mxu0 0
      %469 = vmatprep.subr.bf16.mxu0 0
      %470 = vmatpush1.bf16.msra.mxu0 0
      %471 = vmatprep.mubr.bf16.mxu0 0
      %472 = vmatmul.mubr.bf16.gmra.mrb[0].mxu0 %v389
      %v473 = vpop.f32.mrb[0].mxu0
      %v474 = vadd.f32 0.0, %v473
      %v475 = vpop.f32.mrb[0].mxu0
      %v476 = vpop.f32.mrb[0].mxu0
      %v477 = vpop.f32.mrb[0].mxu0
      %478 = vdwg.mxu0
      %v479 = vadd.f32 %v474, 0.0
      %s480 = scalar_lea.vmem %s3, 64
      %v481 = vld [vmem:[%s480] sm:$0xf]
      %v482 = vld [vmem:[%s480 + $0x4] sm:$0xf]
      %v483 = vld [vmem:[%s480 + $0x8] sm:$0xf]
      %v484 = vld [vmem:[%s480 + $0xc] sm:$0xf]
      %v485 = vld [vmem:[%s480 + $0x10] sm:$0xf]
      %v486 = vld [vmem:[%s480 + $0x14] sm:$0xf]
      %v487 = vld [vmem:[%s480 + $0x18] sm:$0xf]
      %v488 = vld [vmem:[%s480 + $0x1c] sm:$0xf]
      %v489 = vld [vmem:[%s480 + $0x20] sm:$0xf]
      %v490 = vld [vmem:[%s480 + $0x24] sm:$0xf]
      %v491 = vld [vmem:[%s480 + $0x28] sm:$0xf]
      %v492 = vld [vmem:[%s480 + $0x2c] sm:$0xf]
      %v493 = vld [vmem:[%s480 + $0x30] sm:$0xf]
      %v494 = vld [vmem:[%s480 + $0x34] sm:$0xf]
      %v495 = vld [vmem:[%s480 + $0x38] sm:$0xf]
      %v496 = vld [vmem:[%s480 + $0x3c] sm:$0xf]
      %v513 = vunpack.c.l.b16 %v481
      %v514 = vunpack.c.l.b16 %v482
      %v515 = vunpack.c.l.b16 %v483
      %v516 = vunpack.c.l.b16 %v484
      %v517 = vunpack.c.l.b16 %v485
      %v518 = vunpack.c.l.b16 %v486
      %v519 = vunpack.c.l.b16 %v487
      %v520 = vunpack.c.l.b16 %v488
      %v521 = vunpack.c.l.b16 %v489
      %v522 = vunpack.c.l.b16 %v490
      %v523 = vunpack.c.l.b16 %v491
      %v524 = vunpack.c.l.b16 %v492
      %v525 = vunpack.c.l.b16 %v493
      %v526 = vunpack.c.l.b16 %v494
      %v527 = vunpack.c.l.b16 %v495
      %v528 = vunpack.c.l.b16 %v496
      %v529 = vpack.c.b16 %v514, %v513
      %v530 = vpack.c.b16 %v516, %v515
      %v531 = vpack.c.b16 %v518, %v517
      %v532 = vpack.c.b16 %v520, %v519
      %v533 = vpack.c.b16 %v522, %v521
      %v534 = vpack.c.b16 %v524, %v523
      %v535 = vpack.c.b16 %v526, %v525
      %v536 = vpack.c.b16 %v528, %v527
      %545 = vmatprep.subr.bf16.mxu0 0
      %546 = vmatpush1.bf16.msra.mxu0 %v529
      %547 = vmatprep.subr.bf16.mxu0 0
      %548 = vmatpush1.bf16.msra.mxu0 %v530
      %549 = vmatprep.subr.bf16.mxu0 0
      %550 = vmatpush1.bf16.msra.mxu0 %v531
      %551 = vmatprep.subr.bf16.mxu0 0
      %552 = vmatpush1.bf16.msra.mxu0 %v532
      %553 = vmatprep.subr.bf16.mxu0 0
      %554 = vmatpush1.bf16.msra.mxu0 %v533
      %555 = vmatprep.subr.bf16.mxu0 0
      %556 = vmatpush1.bf16.msra.mxu0 %v534
      %557 = vmatprep.subr.bf16.mxu0 0
      %558 = vmatpush1.bf16.msra.mxu0 %v535
      %559 = vmatprep.subr.bf16.mxu0 0
      %560 = vmatpush1.bf16.msra.mxu0 %v536
      %561 = vmatprep.subr.bf16.mxu0 0
      %562 = vmatpush1.bf16.msra.mxu0 0
      %563 = vmatprep.subr.bf16.mxu0 0
      %564 = vmatpush1.bf16.msra.mxu0 0
      %565 = vmatprep.subr.bf16.mxu0 0
      %566 = vmatpush1.bf16.msra.mxu0 0
      %567 = vmatprep.subr.bf16.mxu0 0
      %568 = vmatpush1.bf16.msra.mxu0 0
      %569 = vmatprep.subr.bf16.mxu0 0
      %570 = vmatpush1.bf16.msra.mxu0 0
      %571 = vmatprep.subr.bf16.mxu0 0
      %572 = vmatpush1.bf16.msra.mxu0 0
      %573 = vmatprep.subr.bf16.mxu0 0
      %574 = vmatpush1.bf16.msra.mxu0 0
      %575 = vmatprep.subr.bf16.mxu0 0
      %576 = vmatpush1.bf16.msra.mxu0 0
      %577 = vmatprep.mubr.bf16.mxu0 0
      %578 = vmatmul.mubr.bf16.gmra.mrb[0].mxu0 %v389
      %v579 = vpop.f32.mrb[0].mxu0
      %v580 = vadd.f32 0.0, %v579
      %v581 = vpop.f32.mrb[0].mxu0
      %v582 = vpop.f32.mrb[0].mxu0
      %v583 = vadd.f32 0.0, %v582
      %v584 = vpop.f32.mrb[0].mxu0
      %585 = vdwg.mxu0
      %vm588 = vcmask 1046528
      %v589 = vrot.slane %v580, 1
      %v590 = vrot.slane %v583, 1
      %v591 = vsel %vm588, %v589, %v590
      %v593 = vadd.f32 %v479, %v591
      %s594 = scalar_lea.vmem %s3, 128
      %v595 = vld [vmem:[%s594] sm:$0xf]
      %v596 = vld [vmem:[%s594 + $0x4] sm:$0xf]
      %v597 = vld [vmem:[%s594 + $0x8] sm:$0xf]
      %v598 = vld [vmem:[%s594 + $0xc] sm:$0xf]
      %v599 = vld [vmem:[%s594 + $0x10] sm:$0xf]
      %v600 = vld [vmem:[%s594 + $0x14] sm:$0xf]
      %v601 = vld [vmem:[%s594 + $0x18] sm:$0xf]
      %v602 = vld [vmem:[%s594 + $0x1c] sm:$0xf]
      %v603 = vld [vmem:[%s594 + $0x20] sm:$0xf]
      %v604 = vld [vmem:[%s594 + $0x24] sm:$0xf]
      %v605 = vld [vmem:[%s594 + $0x28] sm:$0xf]
      %v606 = vld [vmem:[%s594 + $0x2c] sm:$0xf]
      %v607 = vld [vmem:[%s594 + $0x30] sm:$0xf]
      %v608 = vld [vmem:[%s594 + $0x34] sm:$0xf]
      %v609 = vld [vmem:[%s594 + $0x38] sm:$0xf]
      %v610 = vld [vmem:[%s594 + $0x3c] sm:$0xf]
      %v627 = vunpack.c.l.b16 %v595
      %v628 = vunpack.c.l.b16 %v596
      %v629 = vunpack.c.l.b16 %v597
      %v630 = vunpack.c.l.b16 %v598
      %v631 = vunpack.c.l.b16 %v599
      %v632 = vunpack.c.l.b16 %v600
      %v633 = vunpack.c.l.b16 %v601
      %v634 = vunpack.c.l.b16 %v602
      %v635 = vunpack.c.l.b16 %v603
      %v636 = vunpack.c.l.b16 %v604
      %v637 = vunpack.c.l.b16 %v605
      %v638 = vunpack.c.l.b16 %v606
      %v639 = vunpack.c.l.b16 %v607
      %v640 = vunpack.c.l.b16 %v608
      %v641 = vunpack.c.l.b16 %v609
      %v642 = vunpack.c.l.b16 %v610
      %v643 = vpack.c.b16 %v628, %v627
      %v644 = vpack.c.b16 %v630, %v629
      %v645 = vpack.c.b16 %v632, %v631
      %v646 = vpack.c.b16 %v634, %v633
      %v647 = vpack.c.b16 %v636, %v635
      %v648 = vpack.c.b16 %v638, %v637
      %v649 = vpack.c.b16 %v640, %v639
      %v650 = vpack.c.b16 %v642, %v641
      %659 = vmatprep.subr.bf16.mxu0 0
      %660 = vmatpush1.bf16.msra.mxu0 %v643
      %661 = vmatprep.subr.bf16.mxu0 0
      %662 = vmatpush1.bf16.msra.mxu0 %v644
      %663 = vmatprep.subr.bf16.mxu0 0
      %664 = vmatpush1.bf16.msra.mxu0 %v645
      %665 = vmatprep.subr.bf16.mxu0 0
      %666 = vmatpush1.bf16.msra.mxu0 %v646
      %667 = vmatprep.subr.bf16.mxu0 0
      %668 = vmatpush1.bf16.msra.mxu0 %v647
      %669 = vmatprep.subr.bf16.mxu0 0
      %670 = vmatpush1.bf16.msra.mxu0 %v648
      %671 = vmatprep.subr.bf16.mxu0 0
      %672 = vmatpush1.bf16.msra.mxu0 %v649
      %673 = vmatprep.subr.bf16.mxu0 0
      %674 = vmatpush1.bf16.msra.mxu0 %v650
      %675 = vmatprep.subr.bf16.mxu0 0
      %676 = vmatpush1.bf16.msra.mxu0 0
      %677 = vmatprep.subr.bf16.mxu0 0
      %678 = vmatpush1.bf16.msra.mxu0 0
      %679 = vmatprep.subr.bf16.mxu0 0
      %680 = vmatpush1.bf16.msra.mxu0 0
      %681 = vmatprep.subr.bf16.mxu0 0
      %682 = vmatpush1.bf16.msra.mxu0 0
      %683 = vmatprep.subr.bf16.mxu0 0
      %684 = vmatpush1.bf16.msra.mxu0 0
      %685 = vmatprep.subr.bf16.mxu0 0
      %686 = vmatpush1.bf16.msra.mxu0 0
      %687 = vmatprep.subr.bf16.mxu0 0
      %688 = vmatpush1.bf16.msra.mxu0 0
      %689 = vmatprep.subr.bf16.mxu0 0
      %690 = vmatpush1.bf16.msra.mxu0 0
      %691 = vmatprep.mubr.bf16.mxu0 0
      %692 = vmatmul.mubr.bf16.gmra.mrb[0].mxu0 %v389
      %v693 = vpop.f32.mrb[0].mxu0
      %v694 = vadd.f32 0.0, %v693
      %v695 = vpop.f32.mrb[0].mxu0
      %v696 = vpop.f32.mrb[0].mxu0
      %v697 = vadd.f32 0.0, %v696
      %v698 = vpop.f32.mrb[0].mxu0
      %699 = vdwg.mxu0
      %vm702 = vcmask 1045504
      %v703 = vrot.slane %v694, 2
      %v704 = vrot.slane %v697, 2
      %v705 = vsel %vm702, %v703, %v704
      %v707 = vadd.f32 %v593, %v705
      %s708 = scalar_lea.vmem %s3, 192
      %v709 = vld [vmem:[%s708] sm:$0xf]
      %v710 = vld [vmem:[%s708 + $0x4] sm:$0xf]
      %v711 = vld [vmem:[%s708 + $0x8] sm:$0xf]
      %v712 = vld [vmem:[%s708 + $0xc] sm:$0xf]
      %v713 = vld [vmem:[%s708 + $0x10] sm:$0xf]
      %v714 = vld [vmem:[%s708 + $0x14] sm:$0xf]
      %v715 = vld [vmem:[%s708 + $0x18] sm:$0xf]
      %v716 = vld [vmem:[%s708 + $0x1c] sm:$0xf]
      %v717 = vld [vmem:[%s708 + $0x20] sm:$0xf]
      %v718 = vld [vmem:[%s708 + $0x24] sm:$0xf]
      %v719 = vld [vmem:[%s708 + $0x28] sm:$0xf]
      %v720 = vld [vmem:[%s708 + $0x2c] sm:$0xf]
      %v721 = vld [vmem:[%s708 + $0x30] sm:$0xf]
      %v722 = vld [vmem:[%s708 + $0x34] sm:$0xf]
      %v723 = vld [vmem:[%s708 + $0x38] sm:$0xf]
      %v724 = vld [vmem:[%s708 + $0x3c] sm:$0xf]
      %v727 = vunpack.c.l.b16 %v365
      %v728 = vunpack.c.l.b16 %v366
      %v729 = vpack.c.b16 %v728, %v727
      %v747 = vunpack.c.l.b16 %v709
      %v748 = vunpack.c.l.b16 %v710
      %v749 = vunpack.c.l.b16 %v711
      %v750 = vunpack.c.l.b16 %v712
      %v751 = vunpack.c.l.b16 %v713
      %v752 = vunpack.c.l.b16 %v714
      %v753 = vunpack.c.l.b16 %v715
      %v754 = vunpack.c.l.b16 %v716
      %v755 = vunpack.c.l.b16 %v717
      %v756 = vunpack.c.l.b16 %v718
      %v757 = vunpack.c.l.b16 %v719
      %v758 = vunpack.c.l.b16 %v720
      %v759 = vunpack.c.l.b16 %v721
      %v760 = vunpack.c.l.b16 %v722
      %v761 = vunpack.c.l.b16 %v723
      %v762 = vunpack.c.l.b16 %v724
      %v763 = vpack.c.b16 %v748, %v747
      %v764 = vpack.c.b16 %v750, %v749
      %v765 = vpack.c.b16 %v752, %v751
      %v766 = vpack.c.b16 %v754, %v753
      %v767 = vpack.c.b16 %v756, %v755
      %v768 = vpack.c.b16 %v758, %v757
      %v769 = vpack.c.b16 %v760, %v759
      %v770 = vpack.c.b16 %v762, %v761
      %779 = vmatprep.subr.bf16.mxu0 0
      %780 = vmatpush1.bf16.msra.mxu0 %v763
      %781 = vmatprep.subr.bf16.mxu0 0
      %782 = vmatpush1.bf16.msra.mxu0 %v764
      %783 = vmatprep.subr.bf16.mxu0 0
      %784 = vmatpush1.bf16.msra.mxu0 %v765
      %785 = vmatprep.subr.bf16.mxu0 0
      %786 = vmatpush1.bf16.msra.mxu0 %v766
      %787 = vmatprep.subr.bf16.mxu0 0
      %788 = vmatpush1.bf16.msra.mxu0 %v767
      %789 = vmatprep.subr.bf16.mxu0 0
      %790 = vmatpush1.bf16.msra.mxu0 %v768
      %791 = vmatprep.subr.bf16.mxu0 0
      %792 = vmatpush1.bf16.msra.mxu0 %v769
      %793 = vmatprep.subr.bf16.mxu0 0
      %794 = vmatpush1.bf16.msra.mxu0 %v770
      %795 = vmatprep.subr.bf16.mxu0 0
      %796 = vmatpush1.bf16.msra.mxu0 0
      %797 = vmatprep.subr.bf16.mxu0 0
      %798 = vmatpush1.bf16.msra.mxu0 0
      %799 = vmatprep.subr.bf16.mxu0 0
      %800 = vmatpush1.bf16.msra.mxu0 0
      %801 = vmatprep.subr.bf16.mxu0 0
      %802 = vmatpush1.bf16.msra.mxu0 0
      %803 = vmatprep.subr.bf16.mxu0 0
      %804 = vmatpush1.bf16.msra.mxu0 0
      %805 = vmatprep.subr.bf16.mxu0 0
      %806 = vmatpush1.bf16.msra.mxu0 0
      %807 = vmatprep.subr.bf16.mxu0 0
      %808 = vmatpush1.bf16.msra.mxu0 0
      %809 = vmatprep.subr.bf16.mxu0 0
      %810 = vmatpush1.bf16.msra.mxu0 0
      %811 = vmatprep.mubr.bf16.mxu0 0
      %812 = vmatmul.mubr.bf16.gmra.mrb[0].mxu0 %v729
      %v813 = vpop.f32.mrb[0].mxu0
      %v814 = vadd.f32 0.0, %v813
      %v815 = vpop.f32.mrb[0].mxu0
      %v816 = vpop.f32.mrb[0].mxu0
      %v817 = vpop.f32.mrb[0].mxu0
      %818 = vdwg.mxu0
      %v819 = vadd.f32 %v707, %v814
      %s820 = scalar_lea.vmem %s3, 256
      %v821 = vld [vmem:[%s820] sm:$0xf]
      %v822 = vld [vmem:[%s820 + $0x4] sm:$0xf]
      %v823 = vld [vmem:[%s820 + $0x8] sm:$0xf]
      %v824 = vld [vmem:[%s820 + $0xc] sm:$0xf]
      %v825 = vld [vmem:[%s820 + $0x10] sm:$0xf]
      %v826 = vld [vmem:[%s820 + $0x14] sm:$0xf]
      %v827 = vld [vmem:[%s820 + $0x18] sm:$0xf]
      %v828 = vld [vmem:[%s820 + $0x1c] sm:$0xf]
      %v829 = vld [vmem:[%s820 + $0x20] sm:$0xf]
      %v830 = vld [vmem:[%s820 + $0x24] sm:$0xf]
      %v831 = vld [vmem:[%s820 + $0x28] sm:$0xf]
      %v832 = vld [vmem:[%s820 + $0x2c] sm:$0xf]
      %v833 = vld [vmem:[%s820 + $0x30] sm:$0xf]
      %v834 = vld [vmem:[%s820 + $0x34] sm:$0xf]
      %v835 = vld [vmem:[%s820 + $0x38] sm:$0xf]
      %v836 = vld [vmem:[%s820 + $0x3c] sm:$0xf]
      %v853 = vunpack.c.l.b16 %v821
      %v854 = vunpack.c.l.b16 %v822
      %v855 = vunpack.c.l.b16 %v823
      %v856 = vunpack.c.l.b16 %v824
      %v857 = vunpack.c.l.b16 %v825
      %v858 = vunpack.c.l.b16 %v826
      %v859 = vunpack.c.l.b16 %v827
      %v860 = vunpack.c.l.b16 %v828
      %v861 = vunpack.c.l.b16 %v829
      %v862 = vunpack.c.l.b16 %v830
      %v863 = vunpack.c.l.b16 %v831
      %v864 = vunpack.c.l.b16 %v832
      %v865 = vunpack.c.l.b16 %v833
      %v866 = vunpack.c.l.b16 %v834
      %v867 = vunpack.c.l.b16 %v835
      %v868 = vunpack.c.l.b16 %v836
      %v869 = vpack.c.b16 %v854, %v853
      %v870 = vpack.c.b16 %v856, %v855
      %v871 = vpack.c.b16 %v858, %v857
      %v872 = vpack.c.b16 %v860, %v859
      %v873 = vpack.c.b16 %v862, %v861
      %v874 = vpack.c.b16 %v864, %v863
      %v875 = vpack.c.b16 %v866, %v865
      %v876 = vpack.c.b16 %v868, %v867
      %885 = vmatprep.subr.bf16.mxu0 0
      %886 = vmatpush1.bf16.msra.mxu0 %v869
      %887 = vmatprep.subr.bf16.mxu0 0
      %888 = vmatpush1.bf16.msra.mxu0 %v870
      %889 = vmatprep.subr.bf16.mxu0 0
      %890 = vmatpush1.bf16.msra.mxu0 %v871
      %891 = vmatprep.subr.bf16.mxu0 0
      %892 = vmatpush1.bf16.msra.mxu0 %v872
      %893 = vmatprep.subr.bf16.mxu0 0
      %894 = vmatpush1.bf16.msra.mxu0 %v873
      %895 = vmatprep.subr.bf16.mxu0 0
      %896 = vmatpush1.bf16.msra.mxu0 %v874
      %897 = vmatprep.subr.bf16.mxu0 0
      %898 = vmatpush1.bf16.msra.mxu0 %v875
      %899 = vmatprep.subr.bf16.mxu0 0
      %900 = vmatpush1.bf16.msra.mxu0 %v876
      %901 = vmatprep.subr.bf16.mxu0 0
      %902 = vmatpush1.bf16.msra.mxu0 0
      %903 = vmatprep.subr.bf16.mxu0 0
      %904 = vmatpush1.bf16.msra.mxu0 0
      %905 = vmatprep.subr.bf16.mxu0 0
      %906 = vmatpush1.bf16.msra.mxu0 0
      %907 = vmatprep.subr.bf16.mxu0 0
      %908 = vmatpush1.bf16.msra.mxu0 0
      %909 = vmatprep.subr.bf16.mxu0 0
      %910 = vmatpush1.bf16.msra.mxu0 0
      %911 = vmatprep.subr.bf16.mxu0 0
      %912 = vmatpush1.bf16.msra.mxu0 0
      %913 = vmatprep.subr.bf16.mxu0 0
      %914 = vmatpush1.bf16.msra.mxu0 0
      %915 = vmatprep.subr.bf16.mxu0 0
      %916 = vmatpush1.bf16.msra.mxu0 0
      %917 = vmatprep.mubr.bf16.mxu0 0
      %918 = vmatmul.mubr.bf16.gmra.mrb[0].mxu0 %v729
      %v919 = vpop.f32.mrb[0].mxu0
      %v920 = vadd.f32 0.0, %v919
      %v921 = vpop.f32.mrb[0].mxu0
      %v922 = vpop.f32.mrb[0].mxu0
      %v923 = vadd.f32 0.0, %v922
      %v924 = vpop.f32.mrb[0].mxu0
      %925 = vdwg.mxu0
      %v928 = vrot.slane %v920, 1
      %v929 = vrot.slane %v923, 1
      %v930 = vsel %vm588, %v928, %v929
      %v932 = vadd.f32 %v819, %v930
      %s933 = scalar_lea.vmem %s3, 320
      %v934 = vld [vmem:[%s933] sm:$0xf]
      %v935 = vld [vmem:[%s933 + $0x4] sm:$0xf]
      %v936 = vld [vmem:[%s933 + $0x8] sm:$0xf]
      %v937 = vld [vmem:[%s933 + $0xc] sm:$0xf]
      %v938 = vld [vmem:[%s933 + $0x10] sm:$0xf]
      %v939 = vld [vmem:[%s933 + $0x14] sm:$0xf]
      %v940 = vld [vmem:[%s933 + $0x18] sm:$0xf]
      %v941 = vld [vmem:[%s933 + $0x1c] sm:$0xf]
      %v942 = vld [vmem:[%s933 + $0x20] sm:$0xf]
      %v943 = vld [vmem:[%s933 + $0x24] sm:$0xf]
      %v944 = vld [vmem:[%s933 + $0x28] sm:$0xf]
      %v945 = vld [vmem:[%s933 + $0x2c] sm:$0xf]
      %v946 = vld [vmem:[%s933 + $0x30] sm:$0xf]
      %v947 = vld [vmem:[%s933 + $0x34] sm:$0xf]
      %v948 = vld [vmem:[%s933 + $0x38] sm:$0xf]
      %v949 = vld [vmem:[%s933 + $0x3c] sm:$0xf]
      %v966 = vunpack.c.l.b16 %v934
      %v967 = vunpack.c.l.b16 %v935
      %v968 = vunpack.c.l.b16 %v936
      %v969 = vunpack.c.l.b16 %v937
      %v970 = vunpack.c.l.b16 %v938
      %v971 = vunpack.c.l.b16 %v939
      %v972 = vunpack.c.l.b16 %v940
      %v973 = vunpack.c.l.b16 %v941
      %v974 = vunpack.c.l.b16 %v942
      %v975 = vunpack.c.l.b16 %v943
      %v976 = vunpack.c.l.b16 %v944
      %v977 = vunpack.c.l.b16 %v945
      %v978 = vunpack.c.l.b16 %v946
      %v979 = vunpack.c.l.b16 %v947
      %v980 = vunpack.c.l.b16 %v948
      %v981 = vunpack.c.l.b16 %v949
      %v982 = vpack.c.b16 %v967, %v966
      %v983 = vpack.c.b16 %v969, %v968
      %v984 = vpack.c.b16 %v971, %v970
      %v985 = vpack.c.b16 %v973, %v972
      %v986 = vpack.c.b16 %v975, %v974
      %v987 = vpack.c.b16 %v977, %v976
      %v988 = vpack.c.b16 %v979, %v978
      %v989 = vpack.c.b16 %v981, %v980
      %998 = vmatprep.subr.bf16.mxu0 0
      %999 = vmatpush1.bf16.msra.mxu0 %v982
      %1000 = vmatprep.subr.bf16.mxu0 0
      %1001 = vmatpush1.bf16.msra.mxu0 %v983
      %1002 = vmatprep.subr.bf16.mxu0 0
      %1003 = vmatpush1.bf16.msra.mxu0 %v984
      %1004 = vmatprep.subr.bf16.mxu0 0
      %1005 = vmatpush1.bf16.msra.mxu0 %v985
      %1006 = vmatprep.subr.bf16.mxu0 0
      %1007 = vmatpush1.bf16.msra.mxu0 %v986
      %1008 = vmatprep.subr.bf16.mxu0 0
      %1009 = vmatpush1.bf16.msra.mxu0 %v987
      %1010 = vmatprep.subr.bf16.mxu0 0
      %1011 = vmatpush1.bf16.msra.mxu0 %v988
      %1012 = vmatprep.subr.bf16.mxu0 0
      %1013 = vmatpush1.bf16.msra.mxu0 %v989
      %1014 = vmatprep.subr.bf16.mxu0 0
      %1015 = vmatpush1.bf16.msra.mxu0 0
      %1016 = vmatprep.subr.bf16.mxu0 0
      %1017 = vmatpush1.bf16.msra.mxu0 0
      %1018 = vmatprep.subr.bf16.mxu0 0
      %1019 = vmatpush1.bf16.msra.mxu0 0
      %1020 = vmatprep.subr.bf16.mxu0 0
      %1021 = vmatpush1.bf16.msra.mxu0 0
      %1022 = vmatprep.subr.bf16.mxu0 0
      %1023 = vmatpush1.bf16.msra.mxu0 0
      %1024 = vmatprep.subr.bf16.mxu0 0
      %1025 = vmatpush1.bf16.msra.mxu0 0
      %1026 = vmatprep.subr.bf16.mxu0 0
      %1027 = vmatpush1.bf16.msra.mxu0 0
      %1028 = vmatprep.subr.bf16.mxu0 0
      %1029 = vmatpush1.bf16.msra.mxu0 0
      %1030 = vmatprep.mubr.bf16.mxu0 0
      %1031 = vmatmul.mubr.bf16.gmra.mrb[0].mxu0 %v729
      %v1032 = vpop.f32.mrb[0].mxu0
      %v1033 = vadd.f32 0.0, %v1032
      %v1034 = vpop.f32.mrb[0].mxu0
      %v1035 = vpop.f32.mrb[0].mxu0
      %v1036 = vadd.f32 0.0, %v1035
      %v1037 = vpop.f32.mrb[0].mxu0
      %1038 = vdwg.mxu0
      %v1041 = vrot.slane %v1033, 2
      %v1042 = vrot.slane %v1036, 2
      %v1043 = vsel %vm702, %v1041, %v1042
      %v1045 = vadd.f32 %v932, %v1043
      %s1046 = scalar_lea.vmem %s3, 384
      %v1047 = vld [vmem:[%s1046] sm:$0xf]
      %v1048 = vld [vmem:[%s1046 + $0x4] sm:$0xf]
      %v1049 = vld [vmem:[%s1046 + $0x8] sm:$0xf]
      %v1050 = vld [vmem:[%s1046 + $0xc] sm:$0xf]
      %v1051 = vld [vmem:[%s1046 + $0x10] sm:$0xf]
      %v1052 = vld [vmem:[%s1046 + $0x14] sm:$0xf]
      %v1053 = vld [vmem:[%s1046 + $0x18] sm:$0xf]
      %v1054 = vld [vmem:[%s1046 + $0x1c] sm:$0xf]
      %v1055 = vld [vmem:[%s1046 + $0x20] sm:$0xf]
      %v1056 = vld [vmem:[%s1046 + $0x24] sm:$0xf]
      %v1057 = vld [vmem:[%s1046 + $0x28] sm:$0xf]
      %v1058 = vld [vmem:[%s1046 + $0x2c] sm:$0xf]
      %v1059 = vld [vmem:[%s1046 + $0x30] sm:$0xf]
      %v1060 = vld [vmem:[%s1046 + $0x34] sm:$0xf]
      %v1061 = vld [vmem:[%s1046 + $0x38] sm:$0xf]
      %v1062 = vld [vmem:[%s1046 + $0x3c] sm:$0xf]
      %v1065 = vunpack.c.l.b16 %v367
      %v1066 = vunpack.c.l.b16 %v368
      %v1067 = vpack.c.b16 %v1066, %v1065
      %v1085 = vunpack.c.l.b16 %v1047
      %v1086 = vunpack.c.l.b16 %v1048
      %v1087 = vunpack.c.l.b16 %v1049
      %v1088 = vunpack.c.l.b16 %v1050
      %v1089 = vunpack.c.l.b16 %v1051
      %v1090 = vunpack.c.l.b16 %v1052
      %v1091 = vunpack.c.l.b16 %v1053
      %v1092 = vunpack.c.l.b16 %v1054
      %v1093 = vunpack.c.l.b16 %v1055
      %v1094 = vunpack.c.l.b16 %v1056
      %v1095 = vunpack.c.l.b16 %v1057
      %v1096 = vunpack.c.l.b16 %v1058
      %v1097 = vunpack.c.l.b16 %v1059
      %v1098 = vunpack.c.l.b16 %v1060
      %v1099 = vunpack.c.l.b16 %v1061
      %v1100 = vunpack.c.l.b16 %v1062
      %v1101 = vpack.c.b16 %v1086, %v1085
      %v1102 = vpack.c.b16 %v1088, %v1087
      %v1103 = vpack.c.b16 %v1090, %v1089
      %v1104 = vpack.c.b16 %v1092, %v1091
      %v1105 = vpack.c.b16 %v1094, %v1093
      %v1106 = vpack.c.b16 %v1096, %v1095
      %v1107 = vpack.c.b16 %v1098, %v1097
      %v1108 = vpack.c.b16 %v1100, %v1099
      %1117 = vmatprep.subr.bf16.mxu0 0
      %1118 = vmatpush1.bf16.msra.mxu0 %v1101
      %1119 = vmatprep.subr.bf16.mxu0 0
      %1120 = vmatpush1.bf16.msra.mxu0 %v1102
      %1121 = vmatprep.subr.bf16.mxu0 0
      %1122 = vmatpush1.bf16.msra.mxu0 %v1103
      %1123 = vmatprep.subr.bf16.mxu0 0
      %1124 = vmatpush1.bf16.msra.mxu0 %v1104
      %1125 = vmatprep.subr.bf16.mxu0 0
      %1126 = vmatpush1.bf16.msra.mxu0 %v1105
      %1127 = vmatprep.subr.bf16.mxu0 0
      %1128 = vmatpush1.bf16.msra.mxu0 %v1106
      %1129 = vmatprep.subr.bf16.mxu0 0
      %1130 = vmatpush1.bf16.msra.mxu0 %v1107
      %1131 = vmatprep.subr.bf16.mxu0 0
      %1132 = vmatpush1.bf16.msra.mxu0 %v1108
      %1133 = vmatprep.subr.bf16.mxu0 0
      %1134 = vmatpush1.bf16.msra.mxu0 0
      %1135 = vmatprep.subr.bf16.mxu0 0
      %1136 = vmatpush1.bf16.msra.mxu0 0
      %1137 = vmatprep.subr.bf16.mxu0 0
      %1138 = vmatpush1.bf16.msra.mxu0 0
      %1139 = vmatprep.subr.bf16.mxu0 0
      %1140 = vmatpush1.bf16.msra.mxu0 0
      %1141 = vmatprep.subr.bf16.mxu0 0
      %1142 = vmatpush1.bf16.msra.mxu0 0
      %1143 = vmatprep.subr.bf16.mxu0 0
      %1144 = vmatpush1.bf16.msra.mxu0 0
      %1145 = vmatprep.subr.bf16.mxu0 0
      %1146 = vmatpush1.bf16.msra.mxu0 0
      %1147 = vmatprep.subr.bf16.mxu0 0
      %1148 = vmatpush1.bf16.msra.mxu0 0
      %1149 = vmatprep.mubr.bf16.mxu0 0
      %1150 = vmatmul.mubr.bf16.gmra.mrb[0].mxu0 %v1067
      %v1151 = vpop.f32.mrb[0].mxu0
      %v1152 = vadd.f32 0.0, %v1151
      %v1153 = vpop.f32.mrb[0].mxu0
      %v1154 = vpop.f32.mrb[0].mxu0
      %v1155 = vpop.f32.mrb[0].mxu0
      %1156 = vdwg.mxu0
      %v1157 = vadd.f32 %v1045, %v1152
      %s1158 = scalar_lea.vmem %s3, 448
      %v1159 = vld [vmem:[%s1158] sm:$0xf]
      %v1160 = vld [vmem:[%s1158 + $0x4] sm:$0xf]
      %v1161 = vld [vmem:[%s1158 + $0x8] sm:$0xf]
      %v1162 = vld [vmem:[%s1158 + $0xc] sm:$0xf]
      %v1163 = vld [vmem:[%s1158 + $0x10] sm:$0xf]
      %v1164 = vld [vmem:[%s1158 + $0x14] sm:$0xf]
      %v1165 = vld [vmem:[%s1158 + $0x18] sm:$0xf]
      %v1166 = vld [vmem:[%s1158 + $0x1c] sm:$0xf]
      %v1167 = vld [vmem:[%s1158 + $0x20] sm:$0xf]
      %v1168 = vld [vmem:[%s1158 + $0x24] sm:$0xf]
      %v1169 = vld [vmem:[%s1158 + $0x28] sm:$0xf]
      %v1170 = vld [vmem:[%s1158 + $0x2c] sm:$0xf]
      %v1171 = vld [vmem:[%s1158 + $0x30] sm:$0xf]
      %v1172 = vld [vmem:[%s1158 + $0x34] sm:$0xf]
      %v1173 = vld [vmem:[%s1158 + $0x38] sm:$0xf]
      %v1174 = vld [vmem:[%s1158 + $0x3c] sm:$0xf]
      %v1191 = vunpack.c.l.b16 %v1159
      %v1192 = vunpack.c.l.b16 %v1160
      %v1193 = vunpack.c.l.b16 %v1161
      %v1194 = vunpack.c.l.b16 %v1162
      %v1195 = vunpack.c.l.b16 %v1163
      %v1196 = vunpack.c.l.b16 %v1164
      %v1197 = vunpack.c.l.b16 %v1165
      %v1198 = vunpack.c.l.b16 %v1166
      %v1199 = vunpack.c.l.b16 %v1167
      %v1200 = vunpack.c.l.b16 %v1168
      %v1201 = vunpack.c.l.b16 %v1169
      %v1202 = vunpack.c.l.b16 %v1170
      %v1203 = vunpack.c.l.b16 %v1171
      %v1204 = vunpack.c.l.b16 %v1172
      %v1205 = vunpack.c.l.b16 %v1173
      %v1206 = vunpack.c.l.b16 %v1174
      %v1207 = vpack.c.b16 %v1192, %v1191
      %v1208 = vpack.c.b16 %v1194, %v1193
      %v1209 = vpack.c.b16 %v1196, %v1195
      %v1210 = vpack.c.b16 %v1198, %v1197
      %v1211 = vpack.c.b16 %v1200, %v1199
      %v1212 = vpack.c.b16 %v1202, %v1201
      %v1213 = vpack.c.b16 %v1204, %v1203
      %v1214 = vpack.c.b16 %v1206, %v1205
      %1223 = vmatprep.subr.bf16.mxu0 0
      %1224 = vmatpush1.bf16.msra.mxu0 %v1207
      %1225 = vmatprep.subr.bf16.mxu0 0
      %1226 = vmatpush1.bf16.msra.mxu0 %v1208
      %1227 = vmatprep.subr.bf16.mxu0 0
      %1228 = vmatpush1.bf16.msra.mxu0 %v1209
      %1229 = vmatprep.subr.bf16.mxu0 0
      %1230 = vmatpush1.bf16.msra.mxu0 %v1210
      %1231 = vmatprep.subr.bf16.mxu0 0
      %1232 = vmatpush1.bf16.msra.mxu0 %v1211
      %1233 = vmatprep.subr.bf16.mxu0 0
      %1234 = vmatpush1.bf16.msra.mxu0 %v1212
      %1235 = vmatprep.subr.bf16.mxu0 0
      %1236 = vmatpush1.bf16.msra.mxu0 %v1213
      %1237 = vmatprep.subr.bf16.mxu0 0
      %1238 = vmatpush1.bf16.msra.mxu0 %v1214
      %1239 = vmatprep.subr.bf16.mxu0 0
      %1240 = vmatpush1.bf16.msra.mxu0 0
      %1241 = vmatprep.subr.bf16.mxu0 0
      %1242 = vmatpush1.bf16.msra.mxu0 0
      %1243 = vmatprep.subr.bf16.mxu0 0
      %1244 = vmatpush1.bf16.msra.mxu0 0
      %1245 = vmatprep.subr.bf16.mxu0 0
      %1246 = vmatpush1.bf16.msra.mxu0 0
      %1247 = vmatprep.subr.bf16.mxu0 0
      %1248 = vmatpush1.bf16.msra.mxu0 0
      %1249 = vmatprep.subr.bf16.mxu0 0
      %1250 = vmatpush1.bf16.msra.mxu0 0
      %1251 = vmatprep.subr.bf16.mxu0 0
      %1252 = vmatpush1.bf16.msra.mxu0 0
      %1253 = vmatprep.subr.bf16.mxu0 0
      %1254 = vmatpush1.bf16.msra.mxu0 0
      %1255 = vmatprep.mubr.bf16.mxu0 0
      %1256 = vmatmul.mubr.bf16.gmra.mrb[0].mxu0 %v1067
      %v1257 = vpop.f32.mrb[0].mxu0
      %v1258 = vadd.f32 0.0, %v1257
      %v1259 = vpop.f32.mrb[0].mxu0
      %v1260 = vpop.f32.mrb[0].mxu0
      %v1261 = vadd.f32 0.0, %v1260
      %v1262 = vpop.f32.mrb[0].mxu0
      %1263 = vdwg.mxu0
      %v1266 = vrot.slane %v1258, 1
      %v1267 = vrot.slane %v1261, 1
      %v1268 = vsel %vm588, %v1266, %v1267
      %v1270 = vadd.f32 %v1157, %v1268
      %s1271 = scalar_lea.vmem %s3, 512
      %v1272 = vld [vmem:[%s1271] sm:$0xf]
      %v1273 = vld [vmem:[%s1271 + $0x4] sm:$0xf]
      %v1274 = vld [vmem:[%s1271 + $0x8] sm:$0xf]
      %v1275 = vld [vmem:[%s1271 + $0xc] sm:$0xf]
      %v1276 = vld [vmem:[%s1271 + $0x10] sm:$0xf]
      %v1277 = vld [vmem:[%s1271 + $0x14] sm:$0xf]
      %v1278 = vld [vmem:[%s1271 + $0x18] sm:$0xf]
      %v1279 = vld [vmem:[%s1271 + $0x1c] sm:$0xf]
      %v1280 = vld [vmem:[%s1271 + $0x20] sm:$0xf]
      %v1281 = vld [vmem:[%s1271 + $0x24] sm:$0xf]
      %v1282 = vld [vmem:[%s1271 + $0x28] sm:$0xf]
      %v1283 = vld [vmem:[%s1271 + $0x2c] sm:$0xf]
      %v1284 = vld [vmem:[%s1271 + $0x30] sm:$0xf]
      %v1285 = vld [vmem:[%s1271 + $0x34] sm:$0xf]
      %v1286 = vld [vmem:[%s1271 + $0x38] sm:$0xf]
      %v1287 = vld [vmem:[%s1271 + $0x3c] sm:$0xf]
      %v1304 = vunpack.c.l.b16 %v1272
      %v1305 = vunpack.c.l.b16 %v1273
      %v1306 = vunpack.c.l.b16 %v1274
      %v1307 = vunpack.c.l.b16 %v1275
      %v1308 = vunpack.c.l.b16 %v1276
      %v1309 = vunpack.c.l.b16 %v1277
      %v1310 = vunpack.c.l.b16 %v1278
      %v1311 = vunpack.c.l.b16 %v1279
      %v1312 = vunpack.c.l.b16 %v1280
      %v1313 = vunpack.c.l.b16 %v1281
      %v1314 = vunpack.c.l.b16 %v1282
      %v1315 = vunpack.c.l.b16 %v1283
      %v1316 = vunpack.c.l.b16 %v1284
      %v1317 = vunpack.c.l.b16 %v1285
      %v1318 = vunpack.c.l.b16 %v1286
      %v1319 = vunpack.c.l.b16 %v1287
      %v1320 = vpack.c.b16 %v1305, %v1304
      %v1321 = vpack.c.b16 %v1307, %v1306
      %v1322 = vpack.c.b16 %v1309, %v1308
      %v1323 = vpack.c.b16 %v1311, %v1310
      %v1324 = vpack.c.b16 %v1313, %v1312
      %v1325 = vpack.c.b16 %v1315, %v1314
      %v1326 = vpack.c.b16 %v1317, %v1316
      %v1327 = vpack.c.b16 %v1319, %v1318
      %1336 = vmatprep.subr.bf16.mxu0 0
      %1337 = vmatpush1.bf16.msra.mxu0 %v1320
      %1338 = vmatprep.subr.bf16.mxu0 0
      %1339 = vmatpush1.bf16.msra.mxu0 %v1321
      %1340 = vmatprep.subr.bf16.mxu0 0
      %1341 = vmatpush1.bf16.msra.mxu0 %v1322
      %1342 = vmatprep.subr.bf16.mxu0 0
      %1343 = vmatpush1.bf16.msra.mxu0 %v1323
      %1344 = vmatprep.subr.bf16.mxu0 0
      %1345 = vmatpush1.bf16.msra.mxu0 %v1324
      %1346 = vmatprep.subr.bf16.mxu0 0
      %1347 = vmatpush1.bf16.msra.mxu0 %v1325
      %1348 = vmatprep.subr.bf16.mxu0 0
      %1349 = vmatpush1.bf16.msra.mxu0 %v1326
      %1350 = vmatprep.subr.bf16.mxu0 0
      %1351 = vmatpush1.bf16.msra.mxu0 %v1327
      %1352 = vmatprep.subr.bf16.mxu0 0
      %1353 = vmatpush1.bf16.msra.mxu0 0
      %1354 = vmatprep.subr.bf16.mxu0 0
      %1355 = vmatpush1.bf16.msra.mxu0 0
      %1356 = vmatprep.subr.bf16.mxu0 0
      %1357 = vmatpush1.bf16.msra.mxu0 0
      %1358 = vmatprep.subr.bf16.mxu0 0
      %1359 = vmatpush1.bf16.msra.mxu0 0
      %1360 = vmatprep.subr.bf16.mxu0 0
      %1361 = vmatpush1.bf16.msra.mxu0 0
      %1362 = vmatprep.subr.bf16.mxu0 0
      %1363 = vmatpush1.bf16.msra.mxu0 0
      %1364 = vmatprep.subr.bf16.mxu0 0
      %1365 = vmatpush1.bf16.msra.mxu0 0
      %1366 = vmatprep.subr.bf16.mxu0 0
      %1367 = vmatpush1.bf16.msra.mxu0 0
      %1368 = vmatprep.mubr.bf16.mxu0 0
      %1369 = vmatmul.mubr.bf16.gmra.mrb[0].mxu0 %v1067
      %v1370 = vpop.f32.mrb[0].mxu0
      %v1371 = vadd.f32 0.0, %v1370
      %v1372 = vpop.f32.mrb[0].mxu0
      %v1373 = vpop.f32.mrb[0].mxu0
      %v1374 = vadd.f32 0.0, %v1373
      %v1375 = vpop.f32.mrb[0].mxu0
      %1376 = vdwg.mxu0
      %v1379 = vrot.slane %v1371, 2
      %v1380 = vrot.slane %v1374, 2
      %v1381 = vsel %vm702, %v1379, %v1380
      %v1383 = vadd.f32 %v1270, %v1381
      %1384 = vst [vmem:[%s353] sm:$0xff] %v1383
      %v1385 = vrot.slane %v1383, 4
      %v1386 = vadd.f32 %v1383, %v1385
      %v1387 = vrot.slane %v1386, 2
      %v1388 = vadd.f32 %v1386, %v1387
      %v1389 = vrot.slane %v1388, 1
      %v1390 = vadd.f32 %v1388, %v1389
      %1391 = vst [vmem:[%s361] sm:$0x1] %v1390
      %v1392 = vmul.f32 %v1383, %v1383
      %v1393 = vrot.slane %v1392, 4
      %v1394 = vadd.f32 %v1392, %v1393
      %v1395 = vrot.slane %v1394, 2
      %v1396 = vadd.f32 %v1394, %v1395
      %v1397 = vrot.slane %v1396, 1
      %v1398 = vadd.f32 %v1396, %v1397
      %1399 = vst [vmem:[%s361 + $0x1] sm:$0x1] %v1398
      %p1400 = scmp.lt.s32.totalorder %s21, 1
      %s1401 = scalar_select %p1400, %s21, 1
      %p1402 = scmp.lt.s32.totalorder %s22, 7
      %s1403 = scalar_select %p1402, %s22, 7
      %s1404 = smul.addr %s1401, 8
      %s1405 = sadd.s32 %s1403, %s1404
      %s1406 = smul.addr %s1405, 8
      %s1407 = scalar_lea.vmem %s4, %s1406
      %p1408 = scmp.lt.s32.totalorder %s21, 1
      %s1409 = scalar_select %p1408, %s21, 1
      %p1410 = scmp.lt.s32.totalorder %s22, 7
      %s1411 = scalar_select %p1410, %s22, 7
      %s1412 = smul.addr %s1409, 8
      %s1413 = sadd.s32 %s1411, %s1412
      %s1414 = smul.addr %s1413, 2
      %s1415 = scalar_lea.vmem %s5, %s1414
      // Predicated region
      $region37: #{discriminator_forward.9} parent=35 // pred_check
        %p1416 = pneg %p158
      $region38: #{discriminator_forward.9} parent=35 // pred_check_branch
        %1418 = sbr.rel (%p1416) target = $region40
      $region39: #{discriminator_forward.9} parent=35 // pred_region
        _
      $region40: #{discriminator_forward.9} parent=35 // pred_fallthru
        _
      // Predicated region
      $region41: #{discriminator_forward.9} parent=35 // pred_check
        %p1419 = pneg %p186
      $region42: #{discriminator_forward.9} parent=35 // pred_check_branch
        %1421 = sbr.rel (%p1419) target = $region44
      $region43: #{discriminator_forward.9} parent=35 // pred_region
        _
      $region44: #{discriminator_forward.9} parent=35 // pred_fallthru
        _
    $region36: #{discriminator_forward.9} parent=5 // pred_fallthru
      _
    %p1422 = scmp.le.s32.totalorder 2, %s12
    // Predicated region
    $region45: #{discriminator_forward.9} parent=5 // pred_check
      %p1423 = pneg %p1422
    $region46: #{discriminator_forward.9} parent=5 // pred_check_branch
      %1425 = sbr.rel (%p1423) target = $region48
    $region47: #{discriminator_forward.9} parent=5 // pred_region
      %s1426 = ssub.s32 %s12, 2
      // Predicated region
      $region49: #{discriminator_forward.9} parent=47 // pred_check
        %p1427 = pneg %p164
      $region50: #{discriminator_forward.9} parent=47 // pred_check_branch
        %1429 = sbr.rel (%p1427) target = $region52
      $region51: #{discriminator_forward.9} parent=47 // pred_region
        %p1430 = scmp.lt.s32.totalorder %s23, 1
        %s1431 = scalar_select %p1430, %s23, 1
        %p1432 = scmp.lt.s32.totalorder %s24, 7
        %s1433 = scalar_select %p1432, %s24, 7
        %s1434 = smul.addr %s1431, 8
        %s1435 = sadd.s32 %s1433, %s1434
        %s1436 = smul.addr %s1435, 8
        %s1437 = scalar_lea.vmem %s4, %s1436
      $region52: #{discriminator_forward.9} parent=47 // pred_fallthru
        _
      // Predicated region
      $region53: #{discriminator_forward.9} parent=47 // pred_check
        %p1438 = pneg %p192
      $region54: #{discriminator_forward.9} parent=47 // pred_check_branch
        %1440 = sbr.rel (%p1438) target = $region56
      $region55: #{discriminator_forward.9} parent=47 // pred_region
        %p1441 = scmp.lt.s32.totalorder %s23, 1
        %s1442 = scalar_select %p1441, %s23, 1
        %p1443 = scmp.lt.s32.totalorder %s24, 7
        %s1444 = scalar_select %p1443, %s24, 7
        %s1445 = smul.addr %s1442, 8
        %s1446 = sadd.s32 %s1444, %s1445
        %s1447 = smul.addr %s1446, 2
        %s1448 = scalar_lea.vmem %s5, %s1447
      $region56: #{discriminator_forward.9} parent=47 // pred_fallthru
        _
    $region48: #{discriminator_forward.9} parent=5 // pred_fallthru
      _
  $region6: #{discriminator_forward.9} parent=0 // loop_footer
    %s16 = sadd.s32 1, %s12
  $region7: #{discriminator_forward.9} parent=0 // loop_footer_branch
    %11 = sbr.rel target = $region3
  $region8: #{discriminator_forward.9} parent=0 // loop_exit
    _

// kernel: discriminator_forward.12
$region0: #{discriminator_forward.12}
  #allocation0 [shape = 'u32[]', space=smem, size = 0x4, offset = 0x4, fixed_abs, tag = 'smem constant byte address 0x4 - core index']
  #allocation1 [shape = 'u32[144,128]{1,0:T(1,128)}', space=vmem, size = 0x12000, scoped, tag = 'internal scratch']
  %s0 = inlined_call_operand.vmem [shape: f32[4,2,2,256], index: 0, kind: input, shape index: {}]
  %s1 = inlined_call_operand.vmem [shape: f32[1,256], index: 1, kind: input, shape index: {}]
  %s2 = inlined_call_operand.vmem [shape: f32[1,256], index: 2, kind: input, shape index: {}]
  %s3 = inlined_call_operand.vmem [shape: f32[4,2,128], index: 3, kind: output, shape index: {}]
  %s4 = sld [smem:[#allocation0]]
  $region45: #{discriminator_forward.12} parent=0
    _
  %s6 = ssub.s32 1, %s4
  %s7 = scalar_select 0, %s6, %s4
  loop: start=0, step=1, limit=6
  $region2: #{discriminator_forward.12} parent=0 // loop_pre_header
    _
  $region3: #{discriminator_forward.12} parent=0 // loop_header
    %s9 = sphi 0, %s13
    %p10 = scmp.ge.s32.totalorder %s9, 6
    %s19 = sphi 0, %s21
    %s22 = sphi 0, %s19
    %s23 = sphi 0, %s22
    %s39 = sphi 0, %s23
    %s43 = sphi 0, %s43
    %s45 = sphi 0, %s43
    %s46 = sphi 0, %s45
    %s60 = sphi 0, %s46
    %s64 = sphi 0, %s64
    %s66 = sphi 0, %s64
    %s67 = sphi 0, %s66
    %s81 = sphi 0, %s67
    %s87 = sphi 0, %s89
    %s90 = sphi 0, %s87
    %s91 = sphi 0, %s90
    %s107 = sphi 0, %s91
  $region4: #{discriminator_forward.12} parent=0 // loop_header_branch
    %12 = sbr.rel (%p10) target = $region8
  $region5: #{discriminator_forward.12} parent=0 // loop_body
    %s14 = ssub.s32 %s9, 1
    %s15 = ssub.s32 %s9, 2
    %s16 = sadd.s32 %s9, 1
    %s17 = ssub.s32 %s9, %s16
    %p18 = scmp.eq.s32.totalorder %s17, 0
    %s20 = sadd.s32 %s19, 1
    %s21 = scalar_select %p18, %s19, %s20
    %p24 = pneg %p18
    %p25 = scmp.eq.s32.totalorder %s9, 3
    %p26 = por %p24, %p25
    %p27 = scmp.ne.s32.totalorder %s19, %s22
    %p28 = scmp.eq.s32.totalorder %s9, 0
    %p29 = por %p27, %p28
    %p30 = scmp.ne.s32.totalorder %s19, %s22
    %p31 = scmp.eq.s32.totalorder %s14, 3
    %p32 = por %p30, %p31
    %p33 = scmp.ne.s32.totalorder %s22, %s23
    %p34 = scmp.eq.s32.totalorder %s14, 0
    %p35 = por %p33, %p34
    %p36 = scmp.ne.s32.totalorder %s22, %s23
    %p37 = scmp.eq.s32.totalorder %s15, 3
    %p38 = por %p36, %p37
    %p40 = scmp.ne.s32.totalorder %s23, %s39
    %p41 = scmp.eq.s32.totalorder %s15, 0
    %p42 = por %p40, %p41
    %s44 = sadd.s32 %s43, 1
    %p47 = scmp.eq.s32.totalorder %s9, 3
    %p48 = scmp.ne.s32.totalorder %s43, %s45
    %p49 = scmp.eq.s32.totalorder %s9, 0
    %p50 = por %p48, %p49
    %p51 = scmp.ne.s32.totalorder %s43, %s45
    %p52 = scmp.eq.s32.totalorder %s14, 3
    %p53 = por %p51, %p52
    %p54 = scmp.ne.s32.totalorder %s45, %s46
    %p55 = scmp.eq.s32.totalorder %s14, 0
    %p56 = por %p54, %p55
    %p57 = scmp.ne.s32.totalorder %s45, %s46
    %p58 = scmp.eq.s32.totalorder %s15, 3
    %p59 = por %p57, %p58
    %p61 = scmp.ne.s32.totalorder %s46, %s60
    %p62 = scmp.eq.s32.totalorder %s15, 0
    %p63 = por %p61, %p62
    %s65 = sadd.s32 %s64, 1
    %p68 = scmp.eq.s32.totalorder %s9, 3
    %p69 = scmp.ne.s32.totalorder %s64, %s66
    %p70 = scmp.eq.s32.totalorder %s9, 0
    %p71 = por %p69, %p70
    %p72 = scmp.ne.s32.totalorder %s64, %s66
    %p73 = scmp.eq.s32.totalorder %s14, 3
    %p74 = por %p72, %p73
    %p75 = scmp.ne.s32.totalorder %s66, %s67
    %p76 = scmp.eq.s32.totalorder %s14, 0
    %p77 = por %p75, %p76
    %p78 = scmp.ne.s32.totalorder %s66, %s67
    %p79 = scmp.eq.s32.totalorder %s15, 3
    %p80 = por %p78, %p79
    %p82 = scmp.ne.s32.totalorder %s67, %s81
    %p83 = scmp.eq.s32.totalorder %s15, 0
    %p84 = por %p82, %p83
    %s85 = ssub.s32 %s9, %s16
    %p86 = scmp.eq.s32.totalorder %s85, 0
    %s88 = sadd.s32 %s87, 1
    %s89 = scalar_select %p86, %s87, %s88
    %p92 = pneg %p86
    %p93 = scmp.eq.s32.totalorder %s9, 3
    %p94 = por %p92, %p93
    %p95 = scmp.ne.s32.totalorder %s87, %s90
    %p96 = scmp.eq.s32.totalorder %s9, 0
    %p97 = por %p95, %p96
    %p98 = scmp.ne.s32.totalorder %s87, %s90
    %p99 = scmp.eq.s32.totalorder %s14, 3
    %p100 = por %p98, %p99
    %p101 = scmp.ne.s32.totalorder %s90, %s91
    %p102 = scmp.eq.s32.totalorder %s14, 0
    %p103 = por %p101, %p102
    %p104 = scmp.ne.s32.totalorder %s90, %s91
    %p105 = scmp.eq.s32.totalorder %s15, 3
    %p106 = por %p104, %p105
    %p108 = scmp.ne.s32.totalorder %s91, %s107
    %p109 = scmp.eq.s32.totalorder %s15, 0
    %p110 = por %p108, %p109
    %p111 = scmp.le.s32.totalorder 1, %s9
    %p112 = scmp.lt.s32.totalorder %s9, 5
    %p113 = pnand %p111, %p112
    %p114 = pneg %p113
    // Predicated region
    $region9: #{discriminator_forward.12} parent=5 // pred_check
      _
    $region10: #{discriminator_forward.12} parent=5 // pred_check_branch
      %116 = sbr.rel (%p113) target = $region12
    $region11: #{discriminator_forward.12} parent=5 // pred_region
      %s117 = ssub.s32 %s9, 1
      // Predicated region
      $region13: #{discriminator_forward.12} parent=11 // pred_check
        %p118 = pneg %p56
      $region14: #{discriminator_forward.12} parent=11 // pred_check_branch
        %120 = sbr.rel (%p118) target = $region16
      $region15: #{discriminator_forward.12} parent=11 // pred_region
        _
      $region16: #{discriminator_forward.12} parent=11 // pred_fallthru
        _
      // Predicated region
      $region17: #{discriminator_forward.12} parent=11 // pred_check
        %p121 = pneg %p77
      $region18: #{discriminator_forward.12} parent=11 // pred_check_branch
        %123 = sbr.rel (%p121) target = $region20
      $region19: #{discriminator_forward.12} parent=11 // pred_region
        _
      $region20: #{discriminator_forward.12} parent=11 // pred_fallthru
        _
    $region12: #{discriminator_forward.12} parent=5 // pred_fallthru
      _
    %p124 = scmp.lt.s32.totalorder %s9, 4
    // Predicated region
    $region21: #{discriminator_forward.12} parent=5 // pred_check
      %p125 = pneg %p124
    $region22: #{discriminator_forward.12} parent=5 // pred_check_branch
      %127 = sbr.rel (%p125) target = $region24
    $region23: #{discriminator_forward.12} parent=5 // pred_region
      // Predicated region
      $region25: #{discriminator_forward.12} parent=23 // pred_check
        %p128 = pneg %p29
      $region26: #{discriminator_forward.12} parent=23 // pred_check_branch
        %130 = sbr.rel (%p128) target = $region28
      $region27: #{discriminator_forward.12} parent=23 // pred_region
        %p131 = scmp.lt.s32.totalorder %s9, 3
        %s132 = scalar_select %p131, %s9, 3
        %s133 = smul.addr %s132, 4
        %s134 = smul.addr %s133, 2
        %s135 = scalar_lea.vmem %s0, %s134
      $region28: #{discriminator_forward.12} parent=23 // pred_fallthru
        _
    $region24: #{discriminator_forward.12} parent=5 // pred_fallthru
      _
    %p136 = scmp.le.s32.totalorder 1, %s9
    %p137 = scmp.lt.s32.totalorder %s9, 5
    %p138 = pnand %p136, %p137
    %p139 = pneg %p138
    // Predicated region
    $region29: #{discriminator_forward.12} parent=5 // pred_check
      _
    $region30: #{discriminator_forward.12} parent=5 // pred_check_branch
      %141 = sbr.rel (%p138) target = $region32
    $region31: #{discriminator_forward.12} parent=5 // pred_region
      %s142 = ssub.s32 %s9, 1
      %p143 = scmp.lt.s32.totalorder %s14, 3
      %s144 = scalar_select %p143, %s14, 3
      %s145 = smul.addr %s144, 4
      %s146 = smul.addr %s145, 2
      %s147 = scalar_lea.vmem %s0, %s146
      %p148 = pneg %p35
      %p149 = pneg %p32
      %p150 = pneg %p56
      %p151 = pneg %p53
      %p152 = pneg %p77
      %p153 = pneg %p74
      %p154 = pneg %p103
      %p155 = pneg %p100
      %p156 = scmp.lt.s32.totalorder %s14, 3
      %s157 = scalar_select %p156, %s14, 3
      %s158 = smul.addr %s157, 2
      %s159 = scalar_lea.vmem %s3, %s158
      %p160 = scmp.lt.s32.totalorder %s14, 3
      %s161 = scalar_select %p160, %s14, 3
      %s162 = smul.addr %s161, 4
      %s163 = smul.addr %s162, 2
      %s164 = scalar_lea.vmem %s0, %s163
      %p165 = scmp.lt.s32.totalorder %s14, 3
      %s166 = scalar_select %p165, %s14, 3
      %s167 = smul.addr %s166, 2
      %s168 = scalar_lea.vmem %s3, %s167
      %v169 = vld [vmem:[%s164] sm:$0xf]
      %v170 = vld [vmem:[%s164 + $0x4] sm:$0xf]
      %v171 = vld [vmem:[%s1] sm:$0x3]
      %v173 = vlaneseq
      %v174 = vshrl.u32 %v173, 7
      %v175 = vsub.s32 0, %v174
      %v176 = vrot.slane %v171, %v175
      %v177 = vlaneseq
      %v178 = vshrl.u32 %v177, 7
      %v179 = vsub.s32 1, %v178
      %v180 = vrot.slane %v171, %v179
      %v181 = vcombine.low %v176, %v180
      %v183 = vunpack.c.l.s4 1983009808
      %v184 = vunpack.c.0.s8 %v183
      %v185 = vlaneseq
      %v186 = vshrl.u32 %v185, 7
      %v187 = vsub.s32 %v184, %v186
      %v188 = vrot.slane %v181, %v187
      %v190 = vmul.f32 %v169, %v188
      %v191 = vmul.f32 %v170, %v188
      %v192 = vld [vmem:[%s2] sm:$0x3]
      %v194 = vlaneseq
      %v195 = vshrl.u32 %v194, 7
      %v196 = vsub.s32 0, %v195
      %v197 = vrot.slane %v192, %v196
      %v198 = vlaneseq
      %v199 = vshrl.u32 %v198, 7
      %v200 = vsub.s32 1, %v199
      %v201 = vrot.slane %v192, %v200
      %v202 = vcombine.low %v197, %v201
      %v204 = vunpack.c.l.s4 1983009808
      %v205 = vunpack.c.0.s8 %v204
      %v206 = vlaneseq
      %v207 = vshrl.u32 %v206, 7
      %v208 = vsub.s32 %v205, %v207
      %v209 = vrot.slane %v202, %v208
      %v211 = vadd.f32 %v190, %v209
      %v212 = vadd.f32 %v191, %v209
      %vm213 = vcmp.gt.f32.partialorder %v211, 0.0
      %vm214 = vcmp.gt.f32.partialorder %v212, 0.0
      %v215 = vmul.f32 %v211, 0.2
      %v216 = vmul.f32 %v212, 0.2
      %v217 = vsel %vm213, %v211, %v215
      %v218 = vsel %vm214, %v212, %v216
      %v219 = vmax.f32 %v217, %v218
      %v221 = vrot.slane %v219, 2
      %v223 = vmax.f32 %v219, %v221
      %224 = vst [vmem:[%s168] sm:$0x3] %v223
      %p225 = scmp.lt.s32.totalorder %s14, 3
      %s226 = scalar_select %p225, %s14, 3
      %s227 = smul.addr %s226, 2
      %s228 = scalar_lea.vmem %s3, %s227
      // Predicated region
      $region33: #{discriminator_forward.12} parent=31 // pred_check
        %p229 = pneg %p100
      $region34: #{discriminator_forward.12} parent=31 // pred_check_branch
        %231 = sbr.rel (%p229) target = $region36
      $region35: #{discriminator_forward.12} parent=31 // pred_region
        _
      $region36: #{discriminator_forward.12} parent=31 // pred_fallthru
        _
    $region32: #{discriminator_forward.12} parent=5 // pred_fallthru
      _
    %p232 = scmp.le.s32.totalorder 2, %s9
    // Predicated region
    $region37: #{discriminator_forward.12} parent=5 // pred_check
      %p233 = pneg %p232
    $region38: #{discriminator_forward.12} parent=5 // pred_check_branch
      %235 = sbr.rel (%p233) target = $region40
    $region39: #{discriminator_forward.12} parent=5 // pred_region
      %s236 = ssub.s32 %s9, 2
      // Predicated region
      $region41: #{discriminator_forward.12} parent=39 // pred_check
        %p237 = pneg %p106
      $region42: #{discriminator_forward.12} parent=39 // pred_check_branch
        %239 = sbr.rel (%p237) target = $region44
      $region43: #{discriminator_forward.12} parent=39 // pred_region
        %p240 = scmp.lt.s32.totalorder %s15, 3
        %s241 = scalar_select %p240, %s15, 3
        %s242 = smul.addr %s241, 2
        %s243 = scalar_lea.vmem %s3, %s242
      $region44: #{discriminator_forward.12} parent=39 // pred_fallthru
        _
    $region40: #{discriminator_forward.12} parent=5 // pred_fallthru
      _
  $region6: #{discriminator_forward.12} parent=0 // loop_footer
    %s13 = sadd.s32 1, %s9
  $region7: #{discriminator_forward.12} parent=0 // loop_footer_branch
    %8 = sbr.rel target = $region3
  $region8: #{discriminator_forward.12} parent=0 // loop_exit
    _

// kernel: discriminator_forward.11
$region0: #{discriminator_forward.11}
  #allocation0 [shape = 'u32[]', space=smem, size = 0x4, offset = 0x4, fixed_abs, tag = 'smem constant byte address 0x4 - core index']
  #allocation1 [shape = 'u32[144,128]{1,0:T(1,128)}', space=vmem, size = 0x12000, scoped, tag = 'internal scratch']
  %s0 = inlined_call_operand.vmem [shape: bf16[2,6,6,128], index: 0, kind: input, shape index: {}, may-alias: {0,1,2}]
  %s1 = inlined_call_operand.vmem [shape: bf16[2,6,6,128], index: 1, kind: input, shape index: {}, may-alias: {0,1,2}]
  %s2 = inlined_call_operand.vmem [shape: bf16[2,6,6,128], index: 2, kind: input, shape index: {}, may-alias: {0,1,2}]
  %s3 = inlined_call_operand.vmem [shape: bf16[9,128,128], index: 3, kind: input, shape index: {}]
  %s4 = inlined_call_operand.vmem [shape: f32[2,4,4,128], index: 4, kind: output, shape index: {0}]
  %s5 = inlined_call_operand.vmem [shape: f32[2,4,2,128], index: 5, kind: output, shape index: {1}]
  %6 = xla_tuple %s4, %s5
  %s7 = sld [smem:[#allocation0]]
  $region57: #{discriminator_forward.11} parent=0
    _
  %s9 = ssub.s32 1, %s7
  %s10 = scalar_select 0, %s9, %s7
  loop: start=0, step=1, limit=10
  $region2: #{discriminator_forward.11} parent=0 // loop_pre_header
    _
  $region3: #{discriminator_forward.11} parent=0 // loop_header
    %s12 = sphi 0, %s16
    %p13 = scmp.ge.s32.totalorder %s12, 10
    %s19 = sphi 0, %s31
    %s20 = sphi 0, %s27
    %s21 = sphi 0, %s19
    %s22 = sphi 0, %s20
    %s23 = sphi 0, %s21
    %s24 = sphi 0, %s22
    %s36 = sphi 0, %s38
    %s39 = sphi 0, %s36
    %s40 = sphi 0, %s39
    %s56 = sphi 0, %s40
    %s66 = sphi 0, %s68
    %s69 = sphi 0, %s66
    %s70 = sphi 0, %s69
    %s86 = sphi 0, %s70
    %s96 = sphi 0, %s98
    %s99 = sphi 0, %s96
    %s100 = sphi 0, %s99
    %s116 = sphi 0, %s100
    %s120 = sphi 0, %s120
    %s122 = sphi 0, %s120
    %s123 = sphi 0, %s122
    %s137 = sphi 0, %s123
    %s145 = sphi 0, %s147
    %s148 = sphi 0, %s145
    %s149 = sphi 0, %s148
    %s165 = sphi 0, %s149
    %s173 = sphi 0, %s175
    %s176 = sphi 0, %s173
    %s177 = sphi 0, %s176
    %s193 = sphi 0, %s177
  $region4: #{discriminator_forward.11} parent=0 // loop_header_branch
    %15 = sbr.rel (%p13) target = $region8
  $region5: #{discriminator_forward.11} parent=0 // loop_body
    %s17 = ssub.s32 %s12, 1
    %s18 = ssub.s32 %s12, 2
    %s25 = sadd.s32 1, %s20
    %p26 = scmp.ge.s32.totalorder %s25, 4
    %s27 = scalar_select %p26, 0, %s25
    %s28 = sadd.s32 1, %s19
    %s29 = scalar_select %p26, %s28, %s19
    %p30 = scmp.ge.s32.totalorder %s29, 2
    %s31 = scalar_select %p30, 0, %s29
    %s32 = ssub.s32 %s19, %s31
    %s33 = ssub.s32 %s20, %s27
    %s34 = sor.u32 %s32, %s33
    %p35 = scmp.eq.s32.totalorder %s34, 0
    %s37 = sadd.s32 %s36, 1
    %s38 = scalar_select %p35, %s36, %s37
    %p41 = pneg %p35
    %p42 = scmp.eq.s32.totalorder %s12, 7
    %p43 = por %p41, %p42
    %p44 = scmp.ne.s32.totalorder %s36, %s39
    %p45 = scmp.eq.s32.totalorder %s12, 0
    %p46 = por %p44, %p45
    %p47 = scmp.ne.s32.totalorder %s36, %s39
    %p48 = scmp.eq.s32.totalorder %s17, 7
    %p49 = por %p47, %p48
    %p50 = scmp.ne.s32.totalorder %s39, %s40
    %p51 = scmp.eq.s32.totalorder %s17, 0
    %p52 = por %p50, %p51
    %p53 = scmp.ne.s32.totalorder %s39, %s40
    %p54 = scmp.eq.s32.totalorder %s18, 7
    %p55 = por %p53, %p54
    %p57 = scmp.ne.s32.totalorder %s40, %s56
    %p58 = scmp.eq.s32.totalorder %s18, 0
    %p59 = por %p57, %p58
    %s60 = sadd.s32 %s20, 1
    %s61 = sadd.s32 %s27, 1
    %s62 = ssub.s32 %s19, %s31
    %s63 = ssub.s32 %s60, %s61
    %s64 = sor.u32 %s62, %s63
    %p65 = scmp.eq.s32.totalorder %s64, 0
    %s67 = sadd.s32 %s66, 1
    %s68 = scalar_select %p65, %s66, %s67
    %p71 = pneg %p65
    %p72 = scmp.eq.s32.totalorder %s12, 7
    %p73 = por %p71, %p72
    %p74 = scmp.ne.s32.totalorder %s66, %s69
    %p75 = scmp.eq.s32.totalorder %s12, 0
    %p76 = por %p74, %p75
    %p77 = scmp.ne.s32.totalorder %s66, %s69
    %p78 = scmp.eq.s32.totalorder %s17, 7
    %p79 = por %p77, %p78
    %p80 = scmp.ne.s32.totalorder %s69, %s70
    %p81 = scmp.eq.s32.totalorder %s17, 0
    %p82 = por %p80, %p81
    %p83 = scmp.ne.s32.totalorder %s69, %s70
    %p84 = scmp.eq.s32.totalorder %s18, 7
    %p85 = por %p83, %p84
    %p87 = scmp.ne.s32.totalorder %s70, %s86
    %p88 = scmp.eq.s32.totalorder %s18, 0
    %p89 = por %p87, %p88
    %s90 = sadd.s32 %s20, 2
    %s91 = sadd.s32 %s27, 2
    %s92 = ssub.s32 %s19, %s31
    %s93 = ssub.s32 %s90, %s91
    %s94 = sor.u32 %s92, %s93
    %p95 = scmp.eq.s32.totalorder %s94, 0
    %s97 = sadd.s32 %s96, 1
    %s98 = scalar_select %p95, %s96, %s97
    %p101 = pneg %p95
    %p102 = scmp.eq.s32.totalorder %s12, 7
    %p103 = por %p101, %p102
    %p104 = scmp.ne.s32.totalorder %s96, %s99
    %p105 = scmp.eq.s32.totalorder %s12, 0
    %p106 = por %p104, %p105
    %p107 = scmp.ne.s32.totalorder %s96, %s99
    %p108 = scmp.eq.s32.totalorder %s17, 7
    %p109 = por %p107, %p108
    %p110 = scmp.ne.s32.totalorder %s99, %s100
    %p111 = scmp.eq.s32.totalorder %s17, 0
    %p112 = por %p110, %p111
    %p113 = scmp.ne.s32.totalorder %s99, %s100
    %p114 = scmp.eq.s32.totalorder %s18, 7
    %p115 = por %p113, %p114
    %p117 = scmp.ne.s32.totalorder %s100, %s116
    %p118 = scmp.eq.s32.totalorder %s18, 0
    %p119 = por %p117, %p118
    %s121 = sadd.s32 %s120, 1
    %p124 = scmp.eq.s32.totalorder %s12, 7
    %p125 = scmp.ne.s32.totalorder %s120, %s122
    %p126 = scmp.eq.s32.totalorder %s12, 0
    %p127 = por %p125, %p126
    %p128 = scmp.ne.s32.totalorder %s120, %s122
    %p129 = scmp.eq.s32.totalorder %s17, 7
    %p130 = por %p128, %p129
    %p131 = scmp.ne.s32.totalorder %s122, %s123
    %p132 = scmp.eq.s32.totalorder %s17, 0
    %p133 = por %p131, %p132
    %p134 = scmp.ne.s32.totalorder %s122, %s123
    %p135 = scmp.eq.s32.totalorder %s18, 7
    %p136 = por %p134, %p135
    %p138 = scmp.ne.s32.totalorder %s123, %s137
    %p139 = scmp.eq.s32.totalorder %s18, 0
    %p140 = por %p138, %p139
    %s141 = ssub.s32 %s19, %s31
    %s142 = ssub.s32 %s20, %s27
    %s143 = sor.u32 %s141, %s142
    %p144 = scmp.eq.s32.totalorder %s143, 0
    %s146 = sadd.s32 %s145, 1
    %s147 = scalar_select %p144, %s145, %s146
    %p150 = pneg %p144
    %p151 = scmp.eq.s32.totalorder %s12, 7
    %p152 = por %p150, %p151
    %p153 = scmp.ne.s32.totalorder %s145, %s148
    %p154 = scmp.eq.s32.totalorder %s12, 0
    %p155 = por %p153, %p154
    %p156 = scmp.ne.s32.totalorder %s145, %s148
    %p157 = scmp.eq.s32.totalorder %s17, 7
    %p158 = por %p156, %p157
    %p159 = scmp.ne.s32.totalorder %s148, %s149
    %p160 = scmp.eq.s32.totalorder %s17, 0
    %p161 = por %p159, %p160
    %p162 = scmp.ne.s32.totalorder %s148, %s149
    %p163 = scmp.eq.s32.totalorder %s18, 7
    %p164 = por %p162, %p163
    %p166 = scmp.ne.s32.totalorder %s149, %s165
    %p167 = scmp.eq.s32.totalorder %s18, 0
    %p168 = por %p166, %p167
    %s169 = ssub.s32 %s19, %s31
    %s170 = ssub.s32 %s20, %s27
    %s171 = sor.u32 %s169, %s170
    %p172 = scmp.eq.s32.totalorder %s171, 0
    %s174 = sadd.s32 %s173, 1
    %s175 = scalar_select %p172, %s173, %s174
    %p178 = pneg %p172
    %p179 = scmp.eq.s32.totalorder %s12, 7
    %p180 = por %p178, %p179
    %p181 = scmp.ne.s32.totalorder %s173, %s176
    %p182 = scmp.eq.s32.totalorder %s12, 0
    %p183 = por %p181, %p182
    %p184 = scmp.ne.s32.totalorder %s173, %s176
    %p185 = scmp.eq.s32.totalorder %s17, 7
    %p186 = por %p184, %p185
    %p187 = scmp.ne.s32.totalorder %s176, %s177
    %p188 = scmp.eq.s32.totalorder %s17, 0
    %p189 = por %p187, %p188
    %p190 = scmp.ne.s32.totalorder %s176, %s177
    %p191 = scmp.eq.s32.totalorder %s18, 7
    %p192 = por %p190, %p191
    %p194 = scmp.ne.s32.totalorder %s177, %s193
    %p195 = scmp.eq.s32.totalorder %s18, 0
    %p196 = por %p194, %p195
    %p197 = scmp.le.s32.totalorder 1, %s12
    %p198 = scmp.lt.s32.totalorder %s12, 9
    %p199 = pnand %p197, %p198
    %p200 = pneg %p199
    // Predicated region
    $region9: #{discriminator_forward.11} parent=5 // pred_check
      _
    $region10: #{discriminator_forward.11} parent=5 // pred_check_branch
      %202 = sbr.rel (%p199) target = $region12
    $region11: #{discriminator_forward.11} parent=5 // pred_region
      %s203 = ssub.s32 %s12, 1
      // Predicated region
      $region13: #{discriminator_forward.11} parent=11 // pred_check
        %p204 = pneg %p133
      $region14: #{discriminator_forward.11} parent=11 // pred_check_branch
        %206 = sbr.rel (%p204) target = $region16
      $region15: #{discriminator_forward.11} parent=11 // pred_region
        _
      $region16: #{discriminator_forward.11} parent=11 // pred_fallthru
        _
    $region12: #{discriminator_forward.11} parent=5 // pred_fallthru
      _
    %p207 = scmp.lt.s32.totalorder %s12, 8
    // Predicated region
    $region17: #{discriminator_forward.11} parent=5 // pred_check
      %p208 = pneg %p207
    $region18: #{discriminator_forward.11} parent=5 // pred_check_branch
      %210 = sbr.rel (%p208) target = $region20
    $region19: #{discriminator_forward.11} parent=5 // pred_region
      // Predicated region
      $region21: #{discriminator_forward.11} parent=19 // pred_check
        %p211 = pneg %p46
      $region22: #{discriminator_forward.11} parent=19 // pred_check_branch
        %213 = sbr.rel (%p211) target = $region24
      $region23: #{discriminator_forward.11} parent=19 // pred_region
        %p214 = scmp.lt.s32.totalorder %s19, 1
        %s215 = scalar_select %p214, %s19, 1
        %p216 = scmp.lt.s32.totalorder %s20, 5
        %s217 = scalar_select %p216, %s20, 5
        %s218 = smul.addr %s215, 6
        %s219 = sadd.s32 %s217, %s218
        %s220 = smul.addr %s219, 4
        %s221 = scalar_lea.vmem %s0, %s220
      $region24: #{discriminator_forward.11} parent=19 // pred_fallthru
        _
      // Predicated region
      $region25: #{discriminator_forward.11} parent=19 // pred_check
        %p222 = pneg %p76
      $region26: #{discriminator_forward.11} parent=19 // pred_check_branch
        %224 = sbr.rel (%p222) target = $region28
      $region27: #{discriminator_forward.11} parent=19 // pred_region
        %s225 = sadd.s32 %s20, 1
        %p226 = scmp.lt.s32.totalorder %s19, 1
        %s227 = scalar_select %p226, %s19, 1
        %p228 = scmp.lt.s32.totalorder %s225, 5
        %s229 = scalar_select %p228, %s225, 5
        %s230 = smul.addr %s227, 6
        %s231 = sadd.s32 %s229, %s230
        %s232 = smul.addr %s231, 4
        %s233 = scalar_lea.vmem %s1, %s232
        %s234 = sadd.s32 %s20, 1
      $region28: #{discriminator_forward.11} parent=19 // pred_fallthru
        _
      // Predicated region
      $region29: #{discriminator_forward.11} parent=19 // pred_check
        %p235 = pneg %p106
      $region30: #{discriminator_forward.11} parent=19 // pred_check_branch
        %237 = sbr.rel (%p235) target = $region32
      $region31: #{discriminator_forward.11} parent=19 // pred_region
        %s238 = sadd.s32 %s20, 2
        %p239 = scmp.lt.s32.totalorder %s19, 1
        %s240 = scalar_select %p239, %s19, 1
        %p241 = scmp.lt.s32.totalorder %s238, 5
        %s242 = scalar_select %p241, %s238, 5
        %s243 = smul.addr %s240, 6
        %s244 = sadd.s32 %s242, %s243
        %s245 = smul.addr %s244, 4
        %s246 = scalar_lea.vmem %s2, %s245
        %s247 = sadd.s32 %s20, 2
      $region32: #{discriminator_forward.11} parent=19 // pred_fallthru
        _
    $region20: #{discriminator_forward.11} parent=5 // pred_fallthru
      _
    %p248 = scmp.le.s32.totalorder 1, %s12
    %p249 = scmp.lt.s32.totalorder %s12, 9
    %p250 = pnand %p248, %p249
    %p251 = pneg %p250
    // Predicated region
    $region33: #{discriminator_forward.11} parent=5 // pred_check
      _
    $region34: #{discriminator_forward.11} parent=5 // pred_check_branch
      %253 = sbr.rel (%p250) target = $region36
    $region35: #{discriminator_forward.11} parent=5 // pred_region
      %s254 = ssub.s32 %s12, 1
      %p255 = scmp.lt.s32.totalorder %s21, 1
      %s256 = scalar_select %p255, %s21, 1
      %p257 = scmp.lt.s32.totalorder %s22, 5
      %s258 = scalar_select %p257, %s22, 5
      %s259 = smul.addr %s256, 6
      %s260 = sadd.s32 %s258, %s259
      %s261 = smul.addr %s260, 4
      %s262 = scalar_lea.vmem %s0, %s261
      %p263 = pneg %p52
      %p264 = pneg %p49
      %s265 = sadd.s32 %s22, 1
      %p266 = scmp.lt.s32.totalorder %s21, 1
      %s267 = scalar_select %p266, %s21, 1
      %p268 = scmp.lt.s32.totalorder %s265, 5
      %s269 = scalar_select %p268, %s265, 5
      %s270 = smul.addr %s267, 6
      %s271 = sadd.s32 %s269, %s270
      %s272 = smul.addr %s271, 4
      %s273 = scalar_lea.vmem %s1, %s272
      %p274 = pneg %p82
      %p275 = pneg %p79
      %s276 = sadd.s32 %s22, 2
      %p277 = scmp.lt.s32.totalorder %s21, 1
      %s278 = scalar_select %p277, %s21, 1
      %p279 = scmp.lt.s32.totalorder %s276, 5
      %s280 = scalar_select %p279, %s276, 5
      %s281 = smul.addr %s278, 6
      %s282 = sadd.s32 %s280, %s281
      %s283 = smul.addr %s282, 4
      %s284 = scalar_lea.vmem %s2, %s283
      %p285 = pneg %p112
      %p286 = pneg %p109
      %p287 = pneg %p133
      %p288 = pneg %p130
      %p289 = pneg %p161
      %p290 = pneg %p158
      %p291 = scmp.lt.s32.totalorder %s21, 1
      %s292 = scalar_select %p291, %s21, 1
      %p293 = scmp.lt.s32.totalorder %s22, 3
      %s294 = scalar_select %p293, %s22, 3
      %s295 = smul.addr %s292, 4
      %s296 = sadd.s32 %s294, %s295
      %s297 = smul.addr %s296, 4
      %s298 = scalar_lea.vmem %s4, %s297
      %p299 = pneg %p189
      %p300 = pneg %p186
      %p301 = scmp.lt.s32.totalorder %s21, 1
      %s302 = scalar_select %p301, %s21, 1
      %p303 = scmp.lt.s32.totalorder %s22, 3
      %s304 = scalar_select %p303, %s22, 3
      %s305 = smul.addr %s302, 4
      %s306 = sadd.s32 %s304, %s305
      %s307 = smul.addr %s306, 2
      %s308 = scalar_lea.vmem %s5, %s307
      %p309 = scmp.lt.s32.totalorder %s21, 1
      %s310 = scalar_select %p309, %s21, 1
      %p311 = scmp.lt.s32.totalorder %s22, 5
      %s312 = scalar_select %p311, %s22, 5
      %s313 = smul.addr %s310, 6
      %s314 = sadd.s32 %s312, %s313
      %s315 = smul.addr %s314, 4
      %s316 = scalar_lea.vmem %s0, %s315
      %s317 = sadd.s32 %s22, 1
      %p318 = scmp.lt.s32.totalorder %s21, 1
      %s319 = scalar_select %p318, %s21, 1
      %p320 = scmp.lt.s32.totalorder %s317, 5
      %s321 = scalar_select %p320, %s317, 5
      %s322 = smul.addr %s319, 6
      %s323 = sadd.s32 %s321, %s322
      %s324 = smul.addr %s323, 4
      %s325 = scalar_lea.vmem %s1, %s324
      %s326 = sadd.s32 %s22, 1
      %s327 = sadd.s32 %s22, 2
      %p328 = scmp.lt.s32.totalorder %s21, 1
      %s329 = scalar_select %p328, %s21, 1
      %p330 = scmp.lt.s32.totalorder %s327, 5
      %s331 = scalar_select %p330, %s327, 5
      %s332 = smul.addr %s329, 6
      %s333 = sadd.s32 %s331, %s332
      %s334 = smul.addr %s333, 4
      %s335 = scalar_lea.vmem %s2, %s334
      %s336 = sadd.s32 %s22, 2
      %p337 = scmp.lt.s32.totalorder %s21, 1
      %s338 = scalar_select %p337, %s21, 1
      %p339 = scmp.lt.s32.totalorder %s22, 3
      %s340 = scalar_select %p339, %s22, 3
      %s341 = smul.addr %s338, 4
      %s342 = sadd.s32 %s340, %s341
      %s343 = smul.addr %s342, 4
      %s344 = scalar_lea.vmem %s4, %s343
      %p345 = scmp.lt.s32.totalorder %s21, 1
      %s346 = scalar_select %p345, %s21, 1
      %p347 = scmp.lt.s32.totalorder %s22, 3
      %s348 = scalar_select %p347, %s22, 3
      %s349 = smul.addr %s346, 4
      %s350 = sadd.s32 %s348, %s349
      %s351 = smul.addr %s350, 2
      %s352 = scalar_lea.vmem %s5, %s351
      %v354 = vld [vmem:[%s316] sm:$0x7]
      %v355 = vld [vmem:[%s325] sm:$0x7]
      %v356 = vld [vmem:[%s335] sm:$0x7]
      %v357 = vld [vmem:[%s3] sm:$0xf]
      %v358 = vld [vmem:[%s3 + $0x4] sm:$0xf]
      %v359 = vld [vmem:[%s3 + $0x8] sm:$0xf]
      %v360 = vld [vmem:[%s3 + $0xc] sm:$0xf]
      %v361 = vld [vmem:[%s3 + $0x10] sm:$0xf]
      %v362 = vld [vmem:[%s3 + $0x14] sm:$0xf]
      %v363 = vld [vmem:[%s3 + $0x18] sm:$0xf]
      %v364 = vld [vmem:[%s3 + $0x1c] sm:$0xf]
      %v365 = vld [vmem:[%s3 + $0x20] sm:$0xf]
      %v366 = vld [vmem:[%s3 + $0x24] sm:$0xf]
      %v367 = vld [vmem:[%s3 + $0x28] sm:$0xf]
      %v368 = vld [vmem:[%s3 + $0x2c] sm:$0xf]
      %v369 = vld [vmem:[%s3 + $0x30] sm:$0xf]
      %v370 = vld [vmem:[%s3 + $0x34] sm:$0xf]
      %v371 = vld [vmem:[%s3 + $0x38] sm:$0xf]
      %v372 = vld [vmem:[%s3 + $0x3c] sm:$0xf]
      %v389 = vunpack.c.l.b16 %v357
      %v390 = vunpack.c.l.b16 %v358
      %v391 = vunpack.c.l.b16 %v359
      %v392 = vunpack.c.l.b16 %v360
      %v393 = vunpack.c.l.b16 %v361
      %v394 = vunpack.c.l.b16 %v362
      %v395 = vunpack.c.l.b16 %v363
      %v396 = vunpack.c.l.b16 %v364
      %v397 = vunpack.c.l.b16 %v365
      %v398 = vunpack.c.l.b16 %v366
      %v399 = vunpack.c.l.b16 %v367
      %v400 = vunpack.c.l.b16 %v368
      %v401 = vunpack.c.l.b16 %v369
      %v402 = vunpack.c.l.b16 %v370
      %v403 = vunpack.c.l.b16 %v371
      %v404 = vunpack.c.l.b16 %v372
      %v405 = vpack.c.b16 %v390, %v389
      %v406 = vpack.c.b16 %v392, %v391
      %v407 = vpack.c.b16 %v394, %v393
      %v408 = vpack.c.b16 %v396, %v395
      %v409 = vpack.c.b16 %v398, %v397
      %v410 = vpack.c.b16 %v400, %v399
      %v411 = vpack.c.b16 %v402, %v401
      %v412 = vpack.c.b16 %v404, %v403
      %421 = vmatprep.subr.bf16.mxu0 0
      %422 = vmatpush1.bf16.msra.mxu0 %v405
      %423 = vmatprep.subr.bf16.mxu0 0
      %424 = vmatpush1.bf16.msra.mxu0 %v406
      %425 = vmatprep.subr.bf16.mxu0 0
      %426 = vmatpush1.bf16.msra.mxu0 %v407
      %427 = vmatprep.subr.bf16.mxu0 0
      %428 = vmatpush1.bf16.msra.mxu0 %v408
      %429 = vmatprep.subr.bf16.mxu0 0
      %430 = vmatpush1.bf16.msra.mxu0 %v409
      %431 = vmatprep.subr.bf16.mxu0 0
      %432 = vmatpush1.bf16.msra.mxu0 %v410
      %433 = vmatprep.subr.bf16.mxu0 0
      %434 = vmatpush1.bf16.msra.mxu0 %v411
      %435 = vmatprep.subr.bf16.mxu0 0
      %436 = vmatpush1.bf16.msra.mxu0 %v412
      %437 = vmatprep.subr.bf16.mxu0 0
      %438 = vmatpush1.bf16.msra.mxu0 0
      %439 = vmatprep.subr.bf16.mxu0 0
      %440 = vmatpush1.bf16.msra.mxu0 0
      %441 = vmatprep.subr.bf16.mxu0 0
      %442 = vmatpush1.bf16.msra.mxu0 0
      %443 = vmatprep.subr.bf16.mxu0 0
      %444 = vmatpush1.bf16.msra.mxu0 0
      %445 = vmatprep.subr.bf16.mxu0 0
      %446 = vmatpush1.bf16.msra.mxu0 0
      %447 = vmatprep.subr.bf16.mxu0 0
      %448 = vmatpush1.bf16.msra.mxu0 0
      %449 = vmatprep.subr.bf16.mxu0 0
      %450 = vmatpush1.bf16.msra.mxu0 0
      %451 = vmatprep.subr.bf16.mxu0 0
      %452 = vmatpush1.bf16.msra.mxu0 0
      %453 = vmatprep.mubr.bf16.mxu0 0
      %454 = vmatmul.mubr.bf16.gmra.mrb[0].mxu0 %v354
      %v455 = vpop.f32.mrb[0].mxu0
      %v456 = vadd.f32 0.0, %v455
      %v457 = vpop.f32.mrb[0].mxu0
      %v458 = vpop.f32.mrb[0].mxu0
      %v459 = vpop.f32.mrb[0].mxu0
      %460 = vdwg.mxu0
      %v461 = vadd.f32 %v456, 0.0
      %s462 = scalar_lea.vmem %s3, 64
      %v463 = vld [vmem:[%s462] sm:$0xf]
      %v464 = vld [vmem:[%s462 + $0x4] sm:$0xf]
      %v465 = vld [vmem:[%s462 + $0x8] sm:$0xf]
      %v466 = vld [vmem:[%s462 + $0xc] sm:$0xf]
      %v467 = vld [vmem:[%s462 + $0x10] sm:$0xf]
      %v468 = vld [vmem:[%s462 + $0x14] sm:$0xf]
      %v469 = vld [vmem:[%s462 + $0x18] sm:$0xf]
      %v470 = vld [vmem:[%s462 + $0x1c] sm:$0xf]
      %v471 = vld [vmem:[%s462 + $0x20] sm:$0xf]
      %v472 = vld [vmem:[%s462 + $0x24] sm:$0xf]
      %v473 = vld [vmem:[%s462 + $0x28] sm:$0xf]
      %v474 = vld [vmem:[%s462 + $0x2c] sm:$0xf]
      %v475 = vld [vmem:[%s462 + $0x30] sm:$0xf]
      %v476 = vld [vmem:[%s462 + $0x34] sm:$0xf]
      %v477 = vld [vmem:[%s462 + $0x38] sm:$0xf]
      %v478 = vld [vmem:[%s462 + $0x3c] sm:$0xf]
      %v495 = vunpack.c.l.b16 %v463
      %v496 = vunpack.c.l.b16 %v464
      %v497 = vunpack.c.l.b16 %v465
      %v498 = vunpack.c.l.b16 %v466
      %v499 = vunpack.c.l.b16 %v467
      %v500 = vunpack.c.l.b16 %v468
      %v501 = vunpack.c.l.b16 %v469
      %v502 = vunpack.c.l.b16 %v470
      %v503 = vunpack.c.l.b16 %v471
      %v504 = vunpack.c.l.b16 %v472
      %v505 = vunpack.c.l.b16 %v473
      %v506 = vunpack.c.l.b16 %v474
      %v507 = vunpack.c.l.b16 %v475
      %v508 = vunpack.c.l.b16 %v476
      %v509 = vunpack.c.l.b16 %v477
      %v510 = vunpack.c.l.b16 %v478
      %v511 = vpack.c.b16 %v496, %v495
      %v512 = vpack.c.b16 %v498, %v497
      %v513 = vpack.c.b16 %v500, %v499
      %v514 = vpack.c.b16 %v502, %v501
      %v515 = vpack.c.b16 %v504, %v503
      %v516 = vpack.c.b16 %v506, %v505
      %v517 = vpack.c.b16 %v508, %v507
      %v518 = vpack.c.b16 %v510, %v509
      %527 = vmatprep.subr.bf16.mxu0 0
      %528 = vmatpush1.bf16.msra.mxu0 %v511
      %529 = vmatprep.subr.bf16.mxu0 0
      %530 = vmatpush1.bf16.msra.mxu0 %v512
      %531 = vmatprep.subr.bf16.mxu0 0
      %532 = vmatpush1.bf16.msra.mxu0 %v513
      %533 = vmatprep.subr.bf16.mxu0 0
      %534 = vmatpush1.bf16.msra.mxu0 %v514
      %535 = vmatprep.subr.bf16.mxu0 0
      %536 = vmatpush1.bf16.msra.mxu0 %v515
      %537 = vmatprep.subr.bf16.mxu0 0
      %538 = vmatpush1.bf16.msra.mxu0 %v516
      %539 = vmatprep.subr.bf16.mxu0 0
      %540 = vmatpush1.bf16.msra.mxu0 %v517
      %541 = vmatprep.subr.bf16.mxu0 0
      %542 = vmatpush1.bf16.msra.mxu0 %v518
      %543 = vmatprep.subr.bf16.mxu0 0
      %544 = vmatpush1.bf16.msra.mxu0 0
      %545 = vmatprep.subr.bf16.mxu0 0
      %546 = vmatpush1.bf16.msra.mxu0 0
      %547 = vmatprep.subr.bf16.mxu0 0
      %548 = vmatpush1.bf16.msra.mxu0 0
      %549 = vmatprep.subr.bf16.mxu0 0
      %550 = vmatpush1.bf16.msra.mxu0 0
      %551 = vmatprep.subr.bf16.mxu0 0
      %552 = vmatpush1.bf16.msra.mxu0 0
      %553 = vmatprep.subr.bf16.mxu0 0
      %554 = vmatpush1.bf16.msra.mxu0 0
      %555 = vmatprep.subr.bf16.mxu0 0
      %556 = vmatpush1.bf16.msra.mxu0 0
      %557 = vmatprep.subr.bf16.mxu0 0
      %558 = vmatpush1.bf16.msra.mxu0 0
      %559 = vmatprep.mubr.bf16.mxu0 0
      %560 = vmatmul.mubr.bf16.gmra.mrb[0].mxu0 %v354
      %v561 = vpop.f32.mrb[0].mxu0
      %v562 = vadd.f32 0.0, %v561
      %v563 = vpop.f32.mrb[0].mxu0
      %v564 = vpop.f32.mrb[0].mxu0
      %v565 = vpop.f32.mrb[0].mxu0
      %566 = vdwg.mxu0
      %v568 = vrot.slane %v562, 1
      %v570 = vadd.f32 %v461, %v568
      %s571 = scalar_lea.vmem %s3, 128
      %v572 = vld [vmem:[%s571] sm:$0xf]
      %v573 = vld [vmem:[%s571 + $0x4] sm:$0xf]
      %v574 = vld [vmem:[%s571 + $0x8] sm:$0xf]
      %v575 = vld [vmem:[%s571 + $0xc] sm:$0xf]
      %v576 = vld [vmem:[%s571 + $0x10] sm:$0xf]
      %v577 = vld [vmem:[%s571 + $0x14] sm:$0xf]
      %v578 = vld [vmem:[%s571 + $0x18] sm:$0xf]
      %v579 = vld [vmem:[%s571 + $0x1c] sm:$0xf]
      %v580 = vld [vmem:[%s571 + $0x20] sm:$0xf]
      %v581 = vld [vmem:[%s571 + $0x24] sm:$0xf]
      %v582 = vld [vmem:[%s571 + $0x28] sm:$0xf]
      %v583 = vld [vmem:[%s571 + $0x2c] sm:$0xf]
      %v584 = vld [vmem:[%s571 + $0x30] sm:$0xf]
      %v585 = vld [vmem:[%s571 + $0x34] sm:$0xf]
      %v586 = vld [vmem:[%s571 + $0x38] sm:$0xf]
      %v587 = vld [vmem:[%s571 + $0x3c] sm:$0xf]
      %v604 = vunpack.c.l.b16 %v572
      %v605 = vunpack.c.l.b16 %v573
      %v606 = vunpack.c.l.b16 %v574
      %v607 = vunpack.c.l.b16 %v575
      %v608 = vunpack.c.l.b16 %v576
      %v609 = vunpack.c.l.b16 %v577
      %v610 = vunpack.c.l.b16 %v578
      %v611 = vunpack.c.l.b16 %v579
      %v612 = vunpack.c.l.b16 %v580
      %v613 = vunpack.c.l.b16 %v581
      %v614 = vunpack.c.l.b16 %v582
      %v615 = vunpack.c.l.b16 %v583
      %v616 = vunpack.c.l.b16 %v584
      %v617 = vunpack.c.l.b16 %v585
      %v618 = vunpack.c.l.b16 %v586
      %v619 = vunpack.c.l.b16 %v587
      %v620 = vpack.c.b16 %v605, %v604
      %v621 = vpack.c.b16 %v607, %v606
      %v622 = vpack.c.b16 %v609, %v608
      %v623 = vpack.c.b16 %v611, %v610
      %v624 = vpack.c.b16 %v613, %v612
      %v625 = vpack.c.b16 %v615, %v614
      %v626 = vpack.c.b16 %v617, %v616
      %v627 = vpack.c.b16 %v619, %v618
      %636 = vmatprep.subr.bf16.mxu0 0
      %637 = vmatpush1.bf16.msra.mxu0 %v620
      %638 = vmatprep.subr.bf16.mxu0 0
      %639 = vmatpush1.bf16.msra.mxu0 %v621
      %640 = vmatprep.subr.bf16.mxu0 0
      %641 = vmatpush1.bf16.msra.mxu0 %v622
      %642 = vmatprep.subr.bf16.mxu0 0
      %643 = vmatpush1.bf16.msra.mxu0 %v623
      %644 = vmatprep.subr.bf16.mxu0 0
      %645 = vmatpush1.bf16.msra.mxu0 %v624
      %646 = vmatprep.subr.bf16.mxu0 0
      %647 = vmatpush1.bf16.msra.mxu0 %v625
      %648 = vmatprep.subr.bf16.mxu0 0
      %649 = vmatpush1.bf16.msra.mxu0 %v626
      %650 = vmatprep.subr.bf16.mxu0 0
      %651 = vmatpush1.bf16.msra.mxu0 %v627
      %652 = vmatprep.subr.bf16.mxu0 0
      %653 = vmatpush1.bf16.msra.mxu0 0
      %654 = vmatprep.subr.bf16.mxu0 0
      %655 = vmatpush1.bf16.msra.mxu0 0
      %656 = vmatprep.subr.bf16.mxu0 0
      %657 = vmatpush1.bf16.msra.mxu0 0
      %658 = vmatprep.subr.bf16.mxu0 0
      %659 = vmatpush1.bf16.msra.mxu0 0
      %660 = vmatprep.subr.bf16.mxu0 0
      %661 = vmatpush1.bf16.msra.mxu0 0
      %662 = vmatprep.subr.bf16.mxu0 0
      %663 = vmatpush1.bf16.msra.mxu0 0
      %664 = vmatprep.subr.bf16.mxu0 0
      %665 = vmatpush1.bf16.msra.mxu0 0
      %666 = vmatprep.subr.bf16.mxu0 0
      %667 = vmatpush1.bf16.msra.mxu0 0
      %668 = vmatprep.mubr.bf16.mxu0 0
      %669 = vmatmul.mubr.bf16.gmra.mrb[0].mxu0 %v354
      %v670 = vpop.f32.mrb[0].mxu0
      %v671 = vadd.f32 0.0, %v670
      %v672 = vpop.f32.mrb[0].mxu0
      %v673 = vpop.f32.mrb[0].mxu0
      %v674 = vpop.f32.mrb[0].mxu0
      %675 = vdwg.mxu0
      %v677 = vrot.slane %v671, 2
      %v679 = vadd.f32 %v570, %v677
      %s680 = scalar_lea.vmem %s3, 192
      %v681 = vld [vmem:[%s680] sm:$0xf]
      %v682 = vld [vmem:[%s680 + $0x4] sm:$0xf]
      %v683 = vld [vmem:[%s680 + $0x8] sm:$0xf]
      %v684 = vld [vmem:[%s680 + $0xc] sm:$0xf]
      %v685 = vld [vmem:[%s680 + $0x10] sm:$0xf]
      %v686 = vld [vmem:[%s680 + $0x14] sm:$0xf]
      %v687 = vld [vmem:[%s680 + $0x18] sm:$0xf]
      %v688 = vld [vmem:[%s680 + $0x1c] sm:$0xf]
      %v689 = vld [vmem:[%s680 + $0x20] sm:$0xf]
      %v690 = vld [vmem:[%s680 + $0x24] sm:$0xf]
      %v691 = vld [vmem:[%s680 + $0x28] sm:$0xf]
      %v692 = vld [vmem:[%s680 + $0x2c] sm:$0xf]
      %v693 = vld [vmem:[%s680 + $0x30] sm:$0xf]
      %v694 = vld [vmem:[%s680 + $0x34] sm:$0xf]
      %v695 = vld [vmem:[%s680 + $0x38] sm:$0xf]
      %v696 = vld [vmem:[%s680 + $0x3c] sm:$0xf]
      %v713 = vunpack.c.l.b16 %v681
      %v714 = vunpack.c.l.b16 %v682
      %v715 = vunpack.c.l.b16 %v683
      %v716 = vunpack.c.l.b16 %v684
      %v717 = vunpack.c.l.b16 %v685
      %v718 = vunpack.c.l.b16 %v686
      %v719 = vunpack.c.l.b16 %v687
      %v720 = vunpack.c.l.b16 %v688
      %v721 = vunpack.c.l.b16 %v689
      %v722 = vunpack.c.l.b16 %v690
      %v723 = vunpack.c.l.b16 %v691
      %v724 = vunpack.c.l.b16 %v692
      %v725 = vunpack.c.l.b16 %v693
      %v726 = vunpack.c.l.b16 %v694
      %v727 = vunpack.c.l.b16 %v695
      %v728 = vunpack.c.l.b16 %v696
      %v729 = vpack.c.b16 %v714, %v713
      %v730 = vpack.c.b16 %v716, %v715
      %v731 = vpack.c.b16 %v718, %v717
      %v732 = vpack.c.b16 %v720, %v719
      %v733 = vpack.c.b16 %v722, %v721
      %v734 = vpack.c.b16 %v724, %v723
      %v735 = vpack.c.b16 %v726, %v725
      %v736 = vpack.c.b16 %v728, %v727
      %745 = vmatprep.subr.bf16.mxu0 0
      %746 = vmatpush1.bf16.msra.mxu0 %v729
      %747 = vmatprep.subr.bf16.mxu0 0
      %748 = vmatpush1.bf16.msra.mxu0 %v730
      %749 = vmatprep.subr.bf16.mxu0 0
      %750 = vmatpush1.bf16.msra.mxu0 %v731
      %751 = vmatprep.subr.bf16.mxu0 0
      %752 = vmatpush1.bf16.msra.mxu0 %v732
      %753 = vmatprep.subr.bf16.mxu0 0
      %754 = vmatpush1.bf16.msra.mxu0 %v733
      %755 = vmatprep.subr.bf16.mxu0 0
      %756 = vmatpush1.bf16.msra.mxu0 %v734
      %757 = vmatprep.subr.bf16.mxu0 0
      %758 = vmatpush1.bf16.msra.mxu0 %v735
      %759 = vmatprep.subr.bf16.mxu0 0
      %760 = vmatpush1.bf16.msra.mxu0 %v736
      %761 = vmatprep.subr.bf16.mxu0 0
      %762 = vmatpush1.bf16.msra.mxu0 0
      %763 = vmatprep.subr.bf16.mxu0 0
      %764 = vmatpush1.bf16.msra.mxu0 0
      %765 = vmatprep.subr.bf16.mxu0 0
      %766 = vmatpush1.bf16.msra.mxu0 0
      %767 = vmatprep.subr.bf16.mxu0 0
      %768 = vmatpush1.bf16.msra.mxu0 0
      %769 = vmatprep.subr.bf16.mxu0 0
      %770 = vmatpush1.bf16.msra.mxu0 0
      %771 = vmatprep.subr.bf16.mxu0 0
      %772 = vmatpush1.bf16.msra.mxu0 0
      %773 = vmatprep.subr.bf16.mxu0 0
      %774 = vmatpush1.bf16.msra.mxu0 0
      %775 = vmatprep.subr.bf16.mxu0 0
      %776 = vmatpush1.bf16.msra.mxu0 0
      %777 = vmatprep.mubr.bf16.mxu0 0
      %778 = vmatmul.mubr.bf16.gmra.mrb[0].mxu0 %v355
      %v779 = vpop.f32.mrb[0].mxu0
      %v780 = vadd.f32 0.0, %v779
      %v781 = vpop.f32.mrb[0].mxu0
      %v782 = vpop.f32.mrb[0].mxu0
      %v783 = vpop.f32.mrb[0].mxu0
      %784 = vdwg.mxu0
      %v785 = vadd.f32 %v679, %v780
      %s786 = scalar_lea.vmem %s3, 256
      %v787 = vld [vmem:[%s786] sm:$0xf]
      %v788 = vld [vmem:[%s786 + $0x4] sm:$0xf]
      %v789 = vld [vmem:[%s786 + $0x8] sm:$0xf]
      %v790 = vld [vmem:[%s786 + $0xc] sm:$0xf]
      %v791 = vld [vmem:[%s786 + $0x10] sm:$0xf]
      %v792 = vld [vmem:[%s786 + $0x14] sm:$0xf]
      %v793 = vld [vmem:[%s786 + $0x18] sm:$0xf]
      %v794 = vld [vmem:[%s786 + $0x1c] sm:$0xf]
      %v795 = vld [vmem:[%s786 + $0x20] sm:$0xf]
      %v796 = vld [vmem:[%s786 + $0x24] sm:$0xf]
      %v797 = vld [vmem:[%s786 + $0x28] sm:$0xf]
      %v798 = vld [vmem:[%s786 + $0x2c] sm:$0xf]
      %v799 = vld [vmem:[%s786 + $0x30] sm:$0xf]
      %v800 = vld [vmem:[%s786 + $0x34] sm:$0xf]
      %v801 = vld [vmem:[%s786 + $0x38] sm:$0xf]
      %v802 = vld [vmem:[%s786 + $0x3c] sm:$0xf]
      %v819 = vunpack.c.l.b16 %v787
      %v820 = vunpack.c.l.b16 %v788
      %v821 = vunpack.c.l.b16 %v789
      %v822 = vunpack.c.l.b16 %v790
      %v823 = vunpack.c.l.b16 %v791
      %v824 = vunpack.c.l.b16 %v792
      %v825 = vunpack.c.l.b16 %v793
      %v826 = vunpack.c.l.b16 %v794
      %v827 = vunpack.c.l.b16 %v795
      %v828 = vunpack.c.l.b16 %v796
      %v829 = vunpack.c.l.b16 %v797
      %v830 = vunpack.c.l.b16 %v798
      %v831 = vunpack.c.l.b16 %v799
      %v832 = vunpack.c.l.b16 %v800
      %v833 = vunpack.c.l.b16 %v801
      %v834 = vunpack.c.l.b16 %v802
      %v835 = vpack.c.b16 %v820, %v819
      %v836 = vpack.c.b16 %v822, %v821
      %v837 = vpack.c.b16 %v824, %v823
      %v838 = vpack.c.b16 %v826, %v825
      %v839 = vpack.c.b16 %v828, %v827
      %v840 = vpack.c.b16 %v830, %v829
      %v841 = vpack.c.b16 %v832, %v831
      %v842 = vpack.c.b16 %v834, %v833
      %851 = vmatprep.subr.bf16.mxu0 0
      %852 = vmatpush1.bf16.msra.mxu0 %v835
      %853 = vmatprep.subr.bf16.mxu0 0
      %854 = vmatpush1.bf16.msra.mxu0 %v836
      %855 = vmatprep.subr.bf16.mxu0 0
      %856 = vmatpush1.bf16.msra.mxu0 %v837
      %857 = vmatprep.subr.bf16.mxu0 0
      %858 = vmatpush1.bf16.msra.mxu0 %v838
      %859 = vmatprep.subr.bf16.mxu0 0
      %860 = vmatpush1.bf16.msra.mxu0 %v839
      %861 = vmatprep.subr.bf16.mxu0 0
      %862 = vmatpush1.bf16.msra.mxu0 %v840
      %863 = vmatprep.subr.bf16.mxu0 0
      %864 = vmatpush1.bf16.msra.mxu0 %v841
      %865 = vmatprep.subr.bf16.mxu0 0
      %866 = vmatpush1.bf16.msra.mxu0 %v842
      %867 = vmatprep.subr.bf16.mxu0 0
      %868 = vmatpush1.bf16.msra.mxu0 0
      %869 = vmatprep.subr.bf16.mxu0 0
      %870 = vmatpush1.bf16.msra.mxu0 0
      %871 = vmatprep.subr.bf16.mxu0 0
      %872 = vmatpush1.bf16.msra.mxu0 0
      %873 = vmatprep.subr.bf16.mxu0 0
      %874 = vmatpush1.bf16.msra.mxu0 0
      %875 = vmatprep.subr.bf16.mxu0 0
      %876 = vmatpush1.bf16.msra.mxu0 0
      %877 = vmatprep.subr.bf16.mxu0 0
      %878 = vmatpush1.bf16.msra.mxu0 0
      %879 = vmatprep.subr.bf16.mxu0 0
      %880 = vmatpush1.bf16.msra.mxu0 0
      %881 = vmatprep.subr.bf16.mxu0 0
      %882 = vmatpush1.bf16.msra.mxu0 0
      %883 = vmatprep.mubr.bf16.mxu0 0
      %884 = vmatmul.mubr.bf16.gmra.mrb[0].mxu0 %v355
      %v885 = vpop.f32.mrb[0].mxu0
      %v886 = vadd.f32 0.0, %v885
      %v887 = vpop.f32.mrb[0].mxu0
      %v888 = vpop.f32.mrb[0].mxu0
      %v889 = vpop.f32.mrb[0].mxu0
      %890 = vdwg.mxu0
      %v892 = vrot.slane %v886, 1
      %v894 = vadd.f32 %v785, %v892
      %s895 = scalar_lea.vmem %s3, 320
      %v896 = vld [vmem:[%s895] sm:$0xf]
      %v897 = vld [vmem:[%s895 + $0x4] sm:$0xf]
      %v898 = vld [vmem:[%s895 + $0x8] sm:$0xf]
      %v899 = vld [vmem:[%s895 + $0xc] sm:$0xf]
      %v900 = vld [vmem:[%s895 + $0x10] sm:$0xf]
      %v901 = vld [vmem:[%s895 + $0x14] sm:$0xf]
      %v902 = vld [vmem:[%s895 + $0x18] sm:$0xf]
      %v903 = vld [vmem:[%s895 + $0x1c] sm:$0xf]
      %v904 = vld [vmem:[%s895 + $0x20] sm:$0xf]
      %v905 = vld [vmem:[%s895 + $0x24] sm:$0xf]
      %v906 = vld [vmem:[%s895 + $0x28] sm:$0xf]
      %v907 = vld [vmem:[%s895 + $0x2c] sm:$0xf]
      %v908 = vld [vmem:[%s895 + $0x30] sm:$0xf]
      %v909 = vld [vmem:[%s895 + $0x34] sm:$0xf]
      %v910 = vld [vmem:[%s895 + $0x38] sm:$0xf]
      %v911 = vld [vmem:[%s895 + $0x3c] sm:$0xf]
      %v928 = vunpack.c.l.b16 %v896
      %v929 = vunpack.c.l.b16 %v897
      %v930 = vunpack.c.l.b16 %v898
      %v931 = vunpack.c.l.b16 %v899
      %v932 = vunpack.c.l.b16 %v900
      %v933 = vunpack.c.l.b16 %v901
      %v934 = vunpack.c.l.b16 %v902
      %v935 = vunpack.c.l.b16 %v903
      %v936 = vunpack.c.l.b16 %v904
      %v937 = vunpack.c.l.b16 %v905
      %v938 = vunpack.c.l.b16 %v906
      %v939 = vunpack.c.l.b16 %v907
      %v940 = vunpack.c.l.b16 %v908
      %v941 = vunpack.c.l.b16 %v909
      %v942 = vunpack.c.l.b16 %v910
      %v943 = vunpack.c.l.b16 %v911
      %v944 = vpack.c.b16 %v929, %v928
      %v945 = vpack.c.b16 %v931, %v930
      %v946 = vpack.c.b16 %v933, %v932
      %v947 = vpack.c.b16 %v935, %v934
      %v948 = vpack.c.b16 %v937, %v936
      %v949 = vpack.c.b16 %v939, %v938
      %v950 = vpack.c.b16 %v941, %v940
      %v951 = vpack.c.b16 %v943, %v942
      %960 = vmatprep.subr.bf16.mxu0 0
      %961 = vmatpush1.bf16.msra.mxu0 %v944
      %962 = vmatprep.subr.bf16.mxu0 0
      %963 = vmatpush1.bf16.msra.mxu0 %v945
      %964 = vmatprep.subr.bf16.mxu0 0
      %965 = vmatpush1.bf16.msra.mxu0 %v946
      %966 = vmatprep.subr.bf16.mxu0 0
      %967 = vmatpush1.bf16.msra.mxu0 %v947
      %968 = vmatprep.subr.bf16.mxu0 0
      %969 = vmatpush1.bf16.msra.mxu0 %v948
      %970 = vmatprep.subr.bf16.mxu0 0
      %971 = vmatpush1.bf16.msra.mxu0 %v949
      %972 = vmatprep.subr.bf16.mxu0 0
      %973 = vmatpush1.bf16.msra.mxu0 %v950
      %974 = vmatprep.subr.bf16.mxu0 0
      %975 = vmatpush1.bf16.msra.mxu0 %v951
      %976 = vmatprep.subr.bf16.mxu0 0
      %977 = vmatpush1.bf16.msra.mxu0 0
      %978 = vmatprep.subr.bf16.mxu0 0
      %979 = vmatpush1.bf16.msra.mxu0 0
      %980 = vmatprep.subr.bf16.mxu0 0
      %981 = vmatpush1.bf16.msra.mxu0 0
      %982 = vmatprep.subr.bf16.mxu0 0
      %983 = vmatpush1.bf16.msra.mxu0 0
      %984 = vmatprep.subr.bf16.mxu0 0
      %985 = vmatpush1.bf16.msra.mxu0 0
      %986 = vmatprep.subr.bf16.mxu0 0
      %987 = vmatpush1.bf16.msra.mxu0 0
      %988 = vmatprep.subr.bf16.mxu0 0
      %989 = vmatpush1.bf16.msra.mxu0 0
      %990 = vmatprep.subr.bf16.mxu0 0
      %991 = vmatpush1.bf16.msra.mxu0 0
      %992 = vmatprep.mubr.bf16.mxu0 0
      %993 = vmatmul.mubr.bf16.gmra.mrb[0].mxu0 %v355
      %v994 = vpop.f32.mrb[0].mxu0
      %v995 = vadd.f32 0.0, %v994
      %v996 = vpop.f32.mrb[0].mxu0
      %v997 = vpop.f32.mrb[0].mxu0
      %v998 = vpop.f32.mrb[0].mxu0
      %999 = vdwg.mxu0
      %v1001 = vrot.slane %v995, 2
      %v1003 = vadd.f32 %v894, %v1001
      %s1004 = scalar_lea.vmem %s3, 384
      %v1005 = vld [vmem:[%s1004] sm:$0xf]
      %v1006 = vld [vmem:[%s1004 + $0x4] sm:$0xf]
      %v1007 = vld [vmem:[%s1004 + $0x8] sm:$0xf]
      %v1008 = vld [vmem:[%s1004 + $0xc] sm:$0xf]
      %v1009 = vld [vmem:[%s1004 + $0x10] sm:$0xf]
      %v1010 = vld [vmem:[%s1004 + $0x14] sm:$0xf]
      %v1011 = vld [vmem:[%s1004 + $0x18] sm:$0xf]
      %v1012 = vld [vmem:[%s1004 + $0x1c] sm:$0xf]
      %v1013 = vld [vmem:[%s1004 + $0x20] sm:$0xf]
      %v1014 = vld [vmem:[%s1004 + $0x24] sm:$0xf]
      %v1015 = vld [vmem:[%s1004 + $0x28] sm:$0xf]
      %v1016 = vld [vmem:[%s1004 + $0x2c] sm:$0xf]
      %v1017 = vld [vmem:[%s1004 + $0x30] sm:$0xf]
      %v1018 = vld [vmem:[%s1004 + $0x34] sm:$0xf]
      %v1019 = vld [vmem:[%s1004 + $0x38] sm:$0xf]
      %v1020 = vld [vmem:[%s1004 + $0x3c] sm:$0xf]
      %v1037 = vunpack.c.l.b16 %v1005
      %v1038 = vunpack.c.l.b16 %v1006
      %v1039 = vunpack.c.l.b16 %v1007
      %v1040 = vunpack.c.l.b16 %v1008
      %v1041 = vunpack.c.l.b16 %v1009
      %v1042 = vunpack.c.l.b16 %v1010
      %v1043 = vunpack.c.l.b16 %v1011
      %v1044 = vunpack.c.l.b16 %v1012
      %v1045 = vunpack.c.l.b16 %v1013
      %v1046 = vunpack.c.l.b16 %v1014
      %v1047 = vunpack.c.l.b16 %v1015
      %v1048 = vunpack.c.l.b16 %v1016
      %v1049 = vunpack.c.l.b16 %v1017
      %v1050 = vunpack.c.l.b16 %v1018
      %v1051 = vunpack.c.l.b16 %v1019
      %v1052 = vunpack.c.l.b16 %v1020
      %v1053 = vpack.c.b16 %v1038, %v1037
      %v1054 = vpack.c.b16 %v1040, %v1039
      %v1055 = vpack.c.b16 %v1042, %v1041
      %v1056 = vpack.c.b16 %v1044, %v1043
      %v1057 = vpack.c.b16 %v1046, %v1045
      %v1058 = vpack.c.b16 %v1048, %v1047
      %v1059 = vpack.c.b16 %v1050, %v1049
      %v1060 = vpack.c.b16 %v1052, %v1051
      %1069 = vmatprep.subr.bf16.mxu0 0
      %1070 = vmatpush1.bf16.msra.mxu0 %v1053
      %1071 = vmatprep.subr.bf16.mxu0 0
      %1072 = vmatpush1.bf16.msra.mxu0 %v1054
      %1073 = vmatprep.subr.bf16.mxu0 0
      %1074 = vmatpush1.bf16.msra.mxu0 %v1055
      %1075 = vmatprep.subr.bf16.mxu0 0
      %1076 = vmatpush1.bf16.msra.mxu0 %v1056
      %1077 = vmatprep.subr.bf16.mxu0 0
      %1078 = vmatpush1.bf16.msra.mxu0 %v1057
      %1079 = vmatprep.subr.bf16.mxu0 0
      %1080 = vmatpush1.bf16.msra.mxu0 %v1058
      %1081 = vmatprep.subr.bf16.mxu0 0
      %1082 = vmatpush1.bf16.msra.mxu0 %v1059
      %1083 = vmatprep.subr.bf16.mxu0 0
      %1084 = vmatpush1.bf16.msra.mxu0 %v1060
      %1085 = vmatprep.subr.bf16.mxu0 0
      %1086 = vmatpush1.bf16.msra.mxu0 0
      %1087 = vmatprep.subr.bf16.mxu0 0
      %1088 = vmatpush1.bf16.msra.mxu0 0
      %1089 = vmatprep.subr.bf16.mxu0 0
      %1090 = vmatpush1.bf16.msra.mxu0 0
      %1091 = vmatprep.subr.bf16.mxu0 0
      %1092 = vmatpush1.bf16.msra.mxu0 0
      %1093 = vmatprep.subr.bf16.mxu0 0
      %1094 = vmatpush1.bf16.msra.mxu0 0
      %1095 = vmatprep.subr.bf16.mxu0 0
      %1096 = vmatpush1.bf16.msra.mxu0 0
      %1097 = vmatprep.subr.bf16.mxu0 0
      %1098 = vmatpush1.bf16.msra.mxu0 0
      %1099 = vmatprep.subr.bf16.mxu0 0
      %1100 = vmatpush1.bf16.msra.mxu0 0
      %1101 = vmatprep.mubr.bf16.mxu0 0
      %1102 = vmatmul.mubr.bf16.gmra.mrb[0].mxu0 %v356
      %v1103 = vpop.f32.mrb[0].mxu0
      %v1104 = vadd.f32 0.0, %v1103
      %v1105 = vpop.f32.mrb[0].mxu0
      %v1106 = vpop.f32.mrb[0].mxu0
      %v1107 = vpop.f32.mrb[0].mxu0
      %1108 = vdwg.mxu0
      %v1109 = vadd.f32 %v1003, %v1104
      %s1110 = scalar_lea.vmem %s3, 448
      %v1111 = vld [vmem:[%s1110] sm:$0xf]
      %v1112 = vld [vmem:[%s1110 + $0x4] sm:$0xf]
      %v1113 = vld [vmem:[%s1110 + $0x8] sm:$0xf]
      %v1114 = vld [vmem:[%s1110 + $0xc] sm:$0xf]
      %v1115 = vld [vmem:[%s1110 + $0x10] sm:$0xf]
      %v1116 = vld [vmem:[%s1110 + $0x14] sm:$0xf]
      %v1117 = vld [vmem:[%s1110 + $0x18] sm:$0xf]
      %v1118 = vld [vmem:[%s1110 + $0x1c] sm:$0xf]
      %v1119 = vld [vmem:[%s1110 + $0x20] sm:$0xf]
      %v1120 = vld [vmem:[%s1110 + $0x24] sm:$0xf]
      %v1121 = vld [vmem:[%s1110 + $0x28] sm:$0xf]
      %v1122 = vld [vmem:[%s1110 + $0x2c] sm:$0xf]
      %v1123 = vld [vmem:[%s1110 + $0x30] sm:$0xf]
      %v1124 = vld [vmem:[%s1110 + $0x34] sm:$0xf]
      %v1125 = vld [vmem:[%s1110 + $0x38] sm:$0xf]
      %v1126 = vld [vmem:[%s1110 + $0x3c] sm:$0xf]
      %v1143 = vunpack.c.l.b16 %v1111
      %v1144 = vunpack.c.l.b16 %v1112
      %v1145 = vunpack.c.l.b16 %v1113
      %v1146 = vunpack.c.l.b16 %v1114
      %v1147 = vunpack.c.l.b16 %v1115
      %v1148 = vunpack.c.l.b16 %v1116
      %v1149 = vunpack.c.l.b16 %v1117
      %v1150 = vunpack.c.l.b16 %v1118
      %v1151 = vunpack.c.l.b16 %v1119
      %v1152 = vunpack.c.l.b16 %v1120
      %v1153 = vunpack.c.l.b16 %v1121
      %v1154 = vunpack.c.l.b16 %v1122
      %v1155 = vunpack.c.l.b16 %v1123
      %v1156 = vunpack.c.l.b16 %v1124
      %v1157 = vunpack.c.l.b16 %v1125
      %v1158 = vunpack.c.l.b16 %v1126
      %v1159 = vpack.c.b16 %v1144, %v1143
      %v1160 = vpack.c.b16 %v1146, %v1145
      %v1161 = vpack.c.b16 %v1148, %v1147
      %v1162 = vpack.c.b16 %v1150, %v1149
      %v1163 = vpack.c.b16 %v1152, %v1151
      %v1164 = vpack.c.b16 %v1154, %v1153
      %v1165 = vpack.c.b16 %v1156, %v1155
      %v1166 = vpack.c.b16 %v1158, %v1157
      %1175 = vmatprep.subr.bf16.mxu0 0
      %1176 = vmatpush1.bf16.msra.mxu0 %v1159
      %1177 = vmatprep.subr.bf16.mxu0 0
      %1178 = vmatpush1.bf16.msra.mxu0 %v1160
      %1179 = vmatprep.subr.bf16.mxu0 0
      %1180 = vmatpush1.bf16.msra.mxu0 %v1161
      %1181 = vmatprep.subr.bf16.mxu0 0
      %1182 = vmatpush1.bf16.msra.mxu0 %v1162
      %1183 = vmatprep.subr.bf16.mxu0 0
      %1184 = vmatpush1.bf16.msra.mxu0 %v1163
      %1185 = vmatprep.subr.bf16.mxu0 0
      %1186 = vmatpush1.bf16.msra.mxu0 %v1164
      %1187 = vmatprep.subr.bf16.mxu0 0
      %1188 = vmatpush1.bf16.msra.mxu0 %v1165
      %1189 = vmatprep.subr.bf16.mxu0 0
      %1190 = vmatpush1.bf16.msra.mxu0 %v1166
      %1191 = vmatprep.subr.bf16.mxu0 0
      %1192 = vmatpush1.bf16.msra.mxu0 0
      %1193 = vmatprep.subr.bf16.mxu0 0
      %1194 = vmatpush1.bf16.msra.mxu0 0
      %1195 = vmatprep.subr.bf16.mxu0 0
      %1196 = vmatpush1.bf16.msra.mxu0 0
      %1197 = vmatprep.subr.bf16.mxu0 0
      %1198 = vmatpush1.bf16.msra.mxu0 0
      %1199 = vmatprep.subr.bf16.mxu0 0
      %1200 = vmatpush1.bf16.msra.mxu0 0
      %1201 = vmatprep.subr.bf16.mxu0 0
      %1202 = vmatpush1.bf16.msra.mxu0 0
      %1203 = vmatprep.subr.bf16.mxu0 0
      %1204 = vmatpush1.bf16.msra.mxu0 0
      %1205 = vmatprep.subr.bf16.mxu0 0
      %1206 = vmatpush1.bf16.msra.mxu0 0
      %1207 = vmatprep.mubr.bf16.mxu0 0
      %1208 = vmatmul.mubr.bf16.gmra.mrb[0].mxu0 %v356
      %v1209 = vpop.f32.mrb[0].mxu0
      %v1210 = vadd.f32 0.0, %v1209
      %v1211 = vpop.f32.mrb[0].mxu0
      %v1212 = vpop.f32.mrb[0].mxu0
      %v1213 = vpop.f32.mrb[0].mxu0
      %1214 = vdwg.mxu0
      %v1216 = vrot.slane %v1210, 1
      %v1218 = vadd.f32 %v1109, %v1216
      %s1219 = scalar_lea.vmem %s3, 512
      %v1220 = vld [vmem:[%s1219] sm:$0xf]
      %v1221 = vld [vmem:[%s1219 + $0x4] sm:$0xf]
      %v1222 = vld [vmem:[%s1219 + $0x8] sm:$0xf]
      %v1223 = vld [vmem:[%s1219 + $0xc] sm:$0xf]
      %v1224 = vld [vmem:[%s1219 + $0x10] sm:$0xf]
      %v1225 = vld [vmem:[%s1219 + $0x14] sm:$0xf]
      %v1226 = vld [vmem:[%s1219 + $0x18] sm:$0xf]
      %v1227 = vld [vmem:[%s1219 + $0x1c] sm:$0xf]
      %v1228 = vld [vmem:[%s1219 + $0x20] sm:$0xf]
      %v1229 = vld [vmem:[%s1219 + $0x24] sm:$0xf]
      %v1230 = vld [vmem:[%s1219 + $0x28] sm:$0xf]
      %v1231 = vld [vmem:[%s1219 + $0x2c] sm:$0xf]
      %v1232 = vld [vmem:[%s1219 + $0x30] sm:$0xf]
      %v1233 = vld [vmem:[%s1219 + $0x34] sm:$0xf]
      %v1234 = vld [vmem:[%s1219 + $0x38] sm:$0xf]
      %v1235 = vld [vmem:[%s1219 + $0x3c] sm:$0xf]
      %v1252 = vunpack.c.l.b16 %v1220
      %v1253 = vunpack.c.l.b16 %v1221
      %v1254 = vunpack.c.l.b16 %v1222
      %v1255 = vunpack.c.l.b16 %v1223
      %v1256 = vunpack.c.l.b16 %v1224
      %v1257 = vunpack.c.l.b16 %v1225
      %v1258 = vunpack.c.l.b16 %v1226
      %v1259 = vunpack.c.l.b16 %v1227
      %v1260 = vunpack.c.l.b16 %v1228
      %v1261 = vunpack.c.l.b16 %v1229
      %v1262 = vunpack.c.l.b16 %v1230
      %v1263 = vunpack.c.l.b16 %v1231
      %v1264 = vunpack.c.l.b16 %v1232
      %v1265 = vunpack.c.l.b16 %v1233
      %v1266 = vunpack.c.l.b16 %v1234
      %v1267 = vunpack.c.l.b16 %v1235
      %v1268 = vpack.c.b16 %v1253, %v1252
      %v1269 = vpack.c.b16 %v1255, %v1254
      %v1270 = vpack.c.b16 %v1257, %v1256
      %v1271 = vpack.c.b16 %v1259, %v1258
      %v1272 = vpack.c.b16 %v1261, %v1260
      %v1273 = vpack.c.b16 %v1263, %v1262
      %v1274 = vpack.c.b16 %v1265, %v1264
      %v1275 = vpack.c.b16 %v1267, %v1266
      %1284 = vmatprep.subr.bf16.mxu0 0
      %1285 = vmatpush1.bf16.msra.mxu0 %v1268
      %1286 = vmatprep.subr.bf16.mxu0 0
      %1287 = vmatpush1.bf16.msra.mxu0 %v1269
      %1288 = vmatprep.subr.bf16.mxu0 0
      %1289 = vmatpush1.bf16.msra.mxu0 %v1270
      %1290 = vmatprep.subr.bf16.mxu0 0
      %1291 = vmatpush1.bf16.msra.mxu0 %v1271
      %1292 = vmatprep.subr.bf16.mxu0 0
      %1293 = vmatpush1.bf16.msra.mxu0 %v1272
      %1294 = vmatprep.subr.bf16.mxu0 0
      %1295 = vmatpush1.bf16.msra.mxu0 %v1273
      %1296 = vmatprep.subr.bf16.mxu0 0
      %1297 = vmatpush1.bf16.msra.mxu0 %v1274
      %1298 = vmatprep.subr.bf16.mxu0 0
      %1299 = vmatpush1.bf16.msra.mxu0 %v1275
      %1300 = vmatprep.subr.bf16.mxu0 0
      %1301 = vmatpush1.bf16.msra.mxu0 0
      %1302 = vmatprep.subr.bf16.mxu0 0
      %1303 = vmatpush1.bf16.msra.mxu0 0
      %1304 = vmatprep.subr.bf16.mxu0 0
      %1305 = vmatpush1.bf16.msra.mxu0 0
      %1306 = vmatprep.subr.bf16.mxu0 0
      %1307 = vmatpush1.bf16.msra.mxu0 0
      %1308 = vmatprep.subr.bf16.mxu0 0
      %1309 = vmatpush1.bf16.msra.mxu0 0
      %1310 = vmatprep.subr.bf16.mxu0 0
      %1311 = vmatpush1.bf16.msra.mxu0 0
      %1312 = vmatprep.subr.bf16.mxu0 0
      %1313 = vmatpush1.bf16.msra.mxu0 0
      %1314 = vmatprep.subr.bf16.mxu0 0
      %1315 = vmatpush1.bf16.msra.mxu0 0
      %1316 = vmatprep.mubr.bf16.mxu0 0
      %1317 = vmatmul.mubr.bf16.gmra.mrb[0].mxu0 %v356
      %v1318 = vpop.f32.mrb[0].mxu0
      %v1319 = vadd.f32 0.0, %v1318
      %v1320 = vpop.f32.mrb[0].mxu0
      %v1321 = vpop.f32.mrb[0].mxu0
      %v1322 = vpop.f32.mrb[0].mxu0
      %1323 = vdwg.mxu0
      %v1325 = vrot.slane %v1319, 2
      %v1327 = vadd.f32 %v1218, %v1325
      %1328 = vst [vmem:[%s344] sm:$0xf] %v1327
      %vm1329 = vcmask 1043456
      %v1330 = vsel %vm1329, %v1327, 0.0
      %v1331 = vrot.slane %v1330, 4
      %v1332 = vadd.f32 %v1330, %v1331
      %v1333 = vrot.slane %v1332, 2
      %v1334 = vadd.f32 %v1332, %v1333
      %v1335 = vrot.slane %v1334, 1
      %v1336 = vadd.f32 %v1334, %v1335
      %1337 = vst [vmem:[%s352] sm:$0x1] %v1336
      %v1338 = vmul.f32 %v1327, %v1327
      %v1339 = vsel %vm1329, %v1338, 0.0
      %v1340 = vrot.slane %v1339, 4
      %v1341 = vadd.f32 %v1339, %v1340
      %v1342 = vrot.slane %v1341, 2
      %v1343 = vadd.f32 %v1341, %v1342
      %v1344 = vrot.slane %v1343, 1
      %v1345 = vadd.f32 %v1343, %v1344
      %1346 = vst [vmem:[%s352 + $0x1] sm:$0x1] %v1345
      %p1347 = scmp.lt.s32.totalorder %s21, 1
      %s1348 = scalar_select %p1347, %s21, 1
      %p1349 = scmp.lt.s32.totalorder %s22, 3
      %s1350 = scalar_select %p1349, %s22, 3
      %s1351 = smul.addr %s1348, 4
      %s1352 = sadd.s32 %s1350, %s1351
      %s1353 = smul.addr %s1352, 4
      %s1354 = scalar_lea.vmem %s4, %s1353
      %p1355 = scmp.lt.s32.totalorder %s21, 1
      %s1356 = scalar_select %p1355, %s21, 1
      %p1357 = scmp.lt.s32.totalorder %s22, 3
      %s1358 = scalar_select %p1357, %s22, 3
      %s1359 = smul.addr %s1356, 4
      %s1360 = sadd.s32 %s1358, %s1359
      %s1361 = smul.addr %s1360, 2
      %s1362 = scalar_lea.vmem %s5, %s1361
      // Predicated region
      $region37: #{discriminator_forward.11} parent=35 // pred_check
        %p1363 = pneg %p158
      $region38: #{discriminator_forward.11} parent=35 // pred_check_branch
        %1365 = sbr.rel (%p1363) target = $region40
      $region39: #{discriminator_forward.11} parent=35 // pred_region
        _
      $region40: #{discriminator_forward.11} parent=35 // pred_fallthru
        _
      // Predicated region
      $region41: #{discriminator_forward.11} parent=35 // pred_check
        %p1366 = pneg %p186
      $region42: #{discriminator_forward.11} parent=35 // pred_check_branch
        %1368 = sbr.rel (%p1366) target = $region44
      $region43: #{discriminator_forward.11} parent=35 // pred_region
        _
      $region44: #{discriminator_forward.11} parent=35 // pred_fallthru
        _
    $region36: #{discriminator_forward.11} parent=5 // pred_fallthru
      _
    %p1369 = scmp.le.s32.totalorder 2, %s12
    // Predicated region
    $region45: #{discriminator_forward.11} parent=5 // pred_check
      %p1370 = pneg %p1369
    $region46: #{discriminator_forward.11} parent=5 // pred_check_branch
      %1372 = sbr.rel (%p1370) target = $region48
    $region47: #{discriminator_forward.11} parent=5 // pred_region
      %s1373 = ssub.s32 %s12, 2
      // Predicated region
      $region49: #{discriminator_forward.11} parent=47 // pred_check
        %p1374 = pneg %p164
      $region50: #{discriminator_forward.11} parent=47 // pred_check_branch
        %1376 = sbr.rel (%p1374) target = $region52
      $region51: #{discriminator_forward.11} parent=47 // pred_region
        %p1377 = scmp.lt.s32.totalorder %s23, 1
        %s1378 = scalar_select %p1377, %s23, 1
        %p1379 = scmp.lt.s32.totalorder %s24, 3
        %s1380 = scalar_select %p1379, %s24, 3
        %s1381 = smul.addr %s1378, 4
        %s1382 = sadd.s32 %s1380, %s1381
        %s1383 = smul.addr %s1382, 4
        %s1384 = scalar_lea.vmem %s4, %s1383
      $region52: #{discriminator_forward.11} parent=47 // pred_fallthru
        _
      // Predicated region
      $region53: #{discriminator_forward.11} parent=47 // pred_check
        %p1385 = pneg %p192
      $region54: #{discriminator_forward.11} parent=47 // pred_check_branch
        %1387 = sbr.rel (%p1385) target = $region56
      $region55: #{discriminator_forward.11} parent=47 // pred_region
        %p1388 = scmp.lt.s32.totalorder %s23, 1
        %s1389 = scalar_select %p1388, %s23, 1
        %p1390 = scmp.lt.s32.totalorder %s24, 3
        %s1391 = scalar_select %p1390, %s24, 3
        %s1392 = smul.addr %s1389, 4
        %s1393 = sadd.s32 %s1391, %s1392
        %s1394 = smul.addr %s1393, 2
        %s1395 = scalar_lea.vmem %s5, %s1394
      $region56: #{discriminator_forward.11} parent=47 // pred_fallthru
        _
    $region48: #{discriminator_forward.11} parent=5 // pred_fallthru
      _
  $region6: #{discriminator_forward.11} parent=0 // loop_footer
    %s16 = sadd.s32 1, %s12
  $region7: #{discriminator_forward.11} parent=0 // loop_footer_branch
    %11 = sbr.rel target = $region3
  $region8: #{discriminator_forward.11} parent=0 // loop_exit
    _

// kernel: discriminator_forward.13
$region0: #{discriminator_forward.13}
  #allocation0 [shape = 'u32[]', space=smem, size = 0x4, offset = 0x4, fixed_abs, tag = 'smem constant byte address 0x4 - core index']
  #allocation1 [shape = 'u32[144,128]{1,0:T(1,128)}', space=vmem, size = 0x12000, scoped, tag = 'internal scratch']
  %s0 = inlined_call_operand.vmem [shape: bf16[2,4,4,128], index: 0, kind: input, shape index: {}, may-alias: {0,1,2}]
  %s1 = inlined_call_operand.vmem [shape: bf16[2,4,4,128], index: 1, kind: input, shape index: {}, may-alias: {0,1,2}]
  %s2 = inlined_call_operand.vmem [shape: bf16[2,4,4,128], index: 2, kind: input, shape index: {}, may-alias: {0,1,2}]
  %s3 = inlined_call_operand.vmem [shape: bf16[9,128,128], index: 3, kind: input, shape index: {}]
  %s4 = inlined_call_operand.vmem [shape: f32[1,128], index: 4, kind: input, shape index: {}]
  %s5 = inlined_call_operand.vmem [shape: f32[2,2,2,128], index: 5, kind: output, shape index: {}]
  %s6 = sld [smem:[#allocation0]]
  $region53: #{discriminator_forward.13} parent=0
    _
  %s8 = ssub.s32 1, %s6
  %s9 = scalar_select 0, %s8, %s6
  loop: start=0, step=1, limit=6
  $region2: #{discriminator_forward.13} parent=0 // loop_pre_header
    _
  $region3: #{discriminator_forward.13} parent=0 // loop_header
    %s11 = sphi 0, %s15
    %p12 = scmp.ge.s32.totalorder %s11, 6
    %s18 = sphi 0, %s30
    %s19 = sphi 0, %s26
    %s20 = sphi 0, %s18
    %s21 = sphi 0, %s19
    %s22 = sphi 0, %s20
    %s23 = sphi 0, %s21
    %s35 = sphi 0, %s37
    %s38 = sphi 0, %s35
    %s39 = sphi 0, %s38
    %s55 = sphi 0, %s39
    %s65 = sphi 0, %s67
    %s68 = sphi 0, %s65
    %s69 = sphi 0, %s68
    %s85 = sphi 0, %s69
    %s95 = sphi 0, %s97
    %s98 = sphi 0, %s95
    %s99 = sphi 0, %s98
    %s115 = sphi 0, %s99
    %s119 = sphi 0, %s119
    %s121 = sphi 0, %s119
    %s122 = sphi 0, %s121
    %s136 = sphi 0, %s122
    %s140 = sphi 0, %s140
    %s142 = sphi 0, %s140
    %s143 = sphi 0, %s142
    %s157 = sphi 0, %s143
    %s165 = sphi 0, %s167
    %s168 = sphi 0, %s165
    %s169 = sphi 0, %s168
    %s185 = sphi 0, %s169
  $region4: #{discriminator_forward.13} parent=0 // loop_header_branch
    %14 = sbr.rel (%p12) target = $region8
  $region5: #{discriminator_forward.13} parent=0 // loop_body
    %s16 = ssub.s32 %s11, 1
    %s17 = ssub.s32 %s11, 2
    %s24 = sadd.s32 1, %s19
    %p25 = scmp.ge.s32.totalorder %s24, 2
    %s26 = scalar_select %p25, 0, %s24
    %s27 = sadd.s32 1, %s18
    %s28 = scalar_select %p25, %s27, %s18
    %p29 = scmp.ge.s32.totalorder %s28, 2
    %s30 = scalar_select %p29, 0, %s28
    %s31 = ssub.s32 %s18, %s30
    %s32 = ssub.s32 %s19, %s26
    %s33 = sor.u32 %s31, %s32
    %p34 = scmp.eq.s32.totalorder %s33, 0
    %s36 = sadd.s32 %s35, 1
    %s37 = scalar_select %p34, %s35, %s36
    %p40 = pneg %p34
    %p41 = scmp.eq.s32.totalorder %s11, 3
    %p42 = por %p40, %p41
    %p43 = scmp.ne.s32.totalorder %s35, %s38
    %p44 = scmp.eq.s32.totalorder %s11, 0
    %p45 = por %p43, %p44
    %p46 = scmp.ne.s32.totalorder %s35, %s38
    %p47 = scmp.eq.s32.totalorder %s16, 3
    %p48 = por %p46, %p47
    %p49 = scmp.ne.s32.totalorder %s38, %s39
    %p50 = scmp.eq.s32.totalorder %s16, 0
    %p51 = por %p49, %p50
    %p52 = scmp.ne.s32.totalorder %s38, %s39
    %p53 = scmp.eq.s32.totalorder %s17, 3
    %p54 = por %p52, %p53
    %p56 = scmp.ne.s32.totalorder %s39, %s55
    %p57 = scmp.eq.s32.totalorder %s17, 0
    %p58 = por %p56, %p57
    %s59 = sadd.s32 %s19, 1
    %s60 = sadd.s32 %s26, 1
    %s61 = ssub.s32 %s18, %s30
    %s62 = ssub.s32 %s59, %s60
    %s63 = sor.u32 %s61, %s62
    %p64 = scmp.eq.s32.totalorder %s63, 0
    %s66 = sadd.s32 %s65, 1
    %s67 = scalar_select %p64, %s65, %s66
    %p70 = pneg %p64
    %p71 = scmp.eq.s32.totalorder %s11, 3
    %p72 = por %p70, %p71
    %p73 = scmp.ne.s32.totalorder %s65, %s68
    %p74 = scmp.eq.s32.totalorder %s11, 0
    %p75 = por %p73, %p74
    %p76 = scmp.ne.s32.totalorder %s65, %s68
    %p77 = scmp.eq.s32.totalorder %s16, 3
    %p78 = por %p76, %p77
    %p79 = scmp.ne.s32.totalorder %s68, %s69
    %p80 = scmp.eq.s32.totalorder %s16, 0
    %p81 = por %p79, %p80
    %p82 = scmp.ne.s32.totalorder %s68, %s69
    %p83 = scmp.eq.s32.totalorder %s17, 3
    %p84 = por %p82, %p83
    %p86 = scmp.ne.s32.totalorder %s69, %s85
    %p87 = scmp.eq.s32.totalorder %s17, 0
    %p88 = por %p86, %p87
    %s89 = sadd.s32 %s19, 2
    %s90 = sadd.s32 %s26, 2
    %s91 = ssub.s32 %s18, %s30
    %s92 = ssub.s32 %s89, %s90
    %s93 = sor.u32 %s91, %s92
    %p94 = scmp.eq.s32.totalorder %s93, 0
    %s96 = sadd.s32 %s95, 1
    %s97 = scalar_select %p94, %s95, %s96
    %p100 = pneg %p94
    %p101 = scmp.eq.s32.totalorder %s11, 3
    %p102 = por %p100, %p101
    %p103 = scmp.ne.s32.totalorder %s95, %s98
    %p104 = scmp.eq.s32.totalorder %s11, 0
    %p105 = por %p103, %p104
    %p106 = scmp.ne.s32.totalorder %s95, %s98
    %p107 = scmp.eq.s32.totalorder %s16, 3
    %p108 = por %p106, %p107
    %p109 = scmp.ne.s32.totalorder %s98, %s99
    %p110 = scmp.eq.s32.totalorder %s16, 0
    %p111 = por %p109, %p110
    %p112 = scmp.ne.s32.totalorder %s98, %s99
    %p113 = scmp.eq.s32.totalorder %s17, 3
    %p114 = por %p112, %p113
    %p116 = scmp.ne.s32.totalorder %s99, %s115
    %p117 = scmp.eq.s32.totalorder %s17, 0
    %p118 = por %p116, %p117
    %s120 = sadd.s32 %s119, 1
    %p123 = scmp.eq.s32.totalorder %s11, 3
    %p124 = scmp.ne.s32.totalorder %s119, %s121
    %p125 = scmp.eq.s32.totalorder %s11, 0
    %p126 = por %p124, %p125
    %p127 = scmp.ne.s32.totalorder %s119, %s121
    %p128 = scmp.eq.s32.totalorder %s16, 3
    %p129 = por %p127, %p128
    %p130 = scmp.ne.s32.totalorder %s121, %s122
    %p131 = scmp.eq.s32.totalorder %s16, 0
    %p132 = por %p130, %p131
    %p133 = scmp.ne.s32.totalorder %s121, %s122
    %p134 = scmp.eq.s32.totalorder %s17, 3
    %p135 = por %p133, %p134
    %p137 = scmp.ne.s32.totalorder %s122, %s136
    %p138 = scmp.eq.s32.totalorder %s17, 0
    %p139 = por %p137, %p138
    %s141 = sadd.s32 %s140, 1
    %p144 = scmp.eq.s32.totalorder %s11, 3
    %p145 = scmp.ne.s32.totalorder %s140, %s142
    %p146 = scmp.eq.s32.totalorder %s11, 0
    %p147 = por %p145, %p146
    %p148 = scmp.ne.s32.totalorder %s140, %s142
    %p149 = scmp.eq.s32.totalorder %s16, 3
    %p150 = por %p148, %p149
    %p151 = scmp.ne.s32.totalorder %s142, %s143
    %p152 = scmp.eq.s32.totalorder %s16, 0
    %p153 = por %p151, %p152
    %p154 = scmp.ne.s32.totalorder %s142, %s143
    %p155 = scmp.eq.s32.totalorder %s17, 3
    %p156 = por %p154, %p155
    %p158 = scmp.ne.s32.totalorder %s143, %s157
    %p159 = scmp.eq.s32.totalorder %s17, 0
    %p160 = por %p158, %p159
    %s161 = ssub.s32 %s18, %s30
    %s162 = ssub.s32 %s19, %s26
    %s163 = sor.u32 %s161, %s162
    %p164 = scmp.eq.s32.totalorder %s163, 0
    %s166 = sadd.s32 %s165, 1
    %s167 = scalar_select %p164, %s165, %s166
    %p170 = pneg %p164
    %p171 = scmp.eq.s32.totalorder %s11, 3
    %p172 = por %p170, %p171
    %p173 = scmp.ne.s32.totalorder %s165, %s168
    %p174 = scmp.eq.s32.totalorder %s11, 0
    %p175 = por %p173, %p174
    %p176 = scmp.ne.s32.totalorder %s165, %s168
    %p177 = scmp.eq.s32.totalorder %s16, 3
    %p178 = por %p176, %p177
    %p179 = scmp.ne.s32.totalorder %s168, %s169
    %p180 = scmp.eq.s32.totalorder %s16, 0
    %p181 = por %p179, %p180
    %p182 = scmp.ne.s32.totalorder %s168, %s169
    %p183 = scmp.eq.s32.totalorder %s17, 3
    %p184 = por %p182, %p183
    %p186 = scmp.ne.s32.totalorder %s169, %s185
    %p187 = scmp.eq.s32.totalorder %s17, 0
    %p188 = por %p186, %p187
    %p189 = scmp.le.s32.totalorder 1, %s11
    %p190 = scmp.lt.s32.totalorder %s11, 5
    %p191 = pnand %p189, %p190
    %p192 = pneg %p191
    // Predicated region
    $region9: #{discriminator_forward.13} parent=5 // pred_check
      _
    $region10: #{discriminator_forward.13} parent=5 // pred_check_branch
      %194 = sbr.rel (%p191) target = $region12
    $region11: #{discriminator_forward.13} parent=5 // pred_region
      %s195 = ssub.s32 %s11, 1
      // Predicated region
      $region13: #{discriminator_forward.13} parent=11 // pred_check
        %p196 = pneg %p132
      $region14: #{discriminator_forward.13} parent=11 // pred_check_branch
        %198 = sbr.rel (%p196) target = $region16
      $region15: #{discriminator_forward.13} parent=11 // pred_region
        _
      $region16: #{discriminator_forward.13} parent=11 // pred_fallthru
        _
      // Predicated region
      $region17: #{discriminator_forward.13} parent=11 // pred_check
        %p199 = pneg %p153
      $region18: #{discriminator_forward.13} parent=11 // pred_check_branch
        %201 = sbr.rel (%p199) target = $region20
      $region19: #{discriminator_forward.13} parent=11 // pred_region
        _
      $region20: #{discriminator_forward.13} parent=11 // pred_fallthru
        _
    $region12: #{discriminator_forward.13} parent=5 // pred_fallthru
      _
    %p202 = scmp.lt.s32.totalorder %s11, 4
    // Predicated region
    $region21: #{discriminator_forward.13} parent=5 // pred_check
      %p203 = pneg %p202
    $region22: #{discriminator_forward.13} parent=5 // pred_check_branch
      %205 = sbr.rel (%p203) target = $region24
    $region23: #{discriminator_forward.13} parent=5 // pred_region
      // Predicated region
      $region25: #{discriminator_forward.13} parent=23 // pred_check
        %p206 = pneg %p45
      $region26: #{discriminator_forward.13} parent=23 // pred_check_branch
        %208 = sbr.rel (%p206) target = $region28
      $region27: #{discriminator_forward.13} parent=23 // pred_region
        %p209 = scmp.lt.s32.totalorder %s18, 1
        %s210 = scalar_select %p209, %s18, 1
        %p211 = scmp.lt.s32.totalorder %s19, 3
        %s212 = scalar_select %p211, %s19, 3
        %s213 = smul.addr %s210, 4
        %s214 = sadd.s32 %s212, %s213
        %s215 = smul.addr %s214, 2
        %s216 = scalar_lea.vmem %s0, %s215
      $region28: #{discriminator_forward.13} parent=23 // pred_fallthru
        _
      // Predicated region
      $region29: #{discriminator_forward.13} parent=23 // pred_check
        %p217 = pneg %p75
      $region30: #{discriminator_forward.13} parent=23 // pred_check_branch
        %219 = sbr.rel (%p217) target = $region32
      $region31: #{discriminator_forward.13} parent=23 // pred_region
        %s220 = sadd.s32 %s19, 1
        %p221 = scmp.lt.s32.totalorder %s18, 1
        %s222 = scalar_select %p221, %s18, 1
        %p223 = scmp.lt.s32.totalorder %s220, 3
        %s224 = scalar_select %p223, %s220, 3
        %s225 = smul.addr %s222, 4
        %s226 = sadd.s32 %s224, %s225
        %s227 = smul.addr %s226, 2
        %s228 = scalar_lea.vmem %s1, %s227
        %s229 = sadd.s32 %s19, 1
      $region32: #{discriminator_forward.13} parent=23 // pred_fallthru
        _
      // Predicated region
      $region33: #{discriminator_forward.13} parent=23 // pred_check
        %p230 = pneg %p105
      $region34: #{discriminator_forward.13} parent=23 // pred_check_branch
        %232 = sbr.rel (%p230) target = $region36
      $region35: #{discriminator_forward.13} parent=23 // pred_region
        %s233 = sadd.s32 %s19, 2
        %p234 = scmp.lt.s32.totalorder %s18, 1
        %s235 = scalar_select %p234, %s18, 1
        %p236 = scmp.lt.s32.totalorder %s233, 3
        %s237 = scalar_select %p236, %s233, 3
        %s238 = smul.addr %s235, 4
        %s239 = sadd.s32 %s237, %s238
        %s240 = smul.addr %s239, 2
        %s241 = scalar_lea.vmem %s2, %s240
        %s242 = sadd.s32 %s19, 2
      $region36: #{discriminator_forward.13} parent=23 // pred_fallthru
        _
    $region24: #{discriminator_forward.13} parent=5 // pred_fallthru
      _
    %p243 = scmp.le.s32.totalorder 1, %s11
    %p244 = scmp.lt.s32.totalorder %s11, 5
    %p245 = pnand %p243, %p244
    %p246 = pneg %p245
    // Predicated region
    $region37: #{discriminator_forward.13} parent=5 // pred_check
      _
    $region38: #{discriminator_forward.13} parent=5 // pred_check_branch
      %248 = sbr.rel (%p245) target = $region40
    $region39: #{discriminator_forward.13} parent=5 // pred_region
      %s249 = ssub.s32 %s11, 1
      %p250 = scmp.lt.s32.totalorder %s20, 1
      %s251 = scalar_select %p250, %s20, 1
      %p252 = scmp.lt.s32.totalorder %s21, 3
      %s253 = scalar_select %p252, %s21, 3
      %s254 = smul.addr %s251, 4
      %s255 = sadd.s32 %s253, %s254
      %s256 = smul.addr %s255, 2
      %s257 = scalar_lea.vmem %s0, %s256
      %p258 = pneg %p51
      %p259 = pneg %p48
      %s260 = sadd.s32 %s21, 1
      %p261 = scmp.lt.s32.totalorder %s20, 1
      %s262 = scalar_select %p261, %s20, 1
      %p263 = scmp.lt.s32.totalorder %s260, 3
      %s264 = scalar_select %p263, %s260, 3
      %s265 = smul.addr %s262, 4
      %s266 = sadd.s32 %s264, %s265
      %s267 = smul.addr %s266, 2
      %s268 = scalar_lea.vmem %s1, %s267
      %p269 = pneg %p81
      %p270 = pneg %p78
      %s271 = sadd.s32 %s21, 2
      %p272 = scmp.lt.s32.totalorder %s20, 1
      %s273 = scalar_select %p272, %s20, 1
      %p274 = scmp.lt.s32.totalorder %s271, 3
      %s275 = scalar_select %p274, %s271, 3
      %s276 = smul.addr %s273, 4
      %s277 = sadd.s32 %s275, %s276
      %s278 = smul.addr %s277, 2
      %s279 = scalar_lea.vmem %s2, %s278
      %p280 = pneg %p111
      %p281 = pneg %p108
      %p282 = pneg %p132
      %p283 = pneg %p129
      %p284 = pneg %p153
      %p285 = pneg %p150
      %p286 = pneg %p181
      %p287 = pneg %p178
      %p288 = scmp.lt.s32.totalorder %s20, 1
      %s289 = scalar_select %p288, %s20, 1
      %p290 = scmp.lt.s32.totalorder %s21, 1
      %s291 = scalar_select %p290, %s21, 1
      %s292 = smul.addr %s289, 2
      %s293 = sadd.s32 %s291, %s292
      %s294 = smul.addr %s293, 2
      %s295 = scalar_lea.vmem %s5, %s294
      %p296 = scmp.lt.s32.totalorder %s20, 1
      %s297 = scalar_select %p296, %s20, 1
      %p298 = scmp.lt.s32.totalorder %s21, 3
      %s299 = scalar_select %p298, %s21, 3
      %s300 = smul.addr %s297, 4
      %s301 = sadd.s32 %s299, %s300
      %s302 = smul.addr %s301, 2
      %s303 = scalar_lea.vmem %s0, %s302
      %s304 = sadd.s32 %s21, 1
      %p305 = scmp.lt.s32.totalorder %s20, 1
      %s306 = scalar_select %p305, %s20, 1
      %p307 = scmp.lt.s32.totalorder %s304, 3
      %s308 = scalar_select %p307, %s304, 3
      %s309 = smul.addr %s306, 4
      %s310 = sadd.s32 %s308, %s309
      %s311 = smul.addr %s310, 2
      %s312 = scalar_lea.vmem %s1, %s311
      %s313 = sadd.s32 %s21, 1
      %s314 = sadd.s32 %s21, 2
      %p315 = scmp.lt.s32.totalorder %s20, 1
      %s316 = scalar_select %p315, %s20, 1
      %p317 = scmp.lt.s32.totalorder %s314, 3
      %s318 = scalar_select %p317, %s314, 3
      %s319 = smul.addr %s316, 4
      %s320 = sadd.s32 %s318, %s319
      %s321 = smul.addr %s320, 2
      %s322 = scalar_lea.vmem %s2, %s321
      %s323 = sadd.s32 %s21, 2
      %p324 = scmp.lt.s32.totalorder %s20, 1
      %s325 = scalar_select %p324, %s20, 1
      %p326 = scmp.lt.s32.totalorder %s21, 1
      %s327 = scalar_select %p326, %s21, 1
      %s328 = smul.addr %s325, 2
      %s329 = sadd.s32 %s327, %s328
      %s330 = smul.addr %s329, 2
      %s331 = scalar_lea.vmem %s5, %s330
      %v333 = vld [vmem:[%s303] sm:$0x3]
      %v334 = vld [vmem:[%s312] sm:$0x3]
      %v335 = vld [vmem:[%s322] sm:$0x3]
      %v336 = vld [vmem:[%s3] sm:$0xf]
      %v337 = vld [vmem:[%s3 + $0x4] sm:$0xf]
      %v338 = vld [vmem:[%s3 + $0x8] sm:$0xf]
      %v339 = vld [vmem:[%s3 + $0xc] sm:$0xf]
      %v340 = vld [vmem:[%s3 + $0x10] sm:$0xf]
      %v341 = vld [vmem:[%s3 + $0x14] sm:$0xf]
      %v342 = vld [vmem:[%s3 + $0x18] sm:$0xf]
      %v343 = vld [vmem:[%s3 + $0x1c] sm:$0xf]
      %v344 = vld [vmem:[%s3 + $0x20] sm:$0xf]
      %v345 = vld [vmem:[%s3 + $0x24] sm:$0xf]
      %v346 = vld [vmem:[%s3 + $0x28] sm:$0xf]
      %v347 = vld [vmem:[%s3 + $0x2c] sm:$0xf]
      %v348 = vld [vmem:[%s3 + $0x30] sm:$0xf]
      %v349 = vld [vmem:[%s3 + $0x34] sm:$0xf]
      %v350 = vld [vmem:[%s3 + $0x38] sm:$0xf]
      %v351 = vld [vmem:[%s3 + $0x3c] sm:$0xf]
      %v368 = vunpack.c.l.b16 %v336
      %v369 = vunpack.c.l.b16 %v337
      %v370 = vunpack.c.l.b16 %v338
      %v371 = vunpack.c.l.b16 %v339
      %v372 = vunpack.c.l.b16 %v340
      %v373 = vunpack.c.l.b16 %v341
      %v374 = vunpack.c.l.b16 %v342
      %v375 = vunpack.c.l.b16 %v343
      %v376 = vunpack.c.l.b16 %v344
      %v377 = vunpack.c.l.b16 %v345
      %v378 = vunpack.c.l.b16 %v346
      %v379 = vunpack.c.l.b16 %v347
      %v380 = vunpack.c.l.b16 %v348
      %v381 = vunpack.c.l.b16 %v349
      %v382 = vunpack.c.l.b16 %v350
      %v383 = vunpack.c.l.b16 %v351
      %v384 = vpack.c.b16 %v369, %v368
      %v385 = vpack.c.b16 %v371, %v370
      %v386 = vpack.c.b16 %v373, %v372
      %v387 = vpack.c.b16 %v375, %v374
      %v388 = vpack.c.b16 %v377, %v376
      %v389 = vpack.c.b16 %v379, %v378
      %v390 = vpack.c.b16 %v381, %v380
      %v391 = vpack.c.b16 %v383, %v382
      %400 = vmatprep.subr.bf16.mxu0 0
      %401 = vmatpush1.bf16.msra.mxu0 %v384
      %402 = vmatprep.subr.bf16.mxu0 0
      %403 = vmatpush1.bf16.msra.mxu0 %v385
      %404 = vmatprep.subr.bf16.mxu0 0
      %405 = vmatpush1.bf16.msra.mxu0 %v386
      %406 = vmatprep.subr.bf16.mxu0 0
      %407 = vmatpush1.bf16.msra.mxu0 %v387
      %408 = vmatprep.subr.bf16.mxu0 0
      %409 = vmatpush1.bf16.msra.mxu0 %v388
      %410 = vmatprep.subr.bf16.mxu0 0
      %411 = vmatpush1.bf16.msra.mxu0 %v389
      %412 = vmatprep.subr.bf16.mxu0 0
      %413 = vmatpush1.bf16.msra.mxu0 %v390
      %414 = vmatprep.subr.bf16.mxu0 0
      %415 = vmatpush1.bf16.msra.mxu0 %v391
      %416 = vmatprep.subr.bf16.mxu0 0
      %417 = vmatpush1.bf16.msra.mxu0 0
      %418 = vmatprep.subr.bf16.mxu0 0
      %419 = vmatpush1.bf16.msra.mxu0 0
      %420 = vmatprep.subr.bf16.mxu0 0
      %421 = vmatpush1.bf16.msra.mxu0 0
      %422 = vmatprep.subr.bf16.mxu0 0
      %423 = vmatpush1.bf16.msra.mxu0 0
      %424 = vmatprep.subr.bf16.mxu0 0
      %425 = vmatpush1.bf16.msra.mxu0 0
      %426 = vmatprep.subr.bf16.mxu0 0
      %427 = vmatpush1.bf16.msra.mxu0 0
      %428 = vmatprep.subr.bf16.mxu0 0
      %429 = vmatpush1.bf16.msra.mxu0 0
      %430 = vmatprep.subr.bf16.mxu0 0
      %431 = vmatpush1.bf16.msra.mxu0 0
      %432 = vmatprep.mubr.bf16.mxu0 0
      %433 = vmatmul.mubr.bf16.gmra.mrb[0].mxu0 %v333
      %v434 = vpop.f32.mrb[0].mxu0
      %v435 = vadd.f32 0.0, %v434
      %v436 = vpop.f32.mrb[0].mxu0
      %v437 = vpop.f32.mrb[0].mxu0
      %v438 = vpop.f32.mrb[0].mxu0
      %439 = vdwg.mxu0
      %v440 = vadd.f32 %v435, 0.0
      %s441 = scalar_lea.vmem %s3, 64
      %v442 = vld [vmem:[%s441] sm:$0xf]
      %v443 = vld [vmem:[%s441 + $0x4] sm:$0xf]
      %v444 = vld [vmem:[%s441 + $0x8] sm:$0xf]
      %v445 = vld [vmem:[%s441 + $0xc] sm:$0xf]
      %v446 = vld [vmem:[%s441 + $0x10] sm:$0xf]
      %v447 = vld [vmem:[%s441 + $0x14] sm:$0xf]
      %v448 = vld [vmem:[%s441 + $0x18] sm:$0xf]
      %v449 = vld [vmem:[%s441 + $0x1c] sm:$0xf]
      %v450 = vld [vmem:[%s441 + $0x20] sm:$0xf]
      %v451 = vld [vmem:[%s441 + $0x24] sm:$0xf]
      %v452 = vld [vmem:[%s441 + $0x28] sm:$0xf]
      %v453 = vld [vmem:[%s441 + $0x2c] sm:$0xf]
      %v454 = vld [vmem:[%s441 + $0x30] sm:$0xf]
      %v455 = vld [vmem:[%s441 + $0x34] sm:$0xf]
      %v456 = vld [vmem:[%s441 + $0x38] sm:$0xf]
      %v457 = vld [vmem:[%s441 + $0x3c] sm:$0xf]
      %v474 = vunpack.c.l.b16 %v442
      %v475 = vunpack.c.l.b16 %v443
      %v476 = vunpack.c.l.b16 %v444
      %v477 = vunpack.c.l.b16 %v445
      %v478 = vunpack.c.l.b16 %v446
      %v479 = vunpack.c.l.b16 %v447
      %v480 = vunpack.c.l.b16 %v448
      %v481 = vunpack.c.l.b16 %v449
      %v482 = vunpack.c.l.b16 %v450
      %v483 = vunpack.c.l.b16 %v451
      %v484 = vunpack.c.l.b16 %v452
      %v485 = vunpack.c.l.b16 %v453
      %v486 = vunpack.c.l.b16 %v454
      %v487 = vunpack.c.l.b16 %v455
      %v488 = vunpack.c.l.b16 %v456
      %v489 = vunpack.c.l.b16 %v457
      %v490 = vpack.c.b16 %v475, %v474
      %v491 = vpack.c.b16 %v477, %v476
      %v492 = vpack.c.b16 %v479, %v478
      %v493 = vpack.c.b16 %v481, %v480
      %v494 = vpack.c.b16 %v483, %v482
      %v495 = vpack.c.b16 %v485, %v484
      %v496 = vpack.c.b16 %v487, %v486
      %v497 = vpack.c.b16 %v489, %v488
      %506 = vmatprep.subr.bf16.mxu0 0
      %507 = vmatpush1.bf16.msra.mxu0 %v490
      %508 = vmatprep.subr.bf16.mxu0 0
      %509 = vmatpush1.bf16.msra.mxu0 %v491
      %510 = vmatprep.subr.bf16.mxu0 0
      %511 = vmatpush1.bf16.msra.mxu0 %v492
      %512 = vmatprep.subr.bf16.mxu0 0
      %513 = vmatpush1.bf16.msra.mxu0 %v493
      %514 = vmatprep.subr.bf16.mxu0 0
      %515 = vmatpush1.bf16.msra.mxu0 %v494
      %516 = vmatprep.subr.bf16.mxu0 0
      %517 = vmatpush1.bf16.msra.mxu0 %v495
      %518 = vmatprep.subr.bf16.mxu0 0
      %519 = vmatpush1.bf16.msra.mxu0 %v496
      %520 = vmatprep.subr.bf16.mxu0 0
      %521 = vmatpush1.bf16.msra.mxu0 %v497
      %522 = vmatprep.subr.bf16.mxu0 0
      %523 = vmatpush1.bf16.msra.mxu0 0
      %524 = vmatprep.subr.bf16.mxu0 0
      %525 = vmatpush1.bf16.msra.mxu0 0
      %526 = vmatprep.subr.bf16.mxu0 0
      %527 = vmatpush1.bf16.msra.mxu0 0
      %528 = vmatprep.subr.bf16.mxu0 0
      %529 = vmatpush1.bf16.msra.mxu0 0
      %530 = vmatprep.subr.bf16.mxu0 0
      %531 = vmatpush1.bf16.msra.mxu0 0
      %532 = vmatprep.subr.bf16.mxu0 0
      %533 = vmatpush1.bf16.msra.mxu0 0
      %534 = vmatprep.subr.bf16.mxu0 0
      %535 = vmatpush1.bf16.msra.mxu0 0
      %536 = vmatprep.subr.bf16.mxu0 0
      %537 = vmatpush1.bf16.msra.mxu0 0
      %538 = vmatprep.mubr.bf16.mxu0 0
      %539 = vmatmul.mubr.bf16.gmra.mrb[0].mxu0 %v333
      %v540 = vpop.f32.mrb[0].mxu0
      %v541 = vadd.f32 0.0, %v540
      %v542 = vpop.f32.mrb[0].mxu0
      %v543 = vpop.f32.mrb[0].mxu0
      %v544 = vpop.f32.mrb[0].mxu0
      %545 = vdwg.mxu0
      %v547 = vrot.slane %v541, 1
      %v549 = vadd.f32 %v440, %v547
      %s550 = scalar_lea.vmem %s3, 128
      %v551 = vld [vmem:[%s550] sm:$0xf]
      %v552 = vld [vmem:[%s550 + $0x4] sm:$0xf]
      %v553 = vld [vmem:[%s550 + $0x8] sm:$0xf]
      %v554 = vld [vmem:[%s550 + $0xc] sm:$0xf]
      %v555 = vld [vmem:[%s550 + $0x10] sm:$0xf]
      %v556 = vld [vmem:[%s550 + $0x14] sm:$0xf]
      %v557 = vld [vmem:[%s550 + $0x18] sm:$0xf]
      %v558 = vld [vmem:[%s550 + $0x1c] sm:$0xf]
      %v559 = vld [vmem:[%s550 + $0x20] sm:$0xf]
      %v560 = vld [vmem:[%s550 + $0x24] sm:$0xf]
      %v561 = vld [vmem:[%s550 + $0x28] sm:$0xf]
      %v562 = vld [vmem:[%s550 + $0x2c] sm:$0xf]
      %v563 = vld [vmem:[%s550 + $0x30] sm:$0xf]
      %v564 = vld [vmem:[%s550 + $0x34] sm:$0xf]
      %v565 = vld [vmem:[%s550 + $0x38] sm:$0xf]
      %v566 = vld [vmem:[%s550 + $0x3c] sm:$0xf]
      %v583 = vunpack.c.l.b16 %v551
      %v584 = vunpack.c.l.b16 %v552
      %v585 = vunpack.c.l.b16 %v553
      %v586 = vunpack.c.l.b16 %v554
      %v587 = vunpack.c.l.b16 %v555
      %v588 = vunpack.c.l.b16 %v556
      %v589 = vunpack.c.l.b16 %v557
      %v590 = vunpack.c.l.b16 %v558
      %v591 = vunpack.c.l.b16 %v559
      %v592 = vunpack.c.l.b16 %v560
      %v593 = vunpack.c.l.b16 %v561
      %v594 = vunpack.c.l.b16 %v562
      %v595 = vunpack.c.l.b16 %v563
      %v596 = vunpack.c.l.b16 %v564
      %v597 = vunpack.c.l.b16 %v565
      %v598 = vunpack.c.l.b16 %v566
      %v599 = vpack.c.b16 %v584, %v583
      %v600 = vpack.c.b16 %v586, %v585
      %v601 = vpack.c.b16 %v588, %v587
      %v602 = vpack.c.b16 %v590, %v589
      %v603 = vpack.c.b16 %v592, %v591
      %v604 = vpack.c.b16 %v594, %v593
      %v605 = vpack.c.b16 %v596, %v595
      %v606 = vpack.c.b16 %v598, %v597
      %615 = vmatprep.subr.bf16.mxu0 0
      %616 = vmatpush1.bf16.msra.mxu0 %v599
      %617 = vmatprep.subr.bf16.mxu0 0
      %618 = vmatpush1.bf16.msra.mxu0 %v600
      %619 = vmatprep.subr.bf16.mxu0 0
      %620 = vmatpush1.bf16.msra.mxu0 %v601
      %621 = vmatprep.subr.bf16.mxu0 0
      %622 = vmatpush1.bf16.msra.mxu0 %v602
      %623 = vmatprep.subr.bf16.mxu0 0
      %624 = vmatpush1.bf16.msra.mxu0 %v603
      %625 = vmatprep.subr.bf16.mxu0 0
      %626 = vmatpush1.bf16.msra.mxu0 %v604
      %627 = vmatprep.subr.bf16.mxu0 0
      %628 = vmatpush1.bf16.msra.mxu0 %v605
      %629 = vmatprep.subr.bf16.mxu0 0
      %630 = vmatpush1.bf16.msra.mxu0 %v606
      %631 = vmatprep.subr.bf16.mxu0 0
      %632 = vmatpush1.bf16.msra.mxu0 0
      %633 = vmatprep.subr.bf16.mxu0 0
      %634 = vmatpush1.bf16.msra.mxu0 0
      %635 = vmatprep.subr.bf16.mxu0 0
      %636 = vmatpush1.bf16.msra.mxu0 0
      %637 = vmatprep.subr.bf16.mxu0 0
      %638 = vmatpush1.bf16.msra.mxu0 0
      %639 = vmatprep.subr.bf16.mxu0 0
      %640 = vmatpush1.bf16.msra.mxu0 0
      %641 = vmatprep.subr.bf16.mxu0 0
      %642 = vmatpush1.bf16.msra.mxu0 0
      %643 = vmatprep.subr.bf16.mxu0 0
      %644 = vmatpush1.bf16.msra.mxu0 0
      %645 = vmatprep.subr.bf16.mxu0 0
      %646 = vmatpush1.bf16.msra.mxu0 0
      %647 = vmatprep.mubr.bf16.mxu0 0
      %648 = vmatmul.mubr.bf16.gmra.mrb[0].mxu0 %v333
      %v649 = vpop.f32.mrb[0].mxu0
      %v650 = vadd.f32 0.0, %v649
      %v651 = vpop.f32.mrb[0].mxu0
      %v652 = vpop.f32.mrb[0].mxu0
      %v653 = vpop.f32.mrb[0].mxu0
      %654 = vdwg.mxu0
      %v656 = vrot.slane %v650, 2
      %v658 = vadd.f32 %v549, %v656
      %s659 = scalar_lea.vmem %s3, 192
      %v660 = vld [vmem:[%s659] sm:$0xf]
      %v661 = vld [vmem:[%s659 + $0x4] sm:$0xf]
      %v662 = vld [vmem:[%s659 + $0x8] sm:$0xf]
      %v663 = vld [vmem:[%s659 + $0xc] sm:$0xf]
      %v664 = vld [vmem:[%s659 + $0x10] sm:$0xf]
      %v665 = vld [vmem:[%s659 + $0x14] sm:$0xf]
      %v666 = vld [vmem:[%s659 + $0x18] sm:$0xf]
      %v667 = vld [vmem:[%s659 + $0x1c] sm:$0xf]
      %v668 = vld [vmem:[%s659 + $0x20] sm:$0xf]
      %v669 = vld [vmem:[%s659 + $0x24] sm:$0xf]
      %v670 = vld [vmem:[%s659 + $0x28] sm:$0xf]
      %v671 = vld [vmem:[%s659 + $0x2c] sm:$0xf]
      %v672 = vld [vmem:[%s659 + $0x30] sm:$0xf]
      %v673 = vld [vmem:[%s659 + $0x34] sm:$0xf]
      %v674 = vld [vmem:[%s659 + $0x38] sm:$0xf]
      %v675 = vld [vmem:[%s659 + $0x3c] sm:$0xf]
      %v692 = vunpack.c.l.b16 %v660
      %v693 = vunpack.c.l.b16 %v661
      %v694 = vunpack.c.l.b16 %v662
      %v695 = vunpack.c.l.b16 %v663
      %v696 = vunpack.c.l.b16 %v664
      %v697 = vunpack.c.l.b16 %v665
      %v698 = vunpack.c.l.b16 %v666
      %v699 = vunpack.c.l.b16 %v667
      %v700 = vunpack.c.l.b16 %v668
      %v701 = vunpack.c.l.b16 %v669
      %v702 = vunpack.c.l.b16 %v670
      %v703 = vunpack.c.l.b16 %v671
      %v704 = vunpack.c.l.b16 %v672
      %v705 = vunpack.c.l.b16 %v673
      %v706 = vunpack.c.l.b16 %v674
      %v707 = vunpack.c.l.b16 %v675
      %v708 = vpack.c.b16 %v693, %v692
      %v709 = vpack.c.b16 %v695, %v694
      %v710 = vpack.c.b16 %v697, %v696
      %v711 = vpack.c.b16 %v699, %v698
      %v712 = vpack.c.b16 %v701, %v700
      %v713 = vpack.c.b16 %v703, %v702
      %v714 = vpack.c.b16 %v705, %v704
      %v715 = vpack.c.b16 %v707, %v706
      %724 = vmatprep.subr.bf16.mxu0 0
      %725 = vmatpush1.bf16.msra.mxu0 %v708
      %726 = vmatprep.subr.bf16.mxu0 0
      %727 = vmatpush1.bf16.msra.mxu0 %v709
      %728 = vmatprep.subr.bf16.mxu0 0
      %729 = vmatpush1.bf16.msra.mxu0 %v710
      %730 = vmatprep.subr.bf16.mxu0 0
      %731 = vmatpush1.bf16.msra.mxu0 %v711
      %732 = vmatprep.subr.bf16.mxu0 0
      %733 = vmatpush1.bf16.msra.mxu0 %v712
      %734 = vmatprep.subr.bf16.mxu0 0
      %735 = vmatpush1.bf16.msra.mxu0 %v713
      %736 = vmatprep.subr.bf16.mxu0 0
      %737 = vmatpush1.bf16.msra.mxu0 %v714
      %738 = vmatprep.subr.bf16.mxu0 0
      %739 = vmatpush1.bf16.msra.mxu0 %v715
      %740 = vmatprep.subr.bf16.mxu0 0
      %741 = vmatpush1.bf16.msra.mxu0 0
      %742 = vmatprep.subr.bf16.mxu0 0
      %743 = vmatpush1.bf16.msra.mxu0 0
      %744 = vmatprep.subr.bf16.mxu0 0
      %745 = vmatpush1.bf16.msra.mxu0 0
      %746 = vmatprep.subr.bf16.mxu0 0
      %747 = vmatpush1.bf16.msra.mxu0 0
      %748 = vmatprep.subr.bf16.mxu0 0
      %749 = vmatpush1.bf16.msra.mxu0 0
      %750 = vmatprep.subr.bf16.mxu0 0
      %751 = vmatpush1.bf16.msra.mxu0 0
      %752 = vmatprep.subr.bf16.mxu0 0
      %753 = vmatpush1.bf16.msra.mxu0 0
      %754 = vmatprep.subr.bf16.mxu0 0
      %755 = vmatpush1.bf16.msra.mxu0 0
      %756 = vmatprep.mubr.bf16.mxu0 0
      %757 = vmatmul.mubr.bf16.gmra.mrb[0].mxu0 %v334
      %v758 = vpop.f32.mrb[0].mxu0
      %v759 = vadd.f32 0.0, %v758
      %v760 = vpop.f32.mrb[0].mxu0
      %v761 = vpop.f32.mrb[0].mxu0
      %v762 = vpop.f32.mrb[0].mxu0
      %763 = vdwg.mxu0
      %v764 = vadd.f32 %v658, %v759
      %s765 = scalar_lea.vmem %s3, 256
      %v766 = vld [vmem:[%s765] sm:$0xf]
      %v767 = vld [vmem:[%s765 + $0x4] sm:$0xf]
      %v768 = vld [vmem:[%s765 + $0x8] sm:$0xf]
      %v769 = vld [vmem:[%s765 + $0xc] sm:$0xf]
      %v770 = vld [vmem:[%s765 + $0x10] sm:$0xf]
      %v771 = vld [vmem:[%s765 + $0x14] sm:$0xf]
      %v772 = vld [vmem:[%s765 + $0x18] sm:$0xf]
      %v773 = vld [vmem:[%s765 + $0x1c] sm:$0xf]
      %v774 = vld [vmem:[%s765 + $0x20] sm:$0xf]
      %v775 = vld [vmem:[%s765 + $0x24] sm:$0xf]
      %v776 = vld [vmem:[%s765 + $0x28] sm:$0xf]
      %v777 = vld [vmem:[%s765 + $0x2c] sm:$0xf]
      %v778 = vld [vmem:[%s765 + $0x30] sm:$0xf]
      %v779 = vld [vmem:[%s765 + $0x34] sm:$0xf]
      %v780 = vld [vmem:[%s765 + $0x38] sm:$0xf]
      %v781 = vld [vmem:[%s765 + $0x3c] sm:$0xf]
      %v798 = vunpack.c.l.b16 %v766
      %v799 = vunpack.c.l.b16 %v767
      %v800 = vunpack.c.l.b16 %v768
      %v801 = vunpack.c.l.b16 %v769
      %v802 = vunpack.c.l.b16 %v770
      %v803 = vunpack.c.l.b16 %v771
      %v804 = vunpack.c.l.b16 %v772
      %v805 = vunpack.c.l.b16 %v773
      %v806 = vunpack.c.l.b16 %v774
      %v807 = vunpack.c.l.b16 %v775
      %v808 = vunpack.c.l.b16 %v776
      %v809 = vunpack.c.l.b16 %v777
      %v810 = vunpack.c.l.b16 %v778
      %v811 = vunpack.c.l.b16 %v779
      %v812 = vunpack.c.l.b16 %v780
      %v813 = vunpack.c.l.b16 %v781
      %v814 = vpack.c.b16 %v799, %v798
      %v815 = vpack.c.b16 %v801, %v800
      %v816 = vpack.c.b16 %v803, %v802
      %v817 = vpack.c.b16 %v805, %v804
      %v818 = vpack.c.b16 %v807, %v806
      %v819 = vpack.c.b16 %v809, %v808
      %v820 = vpack.c.b16 %v811, %v810
      %v821 = vpack.c.b16 %v813, %v812
      %830 = vmatprep.subr.bf16.mxu0 0
      %831 = vmatpush1.bf16.msra.mxu0 %v814
      %832 = vmatprep.subr.bf16.mxu0 0
      %833 = vmatpush1.bf16.msra.mxu0 %v815
      %834 = vmatprep.subr.bf16.mxu0 0
      %835 = vmatpush1.bf16.msra.mxu0 %v816
      %836 = vmatprep.subr.bf16.mxu0 0
      %837 = vmatpush1.bf16.msra.mxu0 %v817
      %838 = vmatprep.subr.bf16.mxu0 0
      %839 = vmatpush1.bf16.msra.mxu0 %v818
      %840 = vmatprep.subr.bf16.mxu0 0
      %841 = vmatpush1.bf16.msra.mxu0 %v819
      %842 = vmatprep.subr.bf16.mxu0 0
      %843 = vmatpush1.bf16.msra.mxu0 %v820
      %844 = vmatprep.subr.bf16.mxu0 0
      %845 = vmatpush1.bf16.msra.mxu0 %v821
      %846 = vmatprep.subr.bf16.mxu0 0
      %847 = vmatpush1.bf16.msra.mxu0 0
      %848 = vmatprep.subr.bf16.mxu0 0
      %849 = vmatpush1.bf16.msra.mxu0 0
      %850 = vmatprep.subr.bf16.mxu0 0
      %851 = vmatpush1.bf16.msra.mxu0 0
      %852 = vmatprep.subr.bf16.mxu0 0
      %853 = vmatpush1.bf16.msra.mxu0 0
      %854 = vmatprep.subr.bf16.mxu0 0
      %855 = vmatpush1.bf16.msra.mxu0 0
      %856 = vmatprep.subr.bf16.mxu0 0
      %857 = vmatpush1.bf16.msra.mxu0 0
      %858 = vmatprep.subr.bf16.mxu0 0
      %859 = vmatpush1.bf16.msra.mxu0 0
      %860 = vmatprep.subr.bf16.mxu0 0
      %861 = vmatpush1.bf16.msra.mxu0 0
      %862 = vmatprep.mubr.bf16.mxu0 0
      %863 = vmatmul.mubr.bf16.gmra.mrb[0].mxu0 %v334
      %v864 = vpop.f32.mrb[0].mxu0
      %v865 = vadd.f32 0.0, %v864
      %v866 = vpop.f32.mrb[0].mxu0
      %v867 = vpop.f32.mrb[0].mxu0
      %v868 = vpop.f32.mrb[0].mxu0
      %869 = vdwg.mxu0
      %v871 = vrot.slane %v865, 1
      %v873 = vadd.f32 %v764, %v871
      %s874 = scalar_lea.vmem %s3, 320
      %v875 = vld [vmem:[%s874] sm:$0xf]
      %v876 = vld [vmem:[%s874 + $0x4] sm:$0xf]
      %v877 = vld [vmem:[%s874 + $0x8] sm:$0xf]
      %v878 = vld [vmem:[%s874 + $0xc] sm:$0xf]
      %v879 = vld [vmem:[%s874 + $0x10] sm:$0xf]
      %v880 = vld [vmem:[%s874 + $0x14] sm:$0xf]
      %v881 = vld [vmem:[%s874 + $0x18] sm:$0xf]
      %v882 = vld [vmem:[%s874 + $0x1c] sm:$0xf]
      %v883 = vld [vmem:[%s874 + $0x20] sm:$0xf]
      %v884 = vld [vmem:[%s874 + $0x24] sm:$0xf]
      %v885 = vld [vmem:[%s874 + $0x28] sm:$0xf]
      %v886 = vld [vmem:[%s874 + $0x2c] sm:$0xf]
      %v887 = vld [vmem:[%s874 + $0x30] sm:$0xf]
      %v888 = vld [vmem:[%s874 + $0x34] sm:$0xf]
      %v889 = vld [vmem:[%s874 + $0x38] sm:$0xf]
      %v890 = vld [vmem:[%s874 + $0x3c] sm:$0xf]
      %v907 = vunpack.c.l.b16 %v875
      %v908 = vunpack.c.l.b16 %v876
      %v909 = vunpack.c.l.b16 %v877
      %v910 = vunpack.c.l.b16 %v878
      %v911 = vunpack.c.l.b16 %v879
      %v912 = vunpack.c.l.b16 %v880
      %v913 = vunpack.c.l.b16 %v881
      %v914 = vunpack.c.l.b16 %v882
      %v915 = vunpack.c.l.b16 %v883
      %v916 = vunpack.c.l.b16 %v884
      %v917 = vunpack.c.l.b16 %v885
      %v918 = vunpack.c.l.b16 %v886
      %v919 = vunpack.c.l.b16 %v887
      %v920 = vunpack.c.l.b16 %v888
      %v921 = vunpack.c.l.b16 %v889
      %v922 = vunpack.c.l.b16 %v890
      %v923 = vpack.c.b16 %v908, %v907
      %v924 = vpack.c.b16 %v910, %v909
      %v925 = vpack.c.b16 %v912, %v911
      %v926 = vpack.c.b16 %v914, %v913
      %v927 = vpack.c.b16 %v916, %v915
      %v928 = vpack.c.b16 %v918, %v917
      %v929 = vpack.c.b16 %v920, %v919
      %v930 = vpack.c.b16 %v922, %v921
      %939 = vmatprep.subr.bf16.mxu0 0
      %940 = vmatpush1.bf16.msra.mxu0 %v923
      %941 = vmatprep.subr.bf16.mxu0 0
      %942 = vmatpush1.bf16.msra.mxu0 %v924
      %943 = vmatprep.subr.bf16.mxu0 0
      %944 = vmatpush1.bf16.msra.mxu0 %v925
      %945 = vmatprep.subr.bf16.mxu0 0
      %946 = vmatpush1.bf16.msra.mxu0 %v926
      %947 = vmatprep.subr.bf16.mxu0 0
      %948 = vmatpush1.bf16.msra.mxu0 %v927
      %949 = vmatprep.subr.bf16.mxu0 0
      %950 = vmatpush1.bf16.msra.mxu0 %v928
      %951 = vmatprep.subr.bf16.mxu0 0
      %952 = vmatpush1.bf16.msra.mxu0 %v929
      %953 = vmatprep.subr.bf16.mxu0 0
      %954 = vmatpush1.bf16.msra.mxu0 %v930
      %955 = vmatprep.subr.bf16.mxu0 0
      %956 = vmatpush1.bf16.msra.mxu0 0
      %957 = vmatprep.subr.bf16.mxu0 0
      %958 = vmatpush1.bf16.msra.mxu0 0
      %959 = vmatprep.subr.bf16.mxu0 0
      %960 = vmatpush1.bf16.msra.mxu0 0
      %961 = vmatprep.subr.bf16.mxu0 0
      %962 = vmatpush1.bf16.msra.mxu0 0
      %963 = vmatprep.subr.bf16.mxu0 0
      %964 = vmatpush1.bf16.msra.mxu0 0
      %965 = vmatprep.subr.bf16.mxu0 0
      %966 = vmatpush1.bf16.msra.mxu0 0
      %967 = vmatprep.subr.bf16.mxu0 0
      %968 = vmatpush1.bf16.msra.mxu0 0
      %969 = vmatprep.subr.bf16.mxu0 0
      %970 = vmatpush1.bf16.msra.mxu0 0
      %971 = vmatprep.mubr.bf16.mxu0 0
      %972 = vmatmul.mubr.bf16.gmra.mrb[0].mxu0 %v334
      %v973 = vpop.f32.mrb[0].mxu0
      %v974 = vadd.f32 0.0, %v973
      %v975 = vpop.f32.mrb[0].mxu0
      %v976 = vpop.f32.mrb[0].mxu0
      %v977 = vpop.f32.mrb[0].mxu0
      %978 = vdwg.mxu0
      %v980 = vrot.slane %v974, 2
      %v982 = vadd.f32 %v873, %v980
      %s983 = scalar_lea.vmem %s3, 384
      %v984 = vld [vmem:[%s983] sm:$0xf]
      %v985 = vld [vmem:[%s983 + $0x4] sm:$0xf]
      %v986 = vld [vmem:[%s983 + $0x8] sm:$0xf]
      %v987 = vld [vmem:[%s983 + $0xc] sm:$0xf]
      %v988 = vld [vmem:[%s983 + $0x10] sm:$0xf]
      %v989 = vld [vmem:[%s983 + $0x14] sm:$0xf]
      %v990 = vld [vmem:[%s983 + $0x18] sm:$0xf]
      %v991 = vld [vmem:[%s983 + $0x1c] sm:$0xf]
      %v992 = vld [vmem:[%s983 + $0x20] sm:$0xf]
      %v993 = vld [vmem:[%s983 + $0x24] sm:$0xf]
      %v994 = vld [vmem:[%s983 + $0x28] sm:$0xf]
      %v995 = vld [vmem:[%s983 + $0x2c] sm:$0xf]
      %v996 = vld [vmem:[%s983 + $0x30] sm:$0xf]
      %v997 = vld [vmem:[%s983 + $0x34] sm:$0xf]
      %v998 = vld [vmem:[%s983 + $0x38] sm:$0xf]
      %v999 = vld [vmem:[%s983 + $0x3c] sm:$0xf]
      %v1016 = vunpack.c.l.b16 %v984
      %v1017 = vunpack.c.l.b16 %v985
      %v1018 = vunpack.c.l.b16 %v986
      %v1019 = vunpack.c.l.b16 %v987
      %v1020 = vunpack.c.l.b16 %v988
      %v1021 = vunpack.c.l.b16 %v989
      %v1022 = vunpack.c.l.b16 %v990
      %v1023 = vunpack.c.l.b16 %v991
      %v1024 = vunpack.c.l.b16 %v992
      %v1025 = vunpack.c.l.b16 %v993
      %v1026 = vunpack.c.l.b16 %v994
      %v1027 = vunpack.c.l.b16 %v995
      %v1028 = vunpack.c.l.b16 %v996
      %v1029 = vunpack.c.l.b16 %v997
      %v1030 = vunpack.c.l.b16 %v998
      %v1031 = vunpack.c.l.b16 %v999
      %v1032 = vpack.c.b16 %v1017, %v1016
      %v1033 = vpack.c.b16 %v1019, %v1018
      %v1034 = vpack.c.b16 %v1021, %v1020
      %v1035 = vpack.c.b16 %v1023, %v1022
      %v1036 = vpack.c.b16 %v1025, %v1024
      %v1037 = vpack.c.b16 %v1027, %v1026
      %v1038 = vpack.c.b16 %v1029, %v1028
      %v1039 = vpack.c.b16 %v1031, %v1030
      %1048 = vmatprep.subr.bf16.mxu0 0
      %1049 = vmatpush1.bf16.msra.mxu0 %v1032
      %1050 = vmatprep.subr.bf16.mxu0 0
      %1051 = vmatpush1.bf16.msra.mxu0 %v1033
      %1052 = vmatprep.subr.bf16.mxu0 0
      %1053 = vmatpush1.bf16.msra.mxu0 %v1034
      %1054 = vmatprep.subr.bf16.mxu0 0
      %1055 = vmatpush1.bf16.msra.mxu0 %v1035
      %1056 = vmatprep.subr.bf16.mxu0 0
      %1057 = vmatpush1.bf16.msra.mxu0 %v1036
      %1058 = vmatprep.subr.bf16.mxu0 0
      %1059 = vmatpush1.bf16.msra.mxu0 %v1037
      %1060 = vmatprep.subr.bf16.mxu0 0
      %1061 = vmatpush1.bf16.msra.mxu0 %v1038
      %1062 = vmatprep.subr.bf16.mxu0 0
      %1063 = vmatpush1.bf16.msra.mxu0 %v1039
      %1064 = vmatprep.subr.bf16.mxu0 0
      %1065 = vmatpush1.bf16.msra.mxu0 0
      %1066 = vmatprep.subr.bf16.mxu0 0
      %1067 = vmatpush1.bf16.msra.mxu0 0
      %1068 = vmatprep.subr.bf16.mxu0 0
      %1069 = vmatpush1.bf16.msra.mxu0 0
      %1070 = vmatprep.subr.bf16.mxu0 0
      %1071 = vmatpush1.bf16.msra.mxu0 0
      %1072 = vmatprep.subr.bf16.mxu0 0
      %1073 = vmatpush1.bf16.msra.mxu0 0
      %1074 = vmatprep.subr.bf16.mxu0 0
      %1075 = vmatpush1.bf16.msra.mxu0 0
      %1076 = vmatprep.subr.bf16.mxu0 0
      %1077 = vmatpush1.bf16.msra.mxu0 0
      %1078 = vmatprep.subr.bf16.mxu0 0
      %1079 = vmatpush1.bf16.msra.mxu0 0
      %1080 = vmatprep.mubr.bf16.mxu0 0
      %1081 = vmatmul.mubr.bf16.gmra.mrb[0].mxu0 %v335
      %v1082 = vpop.f32.mrb[0].mxu0
      %v1083 = vadd.f32 0.0, %v1082
      %v1084 = vpop.f32.mrb[0].mxu0
      %v1085 = vpop.f32.mrb[0].mxu0
      %v1086 = vpop.f32.mrb[0].mxu0
      %1087 = vdwg.mxu0
      %v1088 = vadd.f32 %v982, %v1083
      %s1089 = scalar_lea.vmem %s3, 448
      %v1090 = vld [vmem:[%s1089] sm:$0xf]
      %v1091 = vld [vmem:[%s1089 + $0x4] sm:$0xf]
      %v1092 = vld [vmem:[%s1089 + $0x8] sm:$0xf]
      %v1093 = vld [vmem:[%s1089 + $0xc] sm:$0xf]
      %v1094 = vld [vmem:[%s1089 + $0x10] sm:$0xf]
      %v1095 = vld [vmem:[%s1089 + $0x14] sm:$0xf]
      %v1096 = vld [vmem:[%s1089 + $0x18] sm:$0xf]
      %v1097 = vld [vmem:[%s1089 + $0x1c] sm:$0xf]
      %v1098 = vld [vmem:[%s1089 + $0x20] sm:$0xf]
      %v1099 = vld [vmem:[%s1089 + $0x24] sm:$0xf]
      %v1100 = vld [vmem:[%s1089 + $0x28] sm:$0xf]
      %v1101 = vld [vmem:[%s1089 + $0x2c] sm:$0xf]
      %v1102 = vld [vmem:[%s1089 + $0x30] sm:$0xf]
      %v1103 = vld [vmem:[%s1089 + $0x34] sm:$0xf]
      %v1104 = vld [vmem:[%s1089 + $0x38] sm:$0xf]
      %v1105 = vld [vmem:[%s1089 + $0x3c] sm:$0xf]
      %v1122 = vunpack.c.l.b16 %v1090
      %v1123 = vunpack.c.l.b16 %v1091
      %v1124 = vunpack.c.l.b16 %v1092
      %v1125 = vunpack.c.l.b16 %v1093
      %v1126 = vunpack.c.l.b16 %v1094
      %v1127 = vunpack.c.l.b16 %v1095
      %v1128 = vunpack.c.l.b16 %v1096
      %v1129 = vunpack.c.l.b16 %v1097
      %v1130 = vunpack.c.l.b16 %v1098
      %v1131 = vunpack.c.l.b16 %v1099
      %v1132 = vunpack.c.l.b16 %v1100
      %v1133 = vunpack.c.l.b16 %v1101
      %v1134 = vunpack.c.l.b16 %v1102
      %v1135 = vunpack.c.l.b16 %v1103
      %v1136 = vunpack.c.l.b16 %v1104
      %v1137 = vunpack.c.l.b16 %v1105
      %v1138 = vpack.c.b16 %v1123, %v1122
      %v1139 = vpack.c.b16 %v1125, %v1124
      %v1140 = vpack.c.b16 %v1127, %v1126
      %v1141 = vpack.c.b16 %v1129, %v1128
      %v1142 = vpack.c.b16 %v1131, %v1130
      %v1143 = vpack.c.b16 %v1133, %v1132
      %v1144 = vpack.c.b16 %v1135, %v1134
      %v1145 = vpack.c.b16 %v1137, %v1136
      %1154 = vmatprep.subr.bf16.mxu0 0
      %1155 = vmatpush1.bf16.msra.mxu0 %v1138
      %1156 = vmatprep.subr.bf16.mxu0 0
      %1157 = vmatpush1.bf16.msra.mxu0 %v1139
      %1158 = vmatprep.subr.bf16.mxu0 0
      %1159 = vmatpush1.bf16.msra.mxu0 %v1140
      %1160 = vmatprep.subr.bf16.mxu0 0
      %1161 = vmatpush1.bf16.msra.mxu0 %v1141
      %1162 = vmatprep.subr.bf16.mxu0 0
      %1163 = vmatpush1.bf16.msra.mxu0 %v1142
      %1164 = vmatprep.subr.bf16.mxu0 0
      %1165 = vmatpush1.bf16.msra.mxu0 %v1143
      %1166 = vmatprep.subr.bf16.mxu0 0
      %1167 = vmatpush1.bf16.msra.mxu0 %v1144
      %1168 = vmatprep.subr.bf16.mxu0 0
      %1169 = vmatpush1.bf16.msra.mxu0 %v1145
      %1170 = vmatprep.subr.bf16.mxu0 0
      %1171 = vmatpush1.bf16.msra.mxu0 0
      %1172 = vmatprep.subr.bf16.mxu0 0
      %1173 = vmatpush1.bf16.msra.mxu0 0
      %1174 = vmatprep.subr.bf16.mxu0 0
      %1175 = vmatpush1.bf16.msra.mxu0 0
      %1176 = vmatprep.subr.bf16.mxu0 0
      %1177 = vmatpush1.bf16.msra.mxu0 0
      %1178 = vmatprep.subr.bf16.mxu0 0
      %1179 = vmatpush1.bf16.msra.mxu0 0
      %1180 = vmatprep.subr.bf16.mxu0 0
      %1181 = vmatpush1.bf16.msra.mxu0 0
      %1182 = vmatprep.subr.bf16.mxu0 0
      %1183 = vmatpush1.bf16.msra.mxu0 0
      %1184 = vmatprep.subr.bf16.mxu0 0
      %1185 = vmatpush1.bf16.msra.mxu0 0
      %1186 = vmatprep.mubr.bf16.mxu0 0
      %1187 = vmatmul.mubr.bf16.gmra.mrb[0].mxu0 %v335
      %v1188 = vpop.f32.mrb[0].mxu0
      %v1189 = vadd.f32 0.0, %v1188
      %v1190 = vpop.f32.mrb[0].mxu0
      %v1191 = vpop.f32.mrb[0].mxu0
      %v1192 = vpop.f32.mrb[0].mxu0
      %1193 = vdwg.mxu0
      %v1195 = vrot.slane %v1189, 1
      %v1197 = vadd.f32 %v1088, %v1195
      %s1198 = scalar_lea.vmem %s3, 512
      %v1199 = vld [vmem:[%s1198] sm:$0xf]
      %v1200 = vld [vmem:[%s1198 + $0x4] sm:$0xf]
      %v1201 = vld [vmem:[%s1198 + $0x8] sm:$0xf]
      %v1202 = vld [vmem:[%s1198 + $0xc] sm:$0xf]
      %v1203 = vld [vmem:[%s1198 + $0x10] sm:$0xf]
      %v1204 = vld [vmem:[%s1198 + $0x14] sm:$0xf]
      %v1205 = vld [vmem:[%s1198 + $0x18] sm:$0xf]
      %v1206 = vld [vmem:[%s1198 + $0x1c] sm:$0xf]
      %v1207 = vld [vmem:[%s1198 + $0x20] sm:$0xf]
      %v1208 = vld [vmem:[%s1198 + $0x24] sm:$0xf]
      %v1209 = vld [vmem:[%s1198 + $0x28] sm:$0xf]
      %v1210 = vld [vmem:[%s1198 + $0x2c] sm:$0xf]
      %v1211 = vld [vmem:[%s1198 + $0x30] sm:$0xf]
      %v1212 = vld [vmem:[%s1198 + $0x34] sm:$0xf]
      %v1213 = vld [vmem:[%s1198 + $0x38] sm:$0xf]
      %v1214 = vld [vmem:[%s1198 + $0x3c] sm:$0xf]
      %v1231 = vunpack.c.l.b16 %v1199
      %v1232 = vunpack.c.l.b16 %v1200
      %v1233 = vunpack.c.l.b16 %v1201
      %v1234 = vunpack.c.l.b16 %v1202
      %v1235 = vunpack.c.l.b16 %v1203
      %v1236 = vunpack.c.l.b16 %v1204
      %v1237 = vunpack.c.l.b16 %v1205
      %v1238 = vunpack.c.l.b16 %v1206
      %v1239 = vunpack.c.l.b16 %v1207
      %v1240 = vunpack.c.l.b16 %v1208
      %v1241 = vunpack.c.l.b16 %v1209
      %v1242 = vunpack.c.l.b16 %v1210
      %v1243 = vunpack.c.l.b16 %v1211
      %v1244 = vunpack.c.l.b16 %v1212
      %v1245 = vunpack.c.l.b16 %v1213
      %v1246 = vunpack.c.l.b16 %v1214
      %v1247 = vpack.c.b16 %v1232, %v1231
      %v1248 = vpack.c.b16 %v1234, %v1233
      %v1249 = vpack.c.b16 %v1236, %v1235
      %v1250 = vpack.c.b16 %v1238, %v1237
      %v1251 = vpack.c.b16 %v1240, %v1239
      %v1252 = vpack.c.b16 %v1242, %v1241
      %v1253 = vpack.c.b16 %v1244, %v1243
      %v1254 = vpack.c.b16 %v1246, %v1245
      %1263 = vmatprep.subr.bf16.mxu0 0
      %1264 = vmatpush1.bf16.msra.mxu0 %v1247
      %1265 = vmatprep.subr.bf16.mxu0 0
      %1266 = vmatpush1.bf16.msra.mxu0 %v1248
      %1267 = vmatprep.subr.bf16.mxu0 0
      %1268 = vmatpush1.bf16.msra.mxu0 %v1249
      %1269 = vmatprep.subr.bf16.mxu0 0
      %1270 = vmatpush1.bf16.msra.mxu0 %v1250
      %1271 = vmatprep.subr.bf16.mxu0 0
      %1272 = vmatpush1.bf16.msra.mxu0 %v1251
      %1273 = vmatprep.subr.bf16.mxu0 0
      %1274 = vmatpush1.bf16.msra.mxu0 %v1252
      %1275 = vmatprep.subr.bf16.mxu0 0
      %1276 = vmatpush1.bf16.msra.mxu0 %v1253
      %1277 = vmatprep.subr.bf16.mxu0 0
      %1278 = vmatpush1.bf16.msra.mxu0 %v1254
      %1279 = vmatprep.subr.bf16.mxu0 0
      %1280 = vmatpush1.bf16.msra.mxu0 0
      %1281 = vmatprep.subr.bf16.mxu0 0
      %1282 = vmatpush1.bf16.msra.mxu0 0
      %1283 = vmatprep.subr.bf16.mxu0 0
      %1284 = vmatpush1.bf16.msra.mxu0 0
      %1285 = vmatprep.subr.bf16.mxu0 0
      %1286 = vmatpush1.bf16.msra.mxu0 0
      %1287 = vmatprep.subr.bf16.mxu0 0
      %1288 = vmatpush1.bf16.msra.mxu0 0
      %1289 = vmatprep.subr.bf16.mxu0 0
      %1290 = vmatpush1.bf16.msra.mxu0 0
      %1291 = vmatprep.subr.bf16.mxu0 0
      %1292 = vmatpush1.bf16.msra.mxu0 0
      %1293 = vmatprep.subr.bf16.mxu0 0
      %1294 = vmatpush1.bf16.msra.mxu0 0
      %1295 = vmatprep.mubr.bf16.mxu0 0
      %1296 = vmatmul.mubr.bf16.gmra.mrb[0].mxu0 %v335
      %v1297 = vpop.f32.mrb[0].mxu0
      %v1298 = vadd.f32 0.0, %v1297
      %v1299 = vpop.f32.mrb[0].mxu0
      %v1300 = vpop.f32.mrb[0].mxu0
      %v1301 = vpop.f32.mrb[0].mxu0
      %1302 = vdwg.mxu0
      %v1304 = vrot.slane %v1298, 2
      %v1306 = vadd.f32 %v1197, %v1304
      %v1307 = vld [vmem:[%s4] sm:$0x1]
      %v1309 = vlaneseq
      %v1310 = vshrl.u32 %v1309, 7
      %v1311 = vsub.s32 0, %v1310
      %v1312 = vrot.slane %v1307, %v1311
      %v1314 = vadd.f32 %v1306, %v1312
      %1315 = vst [vmem:[%s331] sm:$0x3] %v1314
      %p1316 = scmp.lt.s32.totalorder %s20, 1
      %s1317 = scalar_select %p1316, %s20, 1
      %p1318 = scmp.lt.s32.totalorder %s21, 1
      %s1319 = scalar_select %p1318, %s21, 1
      %s1320 = smul.addr %s1317, 2
      %s1321 = sadd.s32 %s1319, %s1320
      %s1322 = smul.addr %s1321, 2
      %s1323 = scalar_lea.vmem %s5, %s1322
      // Predicated region
      $region41: #{discriminator_forward.13} parent=39 // pred_check
        %p1324 = pneg %p178
      $region42: #{discriminator_forward.13} parent=39 // pred_check_branch
        %1326 = sbr.rel (%p1324) target = $region44
      $region43: #{discriminator_forward.13} parent=39 // pred_region
        _
      $region44: #{discriminator_forward.13} parent=39 // pred_fallthru
        _
    $region40: #{discriminator_forward.13} parent=5 // pred_fallthru
      _
    %p1327 = scmp.le.s32.totalorder 2, %s11
    // Predicated region
    $region45: #{discriminator_forward.13} parent=5 // pred_check
      %p1328 = pneg %p1327
    $region46: #{discriminator_forward.13} parent=5 // pred_check_branch
      %1330 = sbr.rel (%p1328) target = $region48
    $region47: #{discriminator_forward.13} parent=5 // pred_region
      %s1331 = ssub.s32 %s11, 2
      // Predicated region
      $region49: #{discriminator_forward.13} parent=47 // pred_check
        %p1332 = pneg %p184
      $region50: #{discriminator_forward.13} parent=47 // pred_check_branch
        %1334 = sbr.rel (%p1332) target = $region52
      $region51: #{discriminator_forward.13} parent=47 // pred_region
        %p1335 = scmp.lt.s32.totalorder %s22, 1
        %s1336 = scalar_select %p1335, %s22, 1
        %p1337 = scmp.lt.s32.totalorder %s23, 1
        %s1338 = scalar_select %p1337, %s23, 1
        %s1339 = smul.addr %s1336, 2
        %s1340 = sadd.s32 %s1338, %s1339
        %s1341 = smul.addr %s1340, 2
        %s1342 = scalar_lea.vmem %s5, %s1341
      $region52: #{discriminator_forward.13} parent=47 // pred_fallthru
        _
    $region48: #{discriminator_forward.13} parent=5 // pred_fallthru
      _
  $region6: #{discriminator_forward.13} parent=0 // loop_footer
    %s15 = sadd.s32 1, %s11
  $region7: #{discriminator_forward.13} parent=0 // loop_footer_branch
    %10 = sbr.rel target = $region3
  $region8: #{discriminator_forward.13} parent=0 // loop_exit
    _

</llo_original>
